<compile_context>
chip_gen: v5e
topology: v5e:2x2
jax: 0.10.0
libtpu: 0.0.40
codegen_flags: <defaults>
</compile_context>

<pallas_src>
import jax
import jax.numpy as jnp
from jax import lax
from jax.experimental import pallas as pl
from jax.experimental.pallas import tpu as pltpu

SUB = 8      # sublane height
LANE = 128   # lane width


def _round_up(x, m):
    return (x + m - 1) // m * m


# ----------------------------------------------------------------------------
# Kernel: full free-running decode in one invocation (no grid, full VMEM blocks).
# ----------------------------------------------------------------------------
def decoder_kernel(
    emb_ref,    # (Vp, H)    bf16 embedding table (rows >= V zero)
    wgru_ref,   # (2H, 6H)   bf16 block-diag fused GRU weights [[wih_t, 0], [0, whh_t]]
    bgru_ref,   # (1, 6H)    f32  fused GRU bias [bih | bhh], gate order r,z,n per half
    watt_ref,   # (2H, H)    bf16 attention linear_out weight^T (rows: [mix | output])
    batt_ref,   # (1, H)     f32
    wout_ref,   # (H, Vp)    bf16 vocab projection (cols >= V zero)
    bout_ref,   # (1, Vp)    f32  (-1e30 on padded cols)
    enc_ref,    # (Bp, L, H) f32 encoder outputs (padded batch rows zero)
    h0_ref,     # (Bp, H)    f32 initial decoder hidden (after _init_state)
    tok0_ref,   # (Bp, Vp)   bf16 one-hot of inputs[:, 0] (SOS)
    logp_ref,   # out (T, Bp, Vp) f32 log_softmax per step
    attn_ref,   # out (T, Bp, L)  f32 attention weights per step
    hfin_ref,   # out (Bp, H)     f32 final hidden state
):
    T = logp_ref.shape[0]
    Bp, H = h0_ref.shape
    Vp = emb_ref.shape[0]
    bf = jnp.bfloat16

    # hoist only the small loop-invariant constants (biases + iota); weights stay in
    # VMEM and are loaded at their use sites (vld slots easily re-feed the MXU).
    bgru = bgru_ref[...]
    batt = batt_ref[...]
    bout = bout_ref[...]
    iota_v = lax.broadcasted_iota(jnp.int32, (Bp, Vp), 1)

    def step(t, carry):
        h, tok = carry                                                          # vreg carry

        # ---- embedding lookup: exact one-hot matmul (bf16 0/1 x bf16 rows, f32 acc) ----
        x = jnp.dot(tok, emb_ref[...], preferred_element_type=jnp.float32)      # (Bp, H)

        # ---- fused GRU cell: one (Bp,2H)@(2H,6H) matmul; PyTorch gate order r, z, n ----
        xh = jnp.concatenate([x.astype(bf), h.astype(bf)], axis=-1)             # (Bp, 2H)
        g = jnp.dot(xh, wgru_ref[...], preferred_element_type=jnp.float32) + bgru  # (Bp, 6H)
        r = jax.nn.sigmoid(g[:, 0:H] + g[:, 3 * H:4 * H])
        z = jax.nn.sigmoid(g[:, H:2 * H] + g[:, 4 * H:5 * H])
        n = jnp.tanh(g[:, 2 * H:3 * H] + r * g[:, 5 * H:6 * H])
        h_new = (1.0 - z) * n + z * h

        # ---- attention: scores -> softmax -> mix -> fused linear_out + tanh ----
        enc = enc_ref[...]
        scores = jnp.sum(h_new[:, None, :] * enc, axis=-1)                      # (Bp, L)
        scores = scores - jnp.max(scores, axis=-1, keepdims=True)
        e = jnp.exp(scores)
        attnw = e / jnp.sum(e, axis=-1, keepdims=True)
        attn_ref[t] = attnw
        mix = jnp.sum(attnw[:, :, None] * enc, axis=1)                          # (Bp, H)
        mh = jnp.concatenate([mix.astype(bf), h_new.astype(bf)], axis=-1)       # (Bp, 2H)
        att = jnp.tanh(
            jnp.dot(mh, watt_ref[...], preferred_element_type=jnp.float32) + batt)

        # ---- lane-dense vocab projection (Vp multiple of 128) + log_softmax ----
        logits = (jnp.dot(att.astype(bf), wout_ref[...],
                          preferred_element_type=jnp.float32) + bout)
        m = jnp.max(logits, axis=-1, keepdims=True)
        lse = jnp.log(jnp.sum(jnp.exp(logits - m), axis=-1, keepdims=True)) + m
        logp_ref[t] = logits - lse

        # ---- greedy feedback from logits (argmax invariant to the per-row lse shift) ----
        idx = jnp.min(jnp.where(logits == m, iota_v, Vp), axis=-1, keepdims=True)
        tok_new = (iota_v == idx).astype(bf)
        return (h_new, tok_new)

    h_fin, _ = lax.fori_loop(0, T, step, (h0_ref[...], tok0_ref[...]), unroll=True)
    hfin_ref[...] = h_fin


# ----------------------------------------------------------------------------
# Parameter construction (kernel-ready: fused bf16 weights, padded vocab, f32 biases).
# ----------------------------------------------------------------------------
def init_params(key, vocab_size, hidden_size):
    V, H = vocab_size, hidden_size
    Vp = _round_up(V, LANE)
    ks = jax.random.split(key, 11)
    s = 1.0 / jnp.sqrt(H)
    u = lambda k, shape: jax.random.uniform(k, shape, jnp.float32, -s, s)

    emb = 0.1 * jax.random.normal(ks[0], (V, H), jnp.float32)
    weight_ih = u(ks[1], (3 * H, H))           # nn.GRU weight_ih_l0, gates [r; z; n]
    weight_hh = u(ks[2], (3 * H, H))
    bias_ih = u(ks[3], (3 * H,))
    bias_hh = u(ks[4], (3 * H,))
    w_attn = u(ks[5], (H, 2 * H))              # Attention.linear_out (cols: [mix | output])
    b_attn = u(ks[6], (H,))
    w_out = u(ks[7], (V, H))                   # self.out
    b_out = u(ks[8], (V,))
    w_hc = u(ks[9], (H // 2, H // 2))          # self.hidden_change
    b_hc = u(ks[10], (H // 2,))

    bf = jnp.bfloat16
    emb_p = jnp.zeros((Vp, H), bf).at[:V].set(emb.astype(bf))
    wout_p = jnp.zeros((H, Vp), bf).at[:, :V].set(w_out.T.astype(bf))
    bout_p = jnp.full((1, Vp), -1e30, jnp.float32).at[0, :V].set(b_out)

    # fused block-diagonal GRU weight: [x | h] @ [[wih^T, 0], [0, whh^T]] = [gx | gh]
    w_gru = jnp.zeros((2 * H, 6 * H), bf)
    w_gru = w_gru.at[:H, :3 * H].set(weight_ih.T.astype(bf))
    w_gru = w_gru.at[H:, 3 * H:].set(weight_hh.T.astype(bf))
    b_gru = jnp.concatenate([bias_ih, bias_hh]).reshape(1, 6 * H)

    return dict(
        V=V, Vp=Vp, H=H,
        emb=emb_p,
        w_gru=w_gru, b_gru=b_gru,
        w_att_t=w_attn.T.astype(bf),           # (2H, H), rows: [mix | output]
        b_attn=b_attn.reshape(1, H),
        w_out_t=wout_p, b_out=bout_p,
        w_hc=w_hc, b_hc=b_hc,
    )


def _prepare_inputs(params, inputs_ids, encoder_hidden, encoder_outputs):
    """_init_state + _cat_directions (plain-JAX glue) + batch/vocab padding."""
    B, S = inputs_ids.shape
    T = S - 1                                   # max_length = inputs.size(1) - 1
    Vp, H = params["Vp"], params["H"]
    L = encoder_outputs.shape[1]
    Bp = _round_up(max(B, SUB), SUB)

    h = jnp.tanh(encoder_hidden @ params["w_hc"].T + params["b_hc"])   # (2, B, H//2)
    h0 = jnp.concatenate([h[0::2], h[1::2]], axis=2)[0]                # (B, H)

    h0_p = jnp.zeros((Bp, H), jnp.float32).at[:B].set(h0)
    enc_p = jnp.zeros((Bp, L, H), jnp.float32).at[:B].set(encoder_outputs)
    tok0 = jax.nn.one_hot(inputs_ids[:, 0], Vp, dtype=jnp.bfloat16)    # (B, Vp)
    tok0_p = jnp.zeros((Bp, Vp), jnp.bfloat16).at[:B].set(tok0)
    return enc_p, h0_p, tok0_p, T, Bp


# ----------------------------------------------------------------------------
# Wrapper.
# ----------------------------------------------------------------------------
def decoder_rnn_forward(params, inputs_ids, encoder_hidden, encoder_outputs, eos_id):
    B = inputs_ids.shape[0]
    V, Vp, H = params["V"], params["Vp"], params["H"]
    L = encoder_outputs.shape[1]
    enc_p, h0_p, tok0_p, T, Bp = _prepare_inputs(params, inputs_ids, encoder_hidden,
                                                 encoder_outputs)

    ins = (params["emb"], params["w_gru"], params["b_gru"],
           params["w_att_t"], params["b_attn"],
           params["w_out_t"], params["b_out"],
           enc_p, h0_p, tok0_p)

    vmem = pl.BlockSpec(memory_space=pltpu.MemorySpace.VMEM)   # whole array, single buffer
    out_shape = (
        jax.ShapeDtypeStruct((T, Bp, Vp), jnp.float32),   # log-probs per step
        jax.ShapeDtypeStruct((T, Bp, L), jnp.float32),    # attention weights per step
        jax.ShapeDtypeStruct((Bp, H), jnp.float32),       # final hidden
    )

    logp_f, attn_f, hfin_f = pl.pallas_call(
        decoder_kernel,
        out_shape=out_shape,
        in_specs=[vmem] * len(ins),
        out_specs=(vmem, vmem, vmem),
    )(*ins)

    logp = logp_f[:, :B, :V]                              # (T, B, V)
    attn = attn_f[:, :B, :]                               # (T, B, L)
    hfin = hfin_f[None, :B, :]                            # (1, B, H)

    # symbols reproduced from the returned log-probs (argmax is invariant to the lse
    # shift, so this matches the in-kernel logits-based feedback).
    symbols = jnp.argmax(logp, axis=-1).astype(jnp.int32)  # (T, B)
    eos_mask = symbols == eos_id
    has_eos = jnp.any(eos_mask, axis=0)
    lengths = jnp.where(has_eos, jnp.argmax(eos_mask, axis=0) + 1, logp.shape[0])
    ret_dict = {"attention_score": attn, "sequence": symbols, "length": lengths}
    return logp, hfin, ret_dict


# ----------------------------------------------------------------------------
# Pure-JAX reference with identical fused (bf16-operand, f32-accumulate) math.
# ----------------------------------------------------------------------------
def reference_forward(params, enc_p, h0_p, tok0_p, T):
    H, Vp = params["H"], params["Vp"]
    bf = jnp.bfloat16
    emb, wgru, bgru = params["emb"], params["w_gru"], params["b_gru"]
    watt, batt = params["w_att_t"], params["b_attn"]
    wout, bout = params["w_out_t"], params["b_out"]
    iota_v = jnp.arange(Vp, dtype=jnp.int32)[None, :]
    h, tok = h0_p, tok0_p
    logps, attns = [], []
    for _ in range(T):
        x = jnp.dot(tok, emb, preferred_element_type=jnp.float32)
        xh = jnp.concatenate([x.astype(bf), h.astype(bf)], axis=-1)
        g = jnp.dot(xh, wgru, preferred_element_type=jnp.float32) + bgru
        r = jax.nn.sigmoid(g[:, 0:H] + g[:, 3 * H:4 * H])
        z = jax.nn.sigmoid(g[:, H:2 * H] + g[:, 4 * H:5 * H])
        n = jnp.tanh(g[:, 2 * H:3 * H] + r * g[:, 5 * H:6 * H])
        h = (1.0 - z) * n + z * h
        scores = jnp.sum(h[:, None, :] * enc_p, axis=-1)
        scores = scores - jnp.max(scores, axis=-1, keepdims=True)
        e = jnp.exp(scores)
        attnw = e / jnp.sum(e, axis=-1, keepdims=True)
        mix = jnp.sum(attnw[:, :, None] * enc_p, axis=1)
        mh = jnp.concatenate([mix.astype(bf), h.astype(bf)], axis=-1)
        att = jnp.tanh(jnp.dot(mh, watt, preferred_element_type=jnp.float32) + batt)
        logits = jnp.dot(att.astype(bf), wout, preferred_element_type=jnp.float32) + bout
        m = jnp.max(logits, axis=-1, keepdims=True)
        logp = logits - (jnp.log(jnp.sum(jnp.exp(logits - m), axis=-1, keepdims=True)) + m)
        logps.append(logp)
        attns.append(attnw)
        idx = jnp.min(jnp.where(logits == m, iota_v, Vp), axis=-1, keepdims=True)
        tok = (iota_v == idx).astype(bf)
    return jnp.stack(logps), jnp.stack(attns), h


if __name__ == "__main__":
    B, H, V, L, S = 2, 32, 32, 8, 9            # batch, hidden, vocab, enc_len, input_len
    n_layers, sos_id, eos_id = 1, 1, 2

    key = jax.random.PRNGKey(0)
    kp, k1, k2, k3 = jax.random.split(key, 4)
    params = init_params(kp, V, H)

    inputs_ids = jax.random.randint(k1, (B, S), 0, V, dtype=jnp.int32)
    inputs_ids = inputs_ids.at[:, 0].set(sos_id)
    encoder_hidden = jax.random.normal(k2, (n_layers * 2, B, H // 2), jnp.float32)
    encoder_outputs = jax.random.normal(k3, (B, L, H), jnp.float32)

    logp, hfin, ret = decoder_rnn_forward(params, inputs_ids, encoder_hidden,
                                          encoder_outputs, eos_id)
    jax.block_until_ready((logp, hfin, ret["sequence"], ret["attention_score"]))

    # correctness check against the pure-JAX reference (same fused bf16 math, padded shapes)
    enc_p, h0_p, tok0_p, T, Bp = _prepare_inputs(params, inputs_ids, encoder_hidden,
                                                 encoder_outputs)
    logp_rf, attn_rf, h_rf = reference_forward(params, enc_p, h0_p, tok0_p, T)
    logp_r = logp_rf[:, :B, :V]
    attn_r = attn_rf[:, :B, :]
    h_r = h_rf[:B]
    sym_r = jnp.argmax(logp_r, axis=-1).astype(jnp.int32)

    assert jnp.allclose(logp, logp_r, atol=2e-3, rtol=2e-3)
    assert jnp.allclose(ret["attention_score"], attn_r, atol=2e-3, rtol=2e-3)
    assert jnp.allclose(hfin[0], h_r, atol=2e-3, rtol=2e-3)
    assert bool(jnp.all(ret["sequence"] == sym_r))

    print("KERNEL_OK")
</pallas_src>

<mosaic_0001>
module attributes {stable_mosaic.version = 11 : i64} {
  func.func @decoder_kernel(%arg0: memref<128x32xbf16, #tpu.memory_space<vmem>>, %arg1: memref<64x192xbf16, #tpu.memory_space<vmem>>, %arg2: memref<1x192xf32, #tpu.memory_space<vmem>>, %arg3: memref<64x32xbf16, #tpu.memory_space<vmem>>, %arg4: memref<1x32xf32, #tpu.memory_space<vmem>>, %arg5: memref<32x128xbf16, #tpu.memory_space<vmem>>, %arg6: memref<1x128xf32, #tpu.memory_space<vmem>>, %arg7: memref<8x8x32xf32, #tpu.memory_space<vmem>>, %arg8: memref<8x32xf32, #tpu.memory_space<vmem>>, %arg9: memref<8x128xbf16, #tpu.memory_space<vmem>>, %arg10: memref<8x8x128xf32, #tpu.memory_space<vmem>>, %arg11: memref<8x8x8xf32, #tpu.memory_space<vmem>>, %arg12: memref<8x32xf32, #tpu.memory_space<vmem>>) attributes {dimension_semantics = [], scalar_prefetch = 0 : i64, scratch_operands = 0 : i64, tpu.core_type = #tpu.core_type<tc>} {
    %c0 = arith.constant 0 : index
    %c0_0 = arith.constant 0 : index
    %0 = vector.load %arg2[%c0, %c0_0] : memref<1x192xf32, #tpu.memory_space<vmem>>, vector<1x192xf32>
    %c0_1 = arith.constant 0 : index
    %c0_2 = arith.constant 0 : index
    %1 = vector.load %arg4[%c0_1, %c0_2] : memref<1x32xf32, #tpu.memory_space<vmem>>, vector<1x32xf32>
    %c0_3 = arith.constant 0 : index
    %c0_4 = arith.constant 0 : index
    %2 = vector.load %arg6[%c0_3, %c0_4] : memref<1x128xf32, #tpu.memory_space<vmem>>, vector<1x128xf32>
    %3 = tpu.iota {dimensions = array<i32: 1>} : vector<8x128xi32>
    %c0_5 = arith.constant 0 : index
    %c0_6 = arith.constant 0 : index
    %4 = vector.load %arg8[%c0_5, %c0_6] : memref<8x32xf32, #tpu.memory_space<vmem>>, vector<8x32xf32>
    %c0_7 = arith.constant 0 : index
    %c0_8 = arith.constant 0 : index
    %5 = vector.load %arg9[%c0_7, %c0_8] : memref<8x128xbf16, #tpu.memory_space<vmem>>, vector<8x128xbf16>
    %c0_i32 = arith.constant 0 : i32
    %c0_9 = arith.constant 0 : index
    %c0_10 = arith.constant 0 : index
    %6 = vector.load %arg0[%c0_9, %c0_10] : memref<128x32xbf16, #tpu.memory_space<vmem>>, vector<128x32xbf16>
    %cst = arith.constant dense<0.000000e+00> : vector<8x32xf32>
    %7 = tpu.matmul %5, %6, %cst {dimension_numbers = #tpu.dot_dimension_numbers<[1], [0], [0], [1], [0, 0, 1, 1], [], []>} : vector<8x128xbf16>, vector<128x32xbf16>, vector<8x32xf32> -> vector<8x32xf32>
    %8 = arith.truncf %7 : vector<8x32xf32> to vector<8x32xbf16>
    %9 = arith.truncf %4 : vector<8x32xf32> to vector<8x32xbf16>
    %10 = tpu.concatenate %8, %9 in 1 : vector<8x32xbf16>, vector<8x32xbf16> -> vector<8x64xbf16>
    %c0_11 = arith.constant 0 : index
    %c0_12 = arith.constant 0 : index
    %11 = vector.load %arg1[%c0_11, %c0_12] : memref<64x192xbf16, #tpu.memory_space<vmem>>, vector<64x192xbf16>
    %cst_13 = arith.constant dense<0.000000e+00> : vector<8x192xf32>
    %12 = tpu.matmul %10, %11, %cst_13 {dimension_numbers = #tpu.dot_dimension_numbers<[1], [0], [0], [1], [0, 0, 1, 1], [], []>} : vector<8x64xbf16>, vector<64x192xbf16>, vector<8x192xf32> -> vector<8x192xf32>
    %13 = vector.broadcast %0 : vector<1x192xf32> to vector<8x192xf32>
    %14 = arith.addf %12, %13 : vector<8x192xf32>
    %15 = vector.extract_strided_slice %14 {offsets = [0, 0], sizes = [8, 32], strides = [1, 1]} : vector<8x192xf32> to vector<8x32xf32>
    %16 = vector.extract_strided_slice %14 {offsets = [0, 96], sizes = [8, 32], strides = [1, 1]} : vector<8x192xf32> to vector<8x32xf32>
    %17 = arith.addf %15, %16 : vector<8x32xf32>
    %18 = arith.negf %17 : vector<8x32xf32>
    %19 = math.exp %18 : vector<8x32xf32>
    %cst_14 = arith.constant 1.000000e+00 : f32
    %20 = vector.broadcast %cst_14 : f32 to vector<8x32xf32>
    %21 = arith.addf %20, %19 : vector<8x32xf32>
    %22 = arith.divf %20, %21 : vector<8x32xf32>
    %23 = vector.extract_strided_slice %14 {offsets = [0, 32], sizes = [8, 32], strides = [1, 1]} : vector<8x192xf32> to vector<8x32xf32>
    %24 = vector.extract_strided_slice %14 {offsets = [0, 128], sizes = [8, 32], strides = [1, 1]} : vector<8x192xf32> to vector<8x32xf32>
    %25 = arith.addf %23, %24 : vector<8x32xf32>
    %26 = arith.negf %25 : vector<8x32xf32>
    %27 = math.exp %26 : vector<8x32xf32>
    %cst_15 = arith.constant 1.000000e+00 : f32
    %28 = vector.broadcast %cst_15 : f32 to vector<8x32xf32>
    %29 = arith.addf %28, %27 : vector<8x32xf32>
    %30 = arith.divf %28, %29 : vector<8x32xf32>
    %31 = vector.extract_strided_slice %14 {offsets = [0, 64], sizes = [8, 32], strides = [1, 1]} : vector<8x192xf32> to vector<8x32xf32>
    %32 = vector.extract_strided_slice %14 {offsets = [0, 160], sizes = [8, 32], strides = [1, 1]} : vector<8x192xf32> to vector<8x32xf32>
    %33 = arith.mulf %22, %32 : vector<8x32xf32>
    %34 = arith.addf %31, %33 : vector<8x32xf32>
    %35 = math.tanh %34 : vector<8x32xf32>
    %cst_16 = arith.constant 1.000000e+00 : f32
    %36 = vector.broadcast %cst_16 : f32 to vector<8x32xf32>
    %37 = arith.subf %36, %30 : vector<8x32xf32>
    %38 = arith.mulf %37, %35 : vector<8x32xf32>
    %39 = arith.mulf %30, %4 : vector<8x32xf32>
    %40 = arith.addf %38, %39 : vector<8x32xf32>
    %c0_17 = arith.constant 0 : index
    %c0_18 = arith.constant 0 : index
    %c0_19 = arith.constant 0 : index
    %41 = vector.load %arg7[%c0_17, %c0_18, %c0_19] : memref<8x8x32xf32, #tpu.memory_space<vmem>>, vector<8x8x32xf32>
    %42 = vector.shape_cast %40 : vector<8x32xf32> to vector<8x1x32xf32>
    %43 = vector.broadcast %42 : vector<8x1x32xf32> to vector<8x8x32xf32>
    %44 = arith.mulf %43, %41 : vector<8x8x32xf32>
    %cst_20 = arith.constant dense<0.000000e+00> : vector<8x8xf32>
    %45 = vector.multi_reduction <add>, %44, %cst_20 [2] : vector<8x8x32xf32> to vector<8x8xf32>
    %cst_21 = arith.constant dense<0xFF800000> : vector<8xf32>
    %46 = vector.multi_reduction <maximumf>, %45, %cst_21 [1] : vector<8x8xf32> to vector<8xf32>
    %47 = vector.shape_cast %46 : vector<8xf32> to vector<8x1xf32>
    %48 = vector.broadcast %47 : vector<8x1xf32> to vector<8x8xf32>
    %49 = arith.subf %45, %48 : vector<8x8xf32>
    %50 = math.exp %49 : vector<8x8xf32>
    %cst_22 = arith.constant dense<0.000000e+00> : vector<8xf32>
    %51 = vector.multi_reduction <add>, %50, %cst_22 [1] : vector<8x8xf32> to vector<8xf32>
    %52 = vector.shape_cast %51 : vector<8xf32> to vector<8x1xf32>
    %53 = vector.broadcast %52 : vector<8x1xf32> to vector<8x8xf32>
    %54 = arith.divf %50, %53 : vector<8x8xf32>
    %55 = arith.index_cast %c0_i32 : i32 to index
    %c0_23 = arith.constant 0 : index
    %c0_24 = arith.constant 0 : index
    %56 = vector.load %arg11[%55, %c0_23, %c0_24] : memref<8x8x8xf32, #tpu.memory_space<vmem>>, vector<1x8x8xf32>
    %57 = vector.shape_cast %56 : vector<1x8x8xf32> to vector<8x8xf32>
    %58 = vector.shape_cast %54 : vector<8x8xf32> to vector<1x8x8xf32>
    tpu.vector_store %arg11[%55, %c0_23, %c0_24], %58 {strides = array<i32>} : memref<8x8x8xf32, #tpu.memory_space<vmem>>, vector<1x8x8xf32>,
    %59 = vector.shape_cast %54 : vector<8x8xf32> to vector<8x8x1xf32>
    %60 = vector.broadcast %59 : vector<8x8x1xf32> to vector<8x8x32xf32>
    %61 = arith.mulf %60, %41 : vector<8x8x32xf32>
    %cst_25 = arith.constant dense<0.000000e+00> : vector<8x32xf32>
    %62 = vector.multi_reduction <add>, %61, %cst_25 [1] : vector<8x8x32xf32> to vector<8x32xf32>
    %63 = arith.truncf %62 : vector<8x32xf32> to vector<8x32xbf16>
    %64 = arith.truncf %40 : vector<8x32xf32> to vector<8x32xbf16>
    %65 = tpu.concatenate %63, %64 in 1 : vector<8x32xbf16>, vector<8x32xbf16> -> vector<8x64xbf16>
    %c0_26 = arith.constant 0 : index
    %c0_27 = arith.constant 0 : index
    %66 = vector.load %arg3[%c0_26, %c0_27] : memref<64x32xbf16, #tpu.memory_space<vmem>>, vector<64x32xbf16>
    %cst_28 = arith.constant dense<0.000000e+00> : vector<8x32xf32>
    %67 = tpu.matmul %65, %66, %cst_28 {dimension_numbers = #tpu.dot_dimension_numbers<[1], [0], [0], [1], [0, 0, 1, 1], [], []>} : vector<8x64xbf16>, vector<64x32xbf16>, vector<8x32xf32> -> vector<8x32xf32>
    %68 = vector.broadcast %1 : vector<1x32xf32> to vector<8x32xf32>
    %69 = arith.addf %67, %68 : vector<8x32xf32>
    %70 = math.tanh %69 : vector<8x32xf32>
    %71 = arith.truncf %70 : vector<8x32xf32> to vector<8x32xbf16>
    %c0_29 = arith.constant 0 : index
    %c0_30 = arith.constant 0 : index
    %72 = vector.load %arg5[%c0_29, %c0_30] : memref<32x128xbf16, #tpu.memory_space<vmem>>, vector<32x128xbf16>
    %cst_31 = arith.constant dense<0.000000e+00> : vector<8x128xf32>
    %73 = tpu.matmul %71, %72, %cst_31 {dimension_numbers = #tpu.dot_dimension_numbers<[1], [0], [0], [1], [0, 0, 1, 1], [], []>} : vector<8x32xbf16>, vector<32x128xbf16>, vector<8x128xf32> -> vector<8x128xf32>
    %74 = vector.broadcast %2 : vector<1x128xf32> to vector<8x128xf32>
    %75 = arith.addf %73, %74 : vector<8x128xf32>
    %cst_32 = arith.constant dense<0xFF800000> : vector<8xf32>
    %76 = vector.multi_reduction <maximumf>, %75, %cst_32 [1] : vector<8x128xf32> to vector<8xf32>
    %77 = vector.shape_cast %76 : vector<8xf32> to vector<8x1xf32>
    %78 = vector.broadcast %77 : vector<8x1xf32> to vector<8x128xf32>
    %79 = arith.subf %75, %78 : vector<8x128xf32>
    %80 = math.exp %79 : vector<8x128xf32>
    %cst_33 = arith.constant dense<0.000000e+00> : vector<8xf32>
    %81 = vector.multi_reduction <add>, %80, %cst_33 [1] : vector<8x128xf32> to vector<8xf32>
    %82 = vector.shape_cast %81 : vector<8xf32> to vector<8x1xf32>
    %83 = math.log %82 : vector<8x1xf32>
    %84 = arith.addf %83, %77 : vector<8x1xf32>
    %85 = vector.broadcast %84 : vector<8x1xf32> to vector<8x128xf32>
    %86 = arith.subf %75, %85 : vector<8x128xf32>
    %87 = arith.index_cast %c0_i32 : i32 to index
    %c0_34 = arith.constant 0 : index
    %c0_35 = arith.constant 0 : index
    %88 = vector.load %arg10[%87, %c0_34, %c0_35] : memref<8x8x128xf32, #tpu.memory_space<vmem>>, vector<1x8x128xf32>
    %89 = vector.shape_cast %88 : vector<1x8x128xf32> to vector<8x128xf32>
    %90 = vector.shape_cast %86 : vector<8x128xf32> to vector<1x8x128xf32>
    tpu.vector_store %arg10[%87, %c0_34, %c0_35], %90 {strides = array<i32>} : memref<8x8x128xf32, #tpu.memory_space<vmem>>, vector<1x8x128xf32>,
    %91 = vector.broadcast %77 : vector<8x1xf32> to vector<8x128xf32>
    %92 = arith.cmpf oeq, %75, %91 : vector<8x128xf32>
    %c128_i32 = arith.constant 128 : i32
    %93 = vector.broadcast %c128_i32 : i32 to vector<8x128xi32>
    %94 = arith.select %92, %3, %93 : vector<8x128xi1>, vector<8x128xi32>
    %cst_36 = arith.constant dense<2147483647> : vector<8xi32>
    %95 = vector.multi_reduction <minsi>, %94, %cst_36 [1] : vector<8x128xi32> to vector<8xi32>
    %96 = vector.shape_cast %95 : vector<8xi32> to vector<8x1xi32>
    %97 = vector.broadcast %96 : vector<8x1xi32> to vector<8x128xi32>
    %98 = arith.cmpi eq, %3, %97 : vector<8x128xi32>
    %99 = arith.extui %98 : vector<8x128xi1> to vector<8x128xi32>
    %100 = arith.sitofp %99 : vector<8x128xi32> to vector<8x128xf32>
    %101 = arith.truncf %100 : vector<8x128xf32> to vector<8x128xbf16>
    %c1_i32 = arith.constant 1 : i32
    %c0_37 = arith.constant 0 : index
    %c0_38 = arith.constant 0 : index
    %102 = vector.load %arg0[%c0_37, %c0_38] : memref<128x32xbf16, #tpu.memory_space<vmem>>, vector<128x32xbf16>
    %cst_39 = arith.constant dense<0.000000e+00> : vector<8x32xf32>
    %103 = tpu.matmul %101, %102, %cst_39 {dimension_numbers = #tpu.dot_dimension_numbers<[1], [0], [0], [1], [0, 0, 1, 1], [], []>} : vector<8x128xbf16>, vector<128x32xbf16>, vector<8x32xf32> -> vector<8x32xf32>
    %104 = arith.truncf %103 : vector<8x32xf32> to vector<8x32xbf16>
    %105 = arith.truncf %40 : vector<8x32xf32> to vector<8x32xbf16>
    %106 = tpu.concatenate %104, %105 in 1 : vector<8x32xbf16>, vector<8x32xbf16> -> vector<8x64xbf16>
    %c0_40 = arith.constant 0 : index
    %c0_41 = arith.constant 0 : index
    %107 = vector.load %arg1[%c0_40, %c0_41] : memref<64x192xbf16, #tpu.memory_space<vmem>>, vector<64x192xbf16>
    %cst_42 = arith.constant dense<0.000000e+00> : vector<8x192xf32>
    %108 = tpu.matmul %106, %107, %cst_42 {dimension_numbers = #tpu.dot_dimension_numbers<[1], [0], [0], [1], [0, 0, 1, 1], [], []>} : vector<8x64xbf16>, vector<64x192xbf16>, vector<8x192xf32> -> vector<8x192xf32>
    %109 = vector.broadcast %0 : vector<1x192xf32> to vector<8x192xf32>
    %110 = arith.addf %108, %109 : vector<8x192xf32>
    %111 = vector.extract_strided_slice %110 {offsets = [0, 0], sizes = [8, 32], strides = [1, 1]} : vector<8x192xf32> to vector<8x32xf32>
    %112 = vector.extract_strided_slice %110 {offsets = [0, 96], sizes = [8, 32], strides = [1, 1]} : vector<8x192xf32> to vector<8x32xf32>
    %113 = arith.addf %111, %112 : vector<8x32xf32>
    %114 = arith.negf %113 : vector<8x32xf32>
    %115 = math.exp %114 : vector<8x32xf32>
    %cst_43 = arith.constant 1.000000e+00 : f32
    %116 = vector.broadcast %cst_43 : f32 to vector<8x32xf32>
    %117 = arith.addf %116, %115 : vector<8x32xf32>
    %118 = arith.divf %116, %117 : vector<8x32xf32>
    %119 = vector.extract_strided_slice %110 {offsets = [0, 32], sizes = [8, 32], strides = [1, 1]} : vector<8x192xf32> to vector<8x32xf32>
    %120 = vector.extract_strided_slice %110 {offsets = [0, 128], sizes = [8, 32], strides = [1, 1]} : vector<8x192xf32> to vector<8x32xf32>
    %121 = arith.addf %119, %120 : vector<8x32xf32>
    %122 = arith.negf %121 : vector<8x32xf32>
    %123 = math.exp %122 : vector<8x32xf32>
    %cst_44 = arith.constant 1.000000e+00 : f32
    %124 = vector.broadcast %cst_44 : f32 to vector<8x32xf32>
    %125 = arith.addf %124, %123 : vector<8x32xf32>
    %126 = arith.divf %124, %125 : vector<8x32xf32>
    %127 = vector.extract_strided_slice %110 {offsets = [0, 64], sizes = [8, 32], strides = [1, 1]} : vector<8x192xf32> to vector<8x32xf32>
    %128 = vector.extract_strided_slice %110 {offsets = [0, 160], sizes = [8, 32], strides = [1, 1]} : vector<8x192xf32> to vector<8x32xf32>
    %129 = arith.mulf %118, %128 : vector<8x32xf32>
    %130 = arith.addf %127, %129 : vector<8x32xf32>
    %131 = math.tanh %130 : vector<8x32xf32>
    %cst_45 = arith.constant 1.000000e+00 : f32
    %132 = vector.broadcast %cst_45 : f32 to vector<8x32xf32>
    %133 = arith.subf %132, %126 : vector<8x32xf32>
    %134 = arith.mulf %133, %131 : vector<8x32xf32>
    %135 = arith.mulf %126, %40 : vector<8x32xf32>
    %136 = arith.addf %134, %135 : vector<8x32xf32>
    %c0_46 = arith.constant 0 : index
    %c0_47 = arith.constant 0 : index
    %c0_48 = arith.constant 0 : index
    %137 = vector.load %arg7[%c0_46, %c0_47, %c0_48] : memref<8x8x32xf32, #tpu.memory_space<vmem>>, vector<8x8x32xf32>
    %138 = vector.shape_cast %136 : vector<8x32xf32> to vector<8x1x32xf32>
    %139 = vector.broadcast %138 : vector<8x1x32xf32> to vector<8x8x32xf32>
    %140 = arith.mulf %139, %137 : vector<8x8x32xf32>
    %cst_49 = arith.constant dense<0.000000e+00> : vector<8x8xf32>
    %141 = vector.multi_reduction <add>, %140, %cst_49 [2] : vector<8x8x32xf32> to vector<8x8xf32>
    %cst_50 = arith.constant dense<0xFF800000> : vector<8xf32>
    %142 = vector.multi_reduction <maximumf>, %141, %cst_50 [1] : vector<8x8xf32> to vector<8xf32>
    %143 = vector.shape_cast %142 : vector<8xf32> to vector<8x1xf32>
    %144 = vector.broadcast %143 : vector<8x1xf32> to vector<8x8xf32>
    %145 = arith.subf %141, %144 : vector<8x8xf32>
    %146 = math.exp %145 : vector<8x8xf32>
    %cst_51 = arith.constant dense<0.000000e+00> : vector<8xf32>
    %147 = vector.multi_reduction <add>, %146, %cst_51 [1] : vector<8x8xf32> to vector<8xf32>
    %148 = vector.shape_cast %147 : vector<8xf32> to vector<8x1xf32>
    %149 = vector.broadcast %148 : vector<8x1xf32> to vector<8x8xf32>
    %150 = arith.divf %146, %149 : vector<8x8xf32>
    %151 = arith.index_cast %c1_i32 : i32 to index
    %c0_52 = arith.constant 0 : index
    %c0_53 = arith.constant 0 : index
    %152 = vector.load %arg11[%151, %c0_52, %c0_53] : memref<8x8x8xf32, #tpu.memory_space<vmem>>, vector<1x8x8xf32>
    %153 = vector.shape_cast %152 : vector<1x8x8xf32> to vector<8x8xf32>
    %154 = vector.shape_cast %150 : vector<8x8xf32> to vector<1x8x8xf32>
    tpu.vector_store %arg11[%151, %c0_52, %c0_53], %154 {strides = array<i32>} : memref<8x8x8xf32, #tpu.memory_space<vmem>>, vector<1x8x8xf32>,
    %155 = vector.shape_cast %150 : vector<8x8xf32> to vector<8x8x1xf32>
    %156 = vector.broadcast %155 : vector<8x8x1xf32> to vector<8x8x32xf32>
    %157 = arith.mulf %156, %137 : vector<8x8x32xf32>
    %cst_54 = arith.constant dense<0.000000e+00> : vector<8x32xf32>
    %158 = vector.multi_reduction <add>, %157, %cst_54 [1] : vector<8x8x32xf32> to vector<8x32xf32>
    %159 = arith.truncf %158 : vector<8x32xf32> to vector<8x32xbf16>
    %160 = arith.truncf %136 : vector<8x32xf32> to vector<8x32xbf16>
    %161 = tpu.concatenate %159, %160 in 1 : vector<8x32xbf16>, vector<8x32xbf16> -> vector<8x64xbf16>
    %c0_55 = arith.constant 0 : index
    %c0_56 = arith.constant 0 : index
    %162 = vector.load %arg3[%c0_55, %c0_56] : memref<64x32xbf16, #tpu.memory_space<vmem>>, vector<64x32xbf16>
    %cst_57 = arith.constant dense<0.000000e+00> : vector<8x32xf32>
    %163 = tpu.matmul %161, %162, %cst_57 {dimension_numbers = #tpu.dot_dimension_numbers<[1], [0], [0], [1], [0, 0, 1, 1], [], []>} : vector<8x64xbf16>, vector<64x32xbf16>, vector<8x32xf32> -> vector<8x32xf32>
    %164 = vector.broadcast %1 : vector<1x32xf32> to vector<8x32xf32>
    %165 = arith.addf %163, %164 : vector<8x32xf32>
    %166 = math.tanh %165 : vector<8x32xf32>
    %167 = arith.truncf %166 : vector<8x32xf32> to vector<8x32xbf16>
    %c0_58 = arith.constant 0 : index
    %c0_59 = arith.constant 0 : index
    %168 = vector.load %arg5[%c0_58, %c0_59] : memref<32x128xbf16, #tpu.memory_space<vmem>>, vector<32x128xbf16>
    %cst_60 = arith.constant dense<0.000000e+00> : vector<8x128xf32>
    %169 = tpu.matmul %167, %168, %cst_60 {dimension_numbers = #tpu.dot_dimension_numbers<[1], [0], [0], [1], [0, 0, 1, 1], [], []>} : vector<8x32xbf16>, vector<32x128xbf16>, vector<8x128xf32> -> vector<8x128xf32>
    %170 = vector.broadcast %2 : vector<1x128xf32> to vector<8x128xf32>
    %171 = arith.addf %169, %170 : vector<8x128xf32>
    %cst_61 = arith.constant dense<0xFF800000> : vector<8xf32>
    %172 = vector.multi_reduction <maximumf>, %171, %cst_61 [1] : vector<8x128xf32> to vector<8xf32>
    %173 = vector.shape_cast %172 : vector<8xf32> to vector<8x1xf32>
    %174 = vector.broadcast %173 : vector<8x1xf32> to vector<8x128xf32>
    %175 = arith.subf %171, %174 : vector<8x128xf32>
    %176 = math.exp %175 : vector<8x128xf32>
    %cst_62 = arith.constant dense<0.000000e+00> : vector<8xf32>
    %177 = vector.multi_reduction <add>, %176, %cst_62 [1] : vector<8x128xf32> to vector<8xf32>
    %178 = vector.shape_cast %177 : vector<8xf32> to vector<8x1xf32>
    %179 = math.log %178 : vector<8x1xf32>
    %180 = arith.addf %179, %173 : vector<8x1xf32>
    %181 = vector.broadcast %180 : vector<8x1xf32> to vector<8x128xf32>
    %182 = arith.subf %171, %181 : vector<8x128xf32>
    %183 = arith.index_cast %c1_i32 : i32 to index
    %c0_63 = arith.constant 0 : index
    %c0_64 = arith.constant 0 : index
    %184 = vector.load %arg10[%183, %c0_63, %c0_64] : memref<8x8x128xf32, #tpu.memory_space<vmem>>, vector<1x8x128xf32>
    %185 = vector.shape_cast %184 : vector<1x8x128xf32> to vector<8x128xf32>
    %186 = vector.shape_cast %182 : vector<8x128xf32> to vector<1x8x128xf32>
    tpu.vector_store %arg10[%183, %c0_63, %c0_64], %186 {strides = array<i32>} : memref<8x8x128xf32, #tpu.memory_space<vmem>>, vector<1x8x128xf32>,
    %187 = vector.broadcast %173 : vector<8x1xf32> to vector<8x128xf32>
    %188 = arith.cmpf oeq, %171, %187 : vector<8x128xf32>
    %c128_i32_65 = arith.constant 128 : i32
    %189 = vector.broadcast %c128_i32_65 : i32 to vector<8x128xi32>
    %190 = arith.select %188, %3, %189 : vector<8x128xi1>, vector<8x128xi32>
    %cst_66 = arith.constant dense<2147483647> : vector<8xi32>
    %191 = vector.multi_reduction <minsi>, %190, %cst_66 [1] : vector<8x128xi32> to vector<8xi32>
    %192 = vector.shape_cast %191 : vector<8xi32> to vector<8x1xi32>
    %193 = vector.broadcast %192 : vector<8x1xi32> to vector<8x128xi32>
    %194 = arith.cmpi eq, %3, %193 : vector<8x128xi32>
    %195 = arith.extui %194 : vector<8x128xi1> to vector<8x128xi32>
    %196 = arith.sitofp %195 : vector<8x128xi32> to vector<8x128xf32>
    %197 = arith.truncf %196 : vector<8x128xf32> to vector<8x128xbf16>
    %c2_i32 = arith.constant 2 : i32
    %c0_67 = arith.constant 0 : index
    %c0_68 = arith.constant 0 : index
    %198 = vector.load %arg0[%c0_67, %c0_68] : memref<128x32xbf16, #tpu.memory_space<vmem>>, vector<128x32xbf16>
    %cst_69 = arith.constant dense<0.000000e+00> : vector<8x32xf32>
    %199 = tpu.matmul %197, %198, %cst_69 {dimension_numbers = #tpu.dot_dimension_numbers<[1], [0], [0], [1], [0, 0, 1, 1], [], []>} : vector<8x128xbf16>, vector<128x32xbf16>, vector<8x32xf32> -> vector<8x32xf32>
    %200 = arith.truncf %199 : vector<8x32xf32> to vector<8x32xbf16>
    %201 = arith.truncf %136 : vector<8x32xf32> to vector<8x32xbf16>
    %202 = tpu.concatenate %200, %201 in 1 : vector<8x32xbf16>, vector<8x32xbf16> -> vector<8x64xbf16>
    %c0_70 = arith.constant 0 : index
    %c0_71 = arith.constant 0 : index
    %203 = vector.load %arg1[%c0_70, %c0_71] : memref<64x192xbf16, #tpu.memory_space<vmem>>, vector<64x192xbf16>
    %cst_72 = arith.constant dense<0.000000e+00> : vector<8x192xf32>
    %204 = tpu.matmul %202, %203, %cst_72 {dimension_numbers = #tpu.dot_dimension_numbers<[1], [0], [0], [1], [0, 0, 1, 1], [], []>} : vector<8x64xbf16>, vector<64x192xbf16>, vector<8x192xf32> -> vector<8x192xf32>
    %205 = vector.broadcast %0 : vector<1x192xf32> to vector<8x192xf32>
    %206 = arith.addf %204, %205 : vector<8x192xf32>
    %207 = vector.extract_strided_slice %206 {offsets = [0, 0], sizes = [8, 32], strides = [1, 1]} : vector<8x192xf32> to vector<8x32xf32>
    %208 = vector.extract_strided_slice %206 {offsets = [0, 96], sizes = [8, 32], strides = [1, 1]} : vector<8x192xf32> to vector<8x32xf32>
    %209 = arith.addf %207, %208 : vector<8x32xf32>
    %210 = arith.negf %209 : vector<8x32xf32>
    %211 = math.exp %210 : vector<8x32xf32>
    %cst_73 = arith.constant 1.000000e+00 : f32
    %212 = vector.broadcast %cst_73 : f32 to vector<8x32xf32>
    %213 = arith.addf %212, %211 : vector<8x32xf32>
    %214 = arith.divf %212, %213 : vector<8x32xf32>
    %215 = vector.extract_strided_slice %206 {offsets = [0, 32], sizes = [8, 32], strides = [1, 1]} : vector<8x192xf32> to vector<8x32xf32>
    %216 = vector.extract_strided_slice %206 {offsets = [0, 128], sizes = [8, 32], strides = [1, 1]} : vector<8x192xf32> to vector<8x32xf32>
    %217 = arith.addf %215, %216 : vector<8x32xf32>
    %218 = arith.negf %217 : vector<8x32xf32>
    %219 = math.exp %218 : vector<8x32xf32>
    %cst_74 = arith.constant 1.000000e+00 : f32
    %220 = vector.broadcast %cst_74 : f32 to vector<8x32xf32>
    %221 = arith.addf %220, %219 : vector<8x32xf32>
    %222 = arith.divf %220, %221 : vector<8x32xf32>
    %223 = vector.extract_strided_slice %206 {offsets = [0, 64], sizes = [8, 32], strides = [1, 1]} : vector<8x192xf32> to vector<8x32xf32>
    %224 = vector.extract_strided_slice %206 {offsets = [0, 160], sizes = [8, 32], strides = [1, 1]} : vector<8x192xf32> to vector<8x32xf32>
    %225 = arith.mulf %214, %224 : vector<8x32xf32>
    %226 = arith.addf %223, %225 : vector<8x32xf32>
    %227 = math.tanh %226 : vector<8x32xf32>
    %cst_75 = arith.constant 1.000000e+00 : f32
    %228 = vector.broadcast %cst_75 : f32 to vector<8x32xf32>
    %229 = arith.subf %228, %222 : vector<8x32xf32>
    %230 = arith.mulf %229, %227 : vector<8x32xf32>
    %231 = arith.mulf %222, %136 : vector<8x32xf32>
    %232 = arith.addf %230, %231 : vector<8x32xf32>
    %c0_76 = arith.constant 0 : index
    %c0_77 = arith.constant 0 : index
    %c0_78 = arith.constant 0 : index
    %233 = vector.load %arg7[%c0_76, %c0_77, %c0_78] : memref<8x8x32xf32, #tpu.memory_space<vmem>>, vector<8x8x32xf32>
    %234 = vector.shape_cast %232 : vector<8x32xf32> to vector<8x1x32xf32>
    %235 = vector.broadcast %234 : vector<8x1x32xf32> to vector<8x8x32xf32>
    %236 = arith.mulf %235, %233 : vector<8x8x32xf32>
    %cst_79 = arith.constant dense<0.000000e+00> : vector<8x8xf32>
    %237 = vector.multi_reduction <add>, %236, %cst_79 [2] : vector<8x8x32xf32> to vector<8x8xf32>
    %cst_80 = arith.constant dense<0xFF800000> : vector<8xf32>
    %238 = vector.multi_reduction <maximumf>, %237, %cst_80 [1] : vector<8x8xf32> to vector<8xf32>
    %239 = vector.shape_cast %238 : vector<8xf32> to vector<8x1xf32>
    %240 = vector.broadcast %239 : vector<8x1xf32> to vector<8x8xf32>
    %241 = arith.subf %237, %240 : vector<8x8xf32>
    %242 = math.exp %241 : vector<8x8xf32>
    %cst_81 = arith.constant dense<0.000000e+00> : vector<8xf32>
    %243 = vector.multi_reduction <add>, %242, %cst_81 [1] : vector<8x8xf32> to vector<8xf32>
    %244 = vector.shape_cast %243 : vector<8xf32> to vector<8x1xf32>
    %245 = vector.broadcast %244 : vector<8x1xf32> to vector<8x8xf32>
    %246 = arith.divf %242, %245 : vector<8x8xf32>
    %247 = arith.index_cast %c2_i32 : i32 to index
    %c0_82 = arith.constant 0 : index
    %c0_83 = arith.constant 0 : index
    %248 = vector.load %arg11[%247, %c0_82, %c0_83] : memref<8x8x8xf32, #tpu.memory_space<vmem>>, vector<1x8x8xf32>
    %249 = vector.shape_cast %248 : vector<1x8x8xf32> to vector<8x8xf32>
    %250 = vector.shape_cast %246 : vector<8x8xf32> to vector<1x8x8xf32>
    tpu.vector_store %arg11[%247, %c0_82, %c0_83], %250 {strides = array<i32>} : memref<8x8x8xf32, #tpu.memory_space<vmem>>, vector<1x8x8xf32>,
    %251 = vector.shape_cast %246 : vector<8x8xf32> to vector<8x8x1xf32>
    %252 = vector.broadcast %251 : vector<8x8x1xf32> to vector<8x8x32xf32>
    %253 = arith.mulf %252, %233 : vector<8x8x32xf32>
    %cst_84 = arith.constant dense<0.000000e+00> : vector<8x32xf32>
    %254 = vector.multi_reduction <add>, %253, %cst_84 [1] : vector<8x8x32xf32> to vector<8x32xf32>
    %255 = arith.truncf %254 : vector<8x32xf32> to vector<8x32xbf16>
    %256 = arith.truncf %232 : vector<8x32xf32> to vector<8x32xbf16>
    %257 = tpu.concatenate %255, %256 in 1 : vector<8x32xbf16>, vector<8x32xbf16> -> vector<8x64xbf16>
    %c0_85 = arith.constant 0 : index
    %c0_86 = arith.constant 0 : index
    %258 = vector.load %arg3[%c0_85, %c0_86] : memref<64x32xbf16, #tpu.memory_space<vmem>>, vector<64x32xbf16>
    %cst_87 = arith.constant dense<0.000000e+00> : vector<8x32xf32>
    %259 = tpu.matmul %257, %258, %cst_87 {dimension_numbers = #tpu.dot_dimension_numbers<[1], [0], [0], [1], [0, 0, 1, 1], [], []>} : vector<8x64xbf16>, vector<64x32xbf16>, vector<8x32xf32> -> vector<8x32xf32>
    %260 = vector.broadcast %1 : vector<1x32xf32> to vector<8x32xf32>
    %261 = arith.addf %259, %260 : vector<8x32xf32>
    %262 = math.tanh %261 : vector<8x32xf32>
    %263 = arith.truncf %262 : vector<8x32xf32> to vector<8x32xbf16>
    %c0_88 = arith.constant 0 : index
    %c0_89 = arith.constant 0 : index
    %264 = vector.load %arg5[%c0_88, %c0_89] : memref<32x128xbf16, #tpu.memory_space<vmem>>, vector<32x128xbf16>
    %cst_90 = arith.constant dense<0.000000e+00> : vector<8x128xf32>
    %265 = tpu.matmul %263, %264, %cst_90 {dimension_numbers = #tpu.dot_dimension_numbers<[1], [0], [0], [1], [0, 0, 1, 1], [], []>} : vector<8x32xbf16>, vector<32x128xbf16>, vector<8x128xf32> -> vector<8x128xf32>
    %266 = vector.broadcast %2 : vector<1x128xf32> to vector<8x128xf32>
    %267 = arith.addf %265, %266 : vector<8x128xf32>
    %cst_91 = arith.constant dense<0xFF800000> : vector<8xf32>
    %268 = vector.multi_reduction <maximumf>, %267, %cst_91 [1] : vector<8x128xf32> to vector<8xf32>
    %269 = vector.shape_cast %268 : vector<8xf32> to vector<8x1xf32>
    %270 = vector.broadcast %269 : vector<8x1xf32> to vector<8x128xf32>
    %271 = arith.subf %267, %270 : vector<8x128xf32>
    %272 = math.exp %271 : vector<8x128xf32>
    %cst_92 = arith.constant dense<0.000000e+00> : vector<8xf32>
    %273 = vector.multi_reduction <add>, %272, %cst_92 [1] : vector<8x128xf32> to vector<8xf32>
    %274 = vector.shape_cast %273 : vector<8xf32> to vector<8x1xf32>
    %275 = math.log %274 : vector<8x1xf32>
    %276 = arith.addf %275, %269 : vector<8x1xf32>
    %277 = vector.broadcast %276 : vector<8x1xf32> to vector<8x128xf32>
    %278 = arith.subf %267, %277 : vector<8x128xf32>
    %279 = arith.index_cast %c2_i32 : i32 to index
    %c0_93 = arith.constant 0 : index
    %c0_94 = arith.constant 0 : index
    %280 = vector.load %arg10[%279, %c0_93, %c0_94] : memref<8x8x128xf32, #tpu.memory_space<vmem>>, vector<1x8x128xf32>
    %281 = vector.shape_cast %280 : vector<1x8x128xf32> to vector<8x128xf32>
    %282 = vector.shape_cast %278 : vector<8x128xf32> to vector<1x8x128xf32>
    tpu.vector_store %arg10[%279, %c0_93, %c0_94], %282 {strides = array<i32>} : memref<8x8x128xf32, #tpu.memory_space<vmem>>, vector<1x8x128xf32>,
    %283 = vector.broadcast %269 : vector<8x1xf32> to vector<8x128xf32>
    %284 = arith.cmpf oeq, %267, %283 : vector<8x128xf32>
    %c128_i32_95 = arith.constant 128 : i32
    %285 = vector.broadcast %c128_i32_95 : i32 to vector<8x128xi32>
    %286 = arith.select %284, %3, %285 : vector<8x128xi1>, vector<8x128xi32>
    %cst_96 = arith.constant dense<2147483647> : vector<8xi32>
    %287 = vector.multi_reduction <minsi>, %286, %cst_96 [1] : vector<8x128xi32> to vector<8xi32>
    %288 = vector.shape_cast %287 : vector<8xi32> to vector<8x1xi32>
    %289 = vector.broadcast %288 : vector<8x1xi32> to vector<8x128xi32>
    %290 = arith.cmpi eq, %3, %289 : vector<8x128xi32>
    %291 = arith.extui %290 : vector<8x128xi1> to vector<8x128xi32>
    %292 = arith.sitofp %291 : vector<8x128xi32> to vector<8x128xf32>
    %293 = arith.truncf %292 : vector<8x128xf32> to vector<8x128xbf16>
    %c3_i32 = arith.constant 3 : i32
    %c0_97 = arith.constant 0 : index
    %c0_98 = arith.constant 0 : index
    %294 = vector.load %arg0[%c0_97, %c0_98] : memref<128x32xbf16, #tpu.memory_space<vmem>>, vector<128x32xbf16>
    %cst_99 = arith.constant dense<0.000000e+00> : vector<8x32xf32>
    %295 = tpu.matmul %293, %294, %cst_99 {dimension_numbers = #tpu.dot_dimension_numbers<[1], [0], [0], [1], [0, 0, 1, 1], [], []>} : vector<8x128xbf16>, vector<128x32xbf16>, vector<8x32xf32> -> vector<8x32xf32>
    %296 = arith.truncf %295 : vector<8x32xf32> to vector<8x32xbf16>
    %297 = arith.truncf %232 : vector<8x32xf32> to vector<8x32xbf16>
    %298 = tpu.concatenate %296, %297 in 1 : vector<8x32xbf16>, vector<8x32xbf16> -> vector<8x64xbf16>
    %c0_100 = arith.constant 0 : index
    %c0_101 = arith.constant 0 : index
    %299 = vector.load %arg1[%c0_100, %c0_101] : memref<64x192xbf16, #tpu.memory_space<vmem>>, vector<64x192xbf16>
    %cst_102 = arith.constant dense<0.000000e+00> : vector<8x192xf32>
    %300 = tpu.matmul %298, %299, %cst_102 {dimension_numbers = #tpu.dot_dimension_numbers<[1], [0], [0], [1], [0, 0, 1, 1], [], []>} : vector<8x64xbf16>, vector<64x192xbf16>, vector<8x192xf32> -> vector<8x192xf32>
    %301 = vector.broadcast %0 : vector<1x192xf32> to vector<8x192xf32>
    %302 = arith.addf %300, %301 : vector<8x192xf32>
    %303 = vector.extract_strided_slice %302 {offsets = [0, 0], sizes = [8, 32], strides = [1, 1]} : vector<8x192xf32> to vector<8x32xf32>
    %304 = vector.extract_strided_slice %302 {offsets = [0, 96], sizes = [8, 32], strides = [1, 1]} : vector<8x192xf32> to vector<8x32xf32>
    %305 = arith.addf %303, %304 : vector<8x32xf32>
    %306 = arith.negf %305 : vector<8x32xf32>
    %307 = math.exp %306 : vector<8x32xf32>
    %cst_103 = arith.constant 1.000000e+00 : f32
    %308 = vector.broadcast %cst_103 : f32 to vector<8x32xf32>
    %309 = arith.addf %308, %307 : vector<8x32xf32>
    %310 = arith.divf %308, %309 : vector<8x32xf32>
    %311 = vector.extract_strided_slice %302 {offsets = [0, 32], sizes = [8, 32], strides = [1, 1]} : vector<8x192xf32> to vector<8x32xf32>
    %312 = vector.extract_strided_slice %302 {offsets = [0, 128], sizes = [8, 32], strides = [1, 1]} : vector<8x192xf32> to vector<8x32xf32>
    %313 = arith.addf %311, %312 : vector<8x32xf32>
    %314 = arith.negf %313 : vector<8x32xf32>
    %315 = math.exp %314 : vector<8x32xf32>
    %cst_104 = arith.constant 1.000000e+00 : f32
    %316 = vector.broadcast %cst_104 : f32 to vector<8x32xf32>
    %317 = arith.addf %316, %315 : vector<8x32xf32>
    %318 = arith.divf %316, %317 : vector<8x32xf32>
    %319 = vector.extract_strided_slice %302 {offsets = [0, 64], sizes = [8, 32], strides = [1, 1]} : vector<8x192xf32> to vector<8x32xf32>
    %320 = vector.extract_strided_slice %302 {offsets = [0, 160], sizes = [8, 32], strides = [1, 1]} : vector<8x192xf32> to vector<8x32xf32>
    %321 = arith.mulf %310, %320 : vector<8x32xf32>
    %322 = arith.addf %319, %321 : vector<8x32xf32>
    %323 = math.tanh %322 : vector<8x32xf32>
    %cst_105 = arith.constant 1.000000e+00 : f32
    %324 = vector.broadcast %cst_105 : f32 to vector<8x32xf32>
    %325 = arith.subf %324, %318 : vector<8x32xf32>
    %326 = arith.mulf %325, %323 : vector<8x32xf32>
    %327 = arith.mulf %318, %232 : vector<8x32xf32>
    %328 = arith.addf %326, %327 : vector<8x32xf32>
    %c0_106 = arith.constant 0 : index
    %c0_107 = arith.constant 0 : index
    %c0_108 = arith.constant 0 : index
    %329 = vector.load %arg7[%c0_106, %c0_107, %c0_108] : memref<8x8x32xf32, #tpu.memory_space<vmem>>, vector<8x8x32xf32>
    %330 = vector.shape_cast %328 : vector<8x32xf32> to vector<8x1x32xf32>
    %331 = vector.broadcast %330 : vector<8x1x32xf32> to vector<8x8x32xf32>
    %332 = arith.mulf %331, %329 : vector<8x8x32xf32>
    %cst_109 = arith.constant dense<0.000000e+00> : vector<8x8xf32>
    %333 = vector.multi_reduction <add>, %332, %cst_109 [2] : vector<8x8x32xf32> to vector<8x8xf32>
    %cst_110 = arith.constant dense<0xFF800000> : vector<8xf32>
    %334 = vector.multi_reduction <maximumf>, %333, %cst_110 [1] : vector<8x8xf32> to vector<8xf32>
    %335 = vector.shape_cast %334 : vector<8xf32> to vector<8x1xf32>
    %336 = vector.broadcast %335 : vector<8x1xf32> to vector<8x8xf32>
    %337 = arith.subf %333, %336 : vector<8x8xf32>
    %338 = math.exp %337 : vector<8x8xf32>
    %cst_111 = arith.constant dense<0.000000e+00> : vector<8xf32>
    %339 = vector.multi_reduction <add>, %338, %cst_111 [1] : vector<8x8xf32> to vector<8xf32>
    %340 = vector.shape_cast %339 : vector<8xf32> to vector<8x1xf32>
    %341 = vector.broadcast %340 : vector<8x1xf32> to vector<8x8xf32>
    %342 = arith.divf %338, %341 : vector<8x8xf32>
    %343 = arith.index_cast %c3_i32 : i32 to index
    %c0_112 = arith.constant 0 : index
    %c0_113 = arith.constant 0 : index
    %344 = vector.load %arg11[%343, %c0_112, %c0_113] : memref<8x8x8xf32, #tpu.memory_space<vmem>>, vector<1x8x8xf32>
    %345 = vector.shape_cast %344 : vector<1x8x8xf32> to vector<8x8xf32>
    %346 = vector.shape_cast %342 : vector<8x8xf32> to vector<1x8x8xf32>
    tpu.vector_store %arg11[%343, %c0_112, %c0_113], %346 {strides = array<i32>} : memref<8x8x8xf32, #tpu.memory_space<vmem>>, vector<1x8x8xf32>,
    %347 = vector.shape_cast %342 : vector<8x8xf32> to vector<8x8x1xf32>
    %348 = vector.broadcast %347 : vector<8x8x1xf32> to vector<8x8x32xf32>
    %349 = arith.mulf %348, %329 : vector<8x8x32xf32>
    %cst_114 = arith.constant dense<0.000000e+00> : vector<8x32xf32>
    %350 = vector.multi_reduction <add>, %349, %cst_114 [1] : vector<8x8x32xf32> to vector<8x32xf32>
    %351 = arith.truncf %350 : vector<8x32xf32> to vector<8x32xbf16>
    %352 = arith.truncf %328 : vector<8x32xf32> to vector<8x32xbf16>
    %353 = tpu.concatenate %351, %352 in 1 : vector<8x32xbf16>, vector<8x32xbf16> -> vector<8x64xbf16>
    %c0_115 = arith.constant 0 : index
    %c0_116 = arith.constant 0 : index
    %354 = vector.load %arg3[%c0_115, %c0_116] : memref<64x32xbf16, #tpu.memory_space<vmem>>, vector<64x32xbf16>
    %cst_117 = arith.constant dense<0.000000e+00> : vector<8x32xf32>
    %355 = tpu.matmul %353, %354, %cst_117 {dimension_numbers = #tpu.dot_dimension_numbers<[1], [0], [0], [1], [0, 0, 1, 1], [], []>} : vector<8x64xbf16>, vector<64x32xbf16>, vector<8x32xf32> -> vector<8x32xf32>
    %356 = vector.broadcast %1 : vector<1x32xf32> to vector<8x32xf32>
    %357 = arith.addf %355, %356 : vector<8x32xf32>
    %358 = math.tanh %357 : vector<8x32xf32>
    %359 = arith.truncf %358 : vector<8x32xf32> to vector<8x32xbf16>
    %c0_118 = arith.constant 0 : index
    %c0_119 = arith.constant 0 : index
    %360 = vector.load %arg5[%c0_118, %c0_119] : memref<32x128xbf16, #tpu.memory_space<vmem>>, vector<32x128xbf16>
    %cst_120 = arith.constant dense<0.000000e+00> : vector<8x128xf32>
    %361 = tpu.matmul %359, %360, %cst_120 {dimension_numbers = #tpu.dot_dimension_numbers<[1], [0], [0], [1], [0, 0, 1, 1], [], []>} : vector<8x32xbf16>, vector<32x128xbf16>, vector<8x128xf32> -> vector<8x128xf32>
    %362 = vector.broadcast %2 : vector<1x128xf32> to vector<8x128xf32>
    %363 = arith.addf %361, %362 : vector<8x128xf32>
    %cst_121 = arith.constant dense<0xFF800000> : vector<8xf32>
    %364 = vector.multi_reduction <maximumf>, %363, %cst_121 [1] : vector<8x128xf32> to vector<8xf32>
    %365 = vector.shape_cast %364 : vector<8xf32> to vector<8x1xf32>
    %366 = vector.broadcast %365 : vector<8x1xf32> to vector<8x128xf32>
    %367 = arith.subf %363, %366 : vector<8x128xf32>
    %368 = math.exp %367 : vector<8x128xf32>
    %cst_122 = arith.constant dense<0.000000e+00> : vector<8xf32>
    %369 = vector.multi_reduction <add>, %368, %cst_122 [1] : vector<8x128xf32> to vector<8xf32>
    %370 = vector.shape_cast %369 : vector<8xf32> to vector<8x1xf32>
    %371 = math.log %370 : vector<8x1xf32>
    %372 = arith.addf %371, %365 : vector<8x1xf32>
    %373 = vector.broadcast %372 : vector<8x1xf32> to vector<8x128xf32>
    %374 = arith.subf %363, %373 : vector<8x128xf32>
    %375 = arith.index_cast %c3_i32 : i32 to index
    %c0_123 = arith.constant 0 : index
    %c0_124 = arith.constant 0 : index
    %376 = vector.load %arg10[%375, %c0_123, %c0_124] : memref<8x8x128xf32, #tpu.memory_space<vmem>>, vector<1x8x128xf32>
    %377 = vector.shape_cast %376 : vector<1x8x128xf32> to vector<8x128xf32>
    %378 = vector.shape_cast %374 : vector<8x128xf32> to vector<1x8x128xf32>
    tpu.vector_store %arg10[%375, %c0_123, %c0_124], %378 {strides = array<i32>} : memref<8x8x128xf32, #tpu.memory_space<vmem>>, vector<1x8x128xf32>,
    %379 = vector.broadcast %365 : vector<8x1xf32> to vector<8x128xf32>
    %380 = arith.cmpf oeq, %363, %379 : vector<8x128xf32>
    %c128_i32_125 = arith.constant 128 : i32
    %381 = vector.broadcast %c128_i32_125 : i32 to vector<8x128xi32>
    %382 = arith.select %380, %3, %381 : vector<8x128xi1>, vector<8x128xi32>
    %cst_126 = arith.constant dense<2147483647> : vector<8xi32>
    %383 = vector.multi_reduction <minsi>, %382, %cst_126 [1] : vector<8x128xi32> to vector<8xi32>
    %384 = vector.shape_cast %383 : vector<8xi32> to vector<8x1xi32>
    %385 = vector.broadcast %384 : vector<8x1xi32> to vector<8x128xi32>
    %386 = arith.cmpi eq, %3, %385 : vector<8x128xi32>
    %387 = arith.extui %386 : vector<8x128xi1> to vector<8x128xi32>
    %388 = arith.sitofp %387 : vector<8x128xi32> to vector<8x128xf32>
    %389 = arith.truncf %388 : vector<8x128xf32> to vector<8x128xbf16>
    %c4_i32 = arith.constant 4 : i32
    %c0_127 = arith.constant 0 : index
    %c0_128 = arith.constant 0 : index
    %390 = vector.load %arg0[%c0_127, %c0_128] : memref<128x32xbf16, #tpu.memory_space<vmem>>, vector<128x32xbf16>
    %cst_129 = arith.constant dense<0.000000e+00> : vector<8x32xf32>
    %391 = tpu.matmul %389, %390, %cst_129 {dimension_numbers = #tpu.dot_dimension_numbers<[1], [0], [0], [1], [0, 0, 1, 1], [], []>} : vector<8x128xbf16>, vector<128x32xbf16>, vector<8x32xf32> -> vector<8x32xf32>
    %392 = arith.truncf %391 : vector<8x32xf32> to vector<8x32xbf16>
    %393 = arith.truncf %328 : vector<8x32xf32> to vector<8x32xbf16>
    %394 = tpu.concatenate %392, %393 in 1 : vector<8x32xbf16>, vector<8x32xbf16> -> vector<8x64xbf16>
    %c0_130 = arith.constant 0 : index
    %c0_131 = arith.constant 0 : index
    %395 = vector.load %arg1[%c0_130, %c0_131] : memref<64x192xbf16, #tpu.memory_space<vmem>>, vector<64x192xbf16>
    %cst_132 = arith.constant dense<0.000000e+00> : vector<8x192xf32>
    %396 = tpu.matmul %394, %395, %cst_132 {dimension_numbers = #tpu.dot_dimension_numbers<[1], [0], [0], [1], [0, 0, 1, 1], [], []>} : vector<8x64xbf16>, vector<64x192xbf16>, vector<8x192xf32> -> vector<8x192xf32>
    %397 = vector.broadcast %0 : vector<1x192xf32> to vector<8x192xf32>
    %398 = arith.addf %396, %397 : vector<8x192xf32>
    %399 = vector.extract_strided_slice %398 {offsets = [0, 0], sizes = [8, 32], strides = [1, 1]} : vector<8x192xf32> to vector<8x32xf32>
    %400 = vector.extract_strided_slice %398 {offsets = [0, 96], sizes = [8, 32], strides = [1, 1]} : vector<8x192xf32> to vector<8x32xf32>
    %401 = arith.addf %399, %400 : vector<8x32xf32>
    %402 = arith.negf %401 : vector<8x32xf32>
    %403 = math.exp %402 : vector<8x32xf32>
    %cst_133 = arith.constant 1.000000e+00 : f32
    %404 = vector.broadcast %cst_133 : f32 to vector<8x32xf32>
    %405 = arith.addf %404, %403 : vector<8x32xf32>
    %406 = arith.divf %404, %405 : vector<8x32xf32>
    %407 = vector.extract_strided_slice %398 {offsets = [0, 32], sizes = [8, 32], strides = [1, 1]} : vector<8x192xf32> to vector<8x32xf32>
    %408 = vector.extract_strided_slice %398 {offsets = [0, 128], sizes = [8, 32], strides = [1, 1]} : vector<8x192xf32> to vector<8x32xf32>
    %409 = arith.addf %407, %408 : vector<8x32xf32>
    %410 = arith.negf %409 : vector<8x32xf32>
    %411 = math.exp %410 : vector<8x32xf32>
    %cst_134 = arith.constant 1.000000e+00 : f32
    %412 = vector.broadcast %cst_134 : f32 to vector<8x32xf32>
    %413 = arith.addf %412, %411 : vector<8x32xf32>
    %414 = arith.divf %412, %413 : vector<8x32xf32>
    %415 = vector.extract_strided_slice %398 {offsets = [0, 64], sizes = [8, 32], strides = [1, 1]} : vector<8x192xf32> to vector<8x32xf32>
    %416 = vector.extract_strided_slice %398 {offsets = [0, 160], sizes = [8, 32], strides = [1, 1]} : vector<8x192xf32> to vector<8x32xf32>
    %417 = arith.mulf %406, %416 : vector<8x32xf32>
    %418 = arith.addf %415, %417 : vector<8x32xf32>
    %419 = math.tanh %418 : vector<8x32xf32>
    %cst_135 = arith.constant 1.000000e+00 : f32
    %420 = vector.broadcast %cst_135 : f32 to vector<8x32xf32>
    %421 = arith.subf %420, %414 : vector<8x32xf32>
    %422 = arith.mulf %421, %419 : vector<8x32xf32>
    %423 = arith.mulf %414, %328 : vector<8x32xf32>
    %424 = arith.addf %422, %423 : vector<8x32xf32>
    %c0_136 = arith.constant 0 : index
    %c0_137 = arith.constant 0 : index
    %c0_138 = arith.constant 0 : index
    %425 = vector.load %arg7[%c0_136, %c0_137, %c0_138] : memref<8x8x32xf32, #tpu.memory_space<vmem>>, vector<8x8x32xf32>
    %426 = vector.shape_cast %424 : vector<8x32xf32> to vector<8x1x32xf32>
    %427 = vector.broadcast %426 : vector<8x1x32xf32> to vector<8x8x32xf32>
    %428 = arith.mulf %427, %425 : vector<8x8x32xf32>
    %cst_139 = arith.constant dense<0.000000e+00> : vector<8x8xf32>
    %429 = vector.multi_reduction <add>, %428, %cst_139 [2] : vector<8x8x32xf32> to vector<8x8xf32>
    %cst_140 = arith.constant dense<0xFF800000> : vector<8xf32>
    %430 = vector.multi_reduction <maximumf>, %429, %cst_140 [1] : vector<8x8xf32> to vector<8xf32>
    %431 = vector.shape_cast %430 : vector<8xf32> to vector<8x1xf32>
    %432 = vector.broadcast %431 : vector<8x1xf32> to vector<8x8xf32>
    %433 = arith.subf %429, %432 : vector<8x8xf32>
    %434 = math.exp %433 : vector<8x8xf32>
    %cst_141 = arith.constant dense<0.000000e+00> : vector<8xf32>
    %435 = vector.multi_reduction <add>, %434, %cst_141 [1] : vector<8x8xf32> to vector<8xf32>
    %436 = vector.shape_cast %435 : vector<8xf32> to vector<8x1xf32>
    %437 = vector.broadcast %436 : vector<8x1xf32> to vector<8x8xf32>
    %438 = arith.divf %434, %437 : vector<8x8xf32>
    %439 = arith.index_cast %c4_i32 : i32 to index
    %c0_142 = arith.constant 0 : index
    %c0_143 = arith.constant 0 : index
    %440 = vector.load %arg11[%439, %c0_142, %c0_143] : memref<8x8x8xf32, #tpu.memory_space<vmem>>, vector<1x8x8xf32>
    %441 = vector.shape_cast %440 : vector<1x8x8xf32> to vector<8x8xf32>
    %442 = vector.shape_cast %438 : vector<8x8xf32> to vector<1x8x8xf32>
    tpu.vector_store %arg11[%439, %c0_142, %c0_143], %442 {strides = array<i32>} : memref<8x8x8xf32, #tpu.memory_space<vmem>>, vector<1x8x8xf32>,
    %443 = vector.shape_cast %438 : vector<8x8xf32> to vector<8x8x1xf32>
    %444 = vector.broadcast %443 : vector<8x8x1xf32> to vector<8x8x32xf32>
    %445 = arith.mulf %444, %425 : vector<8x8x32xf32>
    %cst_144 = arith.constant dense<0.000000e+00> : vector<8x32xf32>
    %446 = vector.multi_reduction <add>, %445, %cst_144 [1] : vector<8x8x32xf32> to vector<8x32xf32>
    %447 = arith.truncf %446 : vector<8x32xf32> to vector<8x32xbf16>
    %448 = arith.truncf %424 : vector<8x32xf32> to vector<8x32xbf16>
    %449 = tpu.concatenate %447, %448 in 1 : vector<8x32xbf16>, vector<8x32xbf16> -> vector<8x64xbf16>
    %c0_145 = arith.constant 0 : index
    %c0_146 = arith.constant 0 : index
    %450 = vector.load %arg3[%c0_145, %c0_146] : memref<64x32xbf16, #tpu.memory_space<vmem>>, vector<64x32xbf16>
    %cst_147 = arith.constant dense<0.000000e+00> : vector<8x32xf32>
    %451 = tpu.matmul %449, %450, %cst_147 {dimension_numbers = #tpu.dot_dimension_numbers<[1], [0], [0], [1], [0, 0, 1, 1], [], []>} : vector<8x64xbf16>, vector<64x32xbf16>, vector<8x32xf32> -> vector<8x32xf32>
    %452 = vector.broadcast %1 : vector<1x32xf32> to vector<8x32xf32>
    %453 = arith.addf %451, %452 : vector<8x32xf32>
    %454 = math.tanh %453 : vector<8x32xf32>
    %455 = arith.truncf %454 : vector<8x32xf32> to vector<8x32xbf16>
    %c0_148 = arith.constant 0 : index
    %c0_149 = arith.constant 0 : index
    %456 = vector.load %arg5[%c0_148, %c0_149] : memref<32x128xbf16, #tpu.memory_space<vmem>>, vector<32x128xbf16>
    %cst_150 = arith.constant dense<0.000000e+00> : vector<8x128xf32>
    %457 = tpu.matmul %455, %456, %cst_150 {dimension_numbers = #tpu.dot_dimension_numbers<[1], [0], [0], [1], [0, 0, 1, 1], [], []>} : vector<8x32xbf16>, vector<32x128xbf16>, vector<8x128xf32> -> vector<8x128xf32>
    %458 = vector.broadcast %2 : vector<1x128xf32> to vector<8x128xf32>
    %459 = arith.addf %457, %458 : vector<8x128xf32>
    %cst_151 = arith.constant dense<0xFF800000> : vector<8xf32>
    %460 = vector.multi_reduction <maximumf>, %459, %cst_151 [1] : vector<8x128xf32> to vector<8xf32>
    %461 = vector.shape_cast %460 : vector<8xf32> to vector<8x1xf32>
    %462 = vector.broadcast %461 : vector<8x1xf32> to vector<8x128xf32>
    %463 = arith.subf %459, %462 : vector<8x128xf32>
    %464 = math.exp %463 : vector<8x128xf32>
    %cst_152 = arith.constant dense<0.000000e+00> : vector<8xf32>
    %465 = vector.multi_reduction <add>, %464, %cst_152 [1] : vector<8x128xf32> to vector<8xf32>
    %466 = vector.shape_cast %465 : vector<8xf32> to vector<8x1xf32>
    %467 = math.log %466 : vector<8x1xf32>
    %468 = arith.addf %467, %461 : vector<8x1xf32>
    %469 = vector.broadcast %468 : vector<8x1xf32> to vector<8x128xf32>
    %470 = arith.subf %459, %469 : vector<8x128xf32>
    %471 = arith.index_cast %c4_i32 : i32 to index
    %c0_153 = arith.constant 0 : index
    %c0_154 = arith.constant 0 : index
    %472 = vector.load %arg10[%471, %c0_153, %c0_154] : memref<8x8x128xf32, #tpu.memory_space<vmem>>, vector<1x8x128xf32>
    %473 = vector.shape_cast %472 : vector<1x8x128xf32> to vector<8x128xf32>
    %474 = vector.shape_cast %470 : vector<8x128xf32> to vector<1x8x128xf32>
    tpu.vector_store %arg10[%471, %c0_153, %c0_154], %474 {strides = array<i32>} : memref<8x8x128xf32, #tpu.memory_space<vmem>>, vector<1x8x128xf32>,
    %475 = vector.broadcast %461 : vector<8x1xf32> to vector<8x128xf32>
    %476 = arith.cmpf oeq, %459, %475 : vector<8x128xf32>
    %c128_i32_155 = arith.constant 128 : i32
    %477 = vector.broadcast %c128_i32_155 : i32 to vector<8x128xi32>
    %478 = arith.select %476, %3, %477 : vector<8x128xi1>, vector<8x128xi32>
    %cst_156 = arith.constant dense<2147483647> : vector<8xi32>
    %479 = vector.multi_reduction <minsi>, %478, %cst_156 [1] : vector<8x128xi32> to vector<8xi32>
    %480 = vector.shape_cast %479 : vector<8xi32> to vector<8x1xi32>
    %481 = vector.broadcast %480 : vector<8x1xi32> to vector<8x128xi32>
    %482 = arith.cmpi eq, %3, %481 : vector<8x128xi32>
    %483 = arith.extui %482 : vector<8x128xi1> to vector<8x128xi32>
    %484 = arith.sitofp %483 : vector<8x128xi32> to vector<8x128xf32>
    %485 = arith.truncf %484 : vector<8x128xf32> to vector<8x128xbf16>
    %c5_i32 = arith.constant 5 : i32
    %c0_157 = arith.constant 0 : index
    %c0_158 = arith.constant 0 : index
    %486 = vector.load %arg0[%c0_157, %c0_158] : memref<128x32xbf16, #tpu.memory_space<vmem>>, vector<128x32xbf16>
    %cst_159 = arith.constant dense<0.000000e+00> : vector<8x32xf32>
    %487 = tpu.matmul %485, %486, %cst_159 {dimension_numbers = #tpu.dot_dimension_numbers<[1], [0], [0], [1], [0, 0, 1, 1], [], []>} : vector<8x128xbf16>, vector<128x32xbf16>, vector<8x32xf32> -> vector<8x32xf32>
    %488 = arith.truncf %487 : vector<8x32xf32> to vector<8x32xbf16>
    %489 = arith.truncf %424 : vector<8x32xf32> to vector<8x32xbf16>
    %490 = tpu.concatenate %488, %489 in 1 : vector<8x32xbf16>, vector<8x32xbf16> -> vector<8x64xbf16>
    %c0_160 = arith.constant 0 : index
    %c0_161 = arith.constant 0 : index
    %491 = vector.load %arg1[%c0_160, %c0_161] : memref<64x192xbf16, #tpu.memory_space<vmem>>, vector<64x192xbf16>
    %cst_162 = arith.constant dense<0.000000e+00> : vector<8x192xf32>
    %492 = tpu.matmul %490, %491, %cst_162 {dimension_numbers = #tpu.dot_dimension_numbers<[1], [0], [0], [1], [0, 0, 1, 1], [], []>} : vector<8x64xbf16>, vector<64x192xbf16>, vector<8x192xf32> -> vector<8x192xf32>
    %493 = vector.broadcast %0 : vector<1x192xf32> to vector<8x192xf32>
    %494 = arith.addf %492, %493 : vector<8x192xf32>
    %495 = vector.extract_strided_slice %494 {offsets = [0, 0], sizes = [8, 32], strides = [1, 1]} : vector<8x192xf32> to vector<8x32xf32>
    %496 = vector.extract_strided_slice %494 {offsets = [0, 96], sizes = [8, 32], strides = [1, 1]} : vector<8x192xf32> to vector<8x32xf32>
    %497 = arith.addf %495, %496 : vector<8x32xf32>
    %498 = arith.negf %497 : vector<8x32xf32>
    %499 = math.exp %498 : vector<8x32xf32>
    %cst_163 = arith.constant 1.000000e+00 : f32
    %500 = vector.broadcast %cst_163 : f32 to vector<8x32xf32>
    %501 = arith.addf %500, %499 : vector<8x32xf32>
    %502 = arith.divf %500, %501 : vector<8x32xf32>
    %503 = vector.extract_strided_slice %494 {offsets = [0, 32], sizes = [8, 32], strides = [1, 1]} : vector<8x192xf32> to vector<8x32xf32>
    %504 = vector.extract_strided_slice %494 {offsets = [0, 128], sizes = [8, 32], strides = [1, 1]} : vector<8x192xf32> to vector<8x32xf32>
    %505 = arith.addf %503, %504 : vector<8x32xf32>
    %506 = arith.negf %505 : vector<8x32xf32>
    %507 = math.exp %506 : vector<8x32xf32>
    %cst_164 = arith.constant 1.000000e+00 : f32
    %508 = vector.broadcast %cst_164 : f32 to vector<8x32xf32>
    %509 = arith.addf %508, %507 : vector<8x32xf32>
    %510 = arith.divf %508, %509 : vector<8x32xf32>
    %511 = vector.extract_strided_slice %494 {offsets = [0, 64], sizes = [8, 32], strides = [1, 1]} : vector<8x192xf32> to vector<8x32xf32>
    %512 = vector.extract_strided_slice %494 {offsets = [0, 160], sizes = [8, 32], strides = [1, 1]} : vector<8x192xf32> to vector<8x32xf32>
    %513 = arith.mulf %502, %512 : vector<8x32xf32>
    %514 = arith.addf %511, %513 : vector<8x32xf32>
    %515 = math.tanh %514 : vector<8x32xf32>
    %cst_165 = arith.constant 1.000000e+00 : f32
    %516 = vector.broadcast %cst_165 : f32 to vector<8x32xf32>
    %517 = arith.subf %516, %510 : vector<8x32xf32>
    %518 = arith.mulf %517, %515 : vector<8x32xf32>
    %519 = arith.mulf %510, %424 : vector<8x32xf32>
    %520 = arith.addf %518, %519 : vector<8x32xf32>
    %c0_166 = arith.constant 0 : index
    %c0_167 = arith.constant 0 : index
    %c0_168 = arith.constant 0 : index
    %521 = vector.load %arg7[%c0_166, %c0_167, %c0_168] : memref<8x8x32xf32, #tpu.memory_space<vmem>>, vector<8x8x32xf32>
    %522 = vector.shape_cast %520 : vector<8x32xf32> to vector<8x1x32xf32>
    %523 = vector.broadcast %522 : vector<8x1x32xf32> to vector<8x8x32xf32>
    %524 = arith.mulf %523, %521 : vector<8x8x32xf32>
    %cst_169 = arith.constant dense<0.000000e+00> : vector<8x8xf32>
    %525 = vector.multi_reduction <add>, %524, %cst_169 [2] : vector<8x8x32xf32> to vector<8x8xf32>
    %cst_170 = arith.constant dense<0xFF800000> : vector<8xf32>
    %526 = vector.multi_reduction <maximumf>, %525, %cst_170 [1] : vector<8x8xf32> to vector<8xf32>
    %527 = vector.shape_cast %526 : vector<8xf32> to vector<8x1xf32>
    %528 = vector.broadcast %527 : vector<8x1xf32> to vector<8x8xf32>
    %529 = arith.subf %525, %528 : vector<8x8xf32>
    %530 = math.exp %529 : vector<8x8xf32>
    %cst_171 = arith.constant dense<0.000000e+00> : vector<8xf32>
    %531 = vector.multi_reduction <add>, %530, %cst_171 [1] : vector<8x8xf32> to vector<8xf32>
    %532 = vector.shape_cast %531 : vector<8xf32> to vector<8x1xf32>
    %533 = vector.broadcast %532 : vector<8x1xf32> to vector<8x8xf32>
    %534 = arith.divf %530, %533 : vector<8x8xf32>
    %535 = arith.index_cast %c5_i32 : i32 to index
    %c0_172 = arith.constant 0 : index
    %c0_173 = arith.constant 0 : index
    %536 = vector.load %arg11[%535, %c0_172, %c0_173] : memref<8x8x8xf32, #tpu.memory_space<vmem>>, vector<1x8x8xf32>
    %537 = vector.shape_cast %536 : vector<1x8x8xf32> to vector<8x8xf32>
    %538 = vector.shape_cast %534 : vector<8x8xf32> to vector<1x8x8xf32>
    tpu.vector_store %arg11[%535, %c0_172, %c0_173], %538 {strides = array<i32>} : memref<8x8x8xf32, #tpu.memory_space<vmem>>, vector<1x8x8xf32>,
    %539 = vector.shape_cast %534 : vector<8x8xf32> to vector<8x8x1xf32>
    %540 = vector.broadcast %539 : vector<8x8x1xf32> to vector<8x8x32xf32>
    %541 = arith.mulf %540, %521 : vector<8x8x32xf32>
    %cst_174 = arith.constant dense<0.000000e+00> : vector<8x32xf32>
    %542 = vector.multi_reduction <add>, %541, %cst_174 [1] : vector<8x8x32xf32> to vector<8x32xf32>
    %543 = arith.truncf %542 : vector<8x32xf32> to vector<8x32xbf16>
    %544 = arith.truncf %520 : vector<8x32xf32> to vector<8x32xbf16>
    %545 = tpu.concatenate %543, %544 in 1 : vector<8x32xbf16>, vector<8x32xbf16> -> vector<8x64xbf16>
    %c0_175 = arith.constant 0 : index
    %c0_176 = arith.constant 0 : index
    %546 = vector.load %arg3[%c0_175, %c0_176] : memref<64x32xbf16, #tpu.memory_space<vmem>>, vector<64x32xbf16>
    %cst_177 = arith.constant dense<0.000000e+00> : vector<8x32xf32>
    %547 = tpu.matmul %545, %546, %cst_177 {dimension_numbers = #tpu.dot_dimension_numbers<[1], [0], [0], [1], [0, 0, 1, 1], [], []>} : vector<8x64xbf16>, vector<64x32xbf16>, vector<8x32xf32> -> vector<8x32xf32>
    %548 = vector.broadcast %1 : vector<1x32xf32> to vector<8x32xf32>
    %549 = arith.addf %547, %548 : vector<8x32xf32>
    %550 = math.tanh %549 : vector<8x32xf32>
    %551 = arith.truncf %550 : vector<8x32xf32> to vector<8x32xbf16>
    %c0_178 = arith.constant 0 : index
    %c0_179 = arith.constant 0 : index
    %552 = vector.load %arg5[%c0_178, %c0_179] : memref<32x128xbf16, #tpu.memory_space<vmem>>, vector<32x128xbf16>
    %cst_180 = arith.constant dense<0.000000e+00> : vector<8x128xf32>
    %553 = tpu.matmul %551, %552, %cst_180 {dimension_numbers = #tpu.dot_dimension_numbers<[1], [0], [0], [1], [0, 0, 1, 1], [], []>} : vector<8x32xbf16>, vector<32x128xbf16>, vector<8x128xf32> -> vector<8x128xf32>
    %554 = vector.broadcast %2 : vector<1x128xf32> to vector<8x128xf32>
    %555 = arith.addf %553, %554 : vector<8x128xf32>
    %cst_181 = arith.constant dense<0xFF800000> : vector<8xf32>
    %556 = vector.multi_reduction <maximumf>, %555, %cst_181 [1] : vector<8x128xf32> to vector<8xf32>
    %557 = vector.shape_cast %556 : vector<8xf32> to vector<8x1xf32>
    %558 = vector.broadcast %557 : vector<8x1xf32> to vector<8x128xf32>
    %559 = arith.subf %555, %558 : vector<8x128xf32>
    %560 = math.exp %559 : vector<8x128xf32>
    %cst_182 = arith.constant dense<0.000000e+00> : vector<8xf32>
    %561 = vector.multi_reduction <add>, %560, %cst_182 [1] : vector<8x128xf32> to vector<8xf32>
    %562 = vector.shape_cast %561 : vector<8xf32> to vector<8x1xf32>
    %563 = math.log %562 : vector<8x1xf32>
    %564 = arith.addf %563, %557 : vector<8x1xf32>
    %565 = vector.broadcast %564 : vector<8x1xf32> to vector<8x128xf32>
    %566 = arith.subf %555, %565 : vector<8x128xf32>
    %567 = arith.index_cast %c5_i32 : i32 to index
    %c0_183 = arith.constant 0 : index
    %c0_184 = arith.constant 0 : index
    %568 = vector.load %arg10[%567, %c0_183, %c0_184] : memref<8x8x128xf32, #tpu.memory_space<vmem>>, vector<1x8x128xf32>
    %569 = vector.shape_cast %568 : vector<1x8x128xf32> to vector<8x128xf32>
    %570 = vector.shape_cast %566 : vector<8x128xf32> to vector<1x8x128xf32>
    tpu.vector_store %arg10[%567, %c0_183, %c0_184], %570 {strides = array<i32>} : memref<8x8x128xf32, #tpu.memory_space<vmem>>, vector<1x8x128xf32>,
    %571 = vector.broadcast %557 : vector<8x1xf32> to vector<8x128xf32>
    %572 = arith.cmpf oeq, %555, %571 : vector<8x128xf32>
    %c128_i32_185 = arith.constant 128 : i32
    %573 = vector.broadcast %c128_i32_185 : i32 to vector<8x128xi32>
    %574 = arith.select %572, %3, %573 : vector<8x128xi1>, vector<8x128xi32>
    %cst_186 = arith.constant dense<2147483647> : vector<8xi32>
    %575 = vector.multi_reduction <minsi>, %574, %cst_186 [1] : vector<8x128xi32> to vector<8xi32>
    %576 = vector.shape_cast %575 : vector<8xi32> to vector<8x1xi32>
    %577 = vector.broadcast %576 : vector<8x1xi32> to vector<8x128xi32>
    %578 = arith.cmpi eq, %3, %577 : vector<8x128xi32>
    %579 = arith.extui %578 : vector<8x128xi1> to vector<8x128xi32>
    %580 = arith.sitofp %579 : vector<8x128xi32> to vector<8x128xf32>
    %581 = arith.truncf %580 : vector<8x128xf32> to vector<8x128xbf16>
    %c6_i32 = arith.constant 6 : i32
    %c0_187 = arith.constant 0 : index
    %c0_188 = arith.constant 0 : index
    %582 = vector.load %arg0[%c0_187, %c0_188] : memref<128x32xbf16, #tpu.memory_space<vmem>>, vector<128x32xbf16>
    %cst_189 = arith.constant dense<0.000000e+00> : vector<8x32xf32>
    %583 = tpu.matmul %581, %582, %cst_189 {dimension_numbers = #tpu.dot_dimension_numbers<[1], [0], [0], [1], [0, 0, 1, 1], [], []>} : vector<8x128xbf16>, vector<128x32xbf16>, vector<8x32xf32> -> vector<8x32xf32>
    %584 = arith.truncf %583 : vector<8x32xf32> to vector<8x32xbf16>
    %585 = arith.truncf %520 : vector<8x32xf32> to vector<8x32xbf16>
    %586 = tpu.concatenate %584, %585 in 1 : vector<8x32xbf16>, vector<8x32xbf16> -> vector<8x64xbf16>
    %c0_190 = arith.constant 0 : index
    %c0_191 = arith.constant 0 : index
    %587 = vector.load %arg1[%c0_190, %c0_191] : memref<64x192xbf16, #tpu.memory_space<vmem>>, vector<64x192xbf16>
    %cst_192 = arith.constant dense<0.000000e+00> : vector<8x192xf32>
    %588 = tpu.matmul %586, %587, %cst_192 {dimension_numbers = #tpu.dot_dimension_numbers<[1], [0], [0], [1], [0, 0, 1, 1], [], []>} : vector<8x64xbf16>, vector<64x192xbf16>, vector<8x192xf32> -> vector<8x192xf32>
    %589 = vector.broadcast %0 : vector<1x192xf32> to vector<8x192xf32>
    %590 = arith.addf %588, %589 : vector<8x192xf32>
    %591 = vector.extract_strided_slice %590 {offsets = [0, 0], sizes = [8, 32], strides = [1, 1]} : vector<8x192xf32> to vector<8x32xf32>
    %592 = vector.extract_strided_slice %590 {offsets = [0, 96], sizes = [8, 32], strides = [1, 1]} : vector<8x192xf32> to vector<8x32xf32>
    %593 = arith.addf %591, %592 : vector<8x32xf32>
    %594 = arith.negf %593 : vector<8x32xf32>
    %595 = math.exp %594 : vector<8x32xf32>
    %cst_193 = arith.constant 1.000000e+00 : f32
    %596 = vector.broadcast %cst_193 : f32 to vector<8x32xf32>
    %597 = arith.addf %596, %595 : vector<8x32xf32>
    %598 = arith.divf %596, %597 : vector<8x32xf32>
    %599 = vector.extract_strided_slice %590 {offsets = [0, 32], sizes = [8, 32], strides = [1, 1]} : vector<8x192xf32> to vector<8x32xf32>
    %600 = vector.extract_strided_slice %590 {offsets = [0, 128], sizes = [8, 32], strides = [1, 1]} : vector<8x192xf32> to vector<8x32xf32>
    %601 = arith.addf %599, %600 : vector<8x32xf32>
    %602 = arith.negf %601 : vector<8x32xf32>
    %603 = math.exp %602 : vector<8x32xf32>
    %cst_194 = arith.constant 1.000000e+00 : f32
    %604 = vector.broadcast %cst_194 : f32 to vector<8x32xf32>
    %605 = arith.addf %604, %603 : vector<8x32xf32>
    %606 = arith.divf %604, %605 : vector<8x32xf32>
    %607 = vector.extract_strided_slice %590 {offsets = [0, 64], sizes = [8, 32], strides = [1, 1]} : vector<8x192xf32> to vector<8x32xf32>
    %608 = vector.extract_strided_slice %590 {offsets = [0, 160], sizes = [8, 32], strides = [1, 1]} : vector<8x192xf32> to vector<8x32xf32>
    %609 = arith.mulf %598, %608 : vector<8x32xf32>
    %610 = arith.addf %607, %609 : vector<8x32xf32>
    %611 = math.tanh %610 : vector<8x32xf32>
    %cst_195 = arith.constant 1.000000e+00 : f32
    %612 = vector.broadcast %cst_195 : f32 to vector<8x32xf32>
    %613 = arith.subf %612, %606 : vector<8x32xf32>
    %614 = arith.mulf %613, %611 : vector<8x32xf32>
    %615 = arith.mulf %606, %520 : vector<8x32xf32>
    %616 = arith.addf %614, %615 : vector<8x32xf32>
    %c0_196 = arith.constant 0 : index
    %c0_197 = arith.constant 0 : index
    %c0_198 = arith.constant 0 : index
    %617 = vector.load %arg7[%c0_196, %c0_197, %c0_198] : memref<8x8x32xf32, #tpu.memory_space<vmem>>, vector<8x8x32xf32>
    %618 = vector.shape_cast %616 : vector<8x32xf32> to vector<8x1x32xf32>
    %619 = vector.broadcast %618 : vector<8x1x32xf32> to vector<8x8x32xf32>
    %620 = arith.mulf %619, %617 : vector<8x8x32xf32>
    %cst_199 = arith.constant dense<0.000000e+00> : vector<8x8xf32>
    %621 = vector.multi_reduction <add>, %620, %cst_199 [2] : vector<8x8x32xf32> to vector<8x8xf32>
    %cst_200 = arith.constant dense<0xFF800000> : vector<8xf32>
    %622 = vector.multi_reduction <maximumf>, %621, %cst_200 [1] : vector<8x8xf32> to vector<8xf32>
    %623 = vector.shape_cast %622 : vector<8xf32> to vector<8x1xf32>
    %624 = vector.broadcast %623 : vector<8x1xf32> to vector<8x8xf32>
    %625 = arith.subf %621, %624 : vector<8x8xf32>
    %626 = math.exp %625 : vector<8x8xf32>
    %cst_201 = arith.constant dense<0.000000e+00> : vector<8xf32>
    %627 = vector.multi_reduction <add>, %626, %cst_201 [1] : vector<8x8xf32> to vector<8xf32>
    %628 = vector.shape_cast %627 : vector<8xf32> to vector<8x1xf32>
    %629 = vector.broadcast %628 : vector<8x1xf32> to vector<8x8xf32>
    %630 = arith.divf %626, %629 : vector<8x8xf32>
    %631 = arith.index_cast %c6_i32 : i32 to index
    %c0_202 = arith.constant 0 : index
    %c0_203 = arith.constant 0 : index
    %632 = vector.load %arg11[%631, %c0_202, %c0_203] : memref<8x8x8xf32, #tpu.memory_space<vmem>>, vector<1x8x8xf32>
    %633 = vector.shape_cast %632 : vector<1x8x8xf32> to vector<8x8xf32>
    %634 = vector.shape_cast %630 : vector<8x8xf32> to vector<1x8x8xf32>
    tpu.vector_store %arg11[%631, %c0_202, %c0_203], %634 {strides = array<i32>} : memref<8x8x8xf32, #tpu.memory_space<vmem>>, vector<1x8x8xf32>,
    %635 = vector.shape_cast %630 : vector<8x8xf32> to vector<8x8x1xf32>
    %636 = vector.broadcast %635 : vector<8x8x1xf32> to vector<8x8x32xf32>
    %637 = arith.mulf %636, %617 : vector<8x8x32xf32>
    %cst_204 = arith.constant dense<0.000000e+00> : vector<8x32xf32>
    %638 = vector.multi_reduction <add>, %637, %cst_204 [1] : vector<8x8x32xf32> to vector<8x32xf32>
    %639 = arith.truncf %638 : vector<8x32xf32> to vector<8x32xbf16>
    %640 = arith.truncf %616 : vector<8x32xf32> to vector<8x32xbf16>
    %641 = tpu.concatenate %639, %640 in 1 : vector<8x32xbf16>, vector<8x32xbf16> -> vector<8x64xbf16>
    %c0_205 = arith.constant 0 : index
    %c0_206 = arith.constant 0 : index
    %642 = vector.load %arg3[%c0_205, %c0_206] : memref<64x32xbf16, #tpu.memory_space<vmem>>, vector<64x32xbf16>
    %cst_207 = arith.constant dense<0.000000e+00> : vector<8x32xf32>
    %643 = tpu.matmul %641, %642, %cst_207 {dimension_numbers = #tpu.dot_dimension_numbers<[1], [0], [0], [1], [0, 0, 1, 1], [], []>} : vector<8x64xbf16>, vector<64x32xbf16>, vector<8x32xf32> -> vector<8x32xf32>
    %644 = vector.broadcast %1 : vector<1x32xf32> to vector<8x32xf32>
    %645 = arith.addf %643, %644 : vector<8x32xf32>
    %646 = math.tanh %645 : vector<8x32xf32>
    %647 = arith.truncf %646 : vector<8x32xf32> to vector<8x32xbf16>
    %c0_208 = arith.constant 0 : index
    %c0_209 = arith.constant 0 : index
    %648 = vector.load %arg5[%c0_208, %c0_209] : memref<32x128xbf16, #tpu.memory_space<vmem>>, vector<32x128xbf16>
    %cst_210 = arith.constant dense<0.000000e+00> : vector<8x128xf32>
    %649 = tpu.matmul %647, %648, %cst_210 {dimension_numbers = #tpu.dot_dimension_numbers<[1], [0], [0], [1], [0, 0, 1, 1], [], []>} : vector<8x32xbf16>, vector<32x128xbf16>, vector<8x128xf32> -> vector<8x128xf32>
    %650 = vector.broadcast %2 : vector<1x128xf32> to vector<8x128xf32>
    %651 = arith.addf %649, %650 : vector<8x128xf32>
    %cst_211 = arith.constant dense<0xFF800000> : vector<8xf32>
    %652 = vector.multi_reduction <maximumf>, %651, %cst_211 [1] : vector<8x128xf32> to vector<8xf32>
    %653 = vector.shape_cast %652 : vector<8xf32> to vector<8x1xf32>
    %654 = vector.broadcast %653 : vector<8x1xf32> to vector<8x128xf32>
    %655 = arith.subf %651, %654 : vector<8x128xf32>
    %656 = math.exp %655 : vector<8x128xf32>
    %cst_212 = arith.constant dense<0.000000e+00> : vector<8xf32>
    %657 = vector.multi_reduction <add>, %656, %cst_212 [1] : vector<8x128xf32> to vector<8xf32>
    %658 = vector.shape_cast %657 : vector<8xf32> to vector<8x1xf32>
    %659 = math.log %658 : vector<8x1xf32>
    %660 = arith.addf %659, %653 : vector<8x1xf32>
    %661 = vector.broadcast %660 : vector<8x1xf32> to vector<8x128xf32>
    %662 = arith.subf %651, %661 : vector<8x128xf32>
    %663 = arith.index_cast %c6_i32 : i32 to index
    %c0_213 = arith.constant 0 : index
    %c0_214 = arith.constant 0 : index
    %664 = vector.load %arg10[%663, %c0_213, %c0_214] : memref<8x8x128xf32, #tpu.memory_space<vmem>>, vector<1x8x128xf32>
    %665 = vector.shape_cast %664 : vector<1x8x128xf32> to vector<8x128xf32>
    %666 = vector.shape_cast %662 : vector<8x128xf32> to vector<1x8x128xf32>
    tpu.vector_store %arg10[%663, %c0_213, %c0_214], %666 {strides = array<i32>} : memref<8x8x128xf32, #tpu.memory_space<vmem>>, vector<1x8x128xf32>,
    %667 = vector.broadcast %653 : vector<8x1xf32> to vector<8x128xf32>
    %668 = arith.cmpf oeq, %651, %667 : vector<8x128xf32>
    %c128_i32_215 = arith.constant 128 : i32
    %669 = vector.broadcast %c128_i32_215 : i32 to vector<8x128xi32>
    %670 = arith.select %668, %3, %669 : vector<8x128xi1>, vector<8x128xi32>
    %cst_216 = arith.constant dense<2147483647> : vector<8xi32>
    %671 = vector.multi_reduction <minsi>, %670, %cst_216 [1] : vector<8x128xi32> to vector<8xi32>
    %672 = vector.shape_cast %671 : vector<8xi32> to vector<8x1xi32>
    %673 = vector.broadcast %672 : vector<8x1xi32> to vector<8x128xi32>
    %674 = arith.cmpi eq, %3, %673 : vector<8x128xi32>
    %675 = arith.extui %674 : vector<8x128xi1> to vector<8x128xi32>
    %676 = arith.sitofp %675 : vector<8x128xi32> to vector<8x128xf32>
    %677 = arith.truncf %676 : vector<8x128xf32> to vector<8x128xbf16>
    %c7_i32 = arith.constant 7 : i32
    %c0_217 = arith.constant 0 : index
    %c0_218 = arith.constant 0 : index
    %678 = vector.load %arg0[%c0_217, %c0_218] : memref<128x32xbf16, #tpu.memory_space<vmem>>, vector<128x32xbf16>
    %cst_219 = arith.constant dense<0.000000e+00> : vector<8x32xf32>
    %679 = tpu.matmul %677, %678, %cst_219 {dimension_numbers = #tpu.dot_dimension_numbers<[1], [0], [0], [1], [0, 0, 1, 1], [], []>} : vector<8x128xbf16>, vector<128x32xbf16>, vector<8x32xf32> -> vector<8x32xf32>
    %680 = arith.truncf %679 : vector<8x32xf32> to vector<8x32xbf16>
    %681 = arith.truncf %616 : vector<8x32xf32> to vector<8x32xbf16>
    %682 = tpu.concatenate %680, %681 in 1 : vector<8x32xbf16>, vector<8x32xbf16> -> vector<8x64xbf16>
    %c0_220 = arith.constant 0 : index
    %c0_221 = arith.constant 0 : index
    %683 = vector.load %arg1[%c0_220, %c0_221] : memref<64x192xbf16, #tpu.memory_space<vmem>>, vector<64x192xbf16>
    %cst_222 = arith.constant dense<0.000000e+00> : vector<8x192xf32>
    %684 = tpu.matmul %682, %683, %cst_222 {dimension_numbers = #tpu.dot_dimension_numbers<[1], [0], [0], [1], [0, 0, 1, 1], [], []>} : vector<8x64xbf16>, vector<64x192xbf16>, vector<8x192xf32> -> vector<8x192xf32>
    %685 = vector.broadcast %0 : vector<1x192xf32> to vector<8x192xf32>
    %686 = arith.addf %684, %685 : vector<8x192xf32>
    %687 = vector.extract_strided_slice %686 {offsets = [0, 0], sizes = [8, 32], strides = [1, 1]} : vector<8x192xf32> to vector<8x32xf32>
    %688 = vector.extract_strided_slice %686 {offsets = [0, 96], sizes = [8, 32], strides = [1, 1]} : vector<8x192xf32> to vector<8x32xf32>
    %689 = arith.addf %687, %688 : vector<8x32xf32>
    %690 = arith.negf %689 : vector<8x32xf32>
    %691 = math.exp %690 : vector<8x32xf32>
    %cst_223 = arith.constant 1.000000e+00 : f32
    %692 = vector.broadcast %cst_223 : f32 to vector<8x32xf32>
    %693 = arith.addf %692, %691 : vector<8x32xf32>
    %694 = arith.divf %692, %693 : vector<8x32xf32>
    %695 = vector.extract_strided_slice %686 {offsets = [0, 32], sizes = [8, 32], strides = [1, 1]} : vector<8x192xf32> to vector<8x32xf32>
    %696 = vector.extract_strided_slice %686 {offsets = [0, 128], sizes = [8, 32], strides = [1, 1]} : vector<8x192xf32> to vector<8x32xf32>
    %697 = arith.addf %695, %696 : vector<8x32xf32>
    %698 = arith.negf %697 : vector<8x32xf32>
    %699 = math.exp %698 : vector<8x32xf32>
    %cst_224 = arith.constant 1.000000e+00 : f32
    %700 = vector.broadcast %cst_224 : f32 to vector<8x32xf32>
    %701 = arith.addf %700, %699 : vector<8x32xf32>
    %702 = arith.divf %700, %701 : vector<8x32xf32>
    %703 = vector.extract_strided_slice %686 {offsets = [0, 64], sizes = [8, 32], strides = [1, 1]} : vector<8x192xf32> to vector<8x32xf32>
    %704 = vector.extract_strided_slice %686 {offsets = [0, 160], sizes = [8, 32], strides = [1, 1]} : vector<8x192xf32> to vector<8x32xf32>
    %705 = arith.mulf %694, %704 : vector<8x32xf32>
    %706 = arith.addf %703, %705 : vector<8x32xf32>
    %707 = math.tanh %706 : vector<8x32xf32>
    %cst_225 = arith.constant 1.000000e+00 : f32
    %708 = vector.broadcast %cst_225 : f32 to vector<8x32xf32>
    %709 = arith.subf %708, %702 : vector<8x32xf32>
    %710 = arith.mulf %709, %707 : vector<8x32xf32>
    %711 = arith.mulf %702, %616 : vector<8x32xf32>
    %712 = arith.addf %710, %711 : vector<8x32xf32>
    %c0_226 = arith.constant 0 : index
    %c0_227 = arith.constant 0 : index
    %c0_228 = arith.constant 0 : index
    %713 = vector.load %arg7[%c0_226, %c0_227, %c0_228] : memref<8x8x32xf32, #tpu.memory_space<vmem>>, vector<8x8x32xf32>
    %714 = vector.shape_cast %712 : vector<8x32xf32> to vector<8x1x32xf32>
    %715 = vector.broadcast %714 : vector<8x1x32xf32> to vector<8x8x32xf32>
    %716 = arith.mulf %715, %713 : vector<8x8x32xf32>
    %cst_229 = arith.constant dense<0.000000e+00> : vector<8x8xf32>
    %717 = vector.multi_reduction <add>, %716, %cst_229 [2] : vector<8x8x32xf32> to vector<8x8xf32>
    %cst_230 = arith.constant dense<0xFF800000> : vector<8xf32>
    %718 = vector.multi_reduction <maximumf>, %717, %cst_230 [1] : vector<8x8xf32> to vector<8xf32>
    %719 = vector.shape_cast %718 : vector<8xf32> to vector<8x1xf32>
    %720 = vector.broadcast %719 : vector<8x1xf32> to vector<8x8xf32>
    %721 = arith.subf %717, %720 : vector<8x8xf32>
    %722 = math.exp %721 : vector<8x8xf32>
    %cst_231 = arith.constant dense<0.000000e+00> : vector<8xf32>
    %723 = vector.multi_reduction <add>, %722, %cst_231 [1] : vector<8x8xf32> to vector<8xf32>
    %724 = vector.shape_cast %723 : vector<8xf32> to vector<8x1xf32>
    %725 = vector.broadcast %724 : vector<8x1xf32> to vector<8x8xf32>
    %726 = arith.divf %722, %725 : vector<8x8xf32>
    %727 = arith.index_cast %c7_i32 : i32 to index
    %c0_232 = arith.constant 0 : index
    %c0_233 = arith.constant 0 : index
    %728 = vector.load %arg11[%727, %c0_232, %c0_233] : memref<8x8x8xf32, #tpu.memory_space<vmem>>, vector<1x8x8xf32>
    %729 = vector.shape_cast %728 : vector<1x8x8xf32> to vector<8x8xf32>
    %730 = vector.shape_cast %726 : vector<8x8xf32> to vector<1x8x8xf32>
    tpu.vector_store %arg11[%727, %c0_232, %c0_233], %730 {strides = array<i32>} : memref<8x8x8xf32, #tpu.memory_space<vmem>>, vector<1x8x8xf32>,
    %731 = vector.shape_cast %726 : vector<8x8xf32> to vector<8x8x1xf32>
    %732 = vector.broadcast %731 : vector<8x8x1xf32> to vector<8x8x32xf32>
    %733 = arith.mulf %732, %713 : vector<8x8x32xf32>
    %cst_234 = arith.constant dense<0.000000e+00> : vector<8x32xf32>
    %734 = vector.multi_reduction <add>, %733, %cst_234 [1] : vector<8x8x32xf32> to vector<8x32xf32>
    %735 = arith.truncf %734 : vector<8x32xf32> to vector<8x32xbf16>
    %736 = arith.truncf %712 : vector<8x32xf32> to vector<8x32xbf16>
    %737 = tpu.concatenate %735, %736 in 1 : vector<8x32xbf16>, vector<8x32xbf16> -> vector<8x64xbf16>
    %c0_235 = arith.constant 0 : index
    %c0_236 = arith.constant 0 : index
    %738 = vector.load %arg3[%c0_235, %c0_236] : memref<64x32xbf16, #tpu.memory_space<vmem>>, vector<64x32xbf16>
    %cst_237 = arith.constant dense<0.000000e+00> : vector<8x32xf32>
    %739 = tpu.matmul %737, %738, %cst_237 {dimension_numbers = #tpu.dot_dimension_numbers<[1], [0], [0], [1], [0, 0, 1, 1], [], []>} : vector<8x64xbf16>, vector<64x32xbf16>, vector<8x32xf32> -> vector<8x32xf32>
    %740 = vector.broadcast %1 : vector<1x32xf32> to vector<8x32xf32>
    %741 = arith.addf %739, %740 : vector<8x32xf32>
    %742 = math.tanh %741 : vector<8x32xf32>
    %743 = arith.truncf %742 : vector<8x32xf32> to vector<8x32xbf16>
    %c0_238 = arith.constant 0 : index
    %c0_239 = arith.constant 0 : index
    %744 = vector.load %arg5[%c0_238, %c0_239] : memref<32x128xbf16, #tpu.memory_space<vmem>>, vector<32x128xbf16>
    %cst_240 = arith.constant dense<0.000000e+00> : vector<8x128xf32>
    %745 = tpu.matmul %743, %744, %cst_240 {dimension_numbers = #tpu.dot_dimension_numbers<[1], [0], [0], [1], [0, 0, 1, 1], [], []>} : vector<8x32xbf16>, vector<32x128xbf16>, vector<8x128xf32> -> vector<8x128xf32>
    %746 = vector.broadcast %2 : vector<1x128xf32> to vector<8x128xf32>
    %747 = arith.addf %745, %746 : vector<8x128xf32>
    %cst_241 = arith.constant dense<0xFF800000> : vector<8xf32>
    %748 = vector.multi_reduction <maximumf>, %747, %cst_241 [1] : vector<8x128xf32> to vector<8xf32>
    %749 = vector.shape_cast %748 : vector<8xf32> to vector<8x1xf32>
    %750 = vector.broadcast %749 : vector<8x1xf32> to vector<8x128xf32>
    %751 = arith.subf %747, %750 : vector<8x128xf32>
    %752 = math.exp %751 : vector<8x128xf32>
    %cst_242 = arith.constant dense<0.000000e+00> : vector<8xf32>
    %753 = vector.multi_reduction <add>, %752, %cst_242 [1] : vector<8x128xf32> to vector<8xf32>
    %754 = vector.shape_cast %753 : vector<8xf32> to vector<8x1xf32>
    %755 = math.log %754 : vector<8x1xf32>
    %756 = arith.addf %755, %749 : vector<8x1xf32>
    %757 = vector.broadcast %756 : vector<8x1xf32> to vector<8x128xf32>
    %758 = arith.subf %747, %757 : vector<8x128xf32>
    %759 = arith.index_cast %c7_i32 : i32 to index
    %c0_243 = arith.constant 0 : index
    %c0_244 = arith.constant 0 : index
    %760 = vector.load %arg10[%759, %c0_243, %c0_244] : memref<8x8x128xf32, #tpu.memory_space<vmem>>, vector<1x8x128xf32>
    %761 = vector.shape_cast %760 : vector<1x8x128xf32> to vector<8x128xf32>
    %762 = vector.shape_cast %758 : vector<8x128xf32> to vector<1x8x128xf32>
    tpu.vector_store %arg10[%759, %c0_243, %c0_244], %762 {strides = array<i32>} : memref<8x8x128xf32, #tpu.memory_space<vmem>>, vector<1x8x128xf32>,
    %763 = vector.broadcast %749 : vector<8x1xf32> to vector<8x128xf32>
    %764 = arith.cmpf oeq, %747, %763 : vector<8x128xf32>
    %c128_i32_245 = arith.constant 128 : i32
    %765 = vector.broadcast %c128_i32_245 : i32 to vector<8x128xi32>
    %766 = arith.select %764, %3, %765 : vector<8x128xi1>, vector<8x128xi32>
    %cst_246 = arith.constant dense<2147483647> : vector<8xi32>
    %767 = vector.multi_reduction <minsi>, %766, %cst_246 [1] : vector<8x128xi32> to vector<8xi32>
    %768 = vector.shape_cast %767 : vector<8xi32> to vector<8x1xi32>
    %769 = vector.broadcast %768 : vector<8x1xi32> to vector<8x128xi32>
    %770 = arith.cmpi eq, %3, %769 : vector<8x128xi32>
    %771 = arith.extui %770 : vector<8x128xi1> to vector<8x128xi32>
    %772 = arith.sitofp %771 : vector<8x128xi32> to vector<8x128xf32>
    %773 = arith.truncf %772 : vector<8x128xf32> to vector<8x128xbf16>
    %c8_i32 = arith.constant 8 : i32
    %c0_247 = arith.constant 0 : index
    %c0_248 = arith.constant 0 : index
    %774 = vector.load %arg12[%c0_247, %c0_248] : memref<8x32xf32, #tpu.memory_space<vmem>>, vector<8x32xf32>
    tpu.vector_store %arg12[%c0_247, %c0_248], %712 {strides = array<i32>} : memref<8x32xf32, #tpu.memory_space<vmem>>, vector<8x32xf32>,
    return
  }
}

</mosaic_0001>

<llo_original>
// kernel: tpu_custom_call.1
$region0: #{tpu_custom_call.1}
  #allocation0 [shape = 'u32[]', space=smem, size = 0x4, offset = 0x4, fixed_abs, tag = 'smem constant byte address 0x4 - core index']
  #allocation1 [shape = 'u32[72,128]{1,0:T(1,128)}', space=vmem, size = 0x9000, scoped, tag = 'internal scratch']
  %s0 = inlined_call_operand.vmem [shape: bf16[128,32], index: 0, kind: input, shape index: {}]
  %s1 = inlined_call_operand.vmem [shape: bf16[64,192], index: 1, kind: input, shape index: {}]
  %s2 = inlined_call_operand.vmem [shape: f32[1,192], index: 2, kind: input, shape index: {}]
  %s3 = inlined_call_operand.vmem [shape: bf16[64,32], index: 3, kind: input, shape index: {}]
  %s4 = inlined_call_operand.vmem [shape: f32[1,32], index: 4, kind: input, shape index: {}]
  %s5 = inlined_call_operand.vmem [shape: bf16[32,128], index: 5, kind: input, shape index: {}]
  %s6 = inlined_call_operand.vmem [shape: f32[1,128], index: 6, kind: input, shape index: {}]
  %s7 = inlined_call_operand.hbm [shape: f32[8,8,32], index: 7, kind: input, shape index: {}]
  %s8 = inlined_call_operand.vmem [shape: f32[8,32], index: 8, kind: input, shape index: {}]
  %s9 = inlined_call_operand.vmem [shape: bf16[8,128], index: 9, kind: input, shape index: {}]
  %s10 = inlined_call_operand.hbm [shape: f32[8,8,128], index: 10, kind: output, shape index: {0}]
  %s11 = inlined_call_operand.hbm [shape: f32[8,8,8], index: 11, kind: output, shape index: {1}]
  %s12 = inlined_call_operand.hbm [shape: f32[8,32], index: 12, kind: output, shape index: {2}]
  %13 = xla_tuple %s10, %s11, %s12
  %s14 = sld [smem:[#allocation0]]
  $region70: #{tpu_custom_call.1} parent=0
    _
  %s16 = ssub.s32 1, %s14
  %s17 = scalar_select 0, %s16, %s14
  $region1: #{tpu_custom_call.1} parent=0
    #allocation2 [shape = 'u8[32768]{0}', space=vmem, size = 0x8000, scoped, tag = 'input window, operand 7, single buffered']
    #allocation3 [shape = 's32[1]{0}', space=sflag, size = 0x4, scoped, tag = 'scoped memory for tpu_custom_call.1']
    #allocation4 [shape = 's32[1]{0}', space=sflag, size = 0x4, scoped, tag = 'scoped memory for tpu_custom_call.1']
    #allocation5 [shape = 'u8[32768]{0}', space=vmem, size = 0x8000, scoped, tag = 'output window, operand 0, single buffered']
    #allocation6 [shape = 'u8[32768]{0}', space=vmem, size = 0x8000, scoped, tag = 'output window, operand 1, single buffered']
    #allocation7 [shape = 's32[1]{0}', space=sflag, size = 0x4, scoped, tag = 'scoped memory for tpu_custom_call.1']
    #allocation8 [shape = 'u8[4096]{0}', space=vmem, size = 0x1000, scoped, tag = 'output window, operand 2, single buffered']
    %18 = vsyncpa [#allocation3], 0
    %19 = vsyncpa [#allocation4], 0
    %20 = vsyncpa [#allocation7], 0
    // Predicated region
    $region2: #{tpu_custom_call.1} parent=1 // pred_check
      _
    $region3: #{tpu_custom_call.1} parent=1 // pred_check_branch
      %22 = sbr.rel (0) target = $region5
    $region4: #{tpu_custom_call.1} parent=1 // pred_region
      _
    $region5: #{tpu_custom_call.1} parent=1 // pred_fallthru
      _
    // Predicated region
    $region6: #{tpu_custom_call.1} parent=1 // pred_check
      _
    $region7: #{tpu_custom_call.1} parent=1 // pred_check_branch
      %24 = sbr.rel (0) target = $region9
    $region8: #{tpu_custom_call.1} parent=1 // pred_region
      _
    $region9: #{tpu_custom_call.1} parent=1 // pred_fallthru
      _
    // Predicated region
    $region10: #{tpu_custom_call.1} parent=1 // pred_check
      _
    $region11: #{tpu_custom_call.1} parent=1 // pred_check_branch
      %26 = sbr.rel (0) target = $region13
    $region12: #{tpu_custom_call.1} parent=1 // pred_region
      _
    $region13: #{tpu_custom_call.1} parent=1 // pred_fallthru
      _
    // Predicated region
    $region14: #{tpu_custom_call.1} parent=1 // pred_check
      _
    $region15: #{tpu_custom_call.1} parent=1 // pred_check_branch
      %28 = sbr.rel (0) target = $region17
    $region16: #{tpu_custom_call.1} parent=1 // pred_region
      _
    $region17: #{tpu_custom_call.1} parent=1 // pred_fallthru
      _
    // Predicated region
    $region18: #{tpu_custom_call.1} parent=1 // pred_check
      _
    $region19: #{tpu_custom_call.1} parent=1 // pred_check_branch
      %30 = sbr.rel (0) target = $region21
    $region20: #{tpu_custom_call.1} parent=1 // pred_region
      _
    $region21: #{tpu_custom_call.1} parent=1 // pred_fallthru
      _
    // Predicated region
    $region22: #{tpu_custom_call.1} parent=1 // pred_check
      _
    $region23: #{tpu_custom_call.1} parent=1 // pred_check_branch
      %32 = sbr.rel (0) target = $region25
    $region24: #{tpu_custom_call.1} parent=1 // pred_region
      _
    $region25: #{tpu_custom_call.1} parent=1 // pred_fallthru
      _
    // Predicated region
    $region26: #{tpu_custom_call.1} parent=1 // pred_check
      _
    $region27: #{tpu_custom_call.1} parent=1 // pred_check_branch
      %34 = sbr.rel (0) target = $region29
    $region28: #{tpu_custom_call.1} parent=1 // pred_region
      _
    $region29: #{tpu_custom_call.1} parent=1 // pred_fallthru
      _
    // Predicated region
    $region30: #{tpu_custom_call.1} parent=1 // pred_check
      _
    $region31: #{tpu_custom_call.1} parent=1 // pred_check_branch
      %36 = sbr.rel (0) target = $region33
    $region32: #{tpu_custom_call.1} parent=1 // pred_region
      %38 = vsyncadd [#allocation3], 0
      %s39 = sshll.u32 %s7, 4
      %s40 = int_to_ptr.hbm [resolvable:$true] %s39
      %s41 = sshll.u32 [#allocation2], 4
      %s42 = int_to_ptr.vmem [resolvable:$true] %s41
      %47 = dma.hbm_to_vmem [thread:$0]  %s40, 1024, %s42, [#allocation3], 128, 128, 8
    $region33: #{tpu_custom_call.1} parent=1 // pred_fallthru
      _
    // Predicated region
    $region34: #{tpu_custom_call.1} parent=1 // pred_check
      _
    $region35: #{tpu_custom_call.1} parent=1 // pred_check_branch
      %49 = sbr.rel (0) target = $region37
    $region36: #{tpu_custom_call.1} parent=1 // pred_region
      _
    $region37: #{tpu_custom_call.1} parent=1 // pred_fallthru
      _
    // Predicated region
    $region38: #{tpu_custom_call.1} parent=1 // pred_check
      _
    $region39: #{tpu_custom_call.1} parent=1 // pred_check_branch
      %51 = sbr.rel (0) target = $region41
    $region40: #{tpu_custom_call.1} parent=1 // pred_region
      _
    $region41: #{tpu_custom_call.1} parent=1 // pred_fallthru
      _
    // Predicated region
    $region42: #{tpu_custom_call.1} parent=1 // pred_check
      _
    $region43: #{tpu_custom_call.1} parent=1 // pred_check_branch
      %53 = sbr.rel (0) target = $region45
    $region44: #{tpu_custom_call.1} parent=1 // pred_region
      %55 = dma.done [#allocation3], 1024
    $region45: #{tpu_custom_call.1} parent=1 // pred_fallthru
      _
    %v57 = vld [vmem:[%s2] sm:$0x3]
    %v58 = vld [vmem:[%s4] sm:$0x1]
    %v59 = vld [vmem:[%s6] sm:$0x1]
    %v60 = vlaneseq
    %v61 = vand.u32 %v60, 127
    %v62 = vld [vmem:[%s8] sm:$0xff]
    %v63 = vld [vmem:[%s9] sm:$0xf]
    %v64 = vld [vmem:[%s0] sm:$0xf]
    %v65 = vld [vmem:[%s0 + $0x4] sm:$0xf]
    %v66 = vld [vmem:[%s0 + $0x8] sm:$0xf]
    %v67 = vld [vmem:[%s0 + $0xc] sm:$0xf]
    %v68 = vld [vmem:[%s0 + $0x10] sm:$0xf]
    %v69 = vld [vmem:[%s0 + $0x14] sm:$0xf]
    %v70 = vld [vmem:[%s0 + $0x18] sm:$0xf]
    %v71 = vld [vmem:[%s0 + $0x1c] sm:$0xf]
    %v72 = vld [vmem:[%s0 + $0x20] sm:$0xf]
    %v73 = vld [vmem:[%s0 + $0x24] sm:$0xf]
    %v74 = vld [vmem:[%s0 + $0x28] sm:$0xf]
    %v75 = vld [vmem:[%s0 + $0x2c] sm:$0xf]
    %v76 = vld [vmem:[%s0 + $0x30] sm:$0xf]
    %v77 = vld [vmem:[%s0 + $0x34] sm:$0xf]
    %v78 = vld [vmem:[%s0 + $0x38] sm:$0xf]
    %v79 = vld [vmem:[%s0 + $0x3c] sm:$0xf]
    %v96 = vunpack.c.l.b16 %v64
    %v97 = vunpack.c.l.b16 %v65
    %v98 = vunpack.c.l.b16 %v66
    %v99 = vunpack.c.l.b16 %v67
    %v100 = vunpack.c.l.b16 %v68
    %v101 = vunpack.c.l.b16 %v69
    %v102 = vunpack.c.l.b16 %v70
    %v103 = vunpack.c.l.b16 %v71
    %v104 = vunpack.c.l.b16 %v72
    %v105 = vunpack.c.l.b16 %v73
    %v106 = vunpack.c.l.b16 %v74
    %v107 = vunpack.c.l.b16 %v75
    %v108 = vunpack.c.l.b16 %v76
    %v109 = vunpack.c.l.b16 %v77
    %v110 = vunpack.c.l.b16 %v78
    %v111 = vunpack.c.l.b16 %v79
    %v112 = vpack.c.b16 %v97, %v96
    %v113 = vpack.c.b16 %v99, %v98
    %v114 = vpack.c.b16 %v101, %v100
    %v115 = vpack.c.b16 %v103, %v102
    %v116 = vpack.c.b16 %v105, %v104
    %v117 = vpack.c.b16 %v107, %v106
    %v118 = vpack.c.b16 %v109, %v108
    %v119 = vpack.c.b16 %v111, %v110
    %128 = vmatpush.bf16.msra.mxu0 %v119
    %129 = vmatpush.bf16.msra.mxu0 %v118
    %130 = vmatpush.bf16.msra.mxu0 %v117
    %131 = vmatpush.bf16.msra.mxu0 %v116
    %132 = vmatpush.bf16.msra.mxu0 %v115
    %133 = vmatpush.bf16.msra.mxu0 %v114
    %134 = vmatpush.bf16.msra.mxu0 %v113
    %135 = vmatpush.bf16.msra.mxu0 %v112
    %136 = vmatmul.bf16.gmra.mxu0 %v63
    %v137 = vpop.f32.mrf.mxu0
    %v138 = vadd.f32 0.0, %v137
    %v139 = vpop.f32.mrf.mxu0
    %140 = vdwg.mxu0
    %v141 = vpack.c.bf16 %v138, %v138
    %v142 = vpack.c.bf16 %v62, %v62
    %v144 = vunpack.c.l.b16 %v142
    %v145 = vpack.c.b16 %v144, %v144
    %146 = vrot.lane.b32.xlu0 %v145, 32
    %v147 = vpop.permute.xlu0 %146
    %vm148 = vcmask 261120
    %v151 = vsel %vm148, %v141, %v147
    %v152 = vld [vmem:[%s1] sm:$0xff]
    %v153 = vld [vmem:[%s1 + $0x8] sm:$0xff]
    %v154 = vld [vmem:[%s1 + $0x10] sm:$0xff]
    %v155 = vld [vmem:[%s1 + $0x18] sm:$0xff]
    %v156 = vld [vmem:[%s1 + $0x20] sm:$0xff]
    %v157 = vld [vmem:[%s1 + $0x28] sm:$0xff]
    %v158 = vld [vmem:[%s1 + $0x30] sm:$0xff]
    %v159 = vld [vmem:[%s1 + $0x38] sm:$0xff]
    %v161 = vperm.slane %v57, 0
    %v162 = vperm.slane %v57, 1
    %v173 = vunpack.c.l.b16 %v152
    %v174 = vunpack.c.h.b16 %v152
    %v175 = vunpack.c.l.b16 %v153
    %v176 = vunpack.c.h.b16 %v153
    %v177 = vunpack.c.l.b16 %v154
    %v178 = vunpack.c.h.b16 %v154
    %v179 = vunpack.c.l.b16 %v155
    %v180 = vunpack.c.h.b16 %v155
    %v181 = vunpack.c.l.b16 %v156
    %v182 = vunpack.c.h.b16 %v156
    %v183 = vunpack.c.l.b16 %v157
    %v184 = vunpack.c.h.b16 %v157
    %v185 = vunpack.c.l.b16 %v158
    %v186 = vunpack.c.h.b16 %v158
    %v187 = vunpack.c.l.b16 %v159
    %v188 = vunpack.c.h.b16 %v159
    %v189 = vpack.c.b16 %v175, %v173
    %v190 = vpack.c.b16 %v176, %v174
    %v191 = vpack.c.b16 %v179, %v177
    %v192 = vpack.c.b16 %v180, %v178
    %v193 = vpack.c.b16 %v183, %v181
    %v194 = vpack.c.b16 %v184, %v182
    %v195 = vpack.c.b16 %v187, %v185
    %v196 = vpack.c.b16 %v188, %v186
    %vm205 = vcmask 523264
    %v206 = vsel %vm205, %v151, 0
    %208 = vmatpush.bf16.msra.mxu0 0
    %209 = vmatpush.bf16.msra.mxu0 0
    %210 = vmatpush.bf16.msra.mxu0 0
    %211 = vmatpush.bf16.msra.mxu0 0
    %212 = vmatpush.bf16.msra.mxu0 %v195
    %213 = vmatpush.bf16.msra.mxu0 %v193
    %214 = vmatpush.bf16.msra.mxu0 %v191
    %215 = vmatpush.bf16.msra.mxu0 %v189
    %216 = vmatmul.bf16.gmra.mxu0 %v206
    %v217 = vpop.f32.mrf.mxu0
    %v218 = vadd.f32 %v161, %v217
    %v219 = vpop.f32.mrf.mxu0
    %220 = vdwg.mxu0
    %221 = vmatpush.bf16.msra.mxu0 0
    %222 = vmatpush.bf16.msra.mxu0 0
    %223 = vmatpush.bf16.msra.mxu0 0
    %224 = vmatpush.bf16.msra.mxu0 0
    %225 = vmatpush.bf16.msra.mxu0 %v196
    %226 = vmatpush.bf16.msra.mxu0 %v194
    %227 = vmatpush.bf16.msra.mxu0 %v192
    %228 = vmatpush.bf16.msra.mxu0 %v190
    %229 = vmatmul.bf16.gmra.mxu0 %v206
    %v230 = vpop.f32.mrf.mxu0
    %v231 = vadd.f32 %v162, %v230
    %v232 = vpop.f32.mrf.mxu0
    %233 = vdwg.mxu0
    %235 = vrot.lane.b32.xlu0 %v218, 32
    %v236 = vpop.permute.xlu0 %235
    %v238 = vadd.f32 %v218, %v236
    %v239 = vxor.u32 %v238, 2147483648
    %v240 = vmul.f32 %v239, 1.442695
    %v241 = vpow.pop %v240
    %v242 = vadd.f32 %v241, 1.0
    %v243 = vrcp.pop %v242
    %v244 = vmul.f32 %v242, %v243
    %v245 = vsub.f32 1.0, %v244
    %v246 = vmul.f32 %v243, %v245
    %v247 = vadd.f32 %v243, %v246
    %vm248 = vweird.f32 %v242
    %vm249 = vweird.f32 %v243
    %vm250 = vmor %vm248, %vm249
    %v251 = vsel %vm250, %v243, %v247
    %v252 = vand.u32 2147483647, %v242
    %vm253 = vcmp.eq.f32.partialorder %v252, 8.507059e+37
    %v254 = vand.u32 %v242, 2147483648
    %v255 = vor.u32 1.1754944e-38, %v254
    %v256 = vsel %vm253, %v255, %v251
    %v257 = vmul.f32 1.0, %v256
    %259 = vrot.lane.b32.xlu0 %v231, 32
    %v260 = vpop.permute.xlu0 %259
    %v262 = vadd.f32 %v218, %v260
    %v263 = vxor.u32 %v262, 2147483648
    %v264 = vmul.f32 %v263, 1.442695
    %v265 = vpow.pop %v264
    %v266 = vadd.f32 %v265, 1.0
    %v267 = vrcp.pop %v266
    %v268 = vmul.f32 %v266, %v267
    %v269 = vsub.f32 1.0, %v268
    %v270 = vmul.f32 %v267, %v269
    %v271 = vadd.f32 %v267, %v270
    %vm272 = vweird.f32 %v266
    %vm273 = vweird.f32 %v267
    %vm274 = vmor %vm272, %vm273
    %v275 = vsel %vm274, %v267, %v271
    %v276 = vand.u32 2147483647, %v266
    %vm277 = vcmp.eq.f32.partialorder %v276, 8.507059e+37
    %v278 = vand.u32 %v266, 2147483648
    %v279 = vor.u32 1.1754944e-38, %v278
    %v280 = vsel %vm277, %v279, %v275
    %v281 = vmul.f32 1.0, %v280
    %282 = vrot.lane.b32.xlu0 %v231, 96
    %v283 = vpop.permute.xlu0 %282
    %v285 = vmul.f32 %v257, %v283
    %287 = vrot.lane.b32.xlu0 %v285, 64
    %v288 = vpop.permute.xlu0 %287
    %v290 = vadd.f32 %v218, %v288
    %v291 = vtanh.pop %v290
    %v292 = vsub.f32 1.0, %v281
    %294 = vrot.lane.b32.xlu0 %v291, 96
    %v295 = vpop.permute.xlu0 %294
    %v297 = vmul.f32 %v292, %v295
    %299 = vrot.lane.b32.xlu0 %v62, 32
    %v300 = vpop.permute.xlu0 %299
    %v302 = vmul.f32 %v281, %v300
    %v303 = vadd.f32 %v297, %v302
    %v304 = vld [vmem:[#allocation2] sm:$0xff]
    %v305 = vld [vmem:[#allocation2 + $0x8] sm:$0xff]
    %v306 = vld [vmem:[#allocation2 + $0x10] sm:$0xff]
    %v307 = vld [vmem:[#allocation2 + $0x18] sm:$0xff]
    %v308 = vld [vmem:[#allocation2 + $0x20] sm:$0xff]
    %v309 = vld [vmem:[#allocation2 + $0x28] sm:$0xff]
    %v310 = vld [vmem:[#allocation2 + $0x30] sm:$0xff]
    %v311 = vld [vmem:[#allocation2 + $0x38] sm:$0xff]
    %v313 = vrot.slane %v303, 1
    %v314 = vrot.slane %v303, 2
    %v315 = vrot.slane %v303, 3
    %v316 = vrot.slane %v303, 4
    %v317 = vrot.slane %v303, 5
    %v318 = vrot.slane %v303, 6
    %v319 = vrot.slane %v303, 7
    %v320 = vperm.slane %v303, 0
    %v321 = vperm.slane %v313, 0
    %v322 = vperm.slane %v314, 0
    %v323 = vperm.slane %v315, 0
    %v324 = vperm.slane %v316, 0
    %v325 = vperm.slane %v317, 0
    %v326 = vperm.slane %v318, 0
    %v327 = vperm.slane %v319, 0
    %344 = vrot.lane.b32.xlu0 %v304, 32
    %v345 = vpop.permute.xlu0 %344
    %346 = vrot.lane.b32.xlu0 %v305, 32
    %v347 = vpop.permute.xlu0 %346
    %348 = vrot.lane.b32.xlu0 %v306, 32
    %v349 = vpop.permute.xlu0 %348
    %350 = vrot.lane.b32.xlu0 %v307, 32
    %v351 = vpop.permute.xlu0 %350
    %352 = vrot.lane.b32.xlu0 %v308, 32
    %v353 = vpop.permute.xlu0 %352
    %354 = vrot.lane.b32.xlu0 %v309, 32
    %v355 = vpop.permute.xlu0 %354
    %356 = vrot.lane.b32.xlu0 %v310, 32
    %v357 = vpop.permute.xlu0 %356
    %358 = vrot.lane.b32.xlu0 %v311, 32
    %v359 = vpop.permute.xlu0 %358
    %v368 = vmul.f32 %v320, %v345
    %v369 = vmul.f32 %v321, %v347
    %v370 = vmul.f32 %v322, %v349
    %v371 = vmul.f32 %v323, %v351
    %v372 = vmul.f32 %v324, %v353
    %v373 = vmul.f32 %v325, %v355
    %v374 = vmul.f32 %v326, %v357
    %v375 = vmul.f32 %v327, %v359
    %384 = vrot.lane.b32.xlu0 %v368, 96
    %v385 = vpop.permute.xlu0 %384
    %386 = vrot.lane.b32.xlu0 %v369, 96
    %v387 = vpop.permute.xlu0 %386
    %388 = vrot.lane.b32.xlu0 %v370, 96
    %v389 = vpop.permute.xlu0 %388
    %390 = vrot.lane.b32.xlu0 %v371, 96
    %v391 = vpop.permute.xlu0 %390
    %392 = vrot.lane.b32.xlu0 %v372, 96
    %v393 = vpop.permute.xlu0 %392
    %394 = vrot.lane.b32.xlu0 %v373, 96
    %v395 = vpop.permute.xlu0 %394
    %396 = vrot.lane.b32.xlu0 %v374, 96
    %v397 = vpop.permute.xlu0 %396
    %398 = vrot.lane.b32.xlu0 %v375, 96
    %v399 = vpop.permute.xlu0 %398
    %v408 = vsel %vm148, %v385, 0.0
    %409 = vadd.xlane.f32.xlu0 %v408
    %v410 = vpop.xlane.xlu0 %409
    %v411 = vsel %vm148, %v387, 0.0
    %412 = vadd.xlane.f32.xlu0 %v411
    %v413 = vpop.xlane.xlu0 %412
    %v414 = vsel %vm148, %v389, 0.0
    %415 = vadd.xlane.f32.xlu0 %v414
    %v416 = vpop.xlane.xlu0 %415
    %v417 = vsel %vm148, %v391, 0.0
    %418 = vadd.xlane.f32.xlu0 %v417
    %v419 = vpop.xlane.xlu0 %418
    %v420 = vsel %vm148, %v393, 0.0
    %421 = vadd.xlane.f32.xlu0 %v420
    %v422 = vpop.xlane.xlu0 %421
    %v423 = vsel %vm148, %v395, 0.0
    %424 = vadd.xlane.f32.xlu0 %v423
    %v425 = vpop.xlane.xlu0 %424
    %v426 = vsel %vm148, %v397, 0.0
    %427 = vadd.xlane.f32.xlu0 %v426
    %v428 = vpop.xlane.xlu0 %427
    %v429 = vsel %vm148, %v399, 0.0
    %430 = vadd.xlane.f32.xlu0 %v429
    %v431 = vpop.xlane.xlu0 %430
    %v440 = vperm.slane %v410, %v61
    %v441 = vperm.slane %v413, %v61
    %v442 = vperm.slane %v416, %v61
    %v443 = vperm.slane %v419, %v61
    %v444 = vperm.slane %v422, %v61
    %v445 = vperm.slane %v425, %v61
    %v446 = vperm.slane %v428, %v61
    %v447 = vperm.slane %v431, %v61
    %vm448 = vcmask 1041409
    %v449 = vsel %vm448, %v441, %v440
    %vm450 = vcmask 1042434
    %v451 = vsel %vm450, %v442, %v449
    %vm452 = vcmask 1043459
    %v453 = vsel %vm452, %v443, %v451
    %vm454 = vcmask 1044484
    %v455 = vsel %vm454, %v444, %v453
    %vm456 = vcmask 1045509
    %v457 = vsel %vm456, %v445, %v455
    %vm458 = vcmask 1046534
    %v459 = vsel %vm458, %v446, %v457
    %vm460 = vcmask 1047559
    %v461 = vsel %vm460, %v447, %v459
    %vm463 = vcmask 64512
    %v464 = vsel %vm463, %v461, -inf
    %465 = vmax.xlane.f32.xlu0 %v464
    %v466 = vpop.xlane.xlu0 %465
    %v468 = vperm.slane %v466, 0
    %v469 = vperm.slane %v466, 1
    %v470 = vperm.slane %v466, 2
    %v471 = vperm.slane %v466, 3
    %v472 = vperm.slane %v466, 4
    %v473 = vperm.slane %v466, 5
    %v474 = vperm.slane %v466, 6
    %v475 = vperm.slane %v466, 7
    %v484 = vsub.f32 %v410, %v468
    %v485 = vsub.f32 %v413, %v469
    %v486 = vsub.f32 %v416, %v470
    %v487 = vsub.f32 %v419, %v471
    %v488 = vsub.f32 %v422, %v472
    %v489 = vsub.f32 %v425, %v473
    %v490 = vsub.f32 %v428, %v474
    %v491 = vsub.f32 %v431, %v475
    %v492 = vmul.f32 %v484, 1.442695
    %v493 = vpow.pop %v492
    %v494 = vmul.f32 %v485, 1.442695
    %v495 = vpow.pop %v494
    %v496 = vmul.f32 %v486, 1.442695
    %v497 = vpow.pop %v496
    %v498 = vmul.f32 %v487, 1.442695
    %v499 = vpow.pop %v498
    %v500 = vmul.f32 %v488, 1.442695
    %v501 = vpow.pop %v500
    %v502 = vmul.f32 %v489, 1.442695
    %v503 = vpow.pop %v502
    %v504 = vmul.f32 %v490, 1.442695
    %v505 = vpow.pop %v504
    %v506 = vmul.f32 %v491, 1.442695
    %v507 = vpow.pop %v506
    %516 = vset.pattern.permute.xlu0 0
    %517 = vperm.xlu0 %516, %v493
    %v518 = vpop.permute.xlu0 %517
    %519 = vset.pattern.permute.xlu0 0
    %520 = vperm.xlu0 %519, %v495
    %v521 = vpop.permute.xlu0 %520
    %522 = vset.pattern.permute.xlu0 0
    %523 = vperm.xlu0 %522, %v497
    %v524 = vpop.permute.xlu0 %523
    %525 = vset.pattern.permute.xlu0 0
    %526 = vperm.xlu0 %525, %v499
    %v527 = vpop.permute.xlu0 %526
    %528 = vset.pattern.permute.xlu0 0
    %529 = vperm.xlu0 %528, %v501
    %v530 = vpop.permute.xlu0 %529
    %531 = vset.pattern.permute.xlu0 0
    %532 = vperm.xlu0 %531, %v503
    %v533 = vpop.permute.xlu0 %532
    %534 = vset.pattern.permute.xlu0 0
    %535 = vperm.xlu0 %534, %v505
    %v536 = vpop.permute.xlu0 %535
    %537 = vset.pattern.permute.xlu0 0
    %538 = vperm.xlu0 %537, %v507
    %v539 = vpop.permute.xlu0 %538
    %v540 = vperm.slane %v518, %v61
    %v541 = vperm.slane %v521, %v61
    %v542 = vperm.slane %v524, %v61
    %v543 = vperm.slane %v527, %v61
    %v544 = vperm.slane %v530, %v61
    %v545 = vperm.slane %v533, %v61
    %v546 = vperm.slane %v536, %v61
    %v547 = vperm.slane %v539, %v61
    %v548 = vsel %vm448, %v541, %v540
    %v549 = vsel %vm450, %v542, %v548
    %v550 = vsel %vm452, %v543, %v549
    %v551 = vsel %vm454, %v544, %v550
    %v552 = vsel %vm456, %v545, %v551
    %v553 = vsel %vm458, %v546, %v552
    %v554 = vsel %vm460, %v547, %v553
    %v556 = vsel %vm463, %v554, 0.0
    %557 = vadd.xlane.f32.xlu0 %v556
    %v558 = vpop.xlane.xlu0 %557
    %v560 = vperm.slane %v558, 0
    %v561 = vperm.slane %v558, 1
    %v562 = vperm.slane %v558, 2
    %v563 = vperm.slane %v558, 3
    %v564 = vperm.slane %v558, 4
    %v565 = vperm.slane %v558, 5
    %v566 = vperm.slane %v558, 6
    %v567 = vperm.slane %v558, 7
    %v576 = vrcp.pop %v560
    %v577 = vmul.f32 %v560, %v576
    %v578 = vsub.f32 1.0, %v577
    %v579 = vmul.f32 %v576, %v578
    %v580 = vadd.f32 %v576, %v579
    %vm581 = vweird.f32 %v560
    %vm582 = vweird.f32 %v576
    %vm583 = vmor %vm581, %vm582
    %v584 = vsel %vm583, %v576, %v580
    %v585 = vand.u32 2147483647, %v560
    %vm586 = vcmp.eq.f32.partialorder %v585, 8.507059e+37
    %v587 = vand.u32 %v560, 2147483648
    %v588 = vor.u32 1.1754944e-38, %v587
    %v589 = vsel %vm586, %v588, %v584
    %v590 = vmul.f32 %v493, %v589
    %v591 = vrcp.pop %v561
    %v592 = vmul.f32 %v561, %v591
    %v593 = vsub.f32 1.0, %v592
    %v594 = vmul.f32 %v591, %v593
    %v595 = vadd.f32 %v591, %v594
    %vm596 = vweird.f32 %v561
    %vm597 = vweird.f32 %v591
    %vm598 = vmor %vm596, %vm597
    %v599 = vsel %vm598, %v591, %v595
    %v600 = vand.u32 2147483647, %v561
    %vm601 = vcmp.eq.f32.partialorder %v600, 8.507059e+37
    %v602 = vand.u32 %v561, 2147483648
    %v603 = vor.u32 1.1754944e-38, %v602
    %v604 = vsel %vm601, %v603, %v599
    %v605 = vmul.f32 %v495, %v604
    %v606 = vrcp.pop %v562
    %v607 = vmul.f32 %v562, %v606
    %v608 = vsub.f32 1.0, %v607
    %v609 = vmul.f32 %v606, %v608
    %v610 = vadd.f32 %v606, %v609
    %vm611 = vweird.f32 %v562
    %vm612 = vweird.f32 %v606
    %vm613 = vmor %vm611, %vm612
    %v614 = vsel %vm613, %v606, %v610
    %v615 = vand.u32 2147483647, %v562
    %vm616 = vcmp.eq.f32.partialorder %v615, 8.507059e+37
    %v617 = vand.u32 %v562, 2147483648
    %v618 = vor.u32 1.1754944e-38, %v617
    %v619 = vsel %vm616, %v618, %v614
    %v620 = vmul.f32 %v497, %v619
    %v621 = vrcp.pop %v563
    %v622 = vmul.f32 %v563, %v621
    %v623 = vsub.f32 1.0, %v622
    %v624 = vmul.f32 %v621, %v623
    %v625 = vadd.f32 %v621, %v624
    %vm626 = vweird.f32 %v563
    %vm627 = vweird.f32 %v621
    %vm628 = vmor %vm626, %vm627
    %v629 = vsel %vm628, %v621, %v625
    %v630 = vand.u32 2147483647, %v563
    %vm631 = vcmp.eq.f32.partialorder %v630, 8.507059e+37
    %v632 = vand.u32 %v563, 2147483648
    %v633 = vor.u32 1.1754944e-38, %v632
    %v634 = vsel %vm631, %v633, %v629
    %v635 = vmul.f32 %v499, %v634
    %v636 = vrcp.pop %v564
    %v637 = vmul.f32 %v564, %v636
    %v638 = vsub.f32 1.0, %v637
    %v639 = vmul.f32 %v636, %v638
    %v640 = vadd.f32 %v636, %v639
    %vm641 = vweird.f32 %v564
    %vm642 = vweird.f32 %v636
    %vm643 = vmor %vm641, %vm642
    %v644 = vsel %vm643, %v636, %v640
    %v645 = vand.u32 2147483647, %v564
    %vm646 = vcmp.eq.f32.partialorder %v645, 8.507059e+37
    %v647 = vand.u32 %v564, 2147483648
    %v648 = vor.u32 1.1754944e-38, %v647
    %v649 = vsel %vm646, %v648, %v644
    %v650 = vmul.f32 %v501, %v649
    %v651 = vrcp.pop %v565
    %v652 = vmul.f32 %v565, %v651
    %v653 = vsub.f32 1.0, %v652
    %v654 = vmul.f32 %v651, %v653
    %v655 = vadd.f32 %v651, %v654
    %vm656 = vweird.f32 %v565
    %vm657 = vweird.f32 %v651
    %vm658 = vmor %vm656, %vm657
    %v659 = vsel %vm658, %v651, %v655
    %v660 = vand.u32 2147483647, %v565
    %vm661 = vcmp.eq.f32.partialorder %v660, 8.507059e+37
    %v662 = vand.u32 %v565, 2147483648
    %v663 = vor.u32 1.1754944e-38, %v662
    %v664 = vsel %vm661, %v663, %v659
    %v665 = vmul.f32 %v503, %v664
    %v666 = vrcp.pop %v566
    %v667 = vmul.f32 %v566, %v666
    %v668 = vsub.f32 1.0, %v667
    %v669 = vmul.f32 %v666, %v668
    %v670 = vadd.f32 %v666, %v669
    %vm671 = vweird.f32 %v566
    %vm672 = vweird.f32 %v666
    %vm673 = vmor %vm671, %vm672
    %v674 = vsel %vm673, %v666, %v670
    %v675 = vand.u32 2147483647, %v566
    %vm676 = vcmp.eq.f32.partialorder %v675, 8.507059e+37
    %v677 = vand.u32 %v566, 2147483648
    %v678 = vor.u32 1.1754944e-38, %v677
    %v679 = vsel %vm676, %v678, %v674
    %v680 = vmul.f32 %v505, %v679
    %v681 = vrcp.pop %v567
    %v682 = vmul.f32 %v567, %v681
    %v683 = vsub.f32 1.0, %v682
    %v684 = vmul.f32 %v681, %v683
    %v685 = vadd.f32 %v681, %v684
    %vm686 = vweird.f32 %v567
    %vm687 = vweird.f32 %v681
    %vm688 = vmor %vm686, %vm687
    %v689 = vsel %vm688, %v681, %v685
    %v690 = vand.u32 2147483647, %v567
    %vm691 = vcmp.eq.f32.partialorder %v690, 8.507059e+37
    %v692 = vand.u32 %v567, 2147483648
    %v693 = vor.u32 1.1754944e-38, %v692
    %v694 = vsel %vm691, %v693, %v689
    %v695 = vmul.f32 %v507, %v694
    %704 = vset.pattern.permute.xlu0 0
    %705 = vperm.xlu0 %704, %v590
    %v706 = vpop.permute.xlu0 %705
    %707 = vset.pattern.permute.xlu0 0
    %708 = vperm.xlu0 %707, %v605
    %v709 = vpop.permute.xlu0 %708
    %710 = vset.pattern.permute.xlu0 0
    %711 = vperm.xlu0 %710, %v620
    %v712 = vpop.permute.xlu0 %711
    %713 = vset.pattern.permute.xlu0 0
    %714 = vperm.xlu0 %713, %v635
    %v715 = vpop.permute.xlu0 %714
    %716 = vset.pattern.permute.xlu0 0
    %717 = vperm.xlu0 %716, %v650
    %v718 = vpop.permute.xlu0 %717
    %719 = vset.pattern.permute.xlu0 0
    %720 = vperm.xlu0 %719, %v665
    %v721 = vpop.permute.xlu0 %720
    %722 = vset.pattern.permute.xlu0 0
    %723 = vperm.xlu0 %722, %v680
    %v724 = vpop.permute.xlu0 %723
    %725 = vset.pattern.permute.xlu0 0
    %726 = vperm.xlu0 %725, %v695
    %v727 = vpop.permute.xlu0 %726
    %v728 = vperm.slane %v706, %v61
    %v729 = vperm.slane %v709, %v61
    %v730 = vperm.slane %v712, %v61
    %v731 = vperm.slane %v715, %v61
    %v732 = vperm.slane %v718, %v61
    %v733 = vperm.slane %v721, %v61
    %v734 = vperm.slane %v724, %v61
    %v735 = vperm.slane %v727, %v61
    %v736 = vsel %vm448, %v729, %v728
    %v737 = vsel %vm450, %v730, %v736
    %v738 = vsel %vm452, %v731, %v737
    %v739 = vsel %vm454, %v732, %v738
    %v740 = vsel %vm456, %v733, %v739
    %v741 = vsel %vm458, %v734, %v740
    %v742 = vsel %vm460, %v735, %v741
    %744 = vst.msk [vmem:[#allocation6] sm:$0xff] %vm463, %v742
    %v753 = vmul.f32 %v706, %v304
    %v754 = vmul.f32 %v709, %v305
    %v755 = vmul.f32 %v712, %v306
    %v756 = vmul.f32 %v715, %v307
    %v757 = vmul.f32 %v718, %v308
    %v758 = vmul.f32 %v721, %v309
    %v759 = vmul.f32 %v724, %v310
    %v760 = vmul.f32 %v727, %v311
    %v761 = vsel %vm148, %v753, 0.0
    %v762 = vrot.slane %v761, 4
    %v763 = vadd.f32 %v761, %v762
    %v764 = vrot.slane %v763, 2
    %v765 = vadd.f32 %v763, %v764
    %v766 = vrot.slane %v765, 1
    %v767 = vadd.f32 %v765, %v766
    %v768 = vsel %vm148, %v754, 0.0
    %v769 = vrot.slane %v768, 4
    %v770 = vadd.f32 %v768, %v769
    %v771 = vrot.slane %v770, 2
    %v772 = vadd.f32 %v770, %v771
    %v773 = vrot.slane %v772, 1
    %v774 = vadd.f32 %v772, %v773
    %v775 = vsel %vm148, %v755, 0.0
    %v776 = vrot.slane %v775, 4
    %v777 = vadd.f32 %v775, %v776
    %v778 = vrot.slane %v777, 2
    %v779 = vadd.f32 %v777, %v778
    %v780 = vrot.slane %v779, 1
    %v781 = vadd.f32 %v779, %v780
    %v782 = vsel %vm148, %v756, 0.0
    %v783 = vrot.slane %v782, 4
    %v784 = vadd.f32 %v782, %v783
    %v785 = vrot.slane %v784, 2
    %v786 = vadd.f32 %v784, %v785
    %v787 = vrot.slane %v786, 1
    %v788 = vadd.f32 %v786, %v787
    %v789 = vsel %vm148, %v757, 0.0
    %v790 = vrot.slane %v789, 4
    %v791 = vadd.f32 %v789, %v790
    %v792 = vrot.slane %v791, 2
    %v793 = vadd.f32 %v791, %v792
    %v794 = vrot.slane %v793, 1
    %v795 = vadd.f32 %v793, %v794
    %v796 = vsel %vm148, %v758, 0.0
    %v797 = vrot.slane %v796, 4
    %v798 = vadd.f32 %v796, %v797
    %v799 = vrot.slane %v798, 2
    %v800 = vadd.f32 %v798, %v799
    %v801 = vrot.slane %v800, 1
    %v802 = vadd.f32 %v800, %v801
    %v803 = vsel %vm148, %v759, 0.0
    %v804 = vrot.slane %v803, 4
    %v805 = vadd.f32 %v803, %v804
    %v806 = vrot.slane %v805, 2
    %v807 = vadd.f32 %v805, %v806
    %v808 = vrot.slane %v807, 1
    %v809 = vadd.f32 %v807, %v808
    %v810 = vsel %vm148, %v760, 0.0
    %v811 = vrot.slane %v810, 4
    %v812 = vadd.f32 %v810, %v811
    %v813 = vrot.slane %v812, 2
    %v814 = vadd.f32 %v812, %v813
    %v815 = vrot.slane %v814, 1
    %v816 = vadd.f32 %v814, %v815
    %v817 = vpack.c.bf16 %v767, %v767
    %v818 = vpack.c.bf16 %v774, %v774
    %v819 = vpack.c.bf16 %v781, %v781
    %v820 = vpack.c.bf16 %v788, %v788
    %v821 = vpack.c.bf16 %v795, %v795
    %v822 = vpack.c.bf16 %v802, %v802
    %v823 = vpack.c.bf16 %v809, %v809
    %v824 = vpack.c.bf16 %v816, %v816
    %v825 = vpack.c.bf16 %v303, %v303
    %v834 = vperm.slane %v817, 0
    %v835 = vperm.slane %v818, 0
    %v836 = vperm.slane %v819, 0
    %v837 = vperm.slane %v820, 0
    %v838 = vperm.slane %v821, 0
    %v839 = vperm.slane %v822, 0
    %v840 = vperm.slane %v823, 0
    %v841 = vperm.slane %v824, 0
    %v842 = vunpack.c.l.b16 %v834
    %v843 = vunpack.c.l.b16 %v835
    %v844 = vunpack.c.l.b16 %v836
    %v845 = vunpack.c.l.b16 %v837
    %v846 = vunpack.c.l.b16 %v838
    %v847 = vunpack.c.l.b16 %v839
    %v848 = vunpack.c.l.b16 %v840
    %v849 = vunpack.c.l.b16 %v841
    %v850 = vsel %vm448, %v843, %v842
    %v851 = vsel %vm450, %v844, %v850
    %v852 = vsel %vm452, %v845, %v851
    %v853 = vsel %vm454, %v846, %v852
    %v854 = vsel %vm456, %v847, %v853
    %v855 = vsel %vm458, %v848, %v854
    %v856 = vsel %vm460, %v849, %v855
    %v857 = vpack.c.b16 %v856, %v856
    %v860 = vsel %vm148, %v857, %v825
    %v861 = vld [vmem:[%s3] sm:$0xf]
    %v862 = vld [vmem:[%s3 + $0x4] sm:$0xf]
    %v863 = vld [vmem:[%s3 + $0x8] sm:$0xf]
    %v864 = vld [vmem:[%s3 + $0xc] sm:$0xf]
    %v865 = vld [vmem:[%s3 + $0x10] sm:$0xf]
    %v866 = vld [vmem:[%s3 + $0x14] sm:$0xf]
    %v867 = vld [vmem:[%s3 + $0x18] sm:$0xf]
    %v868 = vld [vmem:[%s3 + $0x1c] sm:$0xf]
    %v870 = vperm.slane %v58, 0
    %v880 = vunpack.c.l.b16 %v861
    %v881 = vunpack.c.l.b16 %v862
    %v882 = vunpack.c.l.b16 %v863
    %v883 = vunpack.c.l.b16 %v864
    %v884 = vunpack.c.l.b16 %v865
    %v885 = vunpack.c.l.b16 %v866
    %v886 = vunpack.c.l.b16 %v867
    %v887 = vunpack.c.l.b16 %v868
    %v888 = vpack.c.b16 %v881, %v880
    %v889 = vpack.c.b16 %v883, %v882
    %v890 = vpack.c.b16 %v885, %v884
    %v891 = vpack.c.b16 %v887, %v886
    %v896 = vsel %vm205, %v860, 0
    %898 = vmatpush.bf16.msra.mxu0 0
    %899 = vmatpush.bf16.msra.mxu0 0
    %900 = vmatpush.bf16.msra.mxu0 0
    %901 = vmatpush.bf16.msra.mxu0 0
    %902 = vmatpush.bf16.msra.mxu0 %v891
    %903 = vmatpush.bf16.msra.mxu0 %v890
    %904 = vmatpush.bf16.msra.mxu0 %v889
    %905 = vmatpush.bf16.msra.mxu0 %v888
    %906 = vmatmul.bf16.gmra.mxu0 %v896
    %v907 = vpop.f32.mrf.mxu0
    %v908 = vadd.f32 %v870, %v907
    %v909 = vpop.f32.mrf.mxu0
    %910 = vdwg.mxu0
    %v911 = vtanh.pop %v908
    %v912 = vpack.c.bf16 %v911, %v911
    %v913 = vld [vmem:[%s5] sm:$0xf]
    %v914 = vld [vmem:[%s5 + $0x4] sm:$0xf]
    %v915 = vld [vmem:[%s5 + $0x8] sm:$0xf]
    %v916 = vld [vmem:[%s5 + $0xc] sm:$0xf]
    %v918 = vperm.slane %v59, 0
    %v924 = vunpack.c.l.b16 %v913
    %v925 = vunpack.c.l.b16 %v914
    %v926 = vunpack.c.l.b16 %v915
    %v927 = vunpack.c.l.b16 %v916
    %v928 = vpack.c.b16 %v925, %v924
    %v929 = vpack.c.b16 %v927, %v926
    %v933 = vsel %vm148, %v912, 0
    %935 = vmatpush.bf16.msra.mxu0 0
    %936 = vmatpush.bf16.msra.mxu0 0
    %937 = vmatpush.bf16.msra.mxu0 0
    %938 = vmatpush.bf16.msra.mxu0 0
    %939 = vmatpush.bf16.msra.mxu0 0
    %940 = vmatpush.bf16.msra.mxu0 0
    %941 = vmatpush.bf16.msra.mxu0 %v929
    %942 = vmatpush.bf16.msra.mxu0 %v928
    %943 = vmatmul.bf16.gmra.mxu0 %v933
    %v944 = vpop.f32.mrf.mxu0
    %v945 = vadd.f32 %v918, %v944
    %v946 = vpop.f32.mrf.mxu0
    %947 = vdwg.mxu0
    %948 = vmax.xlane.f32.xlu0 %v945
    %v949 = vpop.xlane.xlu0 %948
    %v950 = vsub.f32 %v945, %v949
    %v951 = vmul.f32 %v950, 1.442695
    %v952 = vpow.pop %v951
    %953 = vadd.xlane.f32.xlu0 %v952
    %v954 = vpop.xlane.xlu0 %953
    %v955 = vlog2.pop %v954
    %v956 = vmul.f32 %v955, 0.6931472
    %v957 = vadd.f32 %v956, %v949
    %v958 = vsub.f32 %v945, %v957
    %959 = vst [vmem:[#allocation5] sm:$0xff] %v958
    %vm960 = vcmp.eq.f32.partialorder %v945, %v949
    %v961 = vsel %vm960, %v61, 128
    %v962 = vand.u32 %v961, 65535
    %v963 = vshra.s32 %v961, 16
    %v964 = vcvt.s32.f32 %v962
    %v965 = vcvt.s32.f32 %v963
    %966 = vmin.xlane.f32.xlu0 %v965
    %v967 = vpop.xlane.xlu0 %966
    %vm968 = vcmp.eq.f32.partialorder %v965, %v967
    %v969 = vsel %vm968, %v964, inf
    %970 = vmin.xlane.f32.xlu0 %v969
    %v971 = vpop.xlane.xlu0 %970
    %v972 = vcvt.f32.s32 %v971
    %v973 = vcvt.f32.s32 %v967
    %v974 = vshll.u32 %v973, 16
    %v975 = vadd.s32 %v974, %v972
    %vm976 = vcmp.eq.s32.totalorder %v61, %v975
    %v977 = vsel %vm976, 1, 0
    %v978 = vcvt.s32.f32 %v977
    %v979 = vpack.c.bf16 %v978, %v978
    %v980 = vld [vmem:[%s0] sm:$0xf]
    %v981 = vld [vmem:[%s0 + $0x4] sm:$0xf]
    %v982 = vld [vmem:[%s0 + $0x8] sm:$0xf]
    %v983 = vld [vmem:[%s0 + $0xc] sm:$0xf]
    %v984 = vld [vmem:[%s0 + $0x10] sm:$0xf]
    %v985 = vld [vmem:[%s0 + $0x14] sm:$0xf]
    %v986 = vld [vmem:[%s0 + $0x18] sm:$0xf]
    %v987 = vld [vmem:[%s0 + $0x1c] sm:$0xf]
    %v988 = vld [vmem:[%s0 + $0x20] sm:$0xf]
    %v989 = vld [vmem:[%s0 + $0x24] sm:$0xf]
    %v990 = vld [vmem:[%s0 + $0x28] sm:$0xf]
    %v991 = vld [vmem:[%s0 + $0x2c] sm:$0xf]
    %v992 = vld [vmem:[%s0 + $0x30] sm:$0xf]
    %v993 = vld [vmem:[%s0 + $0x34] sm:$0xf]
    %v994 = vld [vmem:[%s0 + $0x38] sm:$0xf]
    %v995 = vld [vmem:[%s0 + $0x3c] sm:$0xf]
    %v1012 = vunpack.c.l.b16 %v980
    %v1013 = vunpack.c.l.b16 %v981
    %v1014 = vunpack.c.l.b16 %v982
    %v1015 = vunpack.c.l.b16 %v983
    %v1016 = vunpack.c.l.b16 %v984
    %v1017 = vunpack.c.l.b16 %v985
    %v1018 = vunpack.c.l.b16 %v986
    %v1019 = vunpack.c.l.b16 %v987
    %v1020 = vunpack.c.l.b16 %v988
    %v1021 = vunpack.c.l.b16 %v989
    %v1022 = vunpack.c.l.b16 %v990
    %v1023 = vunpack.c.l.b16 %v991
    %v1024 = vunpack.c.l.b16 %v992
    %v1025 = vunpack.c.l.b16 %v993
    %v1026 = vunpack.c.l.b16 %v994
    %v1027 = vunpack.c.l.b16 %v995
    %v1028 = vpack.c.b16 %v1013, %v1012
    %v1029 = vpack.c.b16 %v1015, %v1014
    %v1030 = vpack.c.b16 %v1017, %v1016
    %v1031 = vpack.c.b16 %v1019, %v1018
    %v1032 = vpack.c.b16 %v1021, %v1020
    %v1033 = vpack.c.b16 %v1023, %v1022
    %v1034 = vpack.c.b16 %v1025, %v1024
    %v1035 = vpack.c.b16 %v1027, %v1026
    %1044 = vmatpush.bf16.msra.mxu0 %v1035
    %1045 = vmatpush.bf16.msra.mxu0 %v1034
    %1046 = vmatpush.bf16.msra.mxu0 %v1033
    %1047 = vmatpush.bf16.msra.mxu0 %v1032
    %1048 = vmatpush.bf16.msra.mxu0 %v1031
    %1049 = vmatpush.bf16.msra.mxu0 %v1030
    %1050 = vmatpush.bf16.msra.mxu0 %v1029
    %1051 = vmatpush.bf16.msra.mxu0 %v1028
    %1052 = vmatmul.bf16.gmra.mxu0 %v979
    %v1053 = vpop.f32.mrf.mxu0
    %v1054 = vadd.f32 0.0, %v1053
    %v1055 = vpop.f32.mrf.mxu0
    %1056 = vdwg.mxu0
    %v1057 = vpack.c.bf16 %v1054, %v1054
    %v1059 = vsel %vm148, %v1057, %v825
    %v1060 = vld [vmem:[%s1] sm:$0xff]
    %v1061 = vld [vmem:[%s1 + $0x8] sm:$0xff]
    %v1062 = vld [vmem:[%s1 + $0x10] sm:$0xff]
    %v1063 = vld [vmem:[%s1 + $0x18] sm:$0xff]
    %v1064 = vld [vmem:[%s1 + $0x20] sm:$0xff]
    %v1065 = vld [vmem:[%s1 + $0x28] sm:$0xff]
    %v1066 = vld [vmem:[%s1 + $0x30] sm:$0xff]
    %v1067 = vld [vmem:[%s1 + $0x38] sm:$0xff]
    %v1076 = vunpack.c.l.b16 %v1060
    %v1077 = vunpack.c.h.b16 %v1060
    %v1078 = vunpack.c.l.b16 %v1061
    %v1079 = vunpack.c.h.b16 %v1061
    %v1080 = vunpack.c.l.b16 %v1062
    %v1081 = vunpack.c.h.b16 %v1062
    %v1082 = vunpack.c.l.b16 %v1063
    %v1083 = vunpack.c.h.b16 %v1063
    %v1084 = vunpack.c.l.b16 %v1064
    %v1085 = vunpack.c.h.b16 %v1064
    %v1086 = vunpack.c.l.b16 %v1065
    %v1087 = vunpack.c.h.b16 %v1065
    %v1088 = vunpack.c.l.b16 %v1066
    %v1089 = vunpack.c.h.b16 %v1066
    %v1090 = vunpack.c.l.b16 %v1067
    %v1091 = vunpack.c.h.b16 %v1067
    %v1092 = vpack.c.b16 %v1078, %v1076
    %v1093 = vpack.c.b16 %v1079, %v1077
    %v1094 = vpack.c.b16 %v1082, %v1080
    %v1095 = vpack.c.b16 %v1083, %v1081
    %v1096 = vpack.c.b16 %v1086, %v1084
    %v1097 = vpack.c.b16 %v1087, %v1085
    %v1098 = vpack.c.b16 %v1090, %v1088
    %v1099 = vpack.c.b16 %v1091, %v1089
    %v1108 = vsel %vm205, %v1059, 0
    %1110 = vmatpush.bf16.msra.mxu0 0
    %1111 = vmatpush.bf16.msra.mxu0 0
    %1112 = vmatpush.bf16.msra.mxu0 0
    %1113 = vmatpush.bf16.msra.mxu0 0
    %1114 = vmatpush.bf16.msra.mxu0 %v1098
    %1115 = vmatpush.bf16.msra.mxu0 %v1096
    %1116 = vmatpush.bf16.msra.mxu0 %v1094
    %1117 = vmatpush.bf16.msra.mxu0 %v1092
    %1118 = vmatmul.bf16.gmra.mxu0 %v1108
    %v1119 = vpop.f32.mrf.mxu0
    %v1120 = vadd.f32 %v161, %v1119
    %v1121 = vpop.f32.mrf.mxu0
    %1122 = vdwg.mxu0
    %1123 = vmatpush.bf16.msra.mxu0 0
    %1124 = vmatpush.bf16.msra.mxu0 0
    %1125 = vmatpush.bf16.msra.mxu0 0
    %1126 = vmatpush.bf16.msra.mxu0 0
    %1127 = vmatpush.bf16.msra.mxu0 %v1099
    %1128 = vmatpush.bf16.msra.mxu0 %v1097
    %1129 = vmatpush.bf16.msra.mxu0 %v1095
    %1130 = vmatpush.bf16.msra.mxu0 %v1093
    %1131 = vmatmul.bf16.gmra.mxu0 %v1108
    %v1132 = vpop.f32.mrf.mxu0
    %v1133 = vadd.f32 %v162, %v1132
    %v1134 = vpop.f32.mrf.mxu0
    %1135 = vdwg.mxu0
    %1137 = vrot.lane.b32.xlu0 %v1120, 32
    %v1138 = vpop.permute.xlu0 %1137
    %v1140 = vadd.f32 %v1120, %v1138
    %v1141 = vxor.u32 %v1140, 2147483648
    %v1142 = vmul.f32 %v1141, 1.442695
    %v1143 = vpow.pop %v1142
    %v1144 = vadd.f32 %v1143, 1.0
    %v1145 = vrcp.pop %v1144
    %v1146 = vmul.f32 %v1144, %v1145
    %v1147 = vsub.f32 1.0, %v1146
    %v1148 = vmul.f32 %v1145, %v1147
    %v1149 = vadd.f32 %v1145, %v1148
    %vm1150 = vweird.f32 %v1144
    %vm1151 = vweird.f32 %v1145
    %vm1152 = vmor %vm1150, %vm1151
    %v1153 = vsel %vm1152, %v1145, %v1149
    %v1154 = vand.u32 2147483647, %v1144
    %vm1155 = vcmp.eq.f32.partialorder %v1154, 8.507059e+37
    %v1156 = vand.u32 %v1144, 2147483648
    %v1157 = vor.u32 1.1754944e-38, %v1156
    %v1158 = vsel %vm1155, %v1157, %v1153
    %v1159 = vmul.f32 1.0, %v1158
    %1161 = vrot.lane.b32.xlu0 %v1133, 32
    %v1162 = vpop.permute.xlu0 %1161
    %v1164 = vadd.f32 %v1120, %v1162
    %v1165 = vxor.u32 %v1164, 2147483648
    %v1166 = vmul.f32 %v1165, 1.442695
    %v1167 = vpow.pop %v1166
    %v1168 = vadd.f32 %v1167, 1.0
    %v1169 = vrcp.pop %v1168
    %v1170 = vmul.f32 %v1168, %v1169
    %v1171 = vsub.f32 1.0, %v1170
    %v1172 = vmul.f32 %v1169, %v1171
    %v1173 = vadd.f32 %v1169, %v1172
    %vm1174 = vweird.f32 %v1168
    %vm1175 = vweird.f32 %v1169
    %vm1176 = vmor %vm1174, %vm1175
    %v1177 = vsel %vm1176, %v1169, %v1173
    %v1178 = vand.u32 2147483647, %v1168
    %vm1179 = vcmp.eq.f32.partialorder %v1178, 8.507059e+37
    %v1180 = vand.u32 %v1168, 2147483648
    %v1181 = vor.u32 1.1754944e-38, %v1180
    %v1182 = vsel %vm1179, %v1181, %v1177
    %v1183 = vmul.f32 1.0, %v1182
    %1184 = vrot.lane.b32.xlu0 %v1133, 96
    %v1185 = vpop.permute.xlu0 %1184
    %v1187 = vmul.f32 %v1159, %v1185
    %1189 = vrot.lane.b32.xlu0 %v1187, 64
    %v1190 = vpop.permute.xlu0 %1189
    %v1192 = vadd.f32 %v1120, %v1190
    %v1193 = vtanh.pop %v1192
    %v1194 = vsub.f32 1.0, %v1183
    %1196 = vrot.lane.b32.xlu0 %v1193, 96
    %v1197 = vpop.permute.xlu0 %1196
    %v1199 = vmul.f32 %v1194, %v1197
    %v1200 = vmul.f32 %v1183, %v303
    %v1201 = vadd.f32 %v1199, %v1200
    %v1202 = vld [vmem:[#allocation2] sm:$0xff]
    %v1203 = vld [vmem:[#allocation2 + $0x8] sm:$0xff]
    %v1204 = vld [vmem:[#allocation2 + $0x10] sm:$0xff]
    %v1205 = vld [vmem:[#allocation2 + $0x18] sm:$0xff]
    %v1206 = vld [vmem:[#allocation2 + $0x20] sm:$0xff]
    %v1207 = vld [vmem:[#allocation2 + $0x28] sm:$0xff]
    %v1208 = vld [vmem:[#allocation2 + $0x30] sm:$0xff]
    %v1209 = vld [vmem:[#allocation2 + $0x38] sm:$0xff]
    %v1211 = vrot.slane %v1201, 1
    %v1212 = vrot.slane %v1201, 2
    %v1213 = vrot.slane %v1201, 3
    %v1214 = vrot.slane %v1201, 4
    %v1215 = vrot.slane %v1201, 5
    %v1216 = vrot.slane %v1201, 6
    %v1217 = vrot.slane %v1201, 7
    %v1218 = vperm.slane %v1201, 0
    %v1219 = vperm.slane %v1211, 0
    %v1220 = vperm.slane %v1212, 0
    %v1221 = vperm.slane %v1213, 0
    %v1222 = vperm.slane %v1214, 0
    %v1223 = vperm.slane %v1215, 0
    %v1224 = vperm.slane %v1216, 0
    %v1225 = vperm.slane %v1217, 0
    %1242 = vrot.lane.b32.xlu0 %v1202, 32
    %v1243 = vpop.permute.xlu0 %1242
    %1244 = vrot.lane.b32.xlu0 %v1203, 32
    %v1245 = vpop.permute.xlu0 %1244
    %1246 = vrot.lane.b32.xlu0 %v1204, 32
    %v1247 = vpop.permute.xlu0 %1246
    %1248 = vrot.lane.b32.xlu0 %v1205, 32
    %v1249 = vpop.permute.xlu0 %1248
    %1250 = vrot.lane.b32.xlu0 %v1206, 32
    %v1251 = vpop.permute.xlu0 %1250
    %1252 = vrot.lane.b32.xlu0 %v1207, 32
    %v1253 = vpop.permute.xlu0 %1252
    %1254 = vrot.lane.b32.xlu0 %v1208, 32
    %v1255 = vpop.permute.xlu0 %1254
    %1256 = vrot.lane.b32.xlu0 %v1209, 32
    %v1257 = vpop.permute.xlu0 %1256
    %v1266 = vmul.f32 %v1218, %v1243
    %v1267 = vmul.f32 %v1219, %v1245
    %v1268 = vmul.f32 %v1220, %v1247
    %v1269 = vmul.f32 %v1221, %v1249
    %v1270 = vmul.f32 %v1222, %v1251
    %v1271 = vmul.f32 %v1223, %v1253
    %v1272 = vmul.f32 %v1224, %v1255
    %v1273 = vmul.f32 %v1225, %v1257
    %1282 = vrot.lane.b32.xlu0 %v1266, 96
    %v1283 = vpop.permute.xlu0 %1282
    %1284 = vrot.lane.b32.xlu0 %v1267, 96
    %v1285 = vpop.permute.xlu0 %1284
    %1286 = vrot.lane.b32.xlu0 %v1268, 96
    %v1287 = vpop.permute.xlu0 %1286
    %1288 = vrot.lane.b32.xlu0 %v1269, 96
    %v1289 = vpop.permute.xlu0 %1288
    %1290 = vrot.lane.b32.xlu0 %v1270, 96
    %v1291 = vpop.permute.xlu0 %1290
    %1292 = vrot.lane.b32.xlu0 %v1271, 96
    %v1293 = vpop.permute.xlu0 %1292
    %1294 = vrot.lane.b32.xlu0 %v1272, 96
    %v1295 = vpop.permute.xlu0 %1294
    %1296 = vrot.lane.b32.xlu0 %v1273, 96
    %v1297 = vpop.permute.xlu0 %1296
    %v1306 = vsel %vm148, %v1283, 0.0
    %1307 = vadd.xlane.f32.xlu0 %v1306
    %v1308 = vpop.xlane.xlu0 %1307
    %v1309 = vsel %vm148, %v1285, 0.0
    %1310 = vadd.xlane.f32.xlu0 %v1309
    %v1311 = vpop.xlane.xlu0 %1310
    %v1312 = vsel %vm148, %v1287, 0.0
    %1313 = vadd.xlane.f32.xlu0 %v1312
    %v1314 = vpop.xlane.xlu0 %1313
    %v1315 = vsel %vm148, %v1289, 0.0
    %1316 = vadd.xlane.f32.xlu0 %v1315
    %v1317 = vpop.xlane.xlu0 %1316
    %v1318 = vsel %vm148, %v1291, 0.0
    %1319 = vadd.xlane.f32.xlu0 %v1318
    %v1320 = vpop.xlane.xlu0 %1319
    %v1321 = vsel %vm148, %v1293, 0.0
    %1322 = vadd.xlane.f32.xlu0 %v1321
    %v1323 = vpop.xlane.xlu0 %1322
    %v1324 = vsel %vm148, %v1295, 0.0
    %1325 = vadd.xlane.f32.xlu0 %v1324
    %v1326 = vpop.xlane.xlu0 %1325
    %v1327 = vsel %vm148, %v1297, 0.0
    %1328 = vadd.xlane.f32.xlu0 %v1327
    %v1329 = vpop.xlane.xlu0 %1328
    %v1338 = vperm.slane %v1308, %v61
    %v1339 = vperm.slane %v1311, %v61
    %v1340 = vperm.slane %v1314, %v61
    %v1341 = vperm.slane %v1317, %v61
    %v1342 = vperm.slane %v1320, %v61
    %v1343 = vperm.slane %v1323, %v61
    %v1344 = vperm.slane %v1326, %v61
    %v1345 = vperm.slane %v1329, %v61
    %v1346 = vsel %vm448, %v1339, %v1338
    %v1347 = vsel %vm450, %v1340, %v1346
    %v1348 = vsel %vm452, %v1341, %v1347
    %v1349 = vsel %vm454, %v1342, %v1348
    %v1350 = vsel %vm456, %v1343, %v1349
    %v1351 = vsel %vm458, %v1344, %v1350
    %v1352 = vsel %vm460, %v1345, %v1351
    %v1354 = vsel %vm463, %v1352, -inf
    %1355 = vmax.xlane.f32.xlu0 %v1354
    %v1356 = vpop.xlane.xlu0 %1355
    %v1358 = vperm.slane %v1356, 0
    %v1359 = vperm.slane %v1356, 1
    %v1360 = vperm.slane %v1356, 2
    %v1361 = vperm.slane %v1356, 3
    %v1362 = vperm.slane %v1356, 4
    %v1363 = vperm.slane %v1356, 5
    %v1364 = vperm.slane %v1356, 6
    %v1365 = vperm.slane %v1356, 7
    %v1374 = vsub.f32 %v1308, %v1358
    %v1375 = vsub.f32 %v1311, %v1359
    %v1376 = vsub.f32 %v1314, %v1360
    %v1377 = vsub.f32 %v1317, %v1361
    %v1378 = vsub.f32 %v1320, %v1362
    %v1379 = vsub.f32 %v1323, %v1363
    %v1380 = vsub.f32 %v1326, %v1364
    %v1381 = vsub.f32 %v1329, %v1365
    %v1382 = vmul.f32 %v1374, 1.442695
    %v1383 = vpow.pop %v1382
    %v1384 = vmul.f32 %v1375, 1.442695
    %v1385 = vpow.pop %v1384
    %v1386 = vmul.f32 %v1376, 1.442695
    %v1387 = vpow.pop %v1386
    %v1388 = vmul.f32 %v1377, 1.442695
    %v1389 = vpow.pop %v1388
    %v1390 = vmul.f32 %v1378, 1.442695
    %v1391 = vpow.pop %v1390
    %v1392 = vmul.f32 %v1379, 1.442695
    %v1393 = vpow.pop %v1392
    %v1394 = vmul.f32 %v1380, 1.442695
    %v1395 = vpow.pop %v1394
    %v1396 = vmul.f32 %v1381, 1.442695
    %v1397 = vpow.pop %v1396
    %1406 = vset.pattern.permute.xlu0 0
    %1407 = vperm.xlu0 %1406, %v1383
    %v1408 = vpop.permute.xlu0 %1407
    %1409 = vset.pattern.permute.xlu0 0
    %1410 = vperm.xlu0 %1409, %v1385
    %v1411 = vpop.permute.xlu0 %1410
    %1412 = vset.pattern.permute.xlu0 0
    %1413 = vperm.xlu0 %1412, %v1387
    %v1414 = vpop.permute.xlu0 %1413
    %1415 = vset.pattern.permute.xlu0 0
    %1416 = vperm.xlu0 %1415, %v1389
    %v1417 = vpop.permute.xlu0 %1416
    %1418 = vset.pattern.permute.xlu0 0
    %1419 = vperm.xlu0 %1418, %v1391
    %v1420 = vpop.permute.xlu0 %1419
    %1421 = vset.pattern.permute.xlu0 0
    %1422 = vperm.xlu0 %1421, %v1393
    %v1423 = vpop.permute.xlu0 %1422
    %1424 = vset.pattern.permute.xlu0 0
    %1425 = vperm.xlu0 %1424, %v1395
    %v1426 = vpop.permute.xlu0 %1425
    %1427 = vset.pattern.permute.xlu0 0
    %1428 = vperm.xlu0 %1427, %v1397
    %v1429 = vpop.permute.xlu0 %1428
    %v1430 = vperm.slane %v1408, %v61
    %v1431 = vperm.slane %v1411, %v61
    %v1432 = vperm.slane %v1414, %v61
    %v1433 = vperm.slane %v1417, %v61
    %v1434 = vperm.slane %v1420, %v61
    %v1435 = vperm.slane %v1423, %v61
    %v1436 = vperm.slane %v1426, %v61
    %v1437 = vperm.slane %v1429, %v61
    %v1438 = vsel %vm448, %v1431, %v1430
    %v1439 = vsel %vm450, %v1432, %v1438
    %v1440 = vsel %vm452, %v1433, %v1439
    %v1441 = vsel %vm454, %v1434, %v1440
    %v1442 = vsel %vm456, %v1435, %v1441
    %v1443 = vsel %vm458, %v1436, %v1442
    %v1444 = vsel %vm460, %v1437, %v1443
    %v1446 = vsel %vm463, %v1444, 0.0
    %1447 = vadd.xlane.f32.xlu0 %v1446
    %v1448 = vpop.xlane.xlu0 %1447
    %v1450 = vperm.slane %v1448, 0
    %v1451 = vperm.slane %v1448, 1
    %v1452 = vperm.slane %v1448, 2
    %v1453 = vperm.slane %v1448, 3
    %v1454 = vperm.slane %v1448, 4
    %v1455 = vperm.slane %v1448, 5
    %v1456 = vperm.slane %v1448, 6
    %v1457 = vperm.slane %v1448, 7
    %v1466 = vrcp.pop %v1450
    %v1467 = vmul.f32 %v1450, %v1466
    %v1468 = vsub.f32 1.0, %v1467
    %v1469 = vmul.f32 %v1466, %v1468
    %v1470 = vadd.f32 %v1466, %v1469
    %vm1471 = vweird.f32 %v1450
    %vm1472 = vweird.f32 %v1466
    %vm1473 = vmor %vm1471, %vm1472
    %v1474 = vsel %vm1473, %v1466, %v1470
    %v1475 = vand.u32 2147483647, %v1450
    %vm1476 = vcmp.eq.f32.partialorder %v1475, 8.507059e+37
    %v1477 = vand.u32 %v1450, 2147483648
    %v1478 = vor.u32 1.1754944e-38, %v1477
    %v1479 = vsel %vm1476, %v1478, %v1474
    %v1480 = vmul.f32 %v1383, %v1479
    %v1481 = vrcp.pop %v1451
    %v1482 = vmul.f32 %v1451, %v1481
    %v1483 = vsub.f32 1.0, %v1482
    %v1484 = vmul.f32 %v1481, %v1483
    %v1485 = vadd.f32 %v1481, %v1484
    %vm1486 = vweird.f32 %v1451
    %vm1487 = vweird.f32 %v1481
    %vm1488 = vmor %vm1486, %vm1487
    %v1489 = vsel %vm1488, %v1481, %v1485
    %v1490 = vand.u32 2147483647, %v1451
    %vm1491 = vcmp.eq.f32.partialorder %v1490, 8.507059e+37
    %v1492 = vand.u32 %v1451, 2147483648
    %v1493 = vor.u32 1.1754944e-38, %v1492
    %v1494 = vsel %vm1491, %v1493, %v1489
    %v1495 = vmul.f32 %v1385, %v1494
    %v1496 = vrcp.pop %v1452
    %v1497 = vmul.f32 %v1452, %v1496
    %v1498 = vsub.f32 1.0, %v1497
    %v1499 = vmul.f32 %v1496, %v1498
    %v1500 = vadd.f32 %v1496, %v1499
    %vm1501 = vweird.f32 %v1452
    %vm1502 = vweird.f32 %v1496
    %vm1503 = vmor %vm1501, %vm1502
    %v1504 = vsel %vm1503, %v1496, %v1500
    %v1505 = vand.u32 2147483647, %v1452
    %vm1506 = vcmp.eq.f32.partialorder %v1505, 8.507059e+37
    %v1507 = vand.u32 %v1452, 2147483648
    %v1508 = vor.u32 1.1754944e-38, %v1507
    %v1509 = vsel %vm1506, %v1508, %v1504
    %v1510 = vmul.f32 %v1387, %v1509
    %v1511 = vrcp.pop %v1453
    %v1512 = vmul.f32 %v1453, %v1511
    %v1513 = vsub.f32 1.0, %v1512
    %v1514 = vmul.f32 %v1511, %v1513
    %v1515 = vadd.f32 %v1511, %v1514
    %vm1516 = vweird.f32 %v1453
    %vm1517 = vweird.f32 %v1511
    %vm1518 = vmor %vm1516, %vm1517
    %v1519 = vsel %vm1518, %v1511, %v1515
    %v1520 = vand.u32 2147483647, %v1453
    %vm1521 = vcmp.eq.f32.partialorder %v1520, 8.507059e+37
    %v1522 = vand.u32 %v1453, 2147483648
    %v1523 = vor.u32 1.1754944e-38, %v1522
    %v1524 = vsel %vm1521, %v1523, %v1519
    %v1525 = vmul.f32 %v1389, %v1524
    %v1526 = vrcp.pop %v1454
    %v1527 = vmul.f32 %v1454, %v1526
    %v1528 = vsub.f32 1.0, %v1527
    %v1529 = vmul.f32 %v1526, %v1528
    %v1530 = vadd.f32 %v1526, %v1529
    %vm1531 = vweird.f32 %v1454
    %vm1532 = vweird.f32 %v1526
    %vm1533 = vmor %vm1531, %vm1532
    %v1534 = vsel %vm1533, %v1526, %v1530
    %v1535 = vand.u32 2147483647, %v1454
    %vm1536 = vcmp.eq.f32.partialorder %v1535, 8.507059e+37
    %v1537 = vand.u32 %v1454, 2147483648
    %v1538 = vor.u32 1.1754944e-38, %v1537
    %v1539 = vsel %vm1536, %v1538, %v1534
    %v1540 = vmul.f32 %v1391, %v1539
    %v1541 = vrcp.pop %v1455
    %v1542 = vmul.f32 %v1455, %v1541
    %v1543 = vsub.f32 1.0, %v1542
    %v1544 = vmul.f32 %v1541, %v1543
    %v1545 = vadd.f32 %v1541, %v1544
    %vm1546 = vweird.f32 %v1455
    %vm1547 = vweird.f32 %v1541
    %vm1548 = vmor %vm1546, %vm1547
    %v1549 = vsel %vm1548, %v1541, %v1545
    %v1550 = vand.u32 2147483647, %v1455
    %vm1551 = vcmp.eq.f32.partialorder %v1550, 8.507059e+37
    %v1552 = vand.u32 %v1455, 2147483648
    %v1553 = vor.u32 1.1754944e-38, %v1552
    %v1554 = vsel %vm1551, %v1553, %v1549
    %v1555 = vmul.f32 %v1393, %v1554
    %v1556 = vrcp.pop %v1456
    %v1557 = vmul.f32 %v1456, %v1556
    %v1558 = vsub.f32 1.0, %v1557
    %v1559 = vmul.f32 %v1556, %v1558
    %v1560 = vadd.f32 %v1556, %v1559
    %vm1561 = vweird.f32 %v1456
    %vm1562 = vweird.f32 %v1556
    %vm1563 = vmor %vm1561, %vm1562
    %v1564 = vsel %vm1563, %v1556, %v1560
    %v1565 = vand.u32 2147483647, %v1456
    %vm1566 = vcmp.eq.f32.partialorder %v1565, 8.507059e+37
    %v1567 = vand.u32 %v1456, 2147483648
    %v1568 = vor.u32 1.1754944e-38, %v1567
    %v1569 = vsel %vm1566, %v1568, %v1564
    %v1570 = vmul.f32 %v1395, %v1569
    %v1571 = vrcp.pop %v1457
    %v1572 = vmul.f32 %v1457, %v1571
    %v1573 = vsub.f32 1.0, %v1572
    %v1574 = vmul.f32 %v1571, %v1573
    %v1575 = vadd.f32 %v1571, %v1574
    %vm1576 = vweird.f32 %v1457
    %vm1577 = vweird.f32 %v1571
    %vm1578 = vmor %vm1576, %vm1577
    %v1579 = vsel %vm1578, %v1571, %v1575
    %v1580 = vand.u32 2147483647, %v1457
    %vm1581 = vcmp.eq.f32.partialorder %v1580, 8.507059e+37
    %v1582 = vand.u32 %v1457, 2147483648
    %v1583 = vor.u32 1.1754944e-38, %v1582
    %v1584 = vsel %vm1581, %v1583, %v1579
    %v1585 = vmul.f32 %v1397, %v1584
    %1594 = vset.pattern.permute.xlu0 0
    %1595 = vperm.xlu0 %1594, %v1480
    %v1596 = vpop.permute.xlu0 %1595
    %1597 = vset.pattern.permute.xlu0 0
    %1598 = vperm.xlu0 %1597, %v1495
    %v1599 = vpop.permute.xlu0 %1598
    %1600 = vset.pattern.permute.xlu0 0
    %1601 = vperm.xlu0 %1600, %v1510
    %v1602 = vpop.permute.xlu0 %1601
    %1603 = vset.pattern.permute.xlu0 0
    %1604 = vperm.xlu0 %1603, %v1525
    %v1605 = vpop.permute.xlu0 %1604
    %1606 = vset.pattern.permute.xlu0 0
    %1607 = vperm.xlu0 %1606, %v1540
    %v1608 = vpop.permute.xlu0 %1607
    %1609 = vset.pattern.permute.xlu0 0
    %1610 = vperm.xlu0 %1609, %v1555
    %v1611 = vpop.permute.xlu0 %1610
    %1612 = vset.pattern.permute.xlu0 0
    %1613 = vperm.xlu0 %1612, %v1570
    %v1614 = vpop.permute.xlu0 %1613
    %1615 = vset.pattern.permute.xlu0 0
    %1616 = vperm.xlu0 %1615, %v1585
    %v1617 = vpop.permute.xlu0 %1616
    %v1618 = vperm.slane %v1596, %v61
    %v1619 = vperm.slane %v1599, %v61
    %v1620 = vperm.slane %v1602, %v61
    %v1621 = vperm.slane %v1605, %v61
    %v1622 = vperm.slane %v1608, %v61
    %v1623 = vperm.slane %v1611, %v61
    %v1624 = vperm.slane %v1614, %v61
    %v1625 = vperm.slane %v1617, %v61
    %v1626 = vsel %vm448, %v1619, %v1618
    %v1627 = vsel %vm450, %v1620, %v1626
    %v1628 = vsel %vm452, %v1621, %v1627
    %v1629 = vsel %vm454, %v1622, %v1628
    %v1630 = vsel %vm456, %v1623, %v1629
    %v1631 = vsel %vm458, %v1624, %v1630
    %v1632 = vsel %vm460, %v1625, %v1631
    %s1634 = scalar_lea.vmem [#allocation6], 8
    %1635 = vst.msk [vmem:[%s1634] sm:$0xff] %vm463, %v1632
    %v1644 = vmul.f32 %v1596, %v1202
    %v1645 = vmul.f32 %v1599, %v1203
    %v1646 = vmul.f32 %v1602, %v1204
    %v1647 = vmul.f32 %v1605, %v1205
    %v1648 = vmul.f32 %v1608, %v1206
    %v1649 = vmul.f32 %v1611, %v1207
    %v1650 = vmul.f32 %v1614, %v1208
    %v1651 = vmul.f32 %v1617, %v1209
    %v1652 = vsel %vm148, %v1644, 0.0
    %v1653 = vrot.slane %v1652, 4
    %v1654 = vadd.f32 %v1652, %v1653
    %v1655 = vrot.slane %v1654, 2
    %v1656 = vadd.f32 %v1654, %v1655
    %v1657 = vrot.slane %v1656, 1
    %v1658 = vadd.f32 %v1656, %v1657
    %v1659 = vsel %vm148, %v1645, 0.0
    %v1660 = vrot.slane %v1659, 4
    %v1661 = vadd.f32 %v1659, %v1660
    %v1662 = vrot.slane %v1661, 2
    %v1663 = vadd.f32 %v1661, %v1662
    %v1664 = vrot.slane %v1663, 1
    %v1665 = vadd.f32 %v1663, %v1664
    %v1666 = vsel %vm148, %v1646, 0.0
    %v1667 = vrot.slane %v1666, 4
    %v1668 = vadd.f32 %v1666, %v1667
    %v1669 = vrot.slane %v1668, 2
    %v1670 = vadd.f32 %v1668, %v1669
    %v1671 = vrot.slane %v1670, 1
    %v1672 = vadd.f32 %v1670, %v1671
    %v1673 = vsel %vm148, %v1647, 0.0
    %v1674 = vrot.slane %v1673, 4
    %v1675 = vadd.f32 %v1673, %v1674
    %v1676 = vrot.slane %v1675, 2
    %v1677 = vadd.f32 %v1675, %v1676
    %v1678 = vrot.slane %v1677, 1
    %v1679 = vadd.f32 %v1677, %v1678
    %v1680 = vsel %vm148, %v1648, 0.0
    %v1681 = vrot.slane %v1680, 4
    %v1682 = vadd.f32 %v1680, %v1681
    %v1683 = vrot.slane %v1682, 2
    %v1684 = vadd.f32 %v1682, %v1683
    %v1685 = vrot.slane %v1684, 1
    %v1686 = vadd.f32 %v1684, %v1685
    %v1687 = vsel %vm148, %v1649, 0.0
    %v1688 = vrot.slane %v1687, 4
    %v1689 = vadd.f32 %v1687, %v1688
    %v1690 = vrot.slane %v1689, 2
    %v1691 = vadd.f32 %v1689, %v1690
    %v1692 = vrot.slane %v1691, 1
    %v1693 = vadd.f32 %v1691, %v1692
    %v1694 = vsel %vm148, %v1650, 0.0
    %v1695 = vrot.slane %v1694, 4
    %v1696 = vadd.f32 %v1694, %v1695
    %v1697 = vrot.slane %v1696, 2
    %v1698 = vadd.f32 %v1696, %v1697
    %v1699 = vrot.slane %v1698, 1
    %v1700 = vadd.f32 %v1698, %v1699
    %v1701 = vsel %vm148, %v1651, 0.0
    %v1702 = vrot.slane %v1701, 4
    %v1703 = vadd.f32 %v1701, %v1702
    %v1704 = vrot.slane %v1703, 2
    %v1705 = vadd.f32 %v1703, %v1704
    %v1706 = vrot.slane %v1705, 1
    %v1707 = vadd.f32 %v1705, %v1706
    %v1708 = vpack.c.bf16 %v1658, %v1658
    %v1709 = vpack.c.bf16 %v1665, %v1665
    %v1710 = vpack.c.bf16 %v1672, %v1672
    %v1711 = vpack.c.bf16 %v1679, %v1679
    %v1712 = vpack.c.bf16 %v1686, %v1686
    %v1713 = vpack.c.bf16 %v1693, %v1693
    %v1714 = vpack.c.bf16 %v1700, %v1700
    %v1715 = vpack.c.bf16 %v1707, %v1707
    %v1716 = vpack.c.bf16 %v1201, %v1201
    %v1725 = vperm.slane %v1708, 0
    %v1726 = vperm.slane %v1709, 0
    %v1727 = vperm.slane %v1710, 0
    %v1728 = vperm.slane %v1711, 0
    %v1729 = vperm.slane %v1712, 0
    %v1730 = vperm.slane %v1713, 0
    %v1731 = vperm.slane %v1714, 0
    %v1732 = vperm.slane %v1715, 0
    %v1733 = vunpack.c.l.b16 %v1725
    %v1734 = vunpack.c.l.b16 %v1726
    %v1735 = vunpack.c.l.b16 %v1727
    %v1736 = vunpack.c.l.b16 %v1728
    %v1737 = vunpack.c.l.b16 %v1729
    %v1738 = vunpack.c.l.b16 %v1730
    %v1739 = vunpack.c.l.b16 %v1731
    %v1740 = vunpack.c.l.b16 %v1732
    %v1741 = vsel %vm448, %v1734, %v1733
    %v1742 = vsel %vm450, %v1735, %v1741
    %v1743 = vsel %vm452, %v1736, %v1742
    %v1744 = vsel %vm454, %v1737, %v1743
    %v1745 = vsel %vm456, %v1738, %v1744
    %v1746 = vsel %vm458, %v1739, %v1745
    %v1747 = vsel %vm460, %v1740, %v1746
    %v1748 = vpack.c.b16 %v1747, %v1747
    %v1751 = vsel %vm148, %v1748, %v1716
    %v1752 = vld [vmem:[%s3] sm:$0xf]
    %v1753 = vld [vmem:[%s3 + $0x4] sm:$0xf]
    %v1754 = vld [vmem:[%s3 + $0x8] sm:$0xf]
    %v1755 = vld [vmem:[%s3 + $0xc] sm:$0xf]
    %v1756 = vld [vmem:[%s3 + $0x10] sm:$0xf]
    %v1757 = vld [vmem:[%s3 + $0x14] sm:$0xf]
    %v1758 = vld [vmem:[%s3 + $0x18] sm:$0xf]
    %v1759 = vld [vmem:[%s3 + $0x1c] sm:$0xf]
    %v1768 = vunpack.c.l.b16 %v1752
    %v1769 = vunpack.c.l.b16 %v1753
    %v1770 = vunpack.c.l.b16 %v1754
    %v1771 = vunpack.c.l.b16 %v1755
    %v1772 = vunpack.c.l.b16 %v1756
    %v1773 = vunpack.c.l.b16 %v1757
    %v1774 = vunpack.c.l.b16 %v1758
    %v1775 = vunpack.c.l.b16 %v1759
    %v1776 = vpack.c.b16 %v1769, %v1768
    %v1777 = vpack.c.b16 %v1771, %v1770
    %v1778 = vpack.c.b16 %v1773, %v1772
    %v1779 = vpack.c.b16 %v1775, %v1774
    %v1784 = vsel %vm205, %v1751, 0
    %1786 = vmatpush.bf16.msra.mxu0 0
    %1787 = vmatpush.bf16.msra.mxu0 0
    %1788 = vmatpush.bf16.msra.mxu0 0
    %1789 = vmatpush.bf16.msra.mxu0 0
    %1790 = vmatpush.bf16.msra.mxu0 %v1779
    %1791 = vmatpush.bf16.msra.mxu0 %v1778
    %1792 = vmatpush.bf16.msra.mxu0 %v1777
    %1793 = vmatpush.bf16.msra.mxu0 %v1776
    %1794 = vmatmul.bf16.gmra.mxu0 %v1784
    %v1795 = vpop.f32.mrf.mxu0
    %v1796 = vadd.f32 %v870, %v1795
    %v1797 = vpop.f32.mrf.mxu0
    %1798 = vdwg.mxu0
    %v1799 = vtanh.pop %v1796
    %v1800 = vpack.c.bf16 %v1799, %v1799
    %v1801 = vld [vmem:[%s5] sm:$0xf]
    %v1802 = vld [vmem:[%s5 + $0x4] sm:$0xf]
    %v1803 = vld [vmem:[%s5 + $0x8] sm:$0xf]
    %v1804 = vld [vmem:[%s5 + $0xc] sm:$0xf]
    %v1809 = vunpack.c.l.b16 %v1801
    %v1810 = vunpack.c.l.b16 %v1802
    %v1811 = vunpack.c.l.b16 %v1803
    %v1812 = vunpack.c.l.b16 %v1804
    %v1813 = vpack.c.b16 %v1810, %v1809
    %v1814 = vpack.c.b16 %v1812, %v1811
    %v1818 = vsel %vm148, %v1800, 0
    %1820 = vmatpush.bf16.msra.mxu0 0
    %1821 = vmatpush.bf16.msra.mxu0 0
    %1822 = vmatpush.bf16.msra.mxu0 0
    %1823 = vmatpush.bf16.msra.mxu0 0
    %1824 = vmatpush.bf16.msra.mxu0 0
    %1825 = vmatpush.bf16.msra.mxu0 0
    %1826 = vmatpush.bf16.msra.mxu0 %v1814
    %1827 = vmatpush.bf16.msra.mxu0 %v1813
    %1828 = vmatmul.bf16.gmra.mxu0 %v1818
    %v1829 = vpop.f32.mrf.mxu0
    %v1830 = vadd.f32 %v918, %v1829
    %v1831 = vpop.f32.mrf.mxu0
    %1832 = vdwg.mxu0
    %1833 = vmax.xlane.f32.xlu0 %v1830
    %v1834 = vpop.xlane.xlu0 %1833
    %v1835 = vsub.f32 %v1830, %v1834
    %v1836 = vmul.f32 %v1835, 1.442695
    %v1837 = vpow.pop %v1836
    %1838 = vadd.xlane.f32.xlu0 %v1837
    %v1839 = vpop.xlane.xlu0 %1838
    %v1840 = vlog2.pop %v1839
    %v1841 = vmul.f32 %v1840, 0.6931472
    %v1842 = vadd.f32 %v1841, %v1834
    %v1843 = vsub.f32 %v1830, %v1842
    %s1844 = scalar_lea.vmem [#allocation5], 8
    %1845 = vst [vmem:[%s1844] sm:$0xff] %v1843
    %vm1846 = vcmp.eq.f32.partialorder %v1830, %v1834
    %v1847 = vsel %vm1846, %v61, 128
    %v1848 = vand.u32 %v1847, 65535
    %v1849 = vshra.s32 %v1847, 16
    %v1850 = vcvt.s32.f32 %v1848
    %v1851 = vcvt.s32.f32 %v1849
    %1852 = vmin.xlane.f32.xlu0 %v1851
    %v1853 = vpop.xlane.xlu0 %1852
    %vm1854 = vcmp.eq.f32.partialorder %v1851, %v1853
    %v1855 = vsel %vm1854, %v1850, inf
    %1856 = vmin.xlane.f32.xlu0 %v1855
    %v1857 = vpop.xlane.xlu0 %1856
    %v1858 = vcvt.f32.s32 %v1857
    %v1859 = vcvt.f32.s32 %v1853
    %v1860 = vshll.u32 %v1859, 16
    %v1861 = vadd.s32 %v1860, %v1858
    %vm1862 = vcmp.eq.s32.totalorder %v61, %v1861
    %v1863 = vsel %vm1862, 1, 0
    %v1864 = vcvt.s32.f32 %v1863
    %v1865 = vpack.c.bf16 %v1864, %v1864
    %v1866 = vld [vmem:[%s0] sm:$0xf]
    %v1867 = vld [vmem:[%s0 + $0x4] sm:$0xf]
    %v1868 = vld [vmem:[%s0 + $0x8] sm:$0xf]
    %v1869 = vld [vmem:[%s0 + $0xc] sm:$0xf]
    %v1870 = vld [vmem:[%s0 + $0x10] sm:$0xf]
    %v1871 = vld [vmem:[%s0 + $0x14] sm:$0xf]
    %v1872 = vld [vmem:[%s0 + $0x18] sm:$0xf]
    %v1873 = vld [vmem:[%s0 + $0x1c] sm:$0xf]
    %v1874 = vld [vmem:[%s0 + $0x20] sm:$0xf]
    %v1875 = vld [vmem:[%s0 + $0x24] sm:$0xf]
    %v1876 = vld [vmem:[%s0 + $0x28] sm:$0xf]
    %v1877 = vld [vmem:[%s0 + $0x2c] sm:$0xf]
    %v1878 = vld [vmem:[%s0 + $0x30] sm:$0xf]
    %v1879 = vld [vmem:[%s0 + $0x34] sm:$0xf]
    %v1880 = vld [vmem:[%s0 + $0x38] sm:$0xf]
    %v1881 = vld [vmem:[%s0 + $0x3c] sm:$0xf]
    %v1898 = vunpack.c.l.b16 %v1866
    %v1899 = vunpack.c.l.b16 %v1867
    %v1900 = vunpack.c.l.b16 %v1868
    %v1901 = vunpack.c.l.b16 %v1869
    %v1902 = vunpack.c.l.b16 %v1870
    %v1903 = vunpack.c.l.b16 %v1871
    %v1904 = vunpack.c.l.b16 %v1872
    %v1905 = vunpack.c.l.b16 %v1873
    %v1906 = vunpack.c.l.b16 %v1874
    %v1907 = vunpack.c.l.b16 %v1875
    %v1908 = vunpack.c.l.b16 %v1876
    %v1909 = vunpack.c.l.b16 %v1877
    %v1910 = vunpack.c.l.b16 %v1878
    %v1911 = vunpack.c.l.b16 %v1879
    %v1912 = vunpack.c.l.b16 %v1880
    %v1913 = vunpack.c.l.b16 %v1881
    %v1914 = vpack.c.b16 %v1899, %v1898
    %v1915 = vpack.c.b16 %v1901, %v1900
    %v1916 = vpack.c.b16 %v1903, %v1902
    %v1917 = vpack.c.b16 %v1905, %v1904
    %v1918 = vpack.c.b16 %v1907, %v1906
    %v1919 = vpack.c.b16 %v1909, %v1908
    %v1920 = vpack.c.b16 %v1911, %v1910
    %v1921 = vpack.c.b16 %v1913, %v1912
    %1930 = vmatpush.bf16.msra.mxu0 %v1921
    %1931 = vmatpush.bf16.msra.mxu0 %v1920
    %1932 = vmatpush.bf16.msra.mxu0 %v1919
    %1933 = vmatpush.bf16.msra.mxu0 %v1918
    %1934 = vmatpush.bf16.msra.mxu0 %v1917
    %1935 = vmatpush.bf16.msra.mxu0 %v1916
    %1936 = vmatpush.bf16.msra.mxu0 %v1915
    %1937 = vmatpush.bf16.msra.mxu0 %v1914
    %1938 = vmatmul.bf16.gmra.mxu0 %v1865
    %v1939 = vpop.f32.mrf.mxu0
    %v1940 = vadd.f32 0.0, %v1939
    %v1941 = vpop.f32.mrf.mxu0
    %1942 = vdwg.mxu0
    %v1943 = vpack.c.bf16 %v1940, %v1940
    %v1945 = vsel %vm148, %v1943, %v1716
    %v1946 = vld [vmem:[%s1] sm:$0xff]
    %v1947 = vld [vmem:[%s1 + $0x8] sm:$0xff]
    %v1948 = vld [vmem:[%s1 + $0x10] sm:$0xff]
    %v1949 = vld [vmem:[%s1 + $0x18] sm:$0xff]
    %v1950 = vld [vmem:[%s1 + $0x20] sm:$0xff]
    %v1951 = vld [vmem:[%s1 + $0x28] sm:$0xff]
    %v1952 = vld [vmem:[%s1 + $0x30] sm:$0xff]
    %v1953 = vld [vmem:[%s1 + $0x38] sm:$0xff]
    %v1962 = vunpack.c.l.b16 %v1946
    %v1963 = vunpack.c.h.b16 %v1946
    %v1964 = vunpack.c.l.b16 %v1947
    %v1965 = vunpack.c.h.b16 %v1947
    %v1966 = vunpack.c.l.b16 %v1948
    %v1967 = vunpack.c.h.b16 %v1948
    %v1968 = vunpack.c.l.b16 %v1949
    %v1969 = vunpack.c.h.b16 %v1949
    %v1970 = vunpack.c.l.b16 %v1950
    %v1971 = vunpack.c.h.b16 %v1950
    %v1972 = vunpack.c.l.b16 %v1951
    %v1973 = vunpack.c.h.b16 %v1951
    %v1974 = vunpack.c.l.b16 %v1952
    %v1975 = vunpack.c.h.b16 %v1952
    %v1976 = vunpack.c.l.b16 %v1953
    %v1977 = vunpack.c.h.b16 %v1953
    %v1978 = vpack.c.b16 %v1964, %v1962
    %v1979 = vpack.c.b16 %v1965, %v1963
    %v1980 = vpack.c.b16 %v1968, %v1966
    %v1981 = vpack.c.b16 %v1969, %v1967
    %v1982 = vpack.c.b16 %v1972, %v1970
    %v1983 = vpack.c.b16 %v1973, %v1971
    %v1984 = vpack.c.b16 %v1976, %v1974
    %v1985 = vpack.c.b16 %v1977, %v1975
    %v1994 = vsel %vm205, %v1945, 0
    %1996 = vmatpush.bf16.msra.mxu0 0
    %1997 = vmatpush.bf16.msra.mxu0 0
    %1998 = vmatpush.bf16.msra.mxu0 0
    %1999 = vmatpush.bf16.msra.mxu0 0
    %2000 = vmatpush.bf16.msra.mxu0 %v1984
    %2001 = vmatpush.bf16.msra.mxu0 %v1982
    %2002 = vmatpush.bf16.msra.mxu0 %v1980
    %2003 = vmatpush.bf16.msra.mxu0 %v1978
    %2004 = vmatmul.bf16.gmra.mxu0 %v1994
    %v2005 = vpop.f32.mrf.mxu0
    %v2006 = vadd.f32 %v161, %v2005
    %v2007 = vpop.f32.mrf.mxu0
    %2008 = vdwg.mxu0
    %2009 = vmatpush.bf16.msra.mxu0 0
    %2010 = vmatpush.bf16.msra.mxu0 0
    %2011 = vmatpush.bf16.msra.mxu0 0
    %2012 = vmatpush.bf16.msra.mxu0 0
    %2013 = vmatpush.bf16.msra.mxu0 %v1985
    %2014 = vmatpush.bf16.msra.mxu0 %v1983
    %2015 = vmatpush.bf16.msra.mxu0 %v1981
    %2016 = vmatpush.bf16.msra.mxu0 %v1979
    %2017 = vmatmul.bf16.gmra.mxu0 %v1994
    %v2018 = vpop.f32.mrf.mxu0
    %v2019 = vadd.f32 %v162, %v2018
    %v2020 = vpop.f32.mrf.mxu0
    %2021 = vdwg.mxu0
    %2023 = vrot.lane.b32.xlu0 %v2006, 32
    %v2024 = vpop.permute.xlu0 %2023
    %v2026 = vadd.f32 %v2006, %v2024
    %v2027 = vxor.u32 %v2026, 2147483648
    %v2028 = vmul.f32 %v2027, 1.442695
    %v2029 = vpow.pop %v2028
    %v2030 = vadd.f32 %v2029, 1.0
    %v2031 = vrcp.pop %v2030
    %v2032 = vmul.f32 %v2030, %v2031
    %v2033 = vsub.f32 1.0, %v2032
    %v2034 = vmul.f32 %v2031, %v2033
    %v2035 = vadd.f32 %v2031, %v2034
    %vm2036 = vweird.f32 %v2030
    %vm2037 = vweird.f32 %v2031
    %vm2038 = vmor %vm2036, %vm2037
    %v2039 = vsel %vm2038, %v2031, %v2035
    %v2040 = vand.u32 2147483647, %v2030
    %vm2041 = vcmp.eq.f32.partialorder %v2040, 8.507059e+37
    %v2042 = vand.u32 %v2030, 2147483648
    %v2043 = vor.u32 1.1754944e-38, %v2042
    %v2044 = vsel %vm2041, %v2043, %v2039
    %v2045 = vmul.f32 1.0, %v2044
    %2047 = vrot.lane.b32.xlu0 %v2019, 32
    %v2048 = vpop.permute.xlu0 %2047
    %v2050 = vadd.f32 %v2006, %v2048
    %v2051 = vxor.u32 %v2050, 2147483648
    %v2052 = vmul.f32 %v2051, 1.442695
    %v2053 = vpow.pop %v2052
    %v2054 = vadd.f32 %v2053, 1.0
    %v2055 = vrcp.pop %v2054
    %v2056 = vmul.f32 %v2054, %v2055
    %v2057 = vsub.f32 1.0, %v2056
    %v2058 = vmul.f32 %v2055, %v2057
    %v2059 = vadd.f32 %v2055, %v2058
    %vm2060 = vweird.f32 %v2054
    %vm2061 = vweird.f32 %v2055
    %vm2062 = vmor %vm2060, %vm2061
    %v2063 = vsel %vm2062, %v2055, %v2059
    %v2064 = vand.u32 2147483647, %v2054
    %vm2065 = vcmp.eq.f32.partialorder %v2064, 8.507059e+37
    %v2066 = vand.u32 %v2054, 2147483648
    %v2067 = vor.u32 1.1754944e-38, %v2066
    %v2068 = vsel %vm2065, %v2067, %v2063
    %v2069 = vmul.f32 1.0, %v2068
    %2070 = vrot.lane.b32.xlu0 %v2019, 96
    %v2071 = vpop.permute.xlu0 %2070
    %v2073 = vmul.f32 %v2045, %v2071
    %2075 = vrot.lane.b32.xlu0 %v2073, 64
    %v2076 = vpop.permute.xlu0 %2075
    %v2078 = vadd.f32 %v2006, %v2076
    %v2079 = vtanh.pop %v2078
    %v2080 = vsub.f32 1.0, %v2069
    %2082 = vrot.lane.b32.xlu0 %v2079, 96
    %v2083 = vpop.permute.xlu0 %2082
    %v2085 = vmul.f32 %v2080, %v2083
    %v2086 = vmul.f32 %v2069, %v1201
    %v2087 = vadd.f32 %v2085, %v2086
    %v2088 = vld [vmem:[#allocation2] sm:$0xff]
    %v2089 = vld [vmem:[#allocation2 + $0x8] sm:$0xff]
    %v2090 = vld [vmem:[#allocation2 + $0x10] sm:$0xff]
    %v2091 = vld [vmem:[#allocation2 + $0x18] sm:$0xff]
    %v2092 = vld [vmem:[#allocation2 + $0x20] sm:$0xff]
    %v2093 = vld [vmem:[#allocation2 + $0x28] sm:$0xff]
    %v2094 = vld [vmem:[#allocation2 + $0x30] sm:$0xff]
    %v2095 = vld [vmem:[#allocation2 + $0x38] sm:$0xff]
    %v2097 = vrot.slane %v2087, 1
    %v2098 = vrot.slane %v2087, 2
    %v2099 = vrot.slane %v2087, 3
    %v2100 = vrot.slane %v2087, 4
    %v2101 = vrot.slane %v2087, 5
    %v2102 = vrot.slane %v2087, 6
    %v2103 = vrot.slane %v2087, 7
    %v2104 = vperm.slane %v2087, 0
    %v2105 = vperm.slane %v2097, 0
    %v2106 = vperm.slane %v2098, 0
    %v2107 = vperm.slane %v2099, 0
    %v2108 = vperm.slane %v2100, 0
    %v2109 = vperm.slane %v2101, 0
    %v2110 = vperm.slane %v2102, 0
    %v2111 = vperm.slane %v2103, 0
    %2128 = vrot.lane.b32.xlu0 %v2088, 32
    %v2129 = vpop.permute.xlu0 %2128
    %2130 = vrot.lane.b32.xlu0 %v2089, 32
    %v2131 = vpop.permute.xlu0 %2130
    %2132 = vrot.lane.b32.xlu0 %v2090, 32
    %v2133 = vpop.permute.xlu0 %2132
    %2134 = vrot.lane.b32.xlu0 %v2091, 32
    %v2135 = vpop.permute.xlu0 %2134
    %2136 = vrot.lane.b32.xlu0 %v2092, 32
    %v2137 = vpop.permute.xlu0 %2136
    %2138 = vrot.lane.b32.xlu0 %v2093, 32
    %v2139 = vpop.permute.xlu0 %2138
    %2140 = vrot.lane.b32.xlu0 %v2094, 32
    %v2141 = vpop.permute.xlu0 %2140
    %2142 = vrot.lane.b32.xlu0 %v2095, 32
    %v2143 = vpop.permute.xlu0 %2142
    %v2152 = vmul.f32 %v2104, %v2129
    %v2153 = vmul.f32 %v2105, %v2131
    %v2154 = vmul.f32 %v2106, %v2133
    %v2155 = vmul.f32 %v2107, %v2135
    %v2156 = vmul.f32 %v2108, %v2137
    %v2157 = vmul.f32 %v2109, %v2139
    %v2158 = vmul.f32 %v2110, %v2141
    %v2159 = vmul.f32 %v2111, %v2143
    %2168 = vrot.lane.b32.xlu0 %v2152, 96
    %v2169 = vpop.permute.xlu0 %2168
    %2170 = vrot.lane.b32.xlu0 %v2153, 96
    %v2171 = vpop.permute.xlu0 %2170
    %2172 = vrot.lane.b32.xlu0 %v2154, 96
    %v2173 = vpop.permute.xlu0 %2172
    %2174 = vrot.lane.b32.xlu0 %v2155, 96
    %v2175 = vpop.permute.xlu0 %2174
    %2176 = vrot.lane.b32.xlu0 %v2156, 96
    %v2177 = vpop.permute.xlu0 %2176
    %2178 = vrot.lane.b32.xlu0 %v2157, 96
    %v2179 = vpop.permute.xlu0 %2178
    %2180 = vrot.lane.b32.xlu0 %v2158, 96
    %v2181 = vpop.permute.xlu0 %2180
    %2182 = vrot.lane.b32.xlu0 %v2159, 96
    %v2183 = vpop.permute.xlu0 %2182
    %v2192 = vsel %vm148, %v2169, 0.0
    %2193 = vadd.xlane.f32.xlu0 %v2192
    %v2194 = vpop.xlane.xlu0 %2193
    %v2195 = vsel %vm148, %v2171, 0.0
    %2196 = vadd.xlane.f32.xlu0 %v2195
    %v2197 = vpop.xlane.xlu0 %2196
    %v2198 = vsel %vm148, %v2173, 0.0
    %2199 = vadd.xlane.f32.xlu0 %v2198
    %v2200 = vpop.xlane.xlu0 %2199
    %v2201 = vsel %vm148, %v2175, 0.0
    %2202 = vadd.xlane.f32.xlu0 %v2201
    %v2203 = vpop.xlane.xlu0 %2202
    %v2204 = vsel %vm148, %v2177, 0.0
    %2205 = vadd.xlane.f32.xlu0 %v2204
    %v2206 = vpop.xlane.xlu0 %2205
    %v2207 = vsel %vm148, %v2179, 0.0
    %2208 = vadd.xlane.f32.xlu0 %v2207
    %v2209 = vpop.xlane.xlu0 %2208
    %v2210 = vsel %vm148, %v2181, 0.0
    %2211 = vadd.xlane.f32.xlu0 %v2210
    %v2212 = vpop.xlane.xlu0 %2211
    %v2213 = vsel %vm148, %v2183, 0.0
    %2214 = vadd.xlane.f32.xlu0 %v2213
    %v2215 = vpop.xlane.xlu0 %2214
    %v2224 = vperm.slane %v2194, %v61
    %v2225 = vperm.slane %v2197, %v61
    %v2226 = vperm.slane %v2200, %v61
    %v2227 = vperm.slane %v2203, %v61
    %v2228 = vperm.slane %v2206, %v61
    %v2229 = vperm.slane %v2209, %v61
    %v2230 = vperm.slane %v2212, %v61
    %v2231 = vperm.slane %v2215, %v61
    %v2232 = vsel %vm448, %v2225, %v2224
    %v2233 = vsel %vm450, %v2226, %v2232
    %v2234 = vsel %vm452, %v2227, %v2233
    %v2235 = vsel %vm454, %v2228, %v2234
    %v2236 = vsel %vm456, %v2229, %v2235
    %v2237 = vsel %vm458, %v2230, %v2236
    %v2238 = vsel %vm460, %v2231, %v2237
    %v2240 = vsel %vm463, %v2238, -inf
    %2241 = vmax.xlane.f32.xlu0 %v2240
    %v2242 = vpop.xlane.xlu0 %2241
    %v2244 = vperm.slane %v2242, 0
    %v2245 = vperm.slane %v2242, 1
    %v2246 = vperm.slane %v2242, 2
    %v2247 = vperm.slane %v2242, 3
    %v2248 = vperm.slane %v2242, 4
    %v2249 = vperm.slane %v2242, 5
    %v2250 = vperm.slane %v2242, 6
    %v2251 = vperm.slane %v2242, 7
    %v2260 = vsub.f32 %v2194, %v2244
    %v2261 = vsub.f32 %v2197, %v2245
    %v2262 = vsub.f32 %v2200, %v2246
    %v2263 = vsub.f32 %v2203, %v2247
    %v2264 = vsub.f32 %v2206, %v2248
    %v2265 = vsub.f32 %v2209, %v2249
    %v2266 = vsub.f32 %v2212, %v2250
    %v2267 = vsub.f32 %v2215, %v2251
    %v2268 = vmul.f32 %v2260, 1.442695
    %v2269 = vpow.pop %v2268
    %v2270 = vmul.f32 %v2261, 1.442695
    %v2271 = vpow.pop %v2270
    %v2272 = vmul.f32 %v2262, 1.442695
    %v2273 = vpow.pop %v2272
    %v2274 = vmul.f32 %v2263, 1.442695
    %v2275 = vpow.pop %v2274
    %v2276 = vmul.f32 %v2264, 1.442695
    %v2277 = vpow.pop %v2276
    %v2278 = vmul.f32 %v2265, 1.442695
    %v2279 = vpow.pop %v2278
    %v2280 = vmul.f32 %v2266, 1.442695
    %v2281 = vpow.pop %v2280
    %v2282 = vmul.f32 %v2267, 1.442695
    %v2283 = vpow.pop %v2282
    %2292 = vset.pattern.permute.xlu0 0
    %2293 = vperm.xlu0 %2292, %v2269
    %v2294 = vpop.permute.xlu0 %2293
    %2295 = vset.pattern.permute.xlu0 0
    %2296 = vperm.xlu0 %2295, %v2271
    %v2297 = vpop.permute.xlu0 %2296
    %2298 = vset.pattern.permute.xlu0 0
    %2299 = vperm.xlu0 %2298, %v2273
    %v2300 = vpop.permute.xlu0 %2299
    %2301 = vset.pattern.permute.xlu0 0
    %2302 = vperm.xlu0 %2301, %v2275
    %v2303 = vpop.permute.xlu0 %2302
    %2304 = vset.pattern.permute.xlu0 0
    %2305 = vperm.xlu0 %2304, %v2277
    %v2306 = vpop.permute.xlu0 %2305
    %2307 = vset.pattern.permute.xlu0 0
    %2308 = vperm.xlu0 %2307, %v2279
    %v2309 = vpop.permute.xlu0 %2308
    %2310 = vset.pattern.permute.xlu0 0
    %2311 = vperm.xlu0 %2310, %v2281
    %v2312 = vpop.permute.xlu0 %2311
    %2313 = vset.pattern.permute.xlu0 0
    %2314 = vperm.xlu0 %2313, %v2283
    %v2315 = vpop.permute.xlu0 %2314
    %v2316 = vperm.slane %v2294, %v61
    %v2317 = vperm.slane %v2297, %v61
    %v2318 = vperm.slane %v2300, %v61
    %v2319 = vperm.slane %v2303, %v61
    %v2320 = vperm.slane %v2306, %v61
    %v2321 = vperm.slane %v2309, %v61
    %v2322 = vperm.slane %v2312, %v61
    %v2323 = vperm.slane %v2315, %v61
    %v2324 = vsel %vm448, %v2317, %v2316
    %v2325 = vsel %vm450, %v2318, %v2324
    %v2326 = vsel %vm452, %v2319, %v2325
    %v2327 = vsel %vm454, %v2320, %v2326
    %v2328 = vsel %vm456, %v2321, %v2327
    %v2329 = vsel %vm458, %v2322, %v2328
    %v2330 = vsel %vm460, %v2323, %v2329
    %v2332 = vsel %vm463, %v2330, 0.0
    %2333 = vadd.xlane.f32.xlu0 %v2332
    %v2334 = vpop.xlane.xlu0 %2333
    %v2336 = vperm.slane %v2334, 0
    %v2337 = vperm.slane %v2334, 1
    %v2338 = vperm.slane %v2334, 2
    %v2339 = vperm.slane %v2334, 3
    %v2340 = vperm.slane %v2334, 4
    %v2341 = vperm.slane %v2334, 5
    %v2342 = vperm.slane %v2334, 6
    %v2343 = vperm.slane %v2334, 7
    %v2352 = vrcp.pop %v2336
    %v2353 = vmul.f32 %v2336, %v2352
    %v2354 = vsub.f32 1.0, %v2353
    %v2355 = vmul.f32 %v2352, %v2354
    %v2356 = vadd.f32 %v2352, %v2355
    %vm2357 = vweird.f32 %v2336
    %vm2358 = vweird.f32 %v2352
    %vm2359 = vmor %vm2357, %vm2358
    %v2360 = vsel %vm2359, %v2352, %v2356
    %v2361 = vand.u32 2147483647, %v2336
    %vm2362 = vcmp.eq.f32.partialorder %v2361, 8.507059e+37
    %v2363 = vand.u32 %v2336, 2147483648
    %v2364 = vor.u32 1.1754944e-38, %v2363
    %v2365 = vsel %vm2362, %v2364, %v2360
    %v2366 = vmul.f32 %v2269, %v2365
    %v2367 = vrcp.pop %v2337
    %v2368 = vmul.f32 %v2337, %v2367
    %v2369 = vsub.f32 1.0, %v2368
    %v2370 = vmul.f32 %v2367, %v2369
    %v2371 = vadd.f32 %v2367, %v2370
    %vm2372 = vweird.f32 %v2337
    %vm2373 = vweird.f32 %v2367
    %vm2374 = vmor %vm2372, %vm2373
    %v2375 = vsel %vm2374, %v2367, %v2371
    %v2376 = vand.u32 2147483647, %v2337
    %vm2377 = vcmp.eq.f32.partialorder %v2376, 8.507059e+37
    %v2378 = vand.u32 %v2337, 2147483648
    %v2379 = vor.u32 1.1754944e-38, %v2378
    %v2380 = vsel %vm2377, %v2379, %v2375
    %v2381 = vmul.f32 %v2271, %v2380
    %v2382 = vrcp.pop %v2338
    %v2383 = vmul.f32 %v2338, %v2382
    %v2384 = vsub.f32 1.0, %v2383
    %v2385 = vmul.f32 %v2382, %v2384
    %v2386 = vadd.f32 %v2382, %v2385
    %vm2387 = vweird.f32 %v2338
    %vm2388 = vweird.f32 %v2382
    %vm2389 = vmor %vm2387, %vm2388
    %v2390 = vsel %vm2389, %v2382, %v2386
    %v2391 = vand.u32 2147483647, %v2338
    %vm2392 = vcmp.eq.f32.partialorder %v2391, 8.507059e+37
    %v2393 = vand.u32 %v2338, 2147483648
    %v2394 = vor.u32 1.1754944e-38, %v2393
    %v2395 = vsel %vm2392, %v2394, %v2390
    %v2396 = vmul.f32 %v2273, %v2395
    %v2397 = vrcp.pop %v2339
    %v2398 = vmul.f32 %v2339, %v2397
    %v2399 = vsub.f32 1.0, %v2398
    %v2400 = vmul.f32 %v2397, %v2399
    %v2401 = vadd.f32 %v2397, %v2400
    %vm2402 = vweird.f32 %v2339
    %vm2403 = vweird.f32 %v2397
    %vm2404 = vmor %vm2402, %vm2403
    %v2405 = vsel %vm2404, %v2397, %v2401
    %v2406 = vand.u32 2147483647, %v2339
    %vm2407 = vcmp.eq.f32.partialorder %v2406, 8.507059e+37
    %v2408 = vand.u32 %v2339, 2147483648
    %v2409 = vor.u32 1.1754944e-38, %v2408
    %v2410 = vsel %vm2407, %v2409, %v2405
    %v2411 = vmul.f32 %v2275, %v2410
    %v2412 = vrcp.pop %v2340
    %v2413 = vmul.f32 %v2340, %v2412
    %v2414 = vsub.f32 1.0, %v2413
    %v2415 = vmul.f32 %v2412, %v2414
    %v2416 = vadd.f32 %v2412, %v2415
    %vm2417 = vweird.f32 %v2340
    %vm2418 = vweird.f32 %v2412
    %vm2419 = vmor %vm2417, %vm2418
    %v2420 = vsel %vm2419, %v2412, %v2416
    %v2421 = vand.u32 2147483647, %v2340
    %vm2422 = vcmp.eq.f32.partialorder %v2421, 8.507059e+37
    %v2423 = vand.u32 %v2340, 2147483648
    %v2424 = vor.u32 1.1754944e-38, %v2423
    %v2425 = vsel %vm2422, %v2424, %v2420
    %v2426 = vmul.f32 %v2277, %v2425
    %v2427 = vrcp.pop %v2341
    %v2428 = vmul.f32 %v2341, %v2427
    %v2429 = vsub.f32 1.0, %v2428
    %v2430 = vmul.f32 %v2427, %v2429
    %v2431 = vadd.f32 %v2427, %v2430
    %vm2432 = vweird.f32 %v2341
    %vm2433 = vweird.f32 %v2427
    %vm2434 = vmor %vm2432, %vm2433
    %v2435 = vsel %vm2434, %v2427, %v2431
    %v2436 = vand.u32 2147483647, %v2341
    %vm2437 = vcmp.eq.f32.partialorder %v2436, 8.507059e+37
    %v2438 = vand.u32 %v2341, 2147483648
    %v2439 = vor.u32 1.1754944e-38, %v2438
    %v2440 = vsel %vm2437, %v2439, %v2435
    %v2441 = vmul.f32 %v2279, %v2440
    %v2442 = vrcp.pop %v2342
    %v2443 = vmul.f32 %v2342, %v2442
    %v2444 = vsub.f32 1.0, %v2443
    %v2445 = vmul.f32 %v2442, %v2444
    %v2446 = vadd.f32 %v2442, %v2445
    %vm2447 = vweird.f32 %v2342
    %vm2448 = vweird.f32 %v2442
    %vm2449 = vmor %vm2447, %vm2448
    %v2450 = vsel %vm2449, %v2442, %v2446
    %v2451 = vand.u32 2147483647, %v2342
    %vm2452 = vcmp.eq.f32.partialorder %v2451, 8.507059e+37
    %v2453 = vand.u32 %v2342, 2147483648
    %v2454 = vor.u32 1.1754944e-38, %v2453
    %v2455 = vsel %vm2452, %v2454, %v2450
    %v2456 = vmul.f32 %v2281, %v2455
    %v2457 = vrcp.pop %v2343
    %v2458 = vmul.f32 %v2343, %v2457
    %v2459 = vsub.f32 1.0, %v2458
    %v2460 = vmul.f32 %v2457, %v2459
    %v2461 = vadd.f32 %v2457, %v2460
    %vm2462 = vweird.f32 %v2343
    %vm2463 = vweird.f32 %v2457
    %vm2464 = vmor %vm2462, %vm2463
    %v2465 = vsel %vm2464, %v2457, %v2461
    %v2466 = vand.u32 2147483647, %v2343
    %vm2467 = vcmp.eq.f32.partialorder %v2466, 8.507059e+37
    %v2468 = vand.u32 %v2343, 2147483648
    %v2469 = vor.u32 1.1754944e-38, %v2468
    %v2470 = vsel %vm2467, %v2469, %v2465
    %v2471 = vmul.f32 %v2283, %v2470
    %2480 = vset.pattern.permute.xlu0 0
    %2481 = vperm.xlu0 %2480, %v2366
    %v2482 = vpop.permute.xlu0 %2481
    %2483 = vset.pattern.permute.xlu0 0
    %2484 = vperm.xlu0 %2483, %v2381
    %v2485 = vpop.permute.xlu0 %2484
    %2486 = vset.pattern.permute.xlu0 0
    %2487 = vperm.xlu0 %2486, %v2396
    %v2488 = vpop.permute.xlu0 %2487
    %2489 = vset.pattern.permute.xlu0 0
    %2490 = vperm.xlu0 %2489, %v2411
    %v2491 = vpop.permute.xlu0 %2490
    %2492 = vset.pattern.permute.xlu0 0
    %2493 = vperm.xlu0 %2492, %v2426
    %v2494 = vpop.permute.xlu0 %2493
    %2495 = vset.pattern.permute.xlu0 0
    %2496 = vperm.xlu0 %2495, %v2441
    %v2497 = vpop.permute.xlu0 %2496
    %2498 = vset.pattern.permute.xlu0 0
    %2499 = vperm.xlu0 %2498, %v2456
    %v2500 = vpop.permute.xlu0 %2499
    %2501 = vset.pattern.permute.xlu0 0
    %2502 = vperm.xlu0 %2501, %v2471
    %v2503 = vpop.permute.xlu0 %2502
    %v2504 = vperm.slane %v2482, %v61
    %v2505 = vperm.slane %v2485, %v61
    %v2506 = vperm.slane %v2488, %v61
    %v2507 = vperm.slane %v2491, %v61
    %v2508 = vperm.slane %v2494, %v61
    %v2509 = vperm.slane %v2497, %v61
    %v2510 = vperm.slane %v2500, %v61
    %v2511 = vperm.slane %v2503, %v61
    %v2512 = vsel %vm448, %v2505, %v2504
    %v2513 = vsel %vm450, %v2506, %v2512
    %v2514 = vsel %vm452, %v2507, %v2513
    %v2515 = vsel %vm454, %v2508, %v2514
    %v2516 = vsel %vm456, %v2509, %v2515
    %v2517 = vsel %vm458, %v2510, %v2516
    %v2518 = vsel %vm460, %v2511, %v2517
    %s2520 = scalar_lea.vmem [#allocation6], 16
    %2521 = vst.msk [vmem:[%s2520] sm:$0xff] %vm463, %v2518
    %v2530 = vmul.f32 %v2482, %v2088
    %v2531 = vmul.f32 %v2485, %v2089
    %v2532 = vmul.f32 %v2488, %v2090
    %v2533 = vmul.f32 %v2491, %v2091
    %v2534 = vmul.f32 %v2494, %v2092
    %v2535 = vmul.f32 %v2497, %v2093
    %v2536 = vmul.f32 %v2500, %v2094
    %v2537 = vmul.f32 %v2503, %v2095
    %v2538 = vsel %vm148, %v2530, 0.0
    %v2539 = vrot.slane %v2538, 4
    %v2540 = vadd.f32 %v2538, %v2539
    %v2541 = vrot.slane %v2540, 2
    %v2542 = vadd.f32 %v2540, %v2541
    %v2543 = vrot.slane %v2542, 1
    %v2544 = vadd.f32 %v2542, %v2543
    %v2545 = vsel %vm148, %v2531, 0.0
    %v2546 = vrot.slane %v2545, 4
    %v2547 = vadd.f32 %v2545, %v2546
    %v2548 = vrot.slane %v2547, 2
    %v2549 = vadd.f32 %v2547, %v2548
    %v2550 = vrot.slane %v2549, 1
    %v2551 = vadd.f32 %v2549, %v2550
    %v2552 = vsel %vm148, %v2532, 0.0
    %v2553 = vrot.slane %v2552, 4
    %v2554 = vadd.f32 %v2552, %v2553
    %v2555 = vrot.slane %v2554, 2
    %v2556 = vadd.f32 %v2554, %v2555
    %v2557 = vrot.slane %v2556, 1
    %v2558 = vadd.f32 %v2556, %v2557
    %v2559 = vsel %vm148, %v2533, 0.0
    %v2560 = vrot.slane %v2559, 4
    %v2561 = vadd.f32 %v2559, %v2560
    %v2562 = vrot.slane %v2561, 2
    %v2563 = vadd.f32 %v2561, %v2562
    %v2564 = vrot.slane %v2563, 1
    %v2565 = vadd.f32 %v2563, %v2564
    %v2566 = vsel %vm148, %v2534, 0.0
    %v2567 = vrot.slane %v2566, 4
    %v2568 = vadd.f32 %v2566, %v2567
    %v2569 = vrot.slane %v2568, 2
    %v2570 = vadd.f32 %v2568, %v2569
    %v2571 = vrot.slane %v2570, 1
    %v2572 = vadd.f32 %v2570, %v2571
    %v2573 = vsel %vm148, %v2535, 0.0
    %v2574 = vrot.slane %v2573, 4
    %v2575 = vadd.f32 %v2573, %v2574
    %v2576 = vrot.slane %v2575, 2
    %v2577 = vadd.f32 %v2575, %v2576
    %v2578 = vrot.slane %v2577, 1
    %v2579 = vadd.f32 %v2577, %v2578
    %v2580 = vsel %vm148, %v2536, 0.0
    %v2581 = vrot.slane %v2580, 4
    %v2582 = vadd.f32 %v2580, %v2581
    %v2583 = vrot.slane %v2582, 2
    %v2584 = vadd.f32 %v2582, %v2583
    %v2585 = vrot.slane %v2584, 1
    %v2586 = vadd.f32 %v2584, %v2585
    %v2587 = vsel %vm148, %v2537, 0.0
    %v2588 = vrot.slane %v2587, 4
    %v2589 = vadd.f32 %v2587, %v2588
    %v2590 = vrot.slane %v2589, 2
    %v2591 = vadd.f32 %v2589, %v2590
    %v2592 = vrot.slane %v2591, 1
    %v2593 = vadd.f32 %v2591, %v2592
    %v2594 = vpack.c.bf16 %v2544, %v2544
    %v2595 = vpack.c.bf16 %v2551, %v2551
    %v2596 = vpack.c.bf16 %v2558, %v2558
    %v2597 = vpack.c.bf16 %v2565, %v2565
    %v2598 = vpack.c.bf16 %v2572, %v2572
    %v2599 = vpack.c.bf16 %v2579, %v2579
    %v2600 = vpack.c.bf16 %v2586, %v2586
    %v2601 = vpack.c.bf16 %v2593, %v2593
    %v2602 = vpack.c.bf16 %v2087, %v2087
    %v2611 = vperm.slane %v2594, 0
    %v2612 = vperm.slane %v2595, 0
    %v2613 = vperm.slane %v2596, 0
    %v2614 = vperm.slane %v2597, 0
    %v2615 = vperm.slane %v2598, 0
    %v2616 = vperm.slane %v2599, 0
    %v2617 = vperm.slane %v2600, 0
    %v2618 = vperm.slane %v2601, 0
    %v2619 = vunpack.c.l.b16 %v2611
    %v2620 = vunpack.c.l.b16 %v2612
    %v2621 = vunpack.c.l.b16 %v2613
    %v2622 = vunpack.c.l.b16 %v2614
    %v2623 = vunpack.c.l.b16 %v2615
    %v2624 = vunpack.c.l.b16 %v2616
    %v2625 = vunpack.c.l.b16 %v2617
    %v2626 = vunpack.c.l.b16 %v2618
    %v2627 = vsel %vm448, %v2620, %v2619
    %v2628 = vsel %vm450, %v2621, %v2627
    %v2629 = vsel %vm452, %v2622, %v2628
    %v2630 = vsel %vm454, %v2623, %v2629
    %v2631 = vsel %vm456, %v2624, %v2630
    %v2632 = vsel %vm458, %v2625, %v2631
    %v2633 = vsel %vm460, %v2626, %v2632
    %v2634 = vpack.c.b16 %v2633, %v2633
    %v2637 = vsel %vm148, %v2634, %v2602
    %v2638 = vld [vmem:[%s3] sm:$0xf]
    %v2639 = vld [vmem:[%s3 + $0x4] sm:$0xf]
    %v2640 = vld [vmem:[%s3 + $0x8] sm:$0xf]
    %v2641 = vld [vmem:[%s3 + $0xc] sm:$0xf]
    %v2642 = vld [vmem:[%s3 + $0x10] sm:$0xf]
    %v2643 = vld [vmem:[%s3 + $0x14] sm:$0xf]
    %v2644 = vld [vmem:[%s3 + $0x18] sm:$0xf]
    %v2645 = vld [vmem:[%s3 + $0x1c] sm:$0xf]
    %v2654 = vunpack.c.l.b16 %v2638
    %v2655 = vunpack.c.l.b16 %v2639
    %v2656 = vunpack.c.l.b16 %v2640
    %v2657 = vunpack.c.l.b16 %v2641
    %v2658 = vunpack.c.l.b16 %v2642
    %v2659 = vunpack.c.l.b16 %v2643
    %v2660 = vunpack.c.l.b16 %v2644
    %v2661 = vunpack.c.l.b16 %v2645
    %v2662 = vpack.c.b16 %v2655, %v2654
    %v2663 = vpack.c.b16 %v2657, %v2656
    %v2664 = vpack.c.b16 %v2659, %v2658
    %v2665 = vpack.c.b16 %v2661, %v2660
    %v2670 = vsel %vm205, %v2637, 0
    %2672 = vmatpush.bf16.msra.mxu0 0
    %2673 = vmatpush.bf16.msra.mxu0 0
    %2674 = vmatpush.bf16.msra.mxu0 0
    %2675 = vmatpush.bf16.msra.mxu0 0
    %2676 = vmatpush.bf16.msra.mxu0 %v2665
    %2677 = vmatpush.bf16.msra.mxu0 %v2664
    %2678 = vmatpush.bf16.msra.mxu0 %v2663
    %2679 = vmatpush.bf16.msra.mxu0 %v2662
    %2680 = vmatmul.bf16.gmra.mxu0 %v2670
    %v2681 = vpop.f32.mrf.mxu0
    %v2682 = vadd.f32 %v870, %v2681
    %v2683 = vpop.f32.mrf.mxu0
    %2684 = vdwg.mxu0
    %v2685 = vtanh.pop %v2682
    %v2686 = vpack.c.bf16 %v2685, %v2685
    %v2687 = vld [vmem:[%s5] sm:$0xf]
    %v2688 = vld [vmem:[%s5 + $0x4] sm:$0xf]
    %v2689 = vld [vmem:[%s5 + $0x8] sm:$0xf]
    %v2690 = vld [vmem:[%s5 + $0xc] sm:$0xf]
    %v2695 = vunpack.c.l.b16 %v2687
    %v2696 = vunpack.c.l.b16 %v2688
    %v2697 = vunpack.c.l.b16 %v2689
    %v2698 = vunpack.c.l.b16 %v2690
    %v2699 = vpack.c.b16 %v2696, %v2695
    %v2700 = vpack.c.b16 %v2698, %v2697
    %v2704 = vsel %vm148, %v2686, 0
    %2706 = vmatpush.bf16.msra.mxu0 0
    %2707 = vmatpush.bf16.msra.mxu0 0
    %2708 = vmatpush.bf16.msra.mxu0 0
    %2709 = vmatpush.bf16.msra.mxu0 0
    %2710 = vmatpush.bf16.msra.mxu0 0
    %2711 = vmatpush.bf16.msra.mxu0 0
    %2712 = vmatpush.bf16.msra.mxu0 %v2700
    %2713 = vmatpush.bf16.msra.mxu0 %v2699
    %2714 = vmatmul.bf16.gmra.mxu0 %v2704
    %v2715 = vpop.f32.mrf.mxu0
    %v2716 = vadd.f32 %v918, %v2715
    %v2717 = vpop.f32.mrf.mxu0
    %2718 = vdwg.mxu0
    %2719 = vmax.xlane.f32.xlu0 %v2716
    %v2720 = vpop.xlane.xlu0 %2719
    %v2721 = vsub.f32 %v2716, %v2720
    %v2722 = vmul.f32 %v2721, 1.442695
    %v2723 = vpow.pop %v2722
    %2724 = vadd.xlane.f32.xlu0 %v2723
    %v2725 = vpop.xlane.xlu0 %2724
    %v2726 = vlog2.pop %v2725
    %v2727 = vmul.f32 %v2726, 0.6931472
    %v2728 = vadd.f32 %v2727, %v2720
    %v2729 = vsub.f32 %v2716, %v2728
    %s2730 = scalar_lea.vmem [#allocation5], 16
    %2731 = vst [vmem:[%s2730] sm:$0xff] %v2729
    %vm2732 = vcmp.eq.f32.partialorder %v2716, %v2720
    %v2733 = vsel %vm2732, %v61, 128
    %v2734 = vand.u32 %v2733, 65535
    %v2735 = vshra.s32 %v2733, 16
    %v2736 = vcvt.s32.f32 %v2734
    %v2737 = vcvt.s32.f32 %v2735
    %2738 = vmin.xlane.f32.xlu0 %v2737
    %v2739 = vpop.xlane.xlu0 %2738
    %vm2740 = vcmp.eq.f32.partialorder %v2737, %v2739
    %v2741 = vsel %vm2740, %v2736, inf
    %2742 = vmin.xlane.f32.xlu0 %v2741
    %v2743 = vpop.xlane.xlu0 %2742
    %v2744 = vcvt.f32.s32 %v2743
    %v2745 = vcvt.f32.s32 %v2739
    %v2746 = vshll.u32 %v2745, 16
    %v2747 = vadd.s32 %v2746, %v2744
    %vm2748 = vcmp.eq.s32.totalorder %v61, %v2747
    %v2749 = vsel %vm2748, 1, 0
    %v2750 = vcvt.s32.f32 %v2749
    %v2751 = vpack.c.bf16 %v2750, %v2750
    %v2752 = vld [vmem:[%s0] sm:$0xf]
    %v2753 = vld [vmem:[%s0 + $0x4] sm:$0xf]
    %v2754 = vld [vmem:[%s0 + $0x8] sm:$0xf]
    %v2755 = vld [vmem:[%s0 + $0xc] sm:$0xf]
    %v2756 = vld [vmem:[%s0 + $0x10] sm:$0xf]
    %v2757 = vld [vmem:[%s0 + $0x14] sm:$0xf]
    %v2758 = vld [vmem:[%s0 + $0x18] sm:$0xf]
    %v2759 = vld [vmem:[%s0 + $0x1c] sm:$0xf]
    %v2760 = vld [vmem:[%s0 + $0x20] sm:$0xf]
    %v2761 = vld [vmem:[%s0 + $0x24] sm:$0xf]
    %v2762 = vld [vmem:[%s0 + $0x28] sm:$0xf]
    %v2763 = vld [vmem:[%s0 + $0x2c] sm:$0xf]
    %v2764 = vld [vmem:[%s0 + $0x30] sm:$0xf]
    %v2765 = vld [vmem:[%s0 + $0x34] sm:$0xf]
    %v2766 = vld [vmem:[%s0 + $0x38] sm:$0xf]
    %v2767 = vld [vmem:[%s0 + $0x3c] sm:$0xf]
    %v2784 = vunpack.c.l.b16 %v2752
    %v2785 = vunpack.c.l.b16 %v2753
    %v2786 = vunpack.c.l.b16 %v2754
    %v2787 = vunpack.c.l.b16 %v2755
    %v2788 = vunpack.c.l.b16 %v2756
    %v2789 = vunpack.c.l.b16 %v2757
    %v2790 = vunpack.c.l.b16 %v2758
    %v2791 = vunpack.c.l.b16 %v2759
    %v2792 = vunpack.c.l.b16 %v2760
    %v2793 = vunpack.c.l.b16 %v2761
    %v2794 = vunpack.c.l.b16 %v2762
    %v2795 = vunpack.c.l.b16 %v2763
    %v2796 = vunpack.c.l.b16 %v2764
    %v2797 = vunpack.c.l.b16 %v2765
    %v2798 = vunpack.c.l.b16 %v2766
    %v2799 = vunpack.c.l.b16 %v2767
    %v2800 = vpack.c.b16 %v2785, %v2784
    %v2801 = vpack.c.b16 %v2787, %v2786
    %v2802 = vpack.c.b16 %v2789, %v2788
    %v2803 = vpack.c.b16 %v2791, %v2790
    %v2804 = vpack.c.b16 %v2793, %v2792
    %v2805 = vpack.c.b16 %v2795, %v2794
    %v2806 = vpack.c.b16 %v2797, %v2796
    %v2807 = vpack.c.b16 %v2799, %v2798
    %2816 = vmatpush.bf16.msra.mxu0 %v2807
    %2817 = vmatpush.bf16.msra.mxu0 %v2806
    %2818 = vmatpush.bf16.msra.mxu0 %v2805
    %2819 = vmatpush.bf16.msra.mxu0 %v2804
    %2820 = vmatpush.bf16.msra.mxu0 %v2803
    %2821 = vmatpush.bf16.msra.mxu0 %v2802
    %2822 = vmatpush.bf16.msra.mxu0 %v2801
    %2823 = vmatpush.bf16.msra.mxu0 %v2800
    %2824 = vmatmul.bf16.gmra.mxu0 %v2751
    %v2825 = vpop.f32.mrf.mxu0
    %v2826 = vadd.f32 0.0, %v2825
    %v2827 = vpop.f32.mrf.mxu0
    %2828 = vdwg.mxu0
    %v2829 = vpack.c.bf16 %v2826, %v2826
    %v2831 = vsel %vm148, %v2829, %v2602
    %v2832 = vld [vmem:[%s1] sm:$0xff]
    %v2833 = vld [vmem:[%s1 + $0x8] sm:$0xff]
    %v2834 = vld [vmem:[%s1 + $0x10] sm:$0xff]
    %v2835 = vld [vmem:[%s1 + $0x18] sm:$0xff]
    %v2836 = vld [vmem:[%s1 + $0x20] sm:$0xff]
    %v2837 = vld [vmem:[%s1 + $0x28] sm:$0xff]
    %v2838 = vld [vmem:[%s1 + $0x30] sm:$0xff]
    %v2839 = vld [vmem:[%s1 + $0x38] sm:$0xff]
    %v2848 = vunpack.c.l.b16 %v2832
    %v2849 = vunpack.c.h.b16 %v2832
    %v2850 = vunpack.c.l.b16 %v2833
    %v2851 = vunpack.c.h.b16 %v2833
    %v2852 = vunpack.c.l.b16 %v2834
    %v2853 = vunpack.c.h.b16 %v2834
    %v2854 = vunpack.c.l.b16 %v2835
    %v2855 = vunpack.c.h.b16 %v2835
    %v2856 = vunpack.c.l.b16 %v2836
    %v2857 = vunpack.c.h.b16 %v2836
    %v2858 = vunpack.c.l.b16 %v2837
    %v2859 = vunpack.c.h.b16 %v2837
    %v2860 = vunpack.c.l.b16 %v2838
    %v2861 = vunpack.c.h.b16 %v2838
    %v2862 = vunpack.c.l.b16 %v2839
    %v2863 = vunpack.c.h.b16 %v2839
    %v2864 = vpack.c.b16 %v2850, %v2848
    %v2865 = vpack.c.b16 %v2851, %v2849
    %v2866 = vpack.c.b16 %v2854, %v2852
    %v2867 = vpack.c.b16 %v2855, %v2853
    %v2868 = vpack.c.b16 %v2858, %v2856
    %v2869 = vpack.c.b16 %v2859, %v2857
    %v2870 = vpack.c.b16 %v2862, %v2860
    %v2871 = vpack.c.b16 %v2863, %v2861
    %v2880 = vsel %vm205, %v2831, 0
    %2882 = vmatpush.bf16.msra.mxu0 0
    %2883 = vmatpush.bf16.msra.mxu0 0
    %2884 = vmatpush.bf16.msra.mxu0 0
    %2885 = vmatpush.bf16.msra.mxu0 0
    %2886 = vmatpush.bf16.msra.mxu0 %v2870
    %2887 = vmatpush.bf16.msra.mxu0 %v2868
    %2888 = vmatpush.bf16.msra.mxu0 %v2866
    %2889 = vmatpush.bf16.msra.mxu0 %v2864
    %2890 = vmatmul.bf16.gmra.mxu0 %v2880
    %v2891 = vpop.f32.mrf.mxu0
    %v2892 = vadd.f32 %v161, %v2891
    %v2893 = vpop.f32.mrf.mxu0
    %2894 = vdwg.mxu0
    %2895 = vmatpush.bf16.msra.mxu0 0
    %2896 = vmatpush.bf16.msra.mxu0 0
    %2897 = vmatpush.bf16.msra.mxu0 0
    %2898 = vmatpush.bf16.msra.mxu0 0
    %2899 = vmatpush.bf16.msra.mxu0 %v2871
    %2900 = vmatpush.bf16.msra.mxu0 %v2869
    %2901 = vmatpush.bf16.msra.mxu0 %v2867
    %2902 = vmatpush.bf16.msra.mxu0 %v2865
    %2903 = vmatmul.bf16.gmra.mxu0 %v2880
    %v2904 = vpop.f32.mrf.mxu0
    %v2905 = vadd.f32 %v162, %v2904
    %v2906 = vpop.f32.mrf.mxu0
    %2907 = vdwg.mxu0
    %2909 = vrot.lane.b32.xlu0 %v2892, 32
    %v2910 = vpop.permute.xlu0 %2909
    %v2912 = vadd.f32 %v2892, %v2910
    %v2913 = vxor.u32 %v2912, 2147483648
    %v2914 = vmul.f32 %v2913, 1.442695
    %v2915 = vpow.pop %v2914
    %v2916 = vadd.f32 %v2915, 1.0
    %v2917 = vrcp.pop %v2916
    %v2918 = vmul.f32 %v2916, %v2917
    %v2919 = vsub.f32 1.0, %v2918
    %v2920 = vmul.f32 %v2917, %v2919
    %v2921 = vadd.f32 %v2917, %v2920
    %vm2922 = vweird.f32 %v2916
    %vm2923 = vweird.f32 %v2917
    %vm2924 = vmor %vm2922, %vm2923
    %v2925 = vsel %vm2924, %v2917, %v2921
    %v2926 = vand.u32 2147483647, %v2916
    %vm2927 = vcmp.eq.f32.partialorder %v2926, 8.507059e+37
    %v2928 = vand.u32 %v2916, 2147483648
    %v2929 = vor.u32 1.1754944e-38, %v2928
    %v2930 = vsel %vm2927, %v2929, %v2925
    %v2931 = vmul.f32 1.0, %v2930
    %2933 = vrot.lane.b32.xlu0 %v2905, 32
    %v2934 = vpop.permute.xlu0 %2933
    %v2936 = vadd.f32 %v2892, %v2934
    %v2937 = vxor.u32 %v2936, 2147483648
    %v2938 = vmul.f32 %v2937, 1.442695
    %v2939 = vpow.pop %v2938
    %v2940 = vadd.f32 %v2939, 1.0
    %v2941 = vrcp.pop %v2940
    %v2942 = vmul.f32 %v2940, %v2941
    %v2943 = vsub.f32 1.0, %v2942
    %v2944 = vmul.f32 %v2941, %v2943
    %v2945 = vadd.f32 %v2941, %v2944
    %vm2946 = vweird.f32 %v2940
    %vm2947 = vweird.f32 %v2941
    %vm2948 = vmor %vm2946, %vm2947
    %v2949 = vsel %vm2948, %v2941, %v2945
    %v2950 = vand.u32 2147483647, %v2940
    %vm2951 = vcmp.eq.f32.partialorder %v2950, 8.507059e+37
    %v2952 = vand.u32 %v2940, 2147483648
    %v2953 = vor.u32 1.1754944e-38, %v2952
    %v2954 = vsel %vm2951, %v2953, %v2949
    %v2955 = vmul.f32 1.0, %v2954
    %2956 = vrot.lane.b32.xlu0 %v2905, 96
    %v2957 = vpop.permute.xlu0 %2956
    %v2959 = vmul.f32 %v2931, %v2957
    %2961 = vrot.lane.b32.xlu0 %v2959, 64
    %v2962 = vpop.permute.xlu0 %2961
    %v2964 = vadd.f32 %v2892, %v2962
    %v2965 = vtanh.pop %v2964
    %v2966 = vsub.f32 1.0, %v2955
    %2968 = vrot.lane.b32.xlu0 %v2965, 96
    %v2969 = vpop.permute.xlu0 %2968
    %v2971 = vmul.f32 %v2966, %v2969
    %v2972 = vmul.f32 %v2955, %v2087
    %v2973 = vadd.f32 %v2971, %v2972
    %v2974 = vld [vmem:[#allocation2] sm:$0xff]
    %v2975 = vld [vmem:[#allocation2 + $0x8] sm:$0xff]
    %v2976 = vld [vmem:[#allocation2 + $0x10] sm:$0xff]
    %v2977 = vld [vmem:[#allocation2 + $0x18] sm:$0xff]
    %v2978 = vld [vmem:[#allocation2 + $0x20] sm:$0xff]
    %v2979 = vld [vmem:[#allocation2 + $0x28] sm:$0xff]
    %v2980 = vld [vmem:[#allocation2 + $0x30] sm:$0xff]
    %v2981 = vld [vmem:[#allocation2 + $0x38] sm:$0xff]
    %v2983 = vrot.slane %v2973, 1
    %v2984 = vrot.slane %v2973, 2
    %v2985 = vrot.slane %v2973, 3
    %v2986 = vrot.slane %v2973, 4
    %v2987 = vrot.slane %v2973, 5
    %v2988 = vrot.slane %v2973, 6
    %v2989 = vrot.slane %v2973, 7
    %v2990 = vperm.slane %v2973, 0
    %v2991 = vperm.slane %v2983, 0
    %v2992 = vperm.slane %v2984, 0
    %v2993 = vperm.slane %v2985, 0
    %v2994 = vperm.slane %v2986, 0
    %v2995 = vperm.slane %v2987, 0
    %v2996 = vperm.slane %v2988, 0
    %v2997 = vperm.slane %v2989, 0
    %3014 = vrot.lane.b32.xlu0 %v2974, 32
    %v3015 = vpop.permute.xlu0 %3014
    %3016 = vrot.lane.b32.xlu0 %v2975, 32
    %v3017 = vpop.permute.xlu0 %3016
    %3018 = vrot.lane.b32.xlu0 %v2976, 32
    %v3019 = vpop.permute.xlu0 %3018
    %3020 = vrot.lane.b32.xlu0 %v2977, 32
    %v3021 = vpop.permute.xlu0 %3020
    %3022 = vrot.lane.b32.xlu0 %v2978, 32
    %v3023 = vpop.permute.xlu0 %3022
    %3024 = vrot.lane.b32.xlu0 %v2979, 32
    %v3025 = vpop.permute.xlu0 %3024
    %3026 = vrot.lane.b32.xlu0 %v2980, 32
    %v3027 = vpop.permute.xlu0 %3026
    %3028 = vrot.lane.b32.xlu0 %v2981, 32
    %v3029 = vpop.permute.xlu0 %3028
    %v3038 = vmul.f32 %v2990, %v3015
    %v3039 = vmul.f32 %v2991, %v3017
    %v3040 = vmul.f32 %v2992, %v3019
    %v3041 = vmul.f32 %v2993, %v3021
    %v3042 = vmul.f32 %v2994, %v3023
    %v3043 = vmul.f32 %v2995, %v3025
    %v3044 = vmul.f32 %v2996, %v3027
    %v3045 = vmul.f32 %v2997, %v3029
    %3054 = vrot.lane.b32.xlu0 %v3038, 96
    %v3055 = vpop.permute.xlu0 %3054
    %3056 = vrot.lane.b32.xlu0 %v3039, 96
    %v3057 = vpop.permute.xlu0 %3056
    %3058 = vrot.lane.b32.xlu0 %v3040, 96
    %v3059 = vpop.permute.xlu0 %3058
    %3060 = vrot.lane.b32.xlu0 %v3041, 96
    %v3061 = vpop.permute.xlu0 %3060
    %3062 = vrot.lane.b32.xlu0 %v3042, 96
    %v3063 = vpop.permute.xlu0 %3062
    %3064 = vrot.lane.b32.xlu0 %v3043, 96
    %v3065 = vpop.permute.xlu0 %3064
    %3066 = vrot.lane.b32.xlu0 %v3044, 96
    %v3067 = vpop.permute.xlu0 %3066
    %3068 = vrot.lane.b32.xlu0 %v3045, 96
    %v3069 = vpop.permute.xlu0 %3068
    %v3078 = vsel %vm148, %v3055, 0.0
    %3079 = vadd.xlane.f32.xlu0 %v3078
    %v3080 = vpop.xlane.xlu0 %3079
    %v3081 = vsel %vm148, %v3057, 0.0
    %3082 = vadd.xlane.f32.xlu0 %v3081
    %v3083 = vpop.xlane.xlu0 %3082
    %v3084 = vsel %vm148, %v3059, 0.0
    %3085 = vadd.xlane.f32.xlu0 %v3084
    %v3086 = vpop.xlane.xlu0 %3085
    %v3087 = vsel %vm148, %v3061, 0.0
    %3088 = vadd.xlane.f32.xlu0 %v3087
    %v3089 = vpop.xlane.xlu0 %3088
    %v3090 = vsel %vm148, %v3063, 0.0
    %3091 = vadd.xlane.f32.xlu0 %v3090
    %v3092 = vpop.xlane.xlu0 %3091
    %v3093 = vsel %vm148, %v3065, 0.0
    %3094 = vadd.xlane.f32.xlu0 %v3093
    %v3095 = vpop.xlane.xlu0 %3094
    %v3096 = vsel %vm148, %v3067, 0.0
    %3097 = vadd.xlane.f32.xlu0 %v3096
    %v3098 = vpop.xlane.xlu0 %3097
    %v3099 = vsel %vm148, %v3069, 0.0
    %3100 = vadd.xlane.f32.xlu0 %v3099
    %v3101 = vpop.xlane.xlu0 %3100
    %v3110 = vperm.slane %v3080, %v61
    %v3111 = vperm.slane %v3083, %v61
    %v3112 = vperm.slane %v3086, %v61
    %v3113 = vperm.slane %v3089, %v61
    %v3114 = vperm.slane %v3092, %v61
    %v3115 = vperm.slane %v3095, %v61
    %v3116 = vperm.slane %v3098, %v61
    %v3117 = vperm.slane %v3101, %v61
    %v3118 = vsel %vm448, %v3111, %v3110
    %v3119 = vsel %vm450, %v3112, %v3118
    %v3120 = vsel %vm452, %v3113, %v3119
    %v3121 = vsel %vm454, %v3114, %v3120
    %v3122 = vsel %vm456, %v3115, %v3121
    %v3123 = vsel %vm458, %v3116, %v3122
    %v3124 = vsel %vm460, %v3117, %v3123
    %v3126 = vsel %vm463, %v3124, -inf
    %3127 = vmax.xlane.f32.xlu0 %v3126
    %v3128 = vpop.xlane.xlu0 %3127
    %v3130 = vperm.slane %v3128, 0
    %v3131 = vperm.slane %v3128, 1
    %v3132 = vperm.slane %v3128, 2
    %v3133 = vperm.slane %v3128, 3
    %v3134 = vperm.slane %v3128, 4
    %v3135 = vperm.slane %v3128, 5
    %v3136 = vperm.slane %v3128, 6
    %v3137 = vperm.slane %v3128, 7
    %v3146 = vsub.f32 %v3080, %v3130
    %v3147 = vsub.f32 %v3083, %v3131
    %v3148 = vsub.f32 %v3086, %v3132
    %v3149 = vsub.f32 %v3089, %v3133
    %v3150 = vsub.f32 %v3092, %v3134
    %v3151 = vsub.f32 %v3095, %v3135
    %v3152 = vsub.f32 %v3098, %v3136
    %v3153 = vsub.f32 %v3101, %v3137
    %v3154 = vmul.f32 %v3146, 1.442695
    %v3155 = vpow.pop %v3154
    %v3156 = vmul.f32 %v3147, 1.442695
    %v3157 = vpow.pop %v3156
    %v3158 = vmul.f32 %v3148, 1.442695
    %v3159 = vpow.pop %v3158
    %v3160 = vmul.f32 %v3149, 1.442695
    %v3161 = vpow.pop %v3160
    %v3162 = vmul.f32 %v3150, 1.442695
    %v3163 = vpow.pop %v3162
    %v3164 = vmul.f32 %v3151, 1.442695
    %v3165 = vpow.pop %v3164
    %v3166 = vmul.f32 %v3152, 1.442695
    %v3167 = vpow.pop %v3166
    %v3168 = vmul.f32 %v3153, 1.442695
    %v3169 = vpow.pop %v3168
    %3178 = vset.pattern.permute.xlu0 0
    %3179 = vperm.xlu0 %3178, %v3155
    %v3180 = vpop.permute.xlu0 %3179
    %3181 = vset.pattern.permute.xlu0 0
    %3182 = vperm.xlu0 %3181, %v3157
    %v3183 = vpop.permute.xlu0 %3182
    %3184 = vset.pattern.permute.xlu0 0
    %3185 = vperm.xlu0 %3184, %v3159
    %v3186 = vpop.permute.xlu0 %3185
    %3187 = vset.pattern.permute.xlu0 0
    %3188 = vperm.xlu0 %3187, %v3161
    %v3189 = vpop.permute.xlu0 %3188
    %3190 = vset.pattern.permute.xlu0 0
    %3191 = vperm.xlu0 %3190, %v3163
    %v3192 = vpop.permute.xlu0 %3191
    %3193 = vset.pattern.permute.xlu0 0
    %3194 = vperm.xlu0 %3193, %v3165
    %v3195 = vpop.permute.xlu0 %3194
    %3196 = vset.pattern.permute.xlu0 0
    %3197 = vperm.xlu0 %3196, %v3167
    %v3198 = vpop.permute.xlu0 %3197
    %3199 = vset.pattern.permute.xlu0 0
    %3200 = vperm.xlu0 %3199, %v3169
    %v3201 = vpop.permute.xlu0 %3200
    %v3202 = vperm.slane %v3180, %v61
    %v3203 = vperm.slane %v3183, %v61
    %v3204 = vperm.slane %v3186, %v61
    %v3205 = vperm.slane %v3189, %v61
    %v3206 = vperm.slane %v3192, %v61
    %v3207 = vperm.slane %v3195, %v61
    %v3208 = vperm.slane %v3198, %v61
    %v3209 = vperm.slane %v3201, %v61
    %v3210 = vsel %vm448, %v3203, %v3202
    %v3211 = vsel %vm450, %v3204, %v3210
    %v3212 = vsel %vm452, %v3205, %v3211
    %v3213 = vsel %vm454, %v3206, %v3212
    %v3214 = vsel %vm456, %v3207, %v3213
    %v3215 = vsel %vm458, %v3208, %v3214
    %v3216 = vsel %vm460, %v3209, %v3215
    %v3218 = vsel %vm463, %v3216, 0.0
    %3219 = vadd.xlane.f32.xlu0 %v3218
    %v3220 = vpop.xlane.xlu0 %3219
    %v3222 = vperm.slane %v3220, 0
    %v3223 = vperm.slane %v3220, 1
    %v3224 = vperm.slane %v3220, 2
    %v3225 = vperm.slane %v3220, 3
    %v3226 = vperm.slane %v3220, 4
    %v3227 = vperm.slane %v3220, 5
    %v3228 = vperm.slane %v3220, 6
    %v3229 = vperm.slane %v3220, 7
    %v3238 = vrcp.pop %v3222
    %v3239 = vmul.f32 %v3222, %v3238
    %v3240 = vsub.f32 1.0, %v3239
    %v3241 = vmul.f32 %v3238, %v3240
    %v3242 = vadd.f32 %v3238, %v3241
    %vm3243 = vweird.f32 %v3222
    %vm3244 = vweird.f32 %v3238
    %vm3245 = vmor %vm3243, %vm3244
    %v3246 = vsel %vm3245, %v3238, %v3242
    %v3247 = vand.u32 2147483647, %v3222
    %vm3248 = vcmp.eq.f32.partialorder %v3247, 8.507059e+37
    %v3249 = vand.u32 %v3222, 2147483648
    %v3250 = vor.u32 1.1754944e-38, %v3249
    %v3251 = vsel %vm3248, %v3250, %v3246
    %v3252 = vmul.f32 %v3155, %v3251
    %v3253 = vrcp.pop %v3223
    %v3254 = vmul.f32 %v3223, %v3253
    %v3255 = vsub.f32 1.0, %v3254
    %v3256 = vmul.f32 %v3253, %v3255
    %v3257 = vadd.f32 %v3253, %v3256
    %vm3258 = vweird.f32 %v3223
    %vm3259 = vweird.f32 %v3253
    %vm3260 = vmor %vm3258, %vm3259
    %v3261 = vsel %vm3260, %v3253, %v3257
    %v3262 = vand.u32 2147483647, %v3223
    %vm3263 = vcmp.eq.f32.partialorder %v3262, 8.507059e+37
    %v3264 = vand.u32 %v3223, 2147483648
    %v3265 = vor.u32 1.1754944e-38, %v3264
    %v3266 = vsel %vm3263, %v3265, %v3261
    %v3267 = vmul.f32 %v3157, %v3266
    %v3268 = vrcp.pop %v3224
    %v3269 = vmul.f32 %v3224, %v3268
    %v3270 = vsub.f32 1.0, %v3269
    %v3271 = vmul.f32 %v3268, %v3270
    %v3272 = vadd.f32 %v3268, %v3271
    %vm3273 = vweird.f32 %v3224
    %vm3274 = vweird.f32 %v3268
    %vm3275 = vmor %vm3273, %vm3274
    %v3276 = vsel %vm3275, %v3268, %v3272
    %v3277 = vand.u32 2147483647, %v3224
    %vm3278 = vcmp.eq.f32.partialorder %v3277, 8.507059e+37
    %v3279 = vand.u32 %v3224, 2147483648
    %v3280 = vor.u32 1.1754944e-38, %v3279
    %v3281 = vsel %vm3278, %v3280, %v3276
    %v3282 = vmul.f32 %v3159, %v3281
    %v3283 = vrcp.pop %v3225
    %v3284 = vmul.f32 %v3225, %v3283
    %v3285 = vsub.f32 1.0, %v3284
    %v3286 = vmul.f32 %v3283, %v3285
    %v3287 = vadd.f32 %v3283, %v3286
    %vm3288 = vweird.f32 %v3225
    %vm3289 = vweird.f32 %v3283
    %vm3290 = vmor %vm3288, %vm3289
    %v3291 = vsel %vm3290, %v3283, %v3287
    %v3292 = vand.u32 2147483647, %v3225
    %vm3293 = vcmp.eq.f32.partialorder %v3292, 8.507059e+37
    %v3294 = vand.u32 %v3225, 2147483648
    %v3295 = vor.u32 1.1754944e-38, %v3294
    %v3296 = vsel %vm3293, %v3295, %v3291
    %v3297 = vmul.f32 %v3161, %v3296
    %v3298 = vrcp.pop %v3226
    %v3299 = vmul.f32 %v3226, %v3298
    %v3300 = vsub.f32 1.0, %v3299
    %v3301 = vmul.f32 %v3298, %v3300
    %v3302 = vadd.f32 %v3298, %v3301
    %vm3303 = vweird.f32 %v3226
    %vm3304 = vweird.f32 %v3298
    %vm3305 = vmor %vm3303, %vm3304
    %v3306 = vsel %vm3305, %v3298, %v3302
    %v3307 = vand.u32 2147483647, %v3226
    %vm3308 = vcmp.eq.f32.partialorder %v3307, 8.507059e+37
    %v3309 = vand.u32 %v3226, 2147483648
    %v3310 = vor.u32 1.1754944e-38, %v3309
    %v3311 = vsel %vm3308, %v3310, %v3306
    %v3312 = vmul.f32 %v3163, %v3311
    %v3313 = vrcp.pop %v3227
    %v3314 = vmul.f32 %v3227, %v3313
    %v3315 = vsub.f32 1.0, %v3314
    %v3316 = vmul.f32 %v3313, %v3315
    %v3317 = vadd.f32 %v3313, %v3316
    %vm3318 = vweird.f32 %v3227
    %vm3319 = vweird.f32 %v3313
    %vm3320 = vmor %vm3318, %vm3319
    %v3321 = vsel %vm3320, %v3313, %v3317
    %v3322 = vand.u32 2147483647, %v3227
    %vm3323 = vcmp.eq.f32.partialorder %v3322, 8.507059e+37
    %v3324 = vand.u32 %v3227, 2147483648
    %v3325 = vor.u32 1.1754944e-38, %v3324
    %v3326 = vsel %vm3323, %v3325, %v3321
    %v3327 = vmul.f32 %v3165, %v3326
    %v3328 = vrcp.pop %v3228
    %v3329 = vmul.f32 %v3228, %v3328
    %v3330 = vsub.f32 1.0, %v3329
    %v3331 = vmul.f32 %v3328, %v3330
    %v3332 = vadd.f32 %v3328, %v3331
    %vm3333 = vweird.f32 %v3228
    %vm3334 = vweird.f32 %v3328
    %vm3335 = vmor %vm3333, %vm3334
    %v3336 = vsel %vm3335, %v3328, %v3332
    %v3337 = vand.u32 2147483647, %v3228
    %vm3338 = vcmp.eq.f32.partialorder %v3337, 8.507059e+37
    %v3339 = vand.u32 %v3228, 2147483648
    %v3340 = vor.u32 1.1754944e-38, %v3339
    %v3341 = vsel %vm3338, %v3340, %v3336
    %v3342 = vmul.f32 %v3167, %v3341
    %v3343 = vrcp.pop %v3229
    %v3344 = vmul.f32 %v3229, %v3343
    %v3345 = vsub.f32 1.0, %v3344
    %v3346 = vmul.f32 %v3343, %v3345
    %v3347 = vadd.f32 %v3343, %v3346
    %vm3348 = vweird.f32 %v3229
    %vm3349 = vweird.f32 %v3343
    %vm3350 = vmor %vm3348, %vm3349
    %v3351 = vsel %vm3350, %v3343, %v3347
    %v3352 = vand.u32 2147483647, %v3229
    %vm3353 = vcmp.eq.f32.partialorder %v3352, 8.507059e+37
    %v3354 = vand.u32 %v3229, 2147483648
    %v3355 = vor.u32 1.1754944e-38, %v3354
    %v3356 = vsel %vm3353, %v3355, %v3351
    %v3357 = vmul.f32 %v3169, %v3356
    %3366 = vset.pattern.permute.xlu0 0
    %3367 = vperm.xlu0 %3366, %v3252
    %v3368 = vpop.permute.xlu0 %3367
    %3369 = vset.pattern.permute.xlu0 0
    %3370 = vperm.xlu0 %3369, %v3267
    %v3371 = vpop.permute.xlu0 %3370
    %3372 = vset.pattern.permute.xlu0 0
    %3373 = vperm.xlu0 %3372, %v3282
    %v3374 = vpop.permute.xlu0 %3373
    %3375 = vset.pattern.permute.xlu0 0
    %3376 = vperm.xlu0 %3375, %v3297
    %v3377 = vpop.permute.xlu0 %3376
    %3378 = vset.pattern.permute.xlu0 0
    %3379 = vperm.xlu0 %3378, %v3312
    %v3380 = vpop.permute.xlu0 %3379
    %3381 = vset.pattern.permute.xlu0 0
    %3382 = vperm.xlu0 %3381, %v3327
    %v3383 = vpop.permute.xlu0 %3382
    %3384 = vset.pattern.permute.xlu0 0
    %3385 = vperm.xlu0 %3384, %v3342
    %v3386 = vpop.permute.xlu0 %3385
    %3387 = vset.pattern.permute.xlu0 0
    %3388 = vperm.xlu0 %3387, %v3357
    %v3389 = vpop.permute.xlu0 %3388
    %v3390 = vperm.slane %v3368, %v61
    %v3391 = vperm.slane %v3371, %v61
    %v3392 = vperm.slane %v3374, %v61
    %v3393 = vperm.slane %v3377, %v61
    %v3394 = vperm.slane %v3380, %v61
    %v3395 = vperm.slane %v3383, %v61
    %v3396 = vperm.slane %v3386, %v61
    %v3397 = vperm.slane %v3389, %v61
    %v3398 = vsel %vm448, %v3391, %v3390
    %v3399 = vsel %vm450, %v3392, %v3398
    %v3400 = vsel %vm452, %v3393, %v3399
    %v3401 = vsel %vm454, %v3394, %v3400
    %v3402 = vsel %vm456, %v3395, %v3401
    %v3403 = vsel %vm458, %v3396, %v3402
    %v3404 = vsel %vm460, %v3397, %v3403
    %s3406 = scalar_lea.vmem [#allocation6], 24
    %3407 = vst.msk [vmem:[%s3406] sm:$0xff] %vm463, %v3404
    %v3416 = vmul.f32 %v3368, %v2974
    %v3417 = vmul.f32 %v3371, %v2975
    %v3418 = vmul.f32 %v3374, %v2976
    %v3419 = vmul.f32 %v3377, %v2977
    %v3420 = vmul.f32 %v3380, %v2978
    %v3421 = vmul.f32 %v3383, %v2979
    %v3422 = vmul.f32 %v3386, %v2980
    %v3423 = vmul.f32 %v3389, %v2981
    %v3424 = vsel %vm148, %v3416, 0.0
    %v3425 = vrot.slane %v3424, 4
    %v3426 = vadd.f32 %v3424, %v3425
    %v3427 = vrot.slane %v3426, 2
    %v3428 = vadd.f32 %v3426, %v3427
    %v3429 = vrot.slane %v3428, 1
    %v3430 = vadd.f32 %v3428, %v3429
    %v3431 = vsel %vm148, %v3417, 0.0
    %v3432 = vrot.slane %v3431, 4
    %v3433 = vadd.f32 %v3431, %v3432
    %v3434 = vrot.slane %v3433, 2
    %v3435 = vadd.f32 %v3433, %v3434
    %v3436 = vrot.slane %v3435, 1
    %v3437 = vadd.f32 %v3435, %v3436
    %v3438 = vsel %vm148, %v3418, 0.0
    %v3439 = vrot.slane %v3438, 4
    %v3440 = vadd.f32 %v3438, %v3439
    %v3441 = vrot.slane %v3440, 2
    %v3442 = vadd.f32 %v3440, %v3441
    %v3443 = vrot.slane %v3442, 1
    %v3444 = vadd.f32 %v3442, %v3443
    %v3445 = vsel %vm148, %v3419, 0.0
    %v3446 = vrot.slane %v3445, 4
    %v3447 = vadd.f32 %v3445, %v3446
    %v3448 = vrot.slane %v3447, 2
    %v3449 = vadd.f32 %v3447, %v3448
    %v3450 = vrot.slane %v3449, 1
    %v3451 = vadd.f32 %v3449, %v3450
    %v3452 = vsel %vm148, %v3420, 0.0
    %v3453 = vrot.slane %v3452, 4
    %v3454 = vadd.f32 %v3452, %v3453
    %v3455 = vrot.slane %v3454, 2
    %v3456 = vadd.f32 %v3454, %v3455
    %v3457 = vrot.slane %v3456, 1
    %v3458 = vadd.f32 %v3456, %v3457
    %v3459 = vsel %vm148, %v3421, 0.0
    %v3460 = vrot.slane %v3459, 4
    %v3461 = vadd.f32 %v3459, %v3460
    %v3462 = vrot.slane %v3461, 2
    %v3463 = vadd.f32 %v3461, %v3462
    %v3464 = vrot.slane %v3463, 1
    %v3465 = vadd.f32 %v3463, %v3464
    %v3466 = vsel %vm148, %v3422, 0.0
    %v3467 = vrot.slane %v3466, 4
    %v3468 = vadd.f32 %v3466, %v3467
    %v3469 = vrot.slane %v3468, 2
    %v3470 = vadd.f32 %v3468, %v3469
    %v3471 = vrot.slane %v3470, 1
    %v3472 = vadd.f32 %v3470, %v3471
    %v3473 = vsel %vm148, %v3423, 0.0
    %v3474 = vrot.slane %v3473, 4
    %v3475 = vadd.f32 %v3473, %v3474
    %v3476 = vrot.slane %v3475, 2
    %v3477 = vadd.f32 %v3475, %v3476
    %v3478 = vrot.slane %v3477, 1
    %v3479 = vadd.f32 %v3477, %v3478
    %v3480 = vpack.c.bf16 %v3430, %v3430
    %v3481 = vpack.c.bf16 %v3437, %v3437
    %v3482 = vpack.c.bf16 %v3444, %v3444
    %v3483 = vpack.c.bf16 %v3451, %v3451
    %v3484 = vpack.c.bf16 %v3458, %v3458
    %v3485 = vpack.c.bf16 %v3465, %v3465
    %v3486 = vpack.c.bf16 %v3472, %v3472
    %v3487 = vpack.c.bf16 %v3479, %v3479
    %v3488 = vpack.c.bf16 %v2973, %v2973
    %v3497 = vperm.slane %v3480, 0
    %v3498 = vperm.slane %v3481, 0
    %v3499 = vperm.slane %v3482, 0
    %v3500 = vperm.slane %v3483, 0
    %v3501 = vperm.slane %v3484, 0
    %v3502 = vperm.slane %v3485, 0
    %v3503 = vperm.slane %v3486, 0
    %v3504 = vperm.slane %v3487, 0
    %v3505 = vunpack.c.l.b16 %v3497
    %v3506 = vunpack.c.l.b16 %v3498
    %v3507 = vunpack.c.l.b16 %v3499
    %v3508 = vunpack.c.l.b16 %v3500
    %v3509 = vunpack.c.l.b16 %v3501
    %v3510 = vunpack.c.l.b16 %v3502
    %v3511 = vunpack.c.l.b16 %v3503
    %v3512 = vunpack.c.l.b16 %v3504
    %v3513 = vsel %vm448, %v3506, %v3505
    %v3514 = vsel %vm450, %v3507, %v3513
    %v3515 = vsel %vm452, %v3508, %v3514
    %v3516 = vsel %vm454, %v3509, %v3515
    %v3517 = vsel %vm456, %v3510, %v3516
    %v3518 = vsel %vm458, %v3511, %v3517
    %v3519 = vsel %vm460, %v3512, %v3518
    %v3520 = vpack.c.b16 %v3519, %v3519
    %v3523 = vsel %vm148, %v3520, %v3488
    %v3524 = vld [vmem:[%s3] sm:$0xf]
    %v3525 = vld [vmem:[%s3 + $0x4] sm:$0xf]
    %v3526 = vld [vmem:[%s3 + $0x8] sm:$0xf]
    %v3527 = vld [vmem:[%s3 + $0xc] sm:$0xf]
    %v3528 = vld [vmem:[%s3 + $0x10] sm:$0xf]
    %v3529 = vld [vmem:[%s3 + $0x14] sm:$0xf]
    %v3530 = vld [vmem:[%s3 + $0x18] sm:$0xf]
    %v3531 = vld [vmem:[%s3 + $0x1c] sm:$0xf]
    %v3540 = vunpack.c.l.b16 %v3524
    %v3541 = vunpack.c.l.b16 %v3525
    %v3542 = vunpack.c.l.b16 %v3526
    %v3543 = vunpack.c.l.b16 %v3527
    %v3544 = vunpack.c.l.b16 %v3528
    %v3545 = vunpack.c.l.b16 %v3529
    %v3546 = vunpack.c.l.b16 %v3530
    %v3547 = vunpack.c.l.b16 %v3531
    %v3548 = vpack.c.b16 %v3541, %v3540
    %v3549 = vpack.c.b16 %v3543, %v3542
    %v3550 = vpack.c.b16 %v3545, %v3544
    %v3551 = vpack.c.b16 %v3547, %v3546
    %v3556 = vsel %vm205, %v3523, 0
    %3558 = vmatpush.bf16.msra.mxu0 0
    %3559 = vmatpush.bf16.msra.mxu0 0
    %3560 = vmatpush.bf16.msra.mxu0 0
    %3561 = vmatpush.bf16.msra.mxu0 0
    %3562 = vmatpush.bf16.msra.mxu0 %v3551
    %3563 = vmatpush.bf16.msra.mxu0 %v3550
    %3564 = vmatpush.bf16.msra.mxu0 %v3549
    %3565 = vmatpush.bf16.msra.mxu0 %v3548
    %3566 = vmatmul.bf16.gmra.mxu0 %v3556
    %v3567 = vpop.f32.mrf.mxu0
    %v3568 = vadd.f32 %v870, %v3567
    %v3569 = vpop.f32.mrf.mxu0
    %3570 = vdwg.mxu0
    %v3571 = vtanh.pop %v3568
    %v3572 = vpack.c.bf16 %v3571, %v3571
    %v3573 = vld [vmem:[%s5] sm:$0xf]
    %v3574 = vld [vmem:[%s5 + $0x4] sm:$0xf]
    %v3575 = vld [vmem:[%s5 + $0x8] sm:$0xf]
    %v3576 = vld [vmem:[%s5 + $0xc] sm:$0xf]
    %v3581 = vunpack.c.l.b16 %v3573
    %v3582 = vunpack.c.l.b16 %v3574
    %v3583 = vunpack.c.l.b16 %v3575
    %v3584 = vunpack.c.l.b16 %v3576
    %v3585 = vpack.c.b16 %v3582, %v3581
    %v3586 = vpack.c.b16 %v3584, %v3583
    %v3590 = vsel %vm148, %v3572, 0
    %3592 = vmatpush.bf16.msra.mxu0 0
    %3593 = vmatpush.bf16.msra.mxu0 0
    %3594 = vmatpush.bf16.msra.mxu0 0
    %3595 = vmatpush.bf16.msra.mxu0 0
    %3596 = vmatpush.bf16.msra.mxu0 0
    %3597 = vmatpush.bf16.msra.mxu0 0
    %3598 = vmatpush.bf16.msra.mxu0 %v3586
    %3599 = vmatpush.bf16.msra.mxu0 %v3585
    %3600 = vmatmul.bf16.gmra.mxu0 %v3590
    %v3601 = vpop.f32.mrf.mxu0
    %v3602 = vadd.f32 %v918, %v3601
    %v3603 = vpop.f32.mrf.mxu0
    %3604 = vdwg.mxu0
    %3605 = vmax.xlane.f32.xlu0 %v3602
    %v3606 = vpop.xlane.xlu0 %3605
    %v3607 = vsub.f32 %v3602, %v3606
    %v3608 = vmul.f32 %v3607, 1.442695
    %v3609 = vpow.pop %v3608
    %3610 = vadd.xlane.f32.xlu0 %v3609
    %v3611 = vpop.xlane.xlu0 %3610
    %v3612 = vlog2.pop %v3611
    %v3613 = vmul.f32 %v3612, 0.6931472
    %v3614 = vadd.f32 %v3613, %v3606
    %v3615 = vsub.f32 %v3602, %v3614
    %s3616 = scalar_lea.vmem [#allocation5], 24
    %3617 = vst [vmem:[%s3616] sm:$0xff] %v3615
    %vm3618 = vcmp.eq.f32.partialorder %v3602, %v3606
    %v3619 = vsel %vm3618, %v61, 128
    %v3620 = vand.u32 %v3619, 65535
    %v3621 = vshra.s32 %v3619, 16
    %v3622 = vcvt.s32.f32 %v3620
    %v3623 = vcvt.s32.f32 %v3621
    %3624 = vmin.xlane.f32.xlu0 %v3623
    %v3625 = vpop.xlane.xlu0 %3624
    %vm3626 = vcmp.eq.f32.partialorder %v3623, %v3625
    %v3627 = vsel %vm3626, %v3622, inf
    %3628 = vmin.xlane.f32.xlu0 %v3627
    %v3629 = vpop.xlane.xlu0 %3628
    %v3630 = vcvt.f32.s32 %v3629
    %v3631 = vcvt.f32.s32 %v3625
    %v3632 = vshll.u32 %v3631, 16
    %v3633 = vadd.s32 %v3632, %v3630
    %vm3634 = vcmp.eq.s32.totalorder %v61, %v3633
    %v3635 = vsel %vm3634, 1, 0
    %v3636 = vcvt.s32.f32 %v3635
    %v3637 = vpack.c.bf16 %v3636, %v3636
    %v3638 = vld [vmem:[%s0] sm:$0xf]
    %v3639 = vld [vmem:[%s0 + $0x4] sm:$0xf]
    %v3640 = vld [vmem:[%s0 + $0x8] sm:$0xf]
    %v3641 = vld [vmem:[%s0 + $0xc] sm:$0xf]
    %v3642 = vld [vmem:[%s0 + $0x10] sm:$0xf]
    %v3643 = vld [vmem:[%s0 + $0x14] sm:$0xf]
    %v3644 = vld [vmem:[%s0 + $0x18] sm:$0xf]
    %v3645 = vld [vmem:[%s0 + $0x1c] sm:$0xf]
    %v3646 = vld [vmem:[%s0 + $0x20] sm:$0xf]
    %v3647 = vld [vmem:[%s0 + $0x24] sm:$0xf]
    %v3648 = vld [vmem:[%s0 + $0x28] sm:$0xf]
    %v3649 = vld [vmem:[%s0 + $0x2c] sm:$0xf]
    %v3650 = vld [vmem:[%s0 + $0x30] sm:$0xf]
    %v3651 = vld [vmem:[%s0 + $0x34] sm:$0xf]
    %v3652 = vld [vmem:[%s0 + $0x38] sm:$0xf]
    %v3653 = vld [vmem:[%s0 + $0x3c] sm:$0xf]
    %v3670 = vunpack.c.l.b16 %v3638
    %v3671 = vunpack.c.l.b16 %v3639
    %v3672 = vunpack.c.l.b16 %v3640
    %v3673 = vunpack.c.l.b16 %v3641
    %v3674 = vunpack.c.l.b16 %v3642
    %v3675 = vunpack.c.l.b16 %v3643
    %v3676 = vunpack.c.l.b16 %v3644
    %v3677 = vunpack.c.l.b16 %v3645
    %v3678 = vunpack.c.l.b16 %v3646
    %v3679 = vunpack.c.l.b16 %v3647
    %v3680 = vunpack.c.l.b16 %v3648
    %v3681 = vunpack.c.l.b16 %v3649
    %v3682 = vunpack.c.l.b16 %v3650
    %v3683 = vunpack.c.l.b16 %v3651
    %v3684 = vunpack.c.l.b16 %v3652
    %v3685 = vunpack.c.l.b16 %v3653
    %v3686 = vpack.c.b16 %v3671, %v3670
    %v3687 = vpack.c.b16 %v3673, %v3672
    %v3688 = vpack.c.b16 %v3675, %v3674
    %v3689 = vpack.c.b16 %v3677, %v3676
    %v3690 = vpack.c.b16 %v3679, %v3678
    %v3691 = vpack.c.b16 %v3681, %v3680
    %v3692 = vpack.c.b16 %v3683, %v3682
    %v3693 = vpack.c.b16 %v3685, %v3684
    %3702 = vmatpush.bf16.msra.mxu0 %v3693
    %3703 = vmatpush.bf16.msra.mxu0 %v3692
    %3704 = vmatpush.bf16.msra.mxu0 %v3691
    %3705 = vmatpush.bf16.msra.mxu0 %v3690
    %3706 = vmatpush.bf16.msra.mxu0 %v3689
    %3707 = vmatpush.bf16.msra.mxu0 %v3688
    %3708 = vmatpush.bf16.msra.mxu0 %v3687
    %3709 = vmatpush.bf16.msra.mxu0 %v3686
    %3710 = vmatmul.bf16.gmra.mxu0 %v3637
    %v3711 = vpop.f32.mrf.mxu0
    %v3712 = vadd.f32 0.0, %v3711
    %v3713 = vpop.f32.mrf.mxu0
    %3714 = vdwg.mxu0
    %v3715 = vpack.c.bf16 %v3712, %v3712
    %v3717 = vsel %vm148, %v3715, %v3488
    %v3718 = vld [vmem:[%s1] sm:$0xff]
    %v3719 = vld [vmem:[%s1 + $0x8] sm:$0xff]
    %v3720 = vld [vmem:[%s1 + $0x10] sm:$0xff]
    %v3721 = vld [vmem:[%s1 + $0x18] sm:$0xff]
    %v3722 = vld [vmem:[%s1 + $0x20] sm:$0xff]
    %v3723 = vld [vmem:[%s1 + $0x28] sm:$0xff]
    %v3724 = vld [vmem:[%s1 + $0x30] sm:$0xff]
    %v3725 = vld [vmem:[%s1 + $0x38] sm:$0xff]
    %v3734 = vunpack.c.l.b16 %v3718
    %v3735 = vunpack.c.h.b16 %v3718
    %v3736 = vunpack.c.l.b16 %v3719
    %v3737 = vunpack.c.h.b16 %v3719
    %v3738 = vunpack.c.l.b16 %v3720
    %v3739 = vunpack.c.h.b16 %v3720
    %v3740 = vunpack.c.l.b16 %v3721
    %v3741 = vunpack.c.h.b16 %v3721
    %v3742 = vunpack.c.l.b16 %v3722
    %v3743 = vunpack.c.h.b16 %v3722
    %v3744 = vunpack.c.l.b16 %v3723
    %v3745 = vunpack.c.h.b16 %v3723
    %v3746 = vunpack.c.l.b16 %v3724
    %v3747 = vunpack.c.h.b16 %v3724
    %v3748 = vunpack.c.l.b16 %v3725
    %v3749 = vunpack.c.h.b16 %v3725
    %v3750 = vpack.c.b16 %v3736, %v3734
    %v3751 = vpack.c.b16 %v3737, %v3735
    %v3752 = vpack.c.b16 %v3740, %v3738
    %v3753 = vpack.c.b16 %v3741, %v3739
    %v3754 = vpack.c.b16 %v3744, %v3742
    %v3755 = vpack.c.b16 %v3745, %v3743
    %v3756 = vpack.c.b16 %v3748, %v3746
    %v3757 = vpack.c.b16 %v3749, %v3747
    %v3766 = vsel %vm205, %v3717, 0
    %3768 = vmatpush.bf16.msra.mxu0 0
    %3769 = vmatpush.bf16.msra.mxu0 0
    %3770 = vmatpush.bf16.msra.mxu0 0
    %3771 = vmatpush.bf16.msra.mxu0 0
    %3772 = vmatpush.bf16.msra.mxu0 %v3756
    %3773 = vmatpush.bf16.msra.mxu0 %v3754
    %3774 = vmatpush.bf16.msra.mxu0 %v3752
    %3775 = vmatpush.bf16.msra.mxu0 %v3750
    %3776 = vmatmul.bf16.gmra.mxu0 %v3766
    %v3777 = vpop.f32.mrf.mxu0
    %v3778 = vadd.f32 %v161, %v3777
    %v3779 = vpop.f32.mrf.mxu0
    %3780 = vdwg.mxu0
    %3781 = vmatpush.bf16.msra.mxu0 0
    %3782 = vmatpush.bf16.msra.mxu0 0
    %3783 = vmatpush.bf16.msra.mxu0 0
    %3784 = vmatpush.bf16.msra.mxu0 0
    %3785 = vmatpush.bf16.msra.mxu0 %v3757
    %3786 = vmatpush.bf16.msra.mxu0 %v3755
    %3787 = vmatpush.bf16.msra.mxu0 %v3753
    %3788 = vmatpush.bf16.msra.mxu0 %v3751
    %3789 = vmatmul.bf16.gmra.mxu0 %v3766
    %v3790 = vpop.f32.mrf.mxu0
    %v3791 = vadd.f32 %v162, %v3790
    %v3792 = vpop.f32.mrf.mxu0
    %3793 = vdwg.mxu0
    %3795 = vrot.lane.b32.xlu0 %v3778, 32
    %v3796 = vpop.permute.xlu0 %3795
    %v3798 = vadd.f32 %v3778, %v3796
    %v3799 = vxor.u32 %v3798, 2147483648
    %v3800 = vmul.f32 %v3799, 1.442695
    %v3801 = vpow.pop %v3800
    %v3802 = vadd.f32 %v3801, 1.0
    %v3803 = vrcp.pop %v3802
    %v3804 = vmul.f32 %v3802, %v3803
    %v3805 = vsub.f32 1.0, %v3804
    %v3806 = vmul.f32 %v3803, %v3805
    %v3807 = vadd.f32 %v3803, %v3806
    %vm3808 = vweird.f32 %v3802
    %vm3809 = vweird.f32 %v3803
    %vm3810 = vmor %vm3808, %vm3809
    %v3811 = vsel %vm3810, %v3803, %v3807
    %v3812 = vand.u32 2147483647, %v3802
    %vm3813 = vcmp.eq.f32.partialorder %v3812, 8.507059e+37
    %v3814 = vand.u32 %v3802, 2147483648
    %v3815 = vor.u32 1.1754944e-38, %v3814
    %v3816 = vsel %vm3813, %v3815, %v3811
    %v3817 = vmul.f32 1.0, %v3816
    %3819 = vrot.lane.b32.xlu0 %v3791, 32
    %v3820 = vpop.permute.xlu0 %3819
    %v3822 = vadd.f32 %v3778, %v3820
    %v3823 = vxor.u32 %v3822, 2147483648
    %v3824 = vmul.f32 %v3823, 1.442695
    %v3825 = vpow.pop %v3824
    %v3826 = vadd.f32 %v3825, 1.0
    %v3827 = vrcp.pop %v3826
    %v3828 = vmul.f32 %v3826, %v3827
    %v3829 = vsub.f32 1.0, %v3828
    %v3830 = vmul.f32 %v3827, %v3829
    %v3831 = vadd.f32 %v3827, %v3830
    %vm3832 = vweird.f32 %v3826
    %vm3833 = vweird.f32 %v3827
    %vm3834 = vmor %vm3832, %vm3833
    %v3835 = vsel %vm3834, %v3827, %v3831
    %v3836 = vand.u32 2147483647, %v3826
    %vm3837 = vcmp.eq.f32.partialorder %v3836, 8.507059e+37
    %v3838 = vand.u32 %v3826, 2147483648
    %v3839 = vor.u32 1.1754944e-38, %v3838
    %v3840 = vsel %vm3837, %v3839, %v3835
    %v3841 = vmul.f32 1.0, %v3840
    %3842 = vrot.lane.b32.xlu0 %v3791, 96
    %v3843 = vpop.permute.xlu0 %3842
    %v3845 = vmul.f32 %v3817, %v3843
    %3847 = vrot.lane.b32.xlu0 %v3845, 64
    %v3848 = vpop.permute.xlu0 %3847
    %v3850 = vadd.f32 %v3778, %v3848
    %v3851 = vtanh.pop %v3850
    %v3852 = vsub.f32 1.0, %v3841
    %3854 = vrot.lane.b32.xlu0 %v3851, 96
    %v3855 = vpop.permute.xlu0 %3854
    %v3857 = vmul.f32 %v3852, %v3855
    %v3858 = vmul.f32 %v3841, %v2973
    %v3859 = vadd.f32 %v3857, %v3858
    %v3860 = vld [vmem:[#allocation2] sm:$0xff]
    %v3861 = vld [vmem:[#allocation2 + $0x8] sm:$0xff]
    %v3862 = vld [vmem:[#allocation2 + $0x10] sm:$0xff]
    %v3863 = vld [vmem:[#allocation2 + $0x18] sm:$0xff]
    %v3864 = vld [vmem:[#allocation2 + $0x20] sm:$0xff]
    %v3865 = vld [vmem:[#allocation2 + $0x28] sm:$0xff]
    %v3866 = vld [vmem:[#allocation2 + $0x30] sm:$0xff]
    %v3867 = vld [vmem:[#allocation2 + $0x38] sm:$0xff]
    %v3869 = vrot.slane %v3859, 1
    %v3870 = vrot.slane %v3859, 2
    %v3871 = vrot.slane %v3859, 3
    %v3872 = vrot.slane %v3859, 4
    %v3873 = vrot.slane %v3859, 5
    %v3874 = vrot.slane %v3859, 6
    %v3875 = vrot.slane %v3859, 7
    %v3876 = vperm.slane %v3859, 0
    %v3877 = vperm.slane %v3869, 0
    %v3878 = vperm.slane %v3870, 0
    %v3879 = vperm.slane %v3871, 0
    %v3880 = vperm.slane %v3872, 0
    %v3881 = vperm.slane %v3873, 0
    %v3882 = vperm.slane %v3874, 0
    %v3883 = vperm.slane %v3875, 0
    %3900 = vrot.lane.b32.xlu0 %v3860, 32
    %v3901 = vpop.permute.xlu0 %3900
    %3902 = vrot.lane.b32.xlu0 %v3861, 32
    %v3903 = vpop.permute.xlu0 %3902
    %3904 = vrot.lane.b32.xlu0 %v3862, 32
    %v3905 = vpop.permute.xlu0 %3904
    %3906 = vrot.lane.b32.xlu0 %v3863, 32
    %v3907 = vpop.permute.xlu0 %3906
    %3908 = vrot.lane.b32.xlu0 %v3864, 32
    %v3909 = vpop.permute.xlu0 %3908
    %3910 = vrot.lane.b32.xlu0 %v3865, 32
    %v3911 = vpop.permute.xlu0 %3910
    %3912 = vrot.lane.b32.xlu0 %v3866, 32
    %v3913 = vpop.permute.xlu0 %3912
    %3914 = vrot.lane.b32.xlu0 %v3867, 32
    %v3915 = vpop.permute.xlu0 %3914
    %v3924 = vmul.f32 %v3876, %v3901
    %v3925 = vmul.f32 %v3877, %v3903
    %v3926 = vmul.f32 %v3878, %v3905
    %v3927 = vmul.f32 %v3879, %v3907
    %v3928 = vmul.f32 %v3880, %v3909
    %v3929 = vmul.f32 %v3881, %v3911
    %v3930 = vmul.f32 %v3882, %v3913
    %v3931 = vmul.f32 %v3883, %v3915
    %3940 = vrot.lane.b32.xlu0 %v3924, 96
    %v3941 = vpop.permute.xlu0 %3940
    %3942 = vrot.lane.b32.xlu0 %v3925, 96
    %v3943 = vpop.permute.xlu0 %3942
    %3944 = vrot.lane.b32.xlu0 %v3926, 96
    %v3945 = vpop.permute.xlu0 %3944
    %3946 = vrot.lane.b32.xlu0 %v3927, 96
    %v3947 = vpop.permute.xlu0 %3946
    %3948 = vrot.lane.b32.xlu0 %v3928, 96
    %v3949 = vpop.permute.xlu0 %3948
    %3950 = vrot.lane.b32.xlu0 %v3929, 96
    %v3951 = vpop.permute.xlu0 %3950
    %3952 = vrot.lane.b32.xlu0 %v3930, 96
    %v3953 = vpop.permute.xlu0 %3952
    %3954 = vrot.lane.b32.xlu0 %v3931, 96
    %v3955 = vpop.permute.xlu0 %3954
    %v3964 = vsel %vm148, %v3941, 0.0
    %3965 = vadd.xlane.f32.xlu0 %v3964
    %v3966 = vpop.xlane.xlu0 %3965
    %v3967 = vsel %vm148, %v3943, 0.0
    %3968 = vadd.xlane.f32.xlu0 %v3967
    %v3969 = vpop.xlane.xlu0 %3968
    %v3970 = vsel %vm148, %v3945, 0.0
    %3971 = vadd.xlane.f32.xlu0 %v3970
    %v3972 = vpop.xlane.xlu0 %3971
    %v3973 = vsel %vm148, %v3947, 0.0
    %3974 = vadd.xlane.f32.xlu0 %v3973
    %v3975 = vpop.xlane.xlu0 %3974
    %v3976 = vsel %vm148, %v3949, 0.0
    %3977 = vadd.xlane.f32.xlu0 %v3976
    %v3978 = vpop.xlane.xlu0 %3977
    %v3979 = vsel %vm148, %v3951, 0.0
    %3980 = vadd.xlane.f32.xlu0 %v3979
    %v3981 = vpop.xlane.xlu0 %3980
    %v3982 = vsel %vm148, %v3953, 0.0
    %3983 = vadd.xlane.f32.xlu0 %v3982
    %v3984 = vpop.xlane.xlu0 %3983
    %v3985 = vsel %vm148, %v3955, 0.0
    %3986 = vadd.xlane.f32.xlu0 %v3985
    %v3987 = vpop.xlane.xlu0 %3986
    %v3996 = vperm.slane %v3966, %v61
    %v3997 = vperm.slane %v3969, %v61
    %v3998 = vperm.slane %v3972, %v61
    %v3999 = vperm.slane %v3975, %v61
    %v4000 = vperm.slane %v3978, %v61
    %v4001 = vperm.slane %v3981, %v61
    %v4002 = vperm.slane %v3984, %v61
    %v4003 = vperm.slane %v3987, %v61
    %v4004 = vsel %vm448, %v3997, %v3996
    %v4005 = vsel %vm450, %v3998, %v4004
    %v4006 = vsel %vm452, %v3999, %v4005
    %v4007 = vsel %vm454, %v4000, %v4006
    %v4008 = vsel %vm456, %v4001, %v4007
    %v4009 = vsel %vm458, %v4002, %v4008
    %v4010 = vsel %vm460, %v4003, %v4009
    %v4012 = vsel %vm463, %v4010, -inf
    %4013 = vmax.xlane.f32.xlu0 %v4012
    %v4014 = vpop.xlane.xlu0 %4013
    %v4016 = vperm.slane %v4014, 0
    %v4017 = vperm.slane %v4014, 1
    %v4018 = vperm.slane %v4014, 2
    %v4019 = vperm.slane %v4014, 3
    %v4020 = vperm.slane %v4014, 4
    %v4021 = vperm.slane %v4014, 5
    %v4022 = vperm.slane %v4014, 6
    %v4023 = vperm.slane %v4014, 7
    %v4032 = vsub.f32 %v3966, %v4016
    %v4033 = vsub.f32 %v3969, %v4017
    %v4034 = vsub.f32 %v3972, %v4018
    %v4035 = vsub.f32 %v3975, %v4019
    %v4036 = vsub.f32 %v3978, %v4020
    %v4037 = vsub.f32 %v3981, %v4021
    %v4038 = vsub.f32 %v3984, %v4022
    %v4039 = vsub.f32 %v3987, %v4023
    %v4040 = vmul.f32 %v4032, 1.442695
    %v4041 = vpow.pop %v4040
    %v4042 = vmul.f32 %v4033, 1.442695
    %v4043 = vpow.pop %v4042
    %v4044 = vmul.f32 %v4034, 1.442695
    %v4045 = vpow.pop %v4044
    %v4046 = vmul.f32 %v4035, 1.442695
    %v4047 = vpow.pop %v4046
    %v4048 = vmul.f32 %v4036, 1.442695
    %v4049 = vpow.pop %v4048
    %v4050 = vmul.f32 %v4037, 1.442695
    %v4051 = vpow.pop %v4050
    %v4052 = vmul.f32 %v4038, 1.442695
    %v4053 = vpow.pop %v4052
    %v4054 = vmul.f32 %v4039, 1.442695
    %v4055 = vpow.pop %v4054
    %4064 = vset.pattern.permute.xlu0 0
    %4065 = vperm.xlu0 %4064, %v4041
    %v4066 = vpop.permute.xlu0 %4065
    %4067 = vset.pattern.permute.xlu0 0
    %4068 = vperm.xlu0 %4067, %v4043
    %v4069 = vpop.permute.xlu0 %4068
    %4070 = vset.pattern.permute.xlu0 0
    %4071 = vperm.xlu0 %4070, %v4045
    %v4072 = vpop.permute.xlu0 %4071
    %4073 = vset.pattern.permute.xlu0 0
    %4074 = vperm.xlu0 %4073, %v4047
    %v4075 = vpop.permute.xlu0 %4074
    %4076 = vset.pattern.permute.xlu0 0
    %4077 = vperm.xlu0 %4076, %v4049
    %v4078 = vpop.permute.xlu0 %4077
    %4079 = vset.pattern.permute.xlu0 0
    %4080 = vperm.xlu0 %4079, %v4051
    %v4081 = vpop.permute.xlu0 %4080
    %4082 = vset.pattern.permute.xlu0 0
    %4083 = vperm.xlu0 %4082, %v4053
    %v4084 = vpop.permute.xlu0 %4083
    %4085 = vset.pattern.permute.xlu0 0
    %4086 = vperm.xlu0 %4085, %v4055
    %v4087 = vpop.permute.xlu0 %4086
    %v4088 = vperm.slane %v4066, %v61
    %v4089 = vperm.slane %v4069, %v61
    %v4090 = vperm.slane %v4072, %v61
    %v4091 = vperm.slane %v4075, %v61
    %v4092 = vperm.slane %v4078, %v61
    %v4093 = vperm.slane %v4081, %v61
    %v4094 = vperm.slane %v4084, %v61
    %v4095 = vperm.slane %v4087, %v61
    %v4096 = vsel %vm448, %v4089, %v4088
    %v4097 = vsel %vm450, %v4090, %v4096
    %v4098 = vsel %vm452, %v4091, %v4097
    %v4099 = vsel %vm454, %v4092, %v4098
    %v4100 = vsel %vm456, %v4093, %v4099
    %v4101 = vsel %vm458, %v4094, %v4100
    %v4102 = vsel %vm460, %v4095, %v4101
    %v4104 = vsel %vm463, %v4102, 0.0
    %4105 = vadd.xlane.f32.xlu0 %v4104
    %v4106 = vpop.xlane.xlu0 %4105
    %v4108 = vperm.slane %v4106, 0
    %v4109 = vperm.slane %v4106, 1
    %v4110 = vperm.slane %v4106, 2
    %v4111 = vperm.slane %v4106, 3
    %v4112 = vperm.slane %v4106, 4
    %v4113 = vperm.slane %v4106, 5
    %v4114 = vperm.slane %v4106, 6
    %v4115 = vperm.slane %v4106, 7
    %v4124 = vrcp.pop %v4108
    %v4125 = vmul.f32 %v4108, %v4124
    %v4126 = vsub.f32 1.0, %v4125
    %v4127 = vmul.f32 %v4124, %v4126
    %v4128 = vadd.f32 %v4124, %v4127
    %vm4129 = vweird.f32 %v4108
    %vm4130 = vweird.f32 %v4124
    %vm4131 = vmor %vm4129, %vm4130
    %v4132 = vsel %vm4131, %v4124, %v4128
    %v4133 = vand.u32 2147483647, %v4108
    %vm4134 = vcmp.eq.f32.partialorder %v4133, 8.507059e+37
    %v4135 = vand.u32 %v4108, 2147483648
    %v4136 = vor.u32 1.1754944e-38, %v4135
    %v4137 = vsel %vm4134, %v4136, %v4132
    %v4138 = vmul.f32 %v4041, %v4137
    %v4139 = vrcp.pop %v4109
    %v4140 = vmul.f32 %v4109, %v4139
    %v4141 = vsub.f32 1.0, %v4140
    %v4142 = vmul.f32 %v4139, %v4141
    %v4143 = vadd.f32 %v4139, %v4142
    %vm4144 = vweird.f32 %v4109
    %vm4145 = vweird.f32 %v4139
    %vm4146 = vmor %vm4144, %vm4145
    %v4147 = vsel %vm4146, %v4139, %v4143
    %v4148 = vand.u32 2147483647, %v4109
    %vm4149 = vcmp.eq.f32.partialorder %v4148, 8.507059e+37
    %v4150 = vand.u32 %v4109, 2147483648
    %v4151 = vor.u32 1.1754944e-38, %v4150
    %v4152 = vsel %vm4149, %v4151, %v4147
    %v4153 = vmul.f32 %v4043, %v4152
    %v4154 = vrcp.pop %v4110
    %v4155 = vmul.f32 %v4110, %v4154
    %v4156 = vsub.f32 1.0, %v4155
    %v4157 = vmul.f32 %v4154, %v4156
    %v4158 = vadd.f32 %v4154, %v4157
    %vm4159 = vweird.f32 %v4110
    %vm4160 = vweird.f32 %v4154
    %vm4161 = vmor %vm4159, %vm4160
    %v4162 = vsel %vm4161, %v4154, %v4158
    %v4163 = vand.u32 2147483647, %v4110
    %vm4164 = vcmp.eq.f32.partialorder %v4163, 8.507059e+37
    %v4165 = vand.u32 %v4110, 2147483648
    %v4166 = vor.u32 1.1754944e-38, %v4165
    %v4167 = vsel %vm4164, %v4166, %v4162
    %v4168 = vmul.f32 %v4045, %v4167
    %v4169 = vrcp.pop %v4111
    %v4170 = vmul.f32 %v4111, %v4169
    %v4171 = vsub.f32 1.0, %v4170
    %v4172 = vmul.f32 %v4169, %v4171
    %v4173 = vadd.f32 %v4169, %v4172
    %vm4174 = vweird.f32 %v4111
    %vm4175 = vweird.f32 %v4169
    %vm4176 = vmor %vm4174, %vm4175
    %v4177 = vsel %vm4176, %v4169, %v4173
    %v4178 = vand.u32 2147483647, %v4111
    %vm4179 = vcmp.eq.f32.partialorder %v4178, 8.507059e+37
    %v4180 = vand.u32 %v4111, 2147483648
    %v4181 = vor.u32 1.1754944e-38, %v4180
    %v4182 = vsel %vm4179, %v4181, %v4177
    %v4183 = vmul.f32 %v4047, %v4182
    %v4184 = vrcp.pop %v4112
    %v4185 = vmul.f32 %v4112, %v4184
    %v4186 = vsub.f32 1.0, %v4185
    %v4187 = vmul.f32 %v4184, %v4186
    %v4188 = vadd.f32 %v4184, %v4187
    %vm4189 = vweird.f32 %v4112
    %vm4190 = vweird.f32 %v4184
    %vm4191 = vmor %vm4189, %vm4190
    %v4192 = vsel %vm4191, %v4184, %v4188
    %v4193 = vand.u32 2147483647, %v4112
    %vm4194 = vcmp.eq.f32.partialorder %v4193, 8.507059e+37
    %v4195 = vand.u32 %v4112, 2147483648
    %v4196 = vor.u32 1.1754944e-38, %v4195
    %v4197 = vsel %vm4194, %v4196, %v4192
    %v4198 = vmul.f32 %v4049, %v4197
    %v4199 = vrcp.pop %v4113
    %v4200 = vmul.f32 %v4113, %v4199
    %v4201 = vsub.f32 1.0, %v4200
    %v4202 = vmul.f32 %v4199, %v4201
    %v4203 = vadd.f32 %v4199, %v4202
    %vm4204 = vweird.f32 %v4113
    %vm4205 = vweird.f32 %v4199
    %vm4206 = vmor %vm4204, %vm4205
    %v4207 = vsel %vm4206, %v4199, %v4203
    %v4208 = vand.u32 2147483647, %v4113
    %vm4209 = vcmp.eq.f32.partialorder %v4208, 8.507059e+37
    %v4210 = vand.u32 %v4113, 2147483648
    %v4211 = vor.u32 1.1754944e-38, %v4210
    %v4212 = vsel %vm4209, %v4211, %v4207
    %v4213 = vmul.f32 %v4051, %v4212
    %v4214 = vrcp.pop %v4114
    %v4215 = vmul.f32 %v4114, %v4214
    %v4216 = vsub.f32 1.0, %v4215
    %v4217 = vmul.f32 %v4214, %v4216
    %v4218 = vadd.f32 %v4214, %v4217
    %vm4219 = vweird.f32 %v4114
    %vm4220 = vweird.f32 %v4214
    %vm4221 = vmor %vm4219, %vm4220
    %v4222 = vsel %vm4221, %v4214, %v4218
    %v4223 = vand.u32 2147483647, %v4114
    %vm4224 = vcmp.eq.f32.partialorder %v4223, 8.507059e+37
    %v4225 = vand.u32 %v4114, 2147483648
    %v4226 = vor.u32 1.1754944e-38, %v4225
    %v4227 = vsel %vm4224, %v4226, %v4222
    %v4228 = vmul.f32 %v4053, %v4227
    %v4229 = vrcp.pop %v4115
    %v4230 = vmul.f32 %v4115, %v4229
    %v4231 = vsub.f32 1.0, %v4230
    %v4232 = vmul.f32 %v4229, %v4231
    %v4233 = vadd.f32 %v4229, %v4232
    %vm4234 = vweird.f32 %v4115
    %vm4235 = vweird.f32 %v4229
    %vm4236 = vmor %vm4234, %vm4235
    %v4237 = vsel %vm4236, %v4229, %v4233
    %v4238 = vand.u32 2147483647, %v4115
    %vm4239 = vcmp.eq.f32.partialorder %v4238, 8.507059e+37
    %v4240 = vand.u32 %v4115, 2147483648
    %v4241 = vor.u32 1.1754944e-38, %v4240
    %v4242 = vsel %vm4239, %v4241, %v4237
    %v4243 = vmul.f32 %v4055, %v4242
    %4252 = vset.pattern.permute.xlu0 0
    %4253 = vperm.xlu0 %4252, %v4138
    %v4254 = vpop.permute.xlu0 %4253
    %4255 = vset.pattern.permute.xlu0 0
    %4256 = vperm.xlu0 %4255, %v4153
    %v4257 = vpop.permute.xlu0 %4256
    %4258 = vset.pattern.permute.xlu0 0
    %4259 = vperm.xlu0 %4258, %v4168
    %v4260 = vpop.permute.xlu0 %4259
    %4261 = vset.pattern.permute.xlu0 0
    %4262 = vperm.xlu0 %4261, %v4183
    %v4263 = vpop.permute.xlu0 %4262
    %4264 = vset.pattern.permute.xlu0 0
    %4265 = vperm.xlu0 %4264, %v4198
    %v4266 = vpop.permute.xlu0 %4265
    %4267 = vset.pattern.permute.xlu0 0
    %4268 = vperm.xlu0 %4267, %v4213
    %v4269 = vpop.permute.xlu0 %4268
    %4270 = vset.pattern.permute.xlu0 0
    %4271 = vperm.xlu0 %4270, %v4228
    %v4272 = vpop.permute.xlu0 %4271
    %4273 = vset.pattern.permute.xlu0 0
    %4274 = vperm.xlu0 %4273, %v4243
    %v4275 = vpop.permute.xlu0 %4274
    %v4276 = vperm.slane %v4254, %v61
    %v4277 = vperm.slane %v4257, %v61
    %v4278 = vperm.slane %v4260, %v61
    %v4279 = vperm.slane %v4263, %v61
    %v4280 = vperm.slane %v4266, %v61
    %v4281 = vperm.slane %v4269, %v61
    %v4282 = vperm.slane %v4272, %v61
    %v4283 = vperm.slane %v4275, %v61
    %v4284 = vsel %vm448, %v4277, %v4276
    %v4285 = vsel %vm450, %v4278, %v4284
    %v4286 = vsel %vm452, %v4279, %v4285
    %v4287 = vsel %vm454, %v4280, %v4286
    %v4288 = vsel %vm456, %v4281, %v4287
    %v4289 = vsel %vm458, %v4282, %v4288
    %v4290 = vsel %vm460, %v4283, %v4289
    %s4292 = scalar_lea.vmem [#allocation6], 32
    %4293 = vst.msk [vmem:[%s4292] sm:$0xff] %vm463, %v4290
    %v4302 = vmul.f32 %v4254, %v3860
    %v4303 = vmul.f32 %v4257, %v3861
    %v4304 = vmul.f32 %v4260, %v3862
    %v4305 = vmul.f32 %v4263, %v3863
    %v4306 = vmul.f32 %v4266, %v3864
    %v4307 = vmul.f32 %v4269, %v3865
    %v4308 = vmul.f32 %v4272, %v3866
    %v4309 = vmul.f32 %v4275, %v3867
    %v4310 = vsel %vm148, %v4302, 0.0
    %v4311 = vrot.slane %v4310, 4
    %v4312 = vadd.f32 %v4310, %v4311
    %v4313 = vrot.slane %v4312, 2
    %v4314 = vadd.f32 %v4312, %v4313
    %v4315 = vrot.slane %v4314, 1
    %v4316 = vadd.f32 %v4314, %v4315
    %v4317 = vsel %vm148, %v4303, 0.0
    %v4318 = vrot.slane %v4317, 4
    %v4319 = vadd.f32 %v4317, %v4318
    %v4320 = vrot.slane %v4319, 2
    %v4321 = vadd.f32 %v4319, %v4320
    %v4322 = vrot.slane %v4321, 1
    %v4323 = vadd.f32 %v4321, %v4322
    %v4324 = vsel %vm148, %v4304, 0.0
    %v4325 = vrot.slane %v4324, 4
    %v4326 = vadd.f32 %v4324, %v4325
    %v4327 = vrot.slane %v4326, 2
    %v4328 = vadd.f32 %v4326, %v4327
    %v4329 = vrot.slane %v4328, 1
    %v4330 = vadd.f32 %v4328, %v4329
    %v4331 = vsel %vm148, %v4305, 0.0
    %v4332 = vrot.slane %v4331, 4
    %v4333 = vadd.f32 %v4331, %v4332
    %v4334 = vrot.slane %v4333, 2
    %v4335 = vadd.f32 %v4333, %v4334
    %v4336 = vrot.slane %v4335, 1
    %v4337 = vadd.f32 %v4335, %v4336
    %v4338 = vsel %vm148, %v4306, 0.0
    %v4339 = vrot.slane %v4338, 4
    %v4340 = vadd.f32 %v4338, %v4339
    %v4341 = vrot.slane %v4340, 2
    %v4342 = vadd.f32 %v4340, %v4341
    %v4343 = vrot.slane %v4342, 1
    %v4344 = vadd.f32 %v4342, %v4343
    %v4345 = vsel %vm148, %v4307, 0.0
    %v4346 = vrot.slane %v4345, 4
    %v4347 = vadd.f32 %v4345, %v4346
    %v4348 = vrot.slane %v4347, 2
    %v4349 = vadd.f32 %v4347, %v4348
    %v4350 = vrot.slane %v4349, 1
    %v4351 = vadd.f32 %v4349, %v4350
    %v4352 = vsel %vm148, %v4308, 0.0
    %v4353 = vrot.slane %v4352, 4
    %v4354 = vadd.f32 %v4352, %v4353
    %v4355 = vrot.slane %v4354, 2
    %v4356 = vadd.f32 %v4354, %v4355
    %v4357 = vrot.slane %v4356, 1
    %v4358 = vadd.f32 %v4356, %v4357
    %v4359 = vsel %vm148, %v4309, 0.0
    %v4360 = vrot.slane %v4359, 4
    %v4361 = vadd.f32 %v4359, %v4360
    %v4362 = vrot.slane %v4361, 2
    %v4363 = vadd.f32 %v4361, %v4362
    %v4364 = vrot.slane %v4363, 1
    %v4365 = vadd.f32 %v4363, %v4364
    %v4366 = vpack.c.bf16 %v4316, %v4316
    %v4367 = vpack.c.bf16 %v4323, %v4323
    %v4368 = vpack.c.bf16 %v4330, %v4330
    %v4369 = vpack.c.bf16 %v4337, %v4337
    %v4370 = vpack.c.bf16 %v4344, %v4344
    %v4371 = vpack.c.bf16 %v4351, %v4351
    %v4372 = vpack.c.bf16 %v4358, %v4358
    %v4373 = vpack.c.bf16 %v4365, %v4365
    %v4374 = vpack.c.bf16 %v3859, %v3859
    %v4383 = vperm.slane %v4366, 0
    %v4384 = vperm.slane %v4367, 0
    %v4385 = vperm.slane %v4368, 0
    %v4386 = vperm.slane %v4369, 0
    %v4387 = vperm.slane %v4370, 0
    %v4388 = vperm.slane %v4371, 0
    %v4389 = vperm.slane %v4372, 0
    %v4390 = vperm.slane %v4373, 0
    %v4391 = vunpack.c.l.b16 %v4383
    %v4392 = vunpack.c.l.b16 %v4384
    %v4393 = vunpack.c.l.b16 %v4385
    %v4394 = vunpack.c.l.b16 %v4386
    %v4395 = vunpack.c.l.b16 %v4387
    %v4396 = vunpack.c.l.b16 %v4388
    %v4397 = vunpack.c.l.b16 %v4389
    %v4398 = vunpack.c.l.b16 %v4390
    %v4399 = vsel %vm448, %v4392, %v4391
    %v4400 = vsel %vm450, %v4393, %v4399
    %v4401 = vsel %vm452, %v4394, %v4400
    %v4402 = vsel %vm454, %v4395, %v4401
    %v4403 = vsel %vm456, %v4396, %v4402
    %v4404 = vsel %vm458, %v4397, %v4403
    %v4405 = vsel %vm460, %v4398, %v4404
    %v4406 = vpack.c.b16 %v4405, %v4405
    %v4409 = vsel %vm148, %v4406, %v4374
    %v4410 = vld [vmem:[%s3] sm:$0xf]
    %v4411 = vld [vmem:[%s3 + $0x4] sm:$0xf]
    %v4412 = vld [vmem:[%s3 + $0x8] sm:$0xf]
    %v4413 = vld [vmem:[%s3 + $0xc] sm:$0xf]
    %v4414 = vld [vmem:[%s3 + $0x10] sm:$0xf]
    %v4415 = vld [vmem:[%s3 + $0x14] sm:$0xf]
    %v4416 = vld [vmem:[%s3 + $0x18] sm:$0xf]
    %v4417 = vld [vmem:[%s3 + $0x1c] sm:$0xf]
    %v4426 = vunpack.c.l.b16 %v4410
    %v4427 = vunpack.c.l.b16 %v4411
    %v4428 = vunpack.c.l.b16 %v4412
    %v4429 = vunpack.c.l.b16 %v4413
    %v4430 = vunpack.c.l.b16 %v4414
    %v4431 = vunpack.c.l.b16 %v4415
    %v4432 = vunpack.c.l.b16 %v4416
    %v4433 = vunpack.c.l.b16 %v4417
    %v4434 = vpack.c.b16 %v4427, %v4426
    %v4435 = vpack.c.b16 %v4429, %v4428
    %v4436 = vpack.c.b16 %v4431, %v4430
    %v4437 = vpack.c.b16 %v4433, %v4432
    %v4442 = vsel %vm205, %v4409, 0
    %4444 = vmatpush.bf16.msra.mxu0 0
    %4445 = vmatpush.bf16.msra.mxu0 0
    %4446 = vmatpush.bf16.msra.mxu0 0
    %4447 = vmatpush.bf16.msra.mxu0 0
    %4448 = vmatpush.bf16.msra.mxu0 %v4437
    %4449 = vmatpush.bf16.msra.mxu0 %v4436
    %4450 = vmatpush.bf16.msra.mxu0 %v4435
    %4451 = vmatpush.bf16.msra.mxu0 %v4434
    %4452 = vmatmul.bf16.gmra.mxu0 %v4442
    %v4453 = vpop.f32.mrf.mxu0
    %v4454 = vadd.f32 %v870, %v4453
    %v4455 = vpop.f32.mrf.mxu0
    %4456 = vdwg.mxu0
    %v4457 = vtanh.pop %v4454
    %v4458 = vpack.c.bf16 %v4457, %v4457
    %v4459 = vld [vmem:[%s5] sm:$0xf]
    %v4460 = vld [vmem:[%s5 + $0x4] sm:$0xf]
    %v4461 = vld [vmem:[%s5 + $0x8] sm:$0xf]
    %v4462 = vld [vmem:[%s5 + $0xc] sm:$0xf]
    %v4467 = vunpack.c.l.b16 %v4459
    %v4468 = vunpack.c.l.b16 %v4460
    %v4469 = vunpack.c.l.b16 %v4461
    %v4470 = vunpack.c.l.b16 %v4462
    %v4471 = vpack.c.b16 %v4468, %v4467
    %v4472 = vpack.c.b16 %v4470, %v4469
    %v4476 = vsel %vm148, %v4458, 0
    %4478 = vmatpush.bf16.msra.mxu0 0
    %4479 = vmatpush.bf16.msra.mxu0 0
    %4480 = vmatpush.bf16.msra.mxu0 0
    %4481 = vmatpush.bf16.msra.mxu0 0
    %4482 = vmatpush.bf16.msra.mxu0 0
    %4483 = vmatpush.bf16.msra.mxu0 0
    %4484 = vmatpush.bf16.msra.mxu0 %v4472
    %4485 = vmatpush.bf16.msra.mxu0 %v4471
    %4486 = vmatmul.bf16.gmra.mxu0 %v4476
    %v4487 = vpop.f32.mrf.mxu0
    %v4488 = vadd.f32 %v918, %v4487
    %v4489 = vpop.f32.mrf.mxu0
    %4490 = vdwg.mxu0
    %4491 = vmax.xlane.f32.xlu0 %v4488
    %v4492 = vpop.xlane.xlu0 %4491
    %v4493 = vsub.f32 %v4488, %v4492
    %v4494 = vmul.f32 %v4493, 1.442695
    %v4495 = vpow.pop %v4494
    %4496 = vadd.xlane.f32.xlu0 %v4495
    %v4497 = vpop.xlane.xlu0 %4496
    %v4498 = vlog2.pop %v4497
    %v4499 = vmul.f32 %v4498, 0.6931472
    %v4500 = vadd.f32 %v4499, %v4492
    %v4501 = vsub.f32 %v4488, %v4500
    %s4502 = scalar_lea.vmem [#allocation5], 32
    %4503 = vst [vmem:[%s4502] sm:$0xff] %v4501
    %vm4504 = vcmp.eq.f32.partialorder %v4488, %v4492
    %v4505 = vsel %vm4504, %v61, 128
    %v4506 = vand.u32 %v4505, 65535
    %v4507 = vshra.s32 %v4505, 16
    %v4508 = vcvt.s32.f32 %v4506
    %v4509 = vcvt.s32.f32 %v4507
    %4510 = vmin.xlane.f32.xlu0 %v4509
    %v4511 = vpop.xlane.xlu0 %4510
    %vm4512 = vcmp.eq.f32.partialorder %v4509, %v4511
    %v4513 = vsel %vm4512, %v4508, inf
    %4514 = vmin.xlane.f32.xlu0 %v4513
    %v4515 = vpop.xlane.xlu0 %4514
    %v4516 = vcvt.f32.s32 %v4515
    %v4517 = vcvt.f32.s32 %v4511
    %v4518 = vshll.u32 %v4517, 16
    %v4519 = vadd.s32 %v4518, %v4516
    %vm4520 = vcmp.eq.s32.totalorder %v61, %v4519
    %v4521 = vsel %vm4520, 1, 0
    %v4522 = vcvt.s32.f32 %v4521
    %v4523 = vpack.c.bf16 %v4522, %v4522
    %v4524 = vld [vmem:[%s0] sm:$0xf]
    %v4525 = vld [vmem:[%s0 + $0x4] sm:$0xf]
    %v4526 = vld [vmem:[%s0 + $0x8] sm:$0xf]
    %v4527 = vld [vmem:[%s0 + $0xc] sm:$0xf]
    %v4528 = vld [vmem:[%s0 + $0x10] sm:$0xf]
    %v4529 = vld [vmem:[%s0 + $0x14] sm:$0xf]
    %v4530 = vld [vmem:[%s0 + $0x18] sm:$0xf]
    %v4531 = vld [vmem:[%s0 + $0x1c] sm:$0xf]
    %v4532 = vld [vmem:[%s0 + $0x20] sm:$0xf]
    %v4533 = vld [vmem:[%s0 + $0x24] sm:$0xf]
    %v4534 = vld [vmem:[%s0 + $0x28] sm:$0xf]
    %v4535 = vld [vmem:[%s0 + $0x2c] sm:$0xf]
    %v4536 = vld [vmem:[%s0 + $0x30] sm:$0xf]
    %v4537 = vld [vmem:[%s0 + $0x34] sm:$0xf]
    %v4538 = vld [vmem:[%s0 + $0x38] sm:$0xf]
    %v4539 = vld [vmem:[%s0 + $0x3c] sm:$0xf]
    %v4556 = vunpack.c.l.b16 %v4524
    %v4557 = vunpack.c.l.b16 %v4525
    %v4558 = vunpack.c.l.b16 %v4526
    %v4559 = vunpack.c.l.b16 %v4527
    %v4560 = vunpack.c.l.b16 %v4528
    %v4561 = vunpack.c.l.b16 %v4529
    %v4562 = vunpack.c.l.b16 %v4530
    %v4563 = vunpack.c.l.b16 %v4531
    %v4564 = vunpack.c.l.b16 %v4532
    %v4565 = vunpack.c.l.b16 %v4533
    %v4566 = vunpack.c.l.b16 %v4534
    %v4567 = vunpack.c.l.b16 %v4535
    %v4568 = vunpack.c.l.b16 %v4536
    %v4569 = vunpack.c.l.b16 %v4537
    %v4570 = vunpack.c.l.b16 %v4538
    %v4571 = vunpack.c.l.b16 %v4539
    %v4572 = vpack.c.b16 %v4557, %v4556
    %v4573 = vpack.c.b16 %v4559, %v4558
    %v4574 = vpack.c.b16 %v4561, %v4560
    %v4575 = vpack.c.b16 %v4563, %v4562
    %v4576 = vpack.c.b16 %v4565, %v4564
    %v4577 = vpack.c.b16 %v4567, %v4566
    %v4578 = vpack.c.b16 %v4569, %v4568
    %v4579 = vpack.c.b16 %v4571, %v4570
    %4588 = vmatpush.bf16.msra.mxu0 %v4579
    %4589 = vmatpush.bf16.msra.mxu0 %v4578
    %4590 = vmatpush.bf16.msra.mxu0 %v4577
    %4591 = vmatpush.bf16.msra.mxu0 %v4576
    %4592 = vmatpush.bf16.msra.mxu0 %v4575
    %4593 = vmatpush.bf16.msra.mxu0 %v4574
    %4594 = vmatpush.bf16.msra.mxu0 %v4573
    %4595 = vmatpush.bf16.msra.mxu0 %v4572
    %4596 = vmatmul.bf16.gmra.mxu0 %v4523
    %v4597 = vpop.f32.mrf.mxu0
    %v4598 = vadd.f32 0.0, %v4597
    %v4599 = vpop.f32.mrf.mxu0
    %4600 = vdwg.mxu0
    %v4601 = vpack.c.bf16 %v4598, %v4598
    %v4603 = vsel %vm148, %v4601, %v4374
    %v4604 = vld [vmem:[%s1] sm:$0xff]
    %v4605 = vld [vmem:[%s1 + $0x8] sm:$0xff]
    %v4606 = vld [vmem:[%s1 + $0x10] sm:$0xff]
    %v4607 = vld [vmem:[%s1 + $0x18] sm:$0xff]
    %v4608 = vld [vmem:[%s1 + $0x20] sm:$0xff]
    %v4609 = vld [vmem:[%s1 + $0x28] sm:$0xff]
    %v4610 = vld [vmem:[%s1 + $0x30] sm:$0xff]
    %v4611 = vld [vmem:[%s1 + $0x38] sm:$0xff]
    %v4620 = vunpack.c.l.b16 %v4604
    %v4621 = vunpack.c.h.b16 %v4604
    %v4622 = vunpack.c.l.b16 %v4605
    %v4623 = vunpack.c.h.b16 %v4605
    %v4624 = vunpack.c.l.b16 %v4606
    %v4625 = vunpack.c.h.b16 %v4606
    %v4626 = vunpack.c.l.b16 %v4607
    %v4627 = vunpack.c.h.b16 %v4607
    %v4628 = vunpack.c.l.b16 %v4608
    %v4629 = vunpack.c.h.b16 %v4608
    %v4630 = vunpack.c.l.b16 %v4609
    %v4631 = vunpack.c.h.b16 %v4609
    %v4632 = vunpack.c.l.b16 %v4610
    %v4633 = vunpack.c.h.b16 %v4610
    %v4634 = vunpack.c.l.b16 %v4611
    %v4635 = vunpack.c.h.b16 %v4611
    %v4636 = vpack.c.b16 %v4622, %v4620
    %v4637 = vpack.c.b16 %v4623, %v4621
    %v4638 = vpack.c.b16 %v4626, %v4624
    %v4639 = vpack.c.b16 %v4627, %v4625
    %v4640 = vpack.c.b16 %v4630, %v4628
    %v4641 = vpack.c.b16 %v4631, %v4629
    %v4642 = vpack.c.b16 %v4634, %v4632
    %v4643 = vpack.c.b16 %v4635, %v4633
    %v4652 = vsel %vm205, %v4603, 0
    %4654 = vmatpush.bf16.msra.mxu0 0
    %4655 = vmatpush.bf16.msra.mxu0 0
    %4656 = vmatpush.bf16.msra.mxu0 0
    %4657 = vmatpush.bf16.msra.mxu0 0
    %4658 = vmatpush.bf16.msra.mxu0 %v4642
    %4659 = vmatpush.bf16.msra.mxu0 %v4640
    %4660 = vmatpush.bf16.msra.mxu0 %v4638
    %4661 = vmatpush.bf16.msra.mxu0 %v4636
    %4662 = vmatmul.bf16.gmra.mxu0 %v4652
    %v4663 = vpop.f32.mrf.mxu0
    %v4664 = vadd.f32 %v161, %v4663
    %v4665 = vpop.f32.mrf.mxu0
    %4666 = vdwg.mxu0
    %4667 = vmatpush.bf16.msra.mxu0 0
    %4668 = vmatpush.bf16.msra.mxu0 0
    %4669 = vmatpush.bf16.msra.mxu0 0
    %4670 = vmatpush.bf16.msra.mxu0 0
    %4671 = vmatpush.bf16.msra.mxu0 %v4643
    %4672 = vmatpush.bf16.msra.mxu0 %v4641
    %4673 = vmatpush.bf16.msra.mxu0 %v4639
    %4674 = vmatpush.bf16.msra.mxu0 %v4637
    %4675 = vmatmul.bf16.gmra.mxu0 %v4652
    %v4676 = vpop.f32.mrf.mxu0
    %v4677 = vadd.f32 %v162, %v4676
    %v4678 = vpop.f32.mrf.mxu0
    %4679 = vdwg.mxu0
    %4681 = vrot.lane.b32.xlu0 %v4664, 32
    %v4682 = vpop.permute.xlu0 %4681
    %v4684 = vadd.f32 %v4664, %v4682
    %v4685 = vxor.u32 %v4684, 2147483648
    %v4686 = vmul.f32 %v4685, 1.442695
    %v4687 = vpow.pop %v4686
    %v4688 = vadd.f32 %v4687, 1.0
    %v4689 = vrcp.pop %v4688
    %v4690 = vmul.f32 %v4688, %v4689
    %v4691 = vsub.f32 1.0, %v4690
    %v4692 = vmul.f32 %v4689, %v4691
    %v4693 = vadd.f32 %v4689, %v4692
    %vm4694 = vweird.f32 %v4688
    %vm4695 = vweird.f32 %v4689
    %vm4696 = vmor %vm4694, %vm4695
    %v4697 = vsel %vm4696, %v4689, %v4693
    %v4698 = vand.u32 2147483647, %v4688
    %vm4699 = vcmp.eq.f32.partialorder %v4698, 8.507059e+37
    %v4700 = vand.u32 %v4688, 2147483648
    %v4701 = vor.u32 1.1754944e-38, %v4700
    %v4702 = vsel %vm4699, %v4701, %v4697
    %v4703 = vmul.f32 1.0, %v4702
    %4705 = vrot.lane.b32.xlu0 %v4677, 32
    %v4706 = vpop.permute.xlu0 %4705
    %v4708 = vadd.f32 %v4664, %v4706
    %v4709 = vxor.u32 %v4708, 2147483648
    %v4710 = vmul.f32 %v4709, 1.442695
    %v4711 = vpow.pop %v4710
    %v4712 = vadd.f32 %v4711, 1.0
    %v4713 = vrcp.pop %v4712
    %v4714 = vmul.f32 %v4712, %v4713
    %v4715 = vsub.f32 1.0, %v4714
    %v4716 = vmul.f32 %v4713, %v4715
    %v4717 = vadd.f32 %v4713, %v4716
    %vm4718 = vweird.f32 %v4712
    %vm4719 = vweird.f32 %v4713
    %vm4720 = vmor %vm4718, %vm4719
    %v4721 = vsel %vm4720, %v4713, %v4717
    %v4722 = vand.u32 2147483647, %v4712
    %vm4723 = vcmp.eq.f32.partialorder %v4722, 8.507059e+37
    %v4724 = vand.u32 %v4712, 2147483648
    %v4725 = vor.u32 1.1754944e-38, %v4724
    %v4726 = vsel %vm4723, %v4725, %v4721
    %v4727 = vmul.f32 1.0, %v4726
    %4728 = vrot.lane.b32.xlu0 %v4677, 96
    %v4729 = vpop.permute.xlu0 %4728
    %v4731 = vmul.f32 %v4703, %v4729
    %4733 = vrot.lane.b32.xlu0 %v4731, 64
    %v4734 = vpop.permute.xlu0 %4733
    %v4736 = vadd.f32 %v4664, %v4734
    %v4737 = vtanh.pop %v4736
    %v4738 = vsub.f32 1.0, %v4727
    %4740 = vrot.lane.b32.xlu0 %v4737, 96
    %v4741 = vpop.permute.xlu0 %4740
    %v4743 = vmul.f32 %v4738, %v4741
    %v4744 = vmul.f32 %v4727, %v3859
    %v4745 = vadd.f32 %v4743, %v4744
    %v4746 = vld [vmem:[#allocation2] sm:$0xff]
    %v4747 = vld [vmem:[#allocation2 + $0x8] sm:$0xff]
    %v4748 = vld [vmem:[#allocation2 + $0x10] sm:$0xff]
    %v4749 = vld [vmem:[#allocation2 + $0x18] sm:$0xff]
    %v4750 = vld [vmem:[#allocation2 + $0x20] sm:$0xff]
    %v4751 = vld [vmem:[#allocation2 + $0x28] sm:$0xff]
    %v4752 = vld [vmem:[#allocation2 + $0x30] sm:$0xff]
    %v4753 = vld [vmem:[#allocation2 + $0x38] sm:$0xff]
    %v4755 = vrot.slane %v4745, 1
    %v4756 = vrot.slane %v4745, 2
    %v4757 = vrot.slane %v4745, 3
    %v4758 = vrot.slane %v4745, 4
    %v4759 = vrot.slane %v4745, 5
    %v4760 = vrot.slane %v4745, 6
    %v4761 = vrot.slane %v4745, 7
    %v4762 = vperm.slane %v4745, 0
    %v4763 = vperm.slane %v4755, 0
    %v4764 = vperm.slane %v4756, 0
    %v4765 = vperm.slane %v4757, 0
    %v4766 = vperm.slane %v4758, 0
    %v4767 = vperm.slane %v4759, 0
    %v4768 = vperm.slane %v4760, 0
    %v4769 = vperm.slane %v4761, 0
    %4786 = vrot.lane.b32.xlu0 %v4746, 32
    %v4787 = vpop.permute.xlu0 %4786
    %4788 = vrot.lane.b32.xlu0 %v4747, 32
    %v4789 = vpop.permute.xlu0 %4788
    %4790 = vrot.lane.b32.xlu0 %v4748, 32
    %v4791 = vpop.permute.xlu0 %4790
    %4792 = vrot.lane.b32.xlu0 %v4749, 32
    %v4793 = vpop.permute.xlu0 %4792
    %4794 = vrot.lane.b32.xlu0 %v4750, 32
    %v4795 = vpop.permute.xlu0 %4794
    %4796 = vrot.lane.b32.xlu0 %v4751, 32
    %v4797 = vpop.permute.xlu0 %4796
    %4798 = vrot.lane.b32.xlu0 %v4752, 32
    %v4799 = vpop.permute.xlu0 %4798
    %4800 = vrot.lane.b32.xlu0 %v4753, 32
    %v4801 = vpop.permute.xlu0 %4800
    %v4810 = vmul.f32 %v4762, %v4787
    %v4811 = vmul.f32 %v4763, %v4789
    %v4812 = vmul.f32 %v4764, %v4791
    %v4813 = vmul.f32 %v4765, %v4793
    %v4814 = vmul.f32 %v4766, %v4795
    %v4815 = vmul.f32 %v4767, %v4797
    %v4816 = vmul.f32 %v4768, %v4799
    %v4817 = vmul.f32 %v4769, %v4801
    %4826 = vrot.lane.b32.xlu0 %v4810, 96
    %v4827 = vpop.permute.xlu0 %4826
    %4828 = vrot.lane.b32.xlu0 %v4811, 96
    %v4829 = vpop.permute.xlu0 %4828
    %4830 = vrot.lane.b32.xlu0 %v4812, 96
    %v4831 = vpop.permute.xlu0 %4830
    %4832 = vrot.lane.b32.xlu0 %v4813, 96
    %v4833 = vpop.permute.xlu0 %4832
    %4834 = vrot.lane.b32.xlu0 %v4814, 96
    %v4835 = vpop.permute.xlu0 %4834
    %4836 = vrot.lane.b32.xlu0 %v4815, 96
    %v4837 = vpop.permute.xlu0 %4836
    %4838 = vrot.lane.b32.xlu0 %v4816, 96
    %v4839 = vpop.permute.xlu0 %4838
    %4840 = vrot.lane.b32.xlu0 %v4817, 96
    %v4841 = vpop.permute.xlu0 %4840
    %v4850 = vsel %vm148, %v4827, 0.0
    %4851 = vadd.xlane.f32.xlu0 %v4850
    %v4852 = vpop.xlane.xlu0 %4851
    %v4853 = vsel %vm148, %v4829, 0.0
    %4854 = vadd.xlane.f32.xlu0 %v4853
    %v4855 = vpop.xlane.xlu0 %4854
    %v4856 = vsel %vm148, %v4831, 0.0
    %4857 = vadd.xlane.f32.xlu0 %v4856
    %v4858 = vpop.xlane.xlu0 %4857
    %v4859 = vsel %vm148, %v4833, 0.0
    %4860 = vadd.xlane.f32.xlu0 %v4859
    %v4861 = vpop.xlane.xlu0 %4860
    %v4862 = vsel %vm148, %v4835, 0.0
    %4863 = vadd.xlane.f32.xlu0 %v4862
    %v4864 = vpop.xlane.xlu0 %4863
    %v4865 = vsel %vm148, %v4837, 0.0
    %4866 = vadd.xlane.f32.xlu0 %v4865
    %v4867 = vpop.xlane.xlu0 %4866
    %v4868 = vsel %vm148, %v4839, 0.0
    %4869 = vadd.xlane.f32.xlu0 %v4868
    %v4870 = vpop.xlane.xlu0 %4869
    %v4871 = vsel %vm148, %v4841, 0.0
    %4872 = vadd.xlane.f32.xlu0 %v4871
    %v4873 = vpop.xlane.xlu0 %4872
    %v4882 = vperm.slane %v4852, %v61
    %v4883 = vperm.slane %v4855, %v61
    %v4884 = vperm.slane %v4858, %v61
    %v4885 = vperm.slane %v4861, %v61
    %v4886 = vperm.slane %v4864, %v61
    %v4887 = vperm.slane %v4867, %v61
    %v4888 = vperm.slane %v4870, %v61
    %v4889 = vperm.slane %v4873, %v61
    %v4890 = vsel %vm448, %v4883, %v4882
    %v4891 = vsel %vm450, %v4884, %v4890
    %v4892 = vsel %vm452, %v4885, %v4891
    %v4893 = vsel %vm454, %v4886, %v4892
    %v4894 = vsel %vm456, %v4887, %v4893
    %v4895 = vsel %vm458, %v4888, %v4894
    %v4896 = vsel %vm460, %v4889, %v4895
    %v4898 = vsel %vm463, %v4896, -inf
    %4899 = vmax.xlane.f32.xlu0 %v4898
    %v4900 = vpop.xlane.xlu0 %4899
    %v4902 = vperm.slane %v4900, 0
    %v4903 = vperm.slane %v4900, 1
    %v4904 = vperm.slane %v4900, 2
    %v4905 = vperm.slane %v4900, 3
    %v4906 = vperm.slane %v4900, 4
    %v4907 = vperm.slane %v4900, 5
    %v4908 = vperm.slane %v4900, 6
    %v4909 = vperm.slane %v4900, 7
    %v4918 = vsub.f32 %v4852, %v4902
    %v4919 = vsub.f32 %v4855, %v4903
    %v4920 = vsub.f32 %v4858, %v4904
    %v4921 = vsub.f32 %v4861, %v4905
    %v4922 = vsub.f32 %v4864, %v4906
    %v4923 = vsub.f32 %v4867, %v4907
    %v4924 = vsub.f32 %v4870, %v4908
    %v4925 = vsub.f32 %v4873, %v4909
    %v4926 = vmul.f32 %v4918, 1.442695
    %v4927 = vpow.pop %v4926
    %v4928 = vmul.f32 %v4919, 1.442695
    %v4929 = vpow.pop %v4928
    %v4930 = vmul.f32 %v4920, 1.442695
    %v4931 = vpow.pop %v4930
    %v4932 = vmul.f32 %v4921, 1.442695
    %v4933 = vpow.pop %v4932
    %v4934 = vmul.f32 %v4922, 1.442695
    %v4935 = vpow.pop %v4934
    %v4936 = vmul.f32 %v4923, 1.442695
    %v4937 = vpow.pop %v4936
    %v4938 = vmul.f32 %v4924, 1.442695
    %v4939 = vpow.pop %v4938
    %v4940 = vmul.f32 %v4925, 1.442695
    %v4941 = vpow.pop %v4940
    %4950 = vset.pattern.permute.xlu0 0
    %4951 = vperm.xlu0 %4950, %v4927
    %v4952 = vpop.permute.xlu0 %4951
    %4953 = vset.pattern.permute.xlu0 0
    %4954 = vperm.xlu0 %4953, %v4929
    %v4955 = vpop.permute.xlu0 %4954
    %4956 = vset.pattern.permute.xlu0 0
    %4957 = vperm.xlu0 %4956, %v4931
    %v4958 = vpop.permute.xlu0 %4957
    %4959 = vset.pattern.permute.xlu0 0
    %4960 = vperm.xlu0 %4959, %v4933
    %v4961 = vpop.permute.xlu0 %4960
    %4962 = vset.pattern.permute.xlu0 0
    %4963 = vperm.xlu0 %4962, %v4935
    %v4964 = vpop.permute.xlu0 %4963
    %4965 = vset.pattern.permute.xlu0 0
    %4966 = vperm.xlu0 %4965, %v4937
    %v4967 = vpop.permute.xlu0 %4966
    %4968 = vset.pattern.permute.xlu0 0
    %4969 = vperm.xlu0 %4968, %v4939
    %v4970 = vpop.permute.xlu0 %4969
    %4971 = vset.pattern.permute.xlu0 0
    %4972 = vperm.xlu0 %4971, %v4941
    %v4973 = vpop.permute.xlu0 %4972
    %v4974 = vperm.slane %v4952, %v61
    %v4975 = vperm.slane %v4955, %v61
    %v4976 = vperm.slane %v4958, %v61
    %v4977 = vperm.slane %v4961, %v61
    %v4978 = vperm.slane %v4964, %v61
    %v4979 = vperm.slane %v4967, %v61
    %v4980 = vperm.slane %v4970, %v61
    %v4981 = vperm.slane %v4973, %v61
    %v4982 = vsel %vm448, %v4975, %v4974
    %v4983 = vsel %vm450, %v4976, %v4982
    %v4984 = vsel %vm452, %v4977, %v4983
    %v4985 = vsel %vm454, %v4978, %v4984
    %v4986 = vsel %vm456, %v4979, %v4985
    %v4987 = vsel %vm458, %v4980, %v4986
    %v4988 = vsel %vm460, %v4981, %v4987
    %v4990 = vsel %vm463, %v4988, 0.0
    %4991 = vadd.xlane.f32.xlu0 %v4990
    %v4992 = vpop.xlane.xlu0 %4991
    %v4994 = vperm.slane %v4992, 0
    %v4995 = vperm.slane %v4992, 1
    %v4996 = vperm.slane %v4992, 2
    %v4997 = vperm.slane %v4992, 3
    %v4998 = vperm.slane %v4992, 4
    %v4999 = vperm.slane %v4992, 5
    %v5000 = vperm.slane %v4992, 6
    %v5001 = vperm.slane %v4992, 7
    %v5010 = vrcp.pop %v4994
    %v5011 = vmul.f32 %v4994, %v5010
    %v5012 = vsub.f32 1.0, %v5011
    %v5013 = vmul.f32 %v5010, %v5012
    %v5014 = vadd.f32 %v5010, %v5013
    %vm5015 = vweird.f32 %v4994
    %vm5016 = vweird.f32 %v5010
    %vm5017 = vmor %vm5015, %vm5016
    %v5018 = vsel %vm5017, %v5010, %v5014
    %v5019 = vand.u32 2147483647, %v4994
    %vm5020 = vcmp.eq.f32.partialorder %v5019, 8.507059e+37
    %v5021 = vand.u32 %v4994, 2147483648
    %v5022 = vor.u32 1.1754944e-38, %v5021
    %v5023 = vsel %vm5020, %v5022, %v5018
    %v5024 = vmul.f32 %v4927, %v5023
    %v5025 = vrcp.pop %v4995
    %v5026 = vmul.f32 %v4995, %v5025
    %v5027 = vsub.f32 1.0, %v5026
    %v5028 = vmul.f32 %v5025, %v5027
    %v5029 = vadd.f32 %v5025, %v5028
    %vm5030 = vweird.f32 %v4995
    %vm5031 = vweird.f32 %v5025
    %vm5032 = vmor %vm5030, %vm5031
    %v5033 = vsel %vm5032, %v5025, %v5029
    %v5034 = vand.u32 2147483647, %v4995
    %vm5035 = vcmp.eq.f32.partialorder %v5034, 8.507059e+37
    %v5036 = vand.u32 %v4995, 2147483648
    %v5037 = vor.u32 1.1754944e-38, %v5036
    %v5038 = vsel %vm5035, %v5037, %v5033
    %v5039 = vmul.f32 %v4929, %v5038
    %v5040 = vrcp.pop %v4996
    %v5041 = vmul.f32 %v4996, %v5040
    %v5042 = vsub.f32 1.0, %v5041
    %v5043 = vmul.f32 %v5040, %v5042
    %v5044 = vadd.f32 %v5040, %v5043
    %vm5045 = vweird.f32 %v4996
    %vm5046 = vweird.f32 %v5040
    %vm5047 = vmor %vm5045, %vm5046
    %v5048 = vsel %vm5047, %v5040, %v5044
    %v5049 = vand.u32 2147483647, %v4996
    %vm5050 = vcmp.eq.f32.partialorder %v5049, 8.507059e+37
    %v5051 = vand.u32 %v4996, 2147483648
    %v5052 = vor.u32 1.1754944e-38, %v5051
    %v5053 = vsel %vm5050, %v5052, %v5048
    %v5054 = vmul.f32 %v4931, %v5053
    %v5055 = vrcp.pop %v4997
    %v5056 = vmul.f32 %v4997, %v5055
    %v5057 = vsub.f32 1.0, %v5056
    %v5058 = vmul.f32 %v5055, %v5057
    %v5059 = vadd.f32 %v5055, %v5058
    %vm5060 = vweird.f32 %v4997
    %vm5061 = vweird.f32 %v5055
    %vm5062 = vmor %vm5060, %vm5061
    %v5063 = vsel %vm5062, %v5055, %v5059
    %v5064 = vand.u32 2147483647, %v4997
    %vm5065 = vcmp.eq.f32.partialorder %v5064, 8.507059e+37
    %v5066 = vand.u32 %v4997, 2147483648
    %v5067 = vor.u32 1.1754944e-38, %v5066
    %v5068 = vsel %vm5065, %v5067, %v5063
    %v5069 = vmul.f32 %v4933, %v5068
    %v5070 = vrcp.pop %v4998
    %v5071 = vmul.f32 %v4998, %v5070
    %v5072 = vsub.f32 1.0, %v5071
    %v5073 = vmul.f32 %v5070, %v5072
    %v5074 = vadd.f32 %v5070, %v5073
    %vm5075 = vweird.f32 %v4998
    %vm5076 = vweird.f32 %v5070
    %vm5077 = vmor %vm5075, %vm5076
    %v5078 = vsel %vm5077, %v5070, %v5074
    %v5079 = vand.u32 2147483647, %v4998
    %vm5080 = vcmp.eq.f32.partialorder %v5079, 8.507059e+37
    %v5081 = vand.u32 %v4998, 2147483648
    %v5082 = vor.u32 1.1754944e-38, %v5081
    %v5083 = vsel %vm5080, %v5082, %v5078
    %v5084 = vmul.f32 %v4935, %v5083
    %v5085 = vrcp.pop %v4999
    %v5086 = vmul.f32 %v4999, %v5085
    %v5087 = vsub.f32 1.0, %v5086
    %v5088 = vmul.f32 %v5085, %v5087
    %v5089 = vadd.f32 %v5085, %v5088
    %vm5090 = vweird.f32 %v4999
    %vm5091 = vweird.f32 %v5085
    %vm5092 = vmor %vm5090, %vm5091
    %v5093 = vsel %vm5092, %v5085, %v5089
    %v5094 = vand.u32 2147483647, %v4999
    %vm5095 = vcmp.eq.f32.partialorder %v5094, 8.507059e+37
    %v5096 = vand.u32 %v4999, 2147483648
    %v5097 = vor.u32 1.1754944e-38, %v5096
    %v5098 = vsel %vm5095, %v5097, %v5093
    %v5099 = vmul.f32 %v4937, %v5098
    %v5100 = vrcp.pop %v5000
    %v5101 = vmul.f32 %v5000, %v5100
    %v5102 = vsub.f32 1.0, %v5101
    %v5103 = vmul.f32 %v5100, %v5102
    %v5104 = vadd.f32 %v5100, %v5103
    %vm5105 = vweird.f32 %v5000
    %vm5106 = vweird.f32 %v5100
    %vm5107 = vmor %vm5105, %vm5106
    %v5108 = vsel %vm5107, %v5100, %v5104
    %v5109 = vand.u32 2147483647, %v5000
    %vm5110 = vcmp.eq.f32.partialorder %v5109, 8.507059e+37
    %v5111 = vand.u32 %v5000, 2147483648
    %v5112 = vor.u32 1.1754944e-38, %v5111
    %v5113 = vsel %vm5110, %v5112, %v5108
    %v5114 = vmul.f32 %v4939, %v5113
    %v5115 = vrcp.pop %v5001
    %v5116 = vmul.f32 %v5001, %v5115
    %v5117 = vsub.f32 1.0, %v5116
    %v5118 = vmul.f32 %v5115, %v5117
    %v5119 = vadd.f32 %v5115, %v5118
    %vm5120 = vweird.f32 %v5001
    %vm5121 = vweird.f32 %v5115
    %vm5122 = vmor %vm5120, %vm5121
    %v5123 = vsel %vm5122, %v5115, %v5119
    %v5124 = vand.u32 2147483647, %v5001
    %vm5125 = vcmp.eq.f32.partialorder %v5124, 8.507059e+37
    %v5126 = vand.u32 %v5001, 2147483648
    %v5127 = vor.u32 1.1754944e-38, %v5126
    %v5128 = vsel %vm5125, %v5127, %v5123
    %v5129 = vmul.f32 %v4941, %v5128
    %5138 = vset.pattern.permute.xlu0 0
    %5139 = vperm.xlu0 %5138, %v5024
    %v5140 = vpop.permute.xlu0 %5139
    %5141 = vset.pattern.permute.xlu0 0
    %5142 = vperm.xlu0 %5141, %v5039
    %v5143 = vpop.permute.xlu0 %5142
    %5144 = vset.pattern.permute.xlu0 0
    %5145 = vperm.xlu0 %5144, %v5054
    %v5146 = vpop.permute.xlu0 %5145
    %5147 = vset.pattern.permute.xlu0 0
    %5148 = vperm.xlu0 %5147, %v5069
    %v5149 = vpop.permute.xlu0 %5148
    %5150 = vset.pattern.permute.xlu0 0
    %5151 = vperm.xlu0 %5150, %v5084
    %v5152 = vpop.permute.xlu0 %5151
    %5153 = vset.pattern.permute.xlu0 0
    %5154 = vperm.xlu0 %5153, %v5099
    %v5155 = vpop.permute.xlu0 %5154
    %5156 = vset.pattern.permute.xlu0 0
    %5157 = vperm.xlu0 %5156, %v5114
    %v5158 = vpop.permute.xlu0 %5157
    %5159 = vset.pattern.permute.xlu0 0
    %5160 = vperm.xlu0 %5159, %v5129
    %v5161 = vpop.permute.xlu0 %5160
    %v5162 = vperm.slane %v5140, %v61
    %v5163 = vperm.slane %v5143, %v61
    %v5164 = vperm.slane %v5146, %v61
    %v5165 = vperm.slane %v5149, %v61
    %v5166 = vperm.slane %v5152, %v61
    %v5167 = vperm.slane %v5155, %v61
    %v5168 = vperm.slane %v5158, %v61
    %v5169 = vperm.slane %v5161, %v61
    %v5170 = vsel %vm448, %v5163, %v5162
    %v5171 = vsel %vm450, %v5164, %v5170
    %v5172 = vsel %vm452, %v5165, %v5171
    %v5173 = vsel %vm454, %v5166, %v5172
    %v5174 = vsel %vm456, %v5167, %v5173
    %v5175 = vsel %vm458, %v5168, %v5174
    %v5176 = vsel %vm460, %v5169, %v5175
    %s5178 = scalar_lea.vmem [#allocation6], 40
    %5179 = vst.msk [vmem:[%s5178] sm:$0xff] %vm463, %v5176
    %v5188 = vmul.f32 %v5140, %v4746
    %v5189 = vmul.f32 %v5143, %v4747
    %v5190 = vmul.f32 %v5146, %v4748
    %v5191 = vmul.f32 %v5149, %v4749
    %v5192 = vmul.f32 %v5152, %v4750
    %v5193 = vmul.f32 %v5155, %v4751
    %v5194 = vmul.f32 %v5158, %v4752
    %v5195 = vmul.f32 %v5161, %v4753
    %v5196 = vsel %vm148, %v5188, 0.0
    %v5197 = vrot.slane %v5196, 4
    %v5198 = vadd.f32 %v5196, %v5197
    %v5199 = vrot.slane %v5198, 2
    %v5200 = vadd.f32 %v5198, %v5199
    %v5201 = vrot.slane %v5200, 1
    %v5202 = vadd.f32 %v5200, %v5201
    %v5203 = vsel %vm148, %v5189, 0.0
    %v5204 = vrot.slane %v5203, 4
    %v5205 = vadd.f32 %v5203, %v5204
    %v5206 = vrot.slane %v5205, 2
    %v5207 = vadd.f32 %v5205, %v5206
    %v5208 = vrot.slane %v5207, 1
    %v5209 = vadd.f32 %v5207, %v5208
    %v5210 = vsel %vm148, %v5190, 0.0
    %v5211 = vrot.slane %v5210, 4
    %v5212 = vadd.f32 %v5210, %v5211
    %v5213 = vrot.slane %v5212, 2
    %v5214 = vadd.f32 %v5212, %v5213
    %v5215 = vrot.slane %v5214, 1
    %v5216 = vadd.f32 %v5214, %v5215
    %v5217 = vsel %vm148, %v5191, 0.0
    %v5218 = vrot.slane %v5217, 4
    %v5219 = vadd.f32 %v5217, %v5218
    %v5220 = vrot.slane %v5219, 2
    %v5221 = vadd.f32 %v5219, %v5220
    %v5222 = vrot.slane %v5221, 1
    %v5223 = vadd.f32 %v5221, %v5222
    %v5224 = vsel %vm148, %v5192, 0.0
    %v5225 = vrot.slane %v5224, 4
    %v5226 = vadd.f32 %v5224, %v5225
    %v5227 = vrot.slane %v5226, 2
    %v5228 = vadd.f32 %v5226, %v5227
    %v5229 = vrot.slane %v5228, 1
    %v5230 = vadd.f32 %v5228, %v5229
    %v5231 = vsel %vm148, %v5193, 0.0
    %v5232 = vrot.slane %v5231, 4
    %v5233 = vadd.f32 %v5231, %v5232
    %v5234 = vrot.slane %v5233, 2
    %v5235 = vadd.f32 %v5233, %v5234
    %v5236 = vrot.slane %v5235, 1
    %v5237 = vadd.f32 %v5235, %v5236
    %v5238 = vsel %vm148, %v5194, 0.0
    %v5239 = vrot.slane %v5238, 4
    %v5240 = vadd.f32 %v5238, %v5239
    %v5241 = vrot.slane %v5240, 2
    %v5242 = vadd.f32 %v5240, %v5241
    %v5243 = vrot.slane %v5242, 1
    %v5244 = vadd.f32 %v5242, %v5243
    %v5245 = vsel %vm148, %v5195, 0.0
    %v5246 = vrot.slane %v5245, 4
    %v5247 = vadd.f32 %v5245, %v5246
    %v5248 = vrot.slane %v5247, 2
    %v5249 = vadd.f32 %v5247, %v5248
    %v5250 = vrot.slane %v5249, 1
    %v5251 = vadd.f32 %v5249, %v5250
    %v5252 = vpack.c.bf16 %v5202, %v5202
    %v5253 = vpack.c.bf16 %v5209, %v5209
    %v5254 = vpack.c.bf16 %v5216, %v5216
    %v5255 = vpack.c.bf16 %v5223, %v5223
    %v5256 = vpack.c.bf16 %v5230, %v5230
    %v5257 = vpack.c.bf16 %v5237, %v5237
    %v5258 = vpack.c.bf16 %v5244, %v5244
    %v5259 = vpack.c.bf16 %v5251, %v5251
    %v5260 = vpack.c.bf16 %v4745, %v4745
    %v5269 = vperm.slane %v5252, 0
    %v5270 = vperm.slane %v5253, 0
    %v5271 = vperm.slane %v5254, 0
    %v5272 = vperm.slane %v5255, 0
    %v5273 = vperm.slane %v5256, 0
    %v5274 = vperm.slane %v5257, 0
    %v5275 = vperm.slane %v5258, 0
    %v5276 = vperm.slane %v5259, 0
    %v5277 = vunpack.c.l.b16 %v5269
    %v5278 = vunpack.c.l.b16 %v5270
    %v5279 = vunpack.c.l.b16 %v5271
    %v5280 = vunpack.c.l.b16 %v5272
    %v5281 = vunpack.c.l.b16 %v5273
    %v5282 = vunpack.c.l.b16 %v5274
    %v5283 = vunpack.c.l.b16 %v5275
    %v5284 = vunpack.c.l.b16 %v5276
    %v5285 = vsel %vm448, %v5278, %v5277
    %v5286 = vsel %vm450, %v5279, %v5285
    %v5287 = vsel %vm452, %v5280, %v5286
    %v5288 = vsel %vm454, %v5281, %v5287
    %v5289 = vsel %vm456, %v5282, %v5288
    %v5290 = vsel %vm458, %v5283, %v5289
    %v5291 = vsel %vm460, %v5284, %v5290
    %v5292 = vpack.c.b16 %v5291, %v5291
    %v5295 = vsel %vm148, %v5292, %v5260
    %v5296 = vld [vmem:[%s3] sm:$0xf]
    %v5297 = vld [vmem:[%s3 + $0x4] sm:$0xf]
    %v5298 = vld [vmem:[%s3 + $0x8] sm:$0xf]
    %v5299 = vld [vmem:[%s3 + $0xc] sm:$0xf]
    %v5300 = vld [vmem:[%s3 + $0x10] sm:$0xf]
    %v5301 = vld [vmem:[%s3 + $0x14] sm:$0xf]
    %v5302 = vld [vmem:[%s3 + $0x18] sm:$0xf]
    %v5303 = vld [vmem:[%s3 + $0x1c] sm:$0xf]
    %v5312 = vunpack.c.l.b16 %v5296
    %v5313 = vunpack.c.l.b16 %v5297
    %v5314 = vunpack.c.l.b16 %v5298
    %v5315 = vunpack.c.l.b16 %v5299
    %v5316 = vunpack.c.l.b16 %v5300
    %v5317 = vunpack.c.l.b16 %v5301
    %v5318 = vunpack.c.l.b16 %v5302
    %v5319 = vunpack.c.l.b16 %v5303
    %v5320 = vpack.c.b16 %v5313, %v5312
    %v5321 = vpack.c.b16 %v5315, %v5314
    %v5322 = vpack.c.b16 %v5317, %v5316
    %v5323 = vpack.c.b16 %v5319, %v5318
    %v5328 = vsel %vm205, %v5295, 0
    %5330 = vmatpush.bf16.msra.mxu0 0
    %5331 = vmatpush.bf16.msra.mxu0 0
    %5332 = vmatpush.bf16.msra.mxu0 0
    %5333 = vmatpush.bf16.msra.mxu0 0
    %5334 = vmatpush.bf16.msra.mxu0 %v5323
    %5335 = vmatpush.bf16.msra.mxu0 %v5322
    %5336 = vmatpush.bf16.msra.mxu0 %v5321
    %5337 = vmatpush.bf16.msra.mxu0 %v5320
    %5338 = vmatmul.bf16.gmra.mxu0 %v5328
    %v5339 = vpop.f32.mrf.mxu0
    %v5340 = vadd.f32 %v870, %v5339
    %v5341 = vpop.f32.mrf.mxu0
    %5342 = vdwg.mxu0
    %v5343 = vtanh.pop %v5340
    %v5344 = vpack.c.bf16 %v5343, %v5343
    %v5345 = vld [vmem:[%s5] sm:$0xf]
    %v5346 = vld [vmem:[%s5 + $0x4] sm:$0xf]
    %v5347 = vld [vmem:[%s5 + $0x8] sm:$0xf]
    %v5348 = vld [vmem:[%s5 + $0xc] sm:$0xf]
    %v5353 = vunpack.c.l.b16 %v5345
    %v5354 = vunpack.c.l.b16 %v5346
    %v5355 = vunpack.c.l.b16 %v5347
    %v5356 = vunpack.c.l.b16 %v5348
    %v5357 = vpack.c.b16 %v5354, %v5353
    %v5358 = vpack.c.b16 %v5356, %v5355
    %v5362 = vsel %vm148, %v5344, 0
    %5364 = vmatpush.bf16.msra.mxu0 0
    %5365 = vmatpush.bf16.msra.mxu0 0
    %5366 = vmatpush.bf16.msra.mxu0 0
    %5367 = vmatpush.bf16.msra.mxu0 0
    %5368 = vmatpush.bf16.msra.mxu0 0
    %5369 = vmatpush.bf16.msra.mxu0 0
    %5370 = vmatpush.bf16.msra.mxu0 %v5358
    %5371 = vmatpush.bf16.msra.mxu0 %v5357
    %5372 = vmatmul.bf16.gmra.mxu0 %v5362
    %v5373 = vpop.f32.mrf.mxu0
    %v5374 = vadd.f32 %v918, %v5373
    %v5375 = vpop.f32.mrf.mxu0
    %5376 = vdwg.mxu0
    %5377 = vmax.xlane.f32.xlu0 %v5374
    %v5378 = vpop.xlane.xlu0 %5377
    %v5379 = vsub.f32 %v5374, %v5378
    %v5380 = vmul.f32 %v5379, 1.442695
    %v5381 = vpow.pop %v5380
    %5382 = vadd.xlane.f32.xlu0 %v5381
    %v5383 = vpop.xlane.xlu0 %5382
    %v5384 = vlog2.pop %v5383
    %v5385 = vmul.f32 %v5384, 0.6931472
    %v5386 = vadd.f32 %v5385, %v5378
    %v5387 = vsub.f32 %v5374, %v5386
    %s5388 = scalar_lea.vmem [#allocation5], 40
    %5389 = vst [vmem:[%s5388] sm:$0xff] %v5387
    %vm5390 = vcmp.eq.f32.partialorder %v5374, %v5378
    %v5391 = vsel %vm5390, %v61, 128
    %v5392 = vand.u32 %v5391, 65535
    %v5393 = vshra.s32 %v5391, 16
    %v5394 = vcvt.s32.f32 %v5392
    %v5395 = vcvt.s32.f32 %v5393
    %5396 = vmin.xlane.f32.xlu0 %v5395
    %v5397 = vpop.xlane.xlu0 %5396
    %vm5398 = vcmp.eq.f32.partialorder %v5395, %v5397
    %v5399 = vsel %vm5398, %v5394, inf
    %5400 = vmin.xlane.f32.xlu0 %v5399
    %v5401 = vpop.xlane.xlu0 %5400
    %v5402 = vcvt.f32.s32 %v5401
    %v5403 = vcvt.f32.s32 %v5397
    %v5404 = vshll.u32 %v5403, 16
    %v5405 = vadd.s32 %v5404, %v5402
    %vm5406 = vcmp.eq.s32.totalorder %v61, %v5405
    %v5407 = vsel %vm5406, 1, 0
    %v5408 = vcvt.s32.f32 %v5407
    %v5409 = vpack.c.bf16 %v5408, %v5408
    %v5410 = vld [vmem:[%s0] sm:$0xf]
    %v5411 = vld [vmem:[%s0 + $0x4] sm:$0xf]
    %v5412 = vld [vmem:[%s0 + $0x8] sm:$0xf]
    %v5413 = vld [vmem:[%s0 + $0xc] sm:$0xf]
    %v5414 = vld [vmem:[%s0 + $0x10] sm:$0xf]
    %v5415 = vld [vmem:[%s0 + $0x14] sm:$0xf]
    %v5416 = vld [vmem:[%s0 + $0x18] sm:$0xf]
    %v5417 = vld [vmem:[%s0 + $0x1c] sm:$0xf]
    %v5418 = vld [vmem:[%s0 + $0x20] sm:$0xf]
    %v5419 = vld [vmem:[%s0 + $0x24] sm:$0xf]
    %v5420 = vld [vmem:[%s0 + $0x28] sm:$0xf]
    %v5421 = vld [vmem:[%s0 + $0x2c] sm:$0xf]
    %v5422 = vld [vmem:[%s0 + $0x30] sm:$0xf]
    %v5423 = vld [vmem:[%s0 + $0x34] sm:$0xf]
    %v5424 = vld [vmem:[%s0 + $0x38] sm:$0xf]
    %v5425 = vld [vmem:[%s0 + $0x3c] sm:$0xf]
    %v5442 = vunpack.c.l.b16 %v5410
    %v5443 = vunpack.c.l.b16 %v5411
    %v5444 = vunpack.c.l.b16 %v5412
    %v5445 = vunpack.c.l.b16 %v5413
    %v5446 = vunpack.c.l.b16 %v5414
    %v5447 = vunpack.c.l.b16 %v5415
    %v5448 = vunpack.c.l.b16 %v5416
    %v5449 = vunpack.c.l.b16 %v5417
    %v5450 = vunpack.c.l.b16 %v5418
    %v5451 = vunpack.c.l.b16 %v5419
    %v5452 = vunpack.c.l.b16 %v5420
    %v5453 = vunpack.c.l.b16 %v5421
    %v5454 = vunpack.c.l.b16 %v5422
    %v5455 = vunpack.c.l.b16 %v5423
    %v5456 = vunpack.c.l.b16 %v5424
    %v5457 = vunpack.c.l.b16 %v5425
    %v5458 = vpack.c.b16 %v5443, %v5442
    %v5459 = vpack.c.b16 %v5445, %v5444
    %v5460 = vpack.c.b16 %v5447, %v5446
    %v5461 = vpack.c.b16 %v5449, %v5448
    %v5462 = vpack.c.b16 %v5451, %v5450
    %v5463 = vpack.c.b16 %v5453, %v5452
    %v5464 = vpack.c.b16 %v5455, %v5454
    %v5465 = vpack.c.b16 %v5457, %v5456
    %5474 = vmatpush.bf16.msra.mxu0 %v5465
    %5475 = vmatpush.bf16.msra.mxu0 %v5464
    %5476 = vmatpush.bf16.msra.mxu0 %v5463
    %5477 = vmatpush.bf16.msra.mxu0 %v5462
    %5478 = vmatpush.bf16.msra.mxu0 %v5461
    %5479 = vmatpush.bf16.msra.mxu0 %v5460
    %5480 = vmatpush.bf16.msra.mxu0 %v5459
    %5481 = vmatpush.bf16.msra.mxu0 %v5458
    %5482 = vmatmul.bf16.gmra.mxu0 %v5409
    %v5483 = vpop.f32.mrf.mxu0
    %v5484 = vadd.f32 0.0, %v5483
    %v5485 = vpop.f32.mrf.mxu0
    %5486 = vdwg.mxu0
    %v5487 = vpack.c.bf16 %v5484, %v5484
    %v5489 = vsel %vm148, %v5487, %v5260
    %v5490 = vld [vmem:[%s1] sm:$0xff]
    %v5491 = vld [vmem:[%s1 + $0x8] sm:$0xff]
    %v5492 = vld [vmem:[%s1 + $0x10] sm:$0xff]
    %v5493 = vld [vmem:[%s1 + $0x18] sm:$0xff]
    %v5494 = vld [vmem:[%s1 + $0x20] sm:$0xff]
    %v5495 = vld [vmem:[%s1 + $0x28] sm:$0xff]
    %v5496 = vld [vmem:[%s1 + $0x30] sm:$0xff]
    %v5497 = vld [vmem:[%s1 + $0x38] sm:$0xff]
    %v5506 = vunpack.c.l.b16 %v5490
    %v5507 = vunpack.c.h.b16 %v5490
    %v5508 = vunpack.c.l.b16 %v5491
    %v5509 = vunpack.c.h.b16 %v5491
    %v5510 = vunpack.c.l.b16 %v5492
    %v5511 = vunpack.c.h.b16 %v5492
    %v5512 = vunpack.c.l.b16 %v5493
    %v5513 = vunpack.c.h.b16 %v5493
    %v5514 = vunpack.c.l.b16 %v5494
    %v5515 = vunpack.c.h.b16 %v5494
    %v5516 = vunpack.c.l.b16 %v5495
    %v5517 = vunpack.c.h.b16 %v5495
    %v5518 = vunpack.c.l.b16 %v5496
    %v5519 = vunpack.c.h.b16 %v5496
    %v5520 = vunpack.c.l.b16 %v5497
    %v5521 = vunpack.c.h.b16 %v5497
    %v5522 = vpack.c.b16 %v5508, %v5506
    %v5523 = vpack.c.b16 %v5509, %v5507
    %v5524 = vpack.c.b16 %v5512, %v5510
    %v5525 = vpack.c.b16 %v5513, %v5511
    %v5526 = vpack.c.b16 %v5516, %v5514
    %v5527 = vpack.c.b16 %v5517, %v5515
    %v5528 = vpack.c.b16 %v5520, %v5518
    %v5529 = vpack.c.b16 %v5521, %v5519
    %v5538 = vsel %vm205, %v5489, 0
    %5540 = vmatpush.bf16.msra.mxu0 0
    %5541 = vmatpush.bf16.msra.mxu0 0
    %5542 = vmatpush.bf16.msra.mxu0 0
    %5543 = vmatpush.bf16.msra.mxu0 0
    %5544 = vmatpush.bf16.msra.mxu0 %v5528
    %5545 = vmatpush.bf16.msra.mxu0 %v5526
    %5546 = vmatpush.bf16.msra.mxu0 %v5524
    %5547 = vmatpush.bf16.msra.mxu0 %v5522
    %5548 = vmatmul.bf16.gmra.mxu0 %v5538
    %v5549 = vpop.f32.mrf.mxu0
    %v5550 = vadd.f32 %v161, %v5549
    %v5551 = vpop.f32.mrf.mxu0
    %5552 = vdwg.mxu0
    %5553 = vmatpush.bf16.msra.mxu0 0
    %5554 = vmatpush.bf16.msra.mxu0 0
    %5555 = vmatpush.bf16.msra.mxu0 0
    %5556 = vmatpush.bf16.msra.mxu0 0
    %5557 = vmatpush.bf16.msra.mxu0 %v5529
    %5558 = vmatpush.bf16.msra.mxu0 %v5527
    %5559 = vmatpush.bf16.msra.mxu0 %v5525
    %5560 = vmatpush.bf16.msra.mxu0 %v5523
    %5561 = vmatmul.bf16.gmra.mxu0 %v5538
    %v5562 = vpop.f32.mrf.mxu0
    %v5563 = vadd.f32 %v162, %v5562
    %v5564 = vpop.f32.mrf.mxu0
    %5565 = vdwg.mxu0
    %5567 = vrot.lane.b32.xlu0 %v5550, 32
    %v5568 = vpop.permute.xlu0 %5567
    %v5570 = vadd.f32 %v5550, %v5568
    %v5571 = vxor.u32 %v5570, 2147483648
    %v5572 = vmul.f32 %v5571, 1.442695
    %v5573 = vpow.pop %v5572
    %v5574 = vadd.f32 %v5573, 1.0
    %v5575 = vrcp.pop %v5574
    %v5576 = vmul.f32 %v5574, %v5575
    %v5577 = vsub.f32 1.0, %v5576
    %v5578 = vmul.f32 %v5575, %v5577
    %v5579 = vadd.f32 %v5575, %v5578
    %vm5580 = vweird.f32 %v5574
    %vm5581 = vweird.f32 %v5575
    %vm5582 = vmor %vm5580, %vm5581
    %v5583 = vsel %vm5582, %v5575, %v5579
    %v5584 = vand.u32 2147483647, %v5574
    %vm5585 = vcmp.eq.f32.partialorder %v5584, 8.507059e+37
    %v5586 = vand.u32 %v5574, 2147483648
    %v5587 = vor.u32 1.1754944e-38, %v5586
    %v5588 = vsel %vm5585, %v5587, %v5583
    %v5589 = vmul.f32 1.0, %v5588
    %5591 = vrot.lane.b32.xlu0 %v5563, 32
    %v5592 = vpop.permute.xlu0 %5591
    %v5594 = vadd.f32 %v5550, %v5592
    %v5595 = vxor.u32 %v5594, 2147483648
    %v5596 = vmul.f32 %v5595, 1.442695
    %v5597 = vpow.pop %v5596
    %v5598 = vadd.f32 %v5597, 1.0
    %v5599 = vrcp.pop %v5598
    %v5600 = vmul.f32 %v5598, %v5599
    %v5601 = vsub.f32 1.0, %v5600
    %v5602 = vmul.f32 %v5599, %v5601
    %v5603 = vadd.f32 %v5599, %v5602
    %vm5604 = vweird.f32 %v5598
    %vm5605 = vweird.f32 %v5599
    %vm5606 = vmor %vm5604, %vm5605
    %v5607 = vsel %vm5606, %v5599, %v5603
    %v5608 = vand.u32 2147483647, %v5598
    %vm5609 = vcmp.eq.f32.partialorder %v5608, 8.507059e+37
    %v5610 = vand.u32 %v5598, 2147483648
    %v5611 = vor.u32 1.1754944e-38, %v5610
    %v5612 = vsel %vm5609, %v5611, %v5607
    %v5613 = vmul.f32 1.0, %v5612
    %5614 = vrot.lane.b32.xlu0 %v5563, 96
    %v5615 = vpop.permute.xlu0 %5614
    %v5617 = vmul.f32 %v5589, %v5615
    %5619 = vrot.lane.b32.xlu0 %v5617, 64
    %v5620 = vpop.permute.xlu0 %5619
    %v5622 = vadd.f32 %v5550, %v5620
    %v5623 = vtanh.pop %v5622
    %v5624 = vsub.f32 1.0, %v5613
    %5626 = vrot.lane.b32.xlu0 %v5623, 96
    %v5627 = vpop.permute.xlu0 %5626
    %v5629 = vmul.f32 %v5624, %v5627
    %v5630 = vmul.f32 %v5613, %v4745
    %v5631 = vadd.f32 %v5629, %v5630
    %v5632 = vld [vmem:[#allocation2] sm:$0xff]
    %v5633 = vld [vmem:[#allocation2 + $0x8] sm:$0xff]
    %v5634 = vld [vmem:[#allocation2 + $0x10] sm:$0xff]
    %v5635 = vld [vmem:[#allocation2 + $0x18] sm:$0xff]
    %v5636 = vld [vmem:[#allocation2 + $0x20] sm:$0xff]
    %v5637 = vld [vmem:[#allocation2 + $0x28] sm:$0xff]
    %v5638 = vld [vmem:[#allocation2 + $0x30] sm:$0xff]
    %v5639 = vld [vmem:[#allocation2 + $0x38] sm:$0xff]
    %v5641 = vrot.slane %v5631, 1
    %v5642 = vrot.slane %v5631, 2
    %v5643 = vrot.slane %v5631, 3
    %v5644 = vrot.slane %v5631, 4
    %v5645 = vrot.slane %v5631, 5
    %v5646 = vrot.slane %v5631, 6
    %v5647 = vrot.slane %v5631, 7
    %v5648 = vperm.slane %v5631, 0
    %v5649 = vperm.slane %v5641, 0
    %v5650 = vperm.slane %v5642, 0
    %v5651 = vperm.slane %v5643, 0
    %v5652 = vperm.slane %v5644, 0
    %v5653 = vperm.slane %v5645, 0
    %v5654 = vperm.slane %v5646, 0
    %v5655 = vperm.slane %v5647, 0
    %5672 = vrot.lane.b32.xlu0 %v5632, 32
    %v5673 = vpop.permute.xlu0 %5672
    %5674 = vrot.lane.b32.xlu0 %v5633, 32
    %v5675 = vpop.permute.xlu0 %5674
    %5676 = vrot.lane.b32.xlu0 %v5634, 32
    %v5677 = vpop.permute.xlu0 %5676
    %5678 = vrot.lane.b32.xlu0 %v5635, 32
    %v5679 = vpop.permute.xlu0 %5678
    %5680 = vrot.lane.b32.xlu0 %v5636, 32
    %v5681 = vpop.permute.xlu0 %5680
    %5682 = vrot.lane.b32.xlu0 %v5637, 32
    %v5683 = vpop.permute.xlu0 %5682
    %5684 = vrot.lane.b32.xlu0 %v5638, 32
    %v5685 = vpop.permute.xlu0 %5684
    %5686 = vrot.lane.b32.xlu0 %v5639, 32
    %v5687 = vpop.permute.xlu0 %5686
    %v5696 = vmul.f32 %v5648, %v5673
    %v5697 = vmul.f32 %v5649, %v5675
    %v5698 = vmul.f32 %v5650, %v5677
    %v5699 = vmul.f32 %v5651, %v5679
    %v5700 = vmul.f32 %v5652, %v5681
    %v5701 = vmul.f32 %v5653, %v5683
    %v5702 = vmul.f32 %v5654, %v5685
    %v5703 = vmul.f32 %v5655, %v5687
    %5712 = vrot.lane.b32.xlu0 %v5696, 96
    %v5713 = vpop.permute.xlu0 %5712
    %5714 = vrot.lane.b32.xlu0 %v5697, 96
    %v5715 = vpop.permute.xlu0 %5714
    %5716 = vrot.lane.b32.xlu0 %v5698, 96
    %v5717 = vpop.permute.xlu0 %5716
    %5718 = vrot.lane.b32.xlu0 %v5699, 96
    %v5719 = vpop.permute.xlu0 %5718
    %5720 = vrot.lane.b32.xlu0 %v5700, 96
    %v5721 = vpop.permute.xlu0 %5720
    %5722 = vrot.lane.b32.xlu0 %v5701, 96
    %v5723 = vpop.permute.xlu0 %5722
    %5724 = vrot.lane.b32.xlu0 %v5702, 96
    %v5725 = vpop.permute.xlu0 %5724
    %5726 = vrot.lane.b32.xlu0 %v5703, 96
    %v5727 = vpop.permute.xlu0 %5726
    %v5736 = vsel %vm148, %v5713, 0.0
    %5737 = vadd.xlane.f32.xlu0 %v5736
    %v5738 = vpop.xlane.xlu0 %5737
    %v5739 = vsel %vm148, %v5715, 0.0
    %5740 = vadd.xlane.f32.xlu0 %v5739
    %v5741 = vpop.xlane.xlu0 %5740
    %v5742 = vsel %vm148, %v5717, 0.0
    %5743 = vadd.xlane.f32.xlu0 %v5742
    %v5744 = vpop.xlane.xlu0 %5743
    %v5745 = vsel %vm148, %v5719, 0.0
    %5746 = vadd.xlane.f32.xlu0 %v5745
    %v5747 = vpop.xlane.xlu0 %5746
    %v5748 = vsel %vm148, %v5721, 0.0
    %5749 = vadd.xlane.f32.xlu0 %v5748
    %v5750 = vpop.xlane.xlu0 %5749
    %v5751 = vsel %vm148, %v5723, 0.0
    %5752 = vadd.xlane.f32.xlu0 %v5751
    %v5753 = vpop.xlane.xlu0 %5752
    %v5754 = vsel %vm148, %v5725, 0.0
    %5755 = vadd.xlane.f32.xlu0 %v5754
    %v5756 = vpop.xlane.xlu0 %5755
    %v5757 = vsel %vm148, %v5727, 0.0
    %5758 = vadd.xlane.f32.xlu0 %v5757
    %v5759 = vpop.xlane.xlu0 %5758
    %v5768 = vperm.slane %v5738, %v61
    %v5769 = vperm.slane %v5741, %v61
    %v5770 = vperm.slane %v5744, %v61
    %v5771 = vperm.slane %v5747, %v61
    %v5772 = vperm.slane %v5750, %v61
    %v5773 = vperm.slane %v5753, %v61
    %v5774 = vperm.slane %v5756, %v61
    %v5775 = vperm.slane %v5759, %v61
    %v5776 = vsel %vm448, %v5769, %v5768
    %v5777 = vsel %vm450, %v5770, %v5776
    %v5778 = vsel %vm452, %v5771, %v5777
    %v5779 = vsel %vm454, %v5772, %v5778
    %v5780 = vsel %vm456, %v5773, %v5779
    %v5781 = vsel %vm458, %v5774, %v5780
    %v5782 = vsel %vm460, %v5775, %v5781
    %v5784 = vsel %vm463, %v5782, -inf
    %5785 = vmax.xlane.f32.xlu0 %v5784
    %v5786 = vpop.xlane.xlu0 %5785
    %v5788 = vperm.slane %v5786, 0
    %v5789 = vperm.slane %v5786, 1
    %v5790 = vperm.slane %v5786, 2
    %v5791 = vperm.slane %v5786, 3
    %v5792 = vperm.slane %v5786, 4
    %v5793 = vperm.slane %v5786, 5
    %v5794 = vperm.slane %v5786, 6
    %v5795 = vperm.slane %v5786, 7
    %v5804 = vsub.f32 %v5738, %v5788
    %v5805 = vsub.f32 %v5741, %v5789
    %v5806 = vsub.f32 %v5744, %v5790
    %v5807 = vsub.f32 %v5747, %v5791
    %v5808 = vsub.f32 %v5750, %v5792
    %v5809 = vsub.f32 %v5753, %v5793
    %v5810 = vsub.f32 %v5756, %v5794
    %v5811 = vsub.f32 %v5759, %v5795
    %v5812 = vmul.f32 %v5804, 1.442695
    %v5813 = vpow.pop %v5812
    %v5814 = vmul.f32 %v5805, 1.442695
    %v5815 = vpow.pop %v5814
    %v5816 = vmul.f32 %v5806, 1.442695
    %v5817 = vpow.pop %v5816
    %v5818 = vmul.f32 %v5807, 1.442695
    %v5819 = vpow.pop %v5818
    %v5820 = vmul.f32 %v5808, 1.442695
    %v5821 = vpow.pop %v5820
    %v5822 = vmul.f32 %v5809, 1.442695
    %v5823 = vpow.pop %v5822
    %v5824 = vmul.f32 %v5810, 1.442695
    %v5825 = vpow.pop %v5824
    %v5826 = vmul.f32 %v5811, 1.442695
    %v5827 = vpow.pop %v5826
    %5836 = vset.pattern.permute.xlu0 0
    %5837 = vperm.xlu0 %5836, %v5813
    %v5838 = vpop.permute.xlu0 %5837
    %5839 = vset.pattern.permute.xlu0 0
    %5840 = vperm.xlu0 %5839, %v5815
    %v5841 = vpop.permute.xlu0 %5840
    %5842 = vset.pattern.permute.xlu0 0
    %5843 = vperm.xlu0 %5842, %v5817
    %v5844 = vpop.permute.xlu0 %5843
    %5845 = vset.pattern.permute.xlu0 0
    %5846 = vperm.xlu0 %5845, %v5819
    %v5847 = vpop.permute.xlu0 %5846
    %5848 = vset.pattern.permute.xlu0 0
    %5849 = vperm.xlu0 %5848, %v5821
    %v5850 = vpop.permute.xlu0 %5849
    %5851 = vset.pattern.permute.xlu0 0
    %5852 = vperm.xlu0 %5851, %v5823
    %v5853 = vpop.permute.xlu0 %5852
    %5854 = vset.pattern.permute.xlu0 0
    %5855 = vperm.xlu0 %5854, %v5825
    %v5856 = vpop.permute.xlu0 %5855
    %5857 = vset.pattern.permute.xlu0 0
    %5858 = vperm.xlu0 %5857, %v5827
    %v5859 = vpop.permute.xlu0 %5858
    %v5860 = vperm.slane %v5838, %v61
    %v5861 = vperm.slane %v5841, %v61
    %v5862 = vperm.slane %v5844, %v61
    %v5863 = vperm.slane %v5847, %v61
    %v5864 = vperm.slane %v5850, %v61
    %v5865 = vperm.slane %v5853, %v61
    %v5866 = vperm.slane %v5856, %v61
    %v5867 = vperm.slane %v5859, %v61
    %v5868 = vsel %vm448, %v5861, %v5860
    %v5869 = vsel %vm450, %v5862, %v5868
    %v5870 = vsel %vm452, %v5863, %v5869
    %v5871 = vsel %vm454, %v5864, %v5870
    %v5872 = vsel %vm456, %v5865, %v5871
    %v5873 = vsel %vm458, %v5866, %v5872
    %v5874 = vsel %vm460, %v5867, %v5873
    %v5876 = vsel %vm463, %v5874, 0.0
    %5877 = vadd.xlane.f32.xlu0 %v5876
    %v5878 = vpop.xlane.xlu0 %5877
    %v5880 = vperm.slane %v5878, 0
    %v5881 = vperm.slane %v5878, 1
    %v5882 = vperm.slane %v5878, 2
    %v5883 = vperm.slane %v5878, 3
    %v5884 = vperm.slane %v5878, 4
    %v5885 = vperm.slane %v5878, 5
    %v5886 = vperm.slane %v5878, 6
    %v5887 = vperm.slane %v5878, 7
    %v5896 = vrcp.pop %v5880
    %v5897 = vmul.f32 %v5880, %v5896
    %v5898 = vsub.f32 1.0, %v5897
    %v5899 = vmul.f32 %v5896, %v5898
    %v5900 = vadd.f32 %v5896, %v5899
    %vm5901 = vweird.f32 %v5880
    %vm5902 = vweird.f32 %v5896
    %vm5903 = vmor %vm5901, %vm5902
    %v5904 = vsel %vm5903, %v5896, %v5900
    %v5905 = vand.u32 2147483647, %v5880
    %vm5906 = vcmp.eq.f32.partialorder %v5905, 8.507059e+37
    %v5907 = vand.u32 %v5880, 2147483648
    %v5908 = vor.u32 1.1754944e-38, %v5907
    %v5909 = vsel %vm5906, %v5908, %v5904
    %v5910 = vmul.f32 %v5813, %v5909
    %v5911 = vrcp.pop %v5881
    %v5912 = vmul.f32 %v5881, %v5911
    %v5913 = vsub.f32 1.0, %v5912
    %v5914 = vmul.f32 %v5911, %v5913
    %v5915 = vadd.f32 %v5911, %v5914
    %vm5916 = vweird.f32 %v5881
    %vm5917 = vweird.f32 %v5911
    %vm5918 = vmor %vm5916, %vm5917
    %v5919 = vsel %vm5918, %v5911, %v5915
    %v5920 = vand.u32 2147483647, %v5881
    %vm5921 = vcmp.eq.f32.partialorder %v5920, 8.507059e+37
    %v5922 = vand.u32 %v5881, 2147483648
    %v5923 = vor.u32 1.1754944e-38, %v5922
    %v5924 = vsel %vm5921, %v5923, %v5919
    %v5925 = vmul.f32 %v5815, %v5924
    %v5926 = vrcp.pop %v5882
    %v5927 = vmul.f32 %v5882, %v5926
    %v5928 = vsub.f32 1.0, %v5927
    %v5929 = vmul.f32 %v5926, %v5928
    %v5930 = vadd.f32 %v5926, %v5929
    %vm5931 = vweird.f32 %v5882
    %vm5932 = vweird.f32 %v5926
    %vm5933 = vmor %vm5931, %vm5932
    %v5934 = vsel %vm5933, %v5926, %v5930
    %v5935 = vand.u32 2147483647, %v5882
    %vm5936 = vcmp.eq.f32.partialorder %v5935, 8.507059e+37
    %v5937 = vand.u32 %v5882, 2147483648
    %v5938 = vor.u32 1.1754944e-38, %v5937
    %v5939 = vsel %vm5936, %v5938, %v5934
    %v5940 = vmul.f32 %v5817, %v5939
    %v5941 = vrcp.pop %v5883
    %v5942 = vmul.f32 %v5883, %v5941
    %v5943 = vsub.f32 1.0, %v5942
    %v5944 = vmul.f32 %v5941, %v5943
    %v5945 = vadd.f32 %v5941, %v5944
    %vm5946 = vweird.f32 %v5883
    %vm5947 = vweird.f32 %v5941
    %vm5948 = vmor %vm5946, %vm5947
    %v5949 = vsel %vm5948, %v5941, %v5945
    %v5950 = vand.u32 2147483647, %v5883
    %vm5951 = vcmp.eq.f32.partialorder %v5950, 8.507059e+37
    %v5952 = vand.u32 %v5883, 2147483648
    %v5953 = vor.u32 1.1754944e-38, %v5952
    %v5954 = vsel %vm5951, %v5953, %v5949
    %v5955 = vmul.f32 %v5819, %v5954
    %v5956 = vrcp.pop %v5884
    %v5957 = vmul.f32 %v5884, %v5956
    %v5958 = vsub.f32 1.0, %v5957
    %v5959 = vmul.f32 %v5956, %v5958
    %v5960 = vadd.f32 %v5956, %v5959
    %vm5961 = vweird.f32 %v5884
    %vm5962 = vweird.f32 %v5956
    %vm5963 = vmor %vm5961, %vm5962
    %v5964 = vsel %vm5963, %v5956, %v5960
    %v5965 = vand.u32 2147483647, %v5884
    %vm5966 = vcmp.eq.f32.partialorder %v5965, 8.507059e+37
    %v5967 = vand.u32 %v5884, 2147483648
    %v5968 = vor.u32 1.1754944e-38, %v5967
    %v5969 = vsel %vm5966, %v5968, %v5964
    %v5970 = vmul.f32 %v5821, %v5969
    %v5971 = vrcp.pop %v5885
    %v5972 = vmul.f32 %v5885, %v5971
    %v5973 = vsub.f32 1.0, %v5972
    %v5974 = vmul.f32 %v5971, %v5973
    %v5975 = vadd.f32 %v5971, %v5974
    %vm5976 = vweird.f32 %v5885
    %vm5977 = vweird.f32 %v5971
    %vm5978 = vmor %vm5976, %vm5977
    %v5979 = vsel %vm5978, %v5971, %v5975
    %v5980 = vand.u32 2147483647, %v5885
    %vm5981 = vcmp.eq.f32.partialorder %v5980, 8.507059e+37
    %v5982 = vand.u32 %v5885, 2147483648
    %v5983 = vor.u32 1.1754944e-38, %v5982
    %v5984 = vsel %vm5981, %v5983, %v5979
    %v5985 = vmul.f32 %v5823, %v5984
    %v5986 = vrcp.pop %v5886
    %v5987 = vmul.f32 %v5886, %v5986
    %v5988 = vsub.f32 1.0, %v5987
    %v5989 = vmul.f32 %v5986, %v5988
    %v5990 = vadd.f32 %v5986, %v5989
    %vm5991 = vweird.f32 %v5886
    %vm5992 = vweird.f32 %v5986
    %vm5993 = vmor %vm5991, %vm5992
    %v5994 = vsel %vm5993, %v5986, %v5990
    %v5995 = vand.u32 2147483647, %v5886
    %vm5996 = vcmp.eq.f32.partialorder %v5995, 8.507059e+37
    %v5997 = vand.u32 %v5886, 2147483648
    %v5998 = vor.u32 1.1754944e-38, %v5997
    %v5999 = vsel %vm5996, %v5998, %v5994
    %v6000 = vmul.f32 %v5825, %v5999
    %v6001 = vrcp.pop %v5887
    %v6002 = vmul.f32 %v5887, %v6001
    %v6003 = vsub.f32 1.0, %v6002
    %v6004 = vmul.f32 %v6001, %v6003
    %v6005 = vadd.f32 %v6001, %v6004
    %vm6006 = vweird.f32 %v5887
    %vm6007 = vweird.f32 %v6001
    %vm6008 = vmor %vm6006, %vm6007
    %v6009 = vsel %vm6008, %v6001, %v6005
    %v6010 = vand.u32 2147483647, %v5887
    %vm6011 = vcmp.eq.f32.partialorder %v6010, 8.507059e+37
    %v6012 = vand.u32 %v5887, 2147483648
    %v6013 = vor.u32 1.1754944e-38, %v6012
    %v6014 = vsel %vm6011, %v6013, %v6009
    %v6015 = vmul.f32 %v5827, %v6014
    %6024 = vset.pattern.permute.xlu0 0
    %6025 = vperm.xlu0 %6024, %v5910
    %v6026 = vpop.permute.xlu0 %6025
    %6027 = vset.pattern.permute.xlu0 0
    %6028 = vperm.xlu0 %6027, %v5925
    %v6029 = vpop.permute.xlu0 %6028
    %6030 = vset.pattern.permute.xlu0 0
    %6031 = vperm.xlu0 %6030, %v5940
    %v6032 = vpop.permute.xlu0 %6031
    %6033 = vset.pattern.permute.xlu0 0
    %6034 = vperm.xlu0 %6033, %v5955
    %v6035 = vpop.permute.xlu0 %6034
    %6036 = vset.pattern.permute.xlu0 0
    %6037 = vperm.xlu0 %6036, %v5970
    %v6038 = vpop.permute.xlu0 %6037
    %6039 = vset.pattern.permute.xlu0 0
    %6040 = vperm.xlu0 %6039, %v5985
    %v6041 = vpop.permute.xlu0 %6040
    %6042 = vset.pattern.permute.xlu0 0
    %6043 = vperm.xlu0 %6042, %v6000
    %v6044 = vpop.permute.xlu0 %6043
    %6045 = vset.pattern.permute.xlu0 0
    %6046 = vperm.xlu0 %6045, %v6015
    %v6047 = vpop.permute.xlu0 %6046
    %v6048 = vperm.slane %v6026, %v61
    %v6049 = vperm.slane %v6029, %v61
    %v6050 = vperm.slane %v6032, %v61
    %v6051 = vperm.slane %v6035, %v61
    %v6052 = vperm.slane %v6038, %v61
    %v6053 = vperm.slane %v6041, %v61
    %v6054 = vperm.slane %v6044, %v61
    %v6055 = vperm.slane %v6047, %v61
    %v6056 = vsel %vm448, %v6049, %v6048
    %v6057 = vsel %vm450, %v6050, %v6056
    %v6058 = vsel %vm452, %v6051, %v6057
    %v6059 = vsel %vm454, %v6052, %v6058
    %v6060 = vsel %vm456, %v6053, %v6059
    %v6061 = vsel %vm458, %v6054, %v6060
    %v6062 = vsel %vm460, %v6055, %v6061
    %s6064 = scalar_lea.vmem [#allocation6], 48
    %6065 = vst.msk [vmem:[%s6064] sm:$0xff] %vm463, %v6062
    %v6074 = vmul.f32 %v6026, %v5632
    %v6075 = vmul.f32 %v6029, %v5633
    %v6076 = vmul.f32 %v6032, %v5634
    %v6077 = vmul.f32 %v6035, %v5635
    %v6078 = vmul.f32 %v6038, %v5636
    %v6079 = vmul.f32 %v6041, %v5637
    %v6080 = vmul.f32 %v6044, %v5638
    %v6081 = vmul.f32 %v6047, %v5639
    %v6082 = vsel %vm148, %v6074, 0.0
    %v6083 = vrot.slane %v6082, 4
    %v6084 = vadd.f32 %v6082, %v6083
    %v6085 = vrot.slane %v6084, 2
    %v6086 = vadd.f32 %v6084, %v6085
    %v6087 = vrot.slane %v6086, 1
    %v6088 = vadd.f32 %v6086, %v6087
    %v6089 = vsel %vm148, %v6075, 0.0
    %v6090 = vrot.slane %v6089, 4
    %v6091 = vadd.f32 %v6089, %v6090
    %v6092 = vrot.slane %v6091, 2
    %v6093 = vadd.f32 %v6091, %v6092
    %v6094 = vrot.slane %v6093, 1
    %v6095 = vadd.f32 %v6093, %v6094
    %v6096 = vsel %vm148, %v6076, 0.0
    %v6097 = vrot.slane %v6096, 4
    %v6098 = vadd.f32 %v6096, %v6097
    %v6099 = vrot.slane %v6098, 2
    %v6100 = vadd.f32 %v6098, %v6099
    %v6101 = vrot.slane %v6100, 1
    %v6102 = vadd.f32 %v6100, %v6101
    %v6103 = vsel %vm148, %v6077, 0.0
    %v6104 = vrot.slane %v6103, 4
    %v6105 = vadd.f32 %v6103, %v6104
    %v6106 = vrot.slane %v6105, 2
    %v6107 = vadd.f32 %v6105, %v6106
    %v6108 = vrot.slane %v6107, 1
    %v6109 = vadd.f32 %v6107, %v6108
    %v6110 = vsel %vm148, %v6078, 0.0
    %v6111 = vrot.slane %v6110, 4
    %v6112 = vadd.f32 %v6110, %v6111
    %v6113 = vrot.slane %v6112, 2
    %v6114 = vadd.f32 %v6112, %v6113
    %v6115 = vrot.slane %v6114, 1
    %v6116 = vadd.f32 %v6114, %v6115
    %v6117 = vsel %vm148, %v6079, 0.0
    %v6118 = vrot.slane %v6117, 4
    %v6119 = vadd.f32 %v6117, %v6118
    %v6120 = vrot.slane %v6119, 2
    %v6121 = vadd.f32 %v6119, %v6120
    %v6122 = vrot.slane %v6121, 1
    %v6123 = vadd.f32 %v6121, %v6122
    %v6124 = vsel %vm148, %v6080, 0.0
    %v6125 = vrot.slane %v6124, 4
    %v6126 = vadd.f32 %v6124, %v6125
    %v6127 = vrot.slane %v6126, 2
    %v6128 = vadd.f32 %v6126, %v6127
    %v6129 = vrot.slane %v6128, 1
    %v6130 = vadd.f32 %v6128, %v6129
    %v6131 = vsel %vm148, %v6081, 0.0
    %v6132 = vrot.slane %v6131, 4
    %v6133 = vadd.f32 %v6131, %v6132
    %v6134 = vrot.slane %v6133, 2
    %v6135 = vadd.f32 %v6133, %v6134
    %v6136 = vrot.slane %v6135, 1
    %v6137 = vadd.f32 %v6135, %v6136
    %v6138 = vpack.c.bf16 %v6088, %v6088
    %v6139 = vpack.c.bf16 %v6095, %v6095
    %v6140 = vpack.c.bf16 %v6102, %v6102
    %v6141 = vpack.c.bf16 %v6109, %v6109
    %v6142 = vpack.c.bf16 %v6116, %v6116
    %v6143 = vpack.c.bf16 %v6123, %v6123
    %v6144 = vpack.c.bf16 %v6130, %v6130
    %v6145 = vpack.c.bf16 %v6137, %v6137
    %v6146 = vpack.c.bf16 %v5631, %v5631
    %v6155 = vperm.slane %v6138, 0
    %v6156 = vperm.slane %v6139, 0
    %v6157 = vperm.slane %v6140, 0
    %v6158 = vperm.slane %v6141, 0
    %v6159 = vperm.slane %v6142, 0
    %v6160 = vperm.slane %v6143, 0
    %v6161 = vperm.slane %v6144, 0
    %v6162 = vperm.slane %v6145, 0
    %v6163 = vunpack.c.l.b16 %v6155
    %v6164 = vunpack.c.l.b16 %v6156
    %v6165 = vunpack.c.l.b16 %v6157
    %v6166 = vunpack.c.l.b16 %v6158
    %v6167 = vunpack.c.l.b16 %v6159
    %v6168 = vunpack.c.l.b16 %v6160
    %v6169 = vunpack.c.l.b16 %v6161
    %v6170 = vunpack.c.l.b16 %v6162
    %v6171 = vsel %vm448, %v6164, %v6163
    %v6172 = vsel %vm450, %v6165, %v6171
    %v6173 = vsel %vm452, %v6166, %v6172
    %v6174 = vsel %vm454, %v6167, %v6173
    %v6175 = vsel %vm456, %v6168, %v6174
    %v6176 = vsel %vm458, %v6169, %v6175
    %v6177 = vsel %vm460, %v6170, %v6176
    %v6178 = vpack.c.b16 %v6177, %v6177
    %v6181 = vsel %vm148, %v6178, %v6146
    %v6182 = vld [vmem:[%s3] sm:$0xf]
    %v6183 = vld [vmem:[%s3 + $0x4] sm:$0xf]
    %v6184 = vld [vmem:[%s3 + $0x8] sm:$0xf]
    %v6185 = vld [vmem:[%s3 + $0xc] sm:$0xf]
    %v6186 = vld [vmem:[%s3 + $0x10] sm:$0xf]
    %v6187 = vld [vmem:[%s3 + $0x14] sm:$0xf]
    %v6188 = vld [vmem:[%s3 + $0x18] sm:$0xf]
    %v6189 = vld [vmem:[%s3 + $0x1c] sm:$0xf]
    %v6198 = vunpack.c.l.b16 %v6182
    %v6199 = vunpack.c.l.b16 %v6183
    %v6200 = vunpack.c.l.b16 %v6184
    %v6201 = vunpack.c.l.b16 %v6185
    %v6202 = vunpack.c.l.b16 %v6186
    %v6203 = vunpack.c.l.b16 %v6187
    %v6204 = vunpack.c.l.b16 %v6188
    %v6205 = vunpack.c.l.b16 %v6189
    %v6206 = vpack.c.b16 %v6199, %v6198
    %v6207 = vpack.c.b16 %v6201, %v6200
    %v6208 = vpack.c.b16 %v6203, %v6202
    %v6209 = vpack.c.b16 %v6205, %v6204
    %v6214 = vsel %vm205, %v6181, 0
    %6216 = vmatpush.bf16.msra.mxu0 0
    %6217 = vmatpush.bf16.msra.mxu0 0
    %6218 = vmatpush.bf16.msra.mxu0 0
    %6219 = vmatpush.bf16.msra.mxu0 0
    %6220 = vmatpush.bf16.msra.mxu0 %v6209
    %6221 = vmatpush.bf16.msra.mxu0 %v6208
    %6222 = vmatpush.bf16.msra.mxu0 %v6207
    %6223 = vmatpush.bf16.msra.mxu0 %v6206
    %6224 = vmatmul.bf16.gmra.mxu0 %v6214
    %v6225 = vpop.f32.mrf.mxu0
    %v6226 = vadd.f32 %v870, %v6225
    %v6227 = vpop.f32.mrf.mxu0
    %6228 = vdwg.mxu0
    %v6229 = vtanh.pop %v6226
    %v6230 = vpack.c.bf16 %v6229, %v6229
    %v6231 = vld [vmem:[%s5] sm:$0xf]
    %v6232 = vld [vmem:[%s5 + $0x4] sm:$0xf]
    %v6233 = vld [vmem:[%s5 + $0x8] sm:$0xf]
    %v6234 = vld [vmem:[%s5 + $0xc] sm:$0xf]
    %v6239 = vunpack.c.l.b16 %v6231
    %v6240 = vunpack.c.l.b16 %v6232
    %v6241 = vunpack.c.l.b16 %v6233
    %v6242 = vunpack.c.l.b16 %v6234
    %v6243 = vpack.c.b16 %v6240, %v6239
    %v6244 = vpack.c.b16 %v6242, %v6241
    %v6248 = vsel %vm148, %v6230, 0
    %6250 = vmatpush.bf16.msra.mxu0 0
    %6251 = vmatpush.bf16.msra.mxu0 0
    %6252 = vmatpush.bf16.msra.mxu0 0
    %6253 = vmatpush.bf16.msra.mxu0 0
    %6254 = vmatpush.bf16.msra.mxu0 0
    %6255 = vmatpush.bf16.msra.mxu0 0
    %6256 = vmatpush.bf16.msra.mxu0 %v6244
    %6257 = vmatpush.bf16.msra.mxu0 %v6243
    %6258 = vmatmul.bf16.gmra.mxu0 %v6248
    %v6259 = vpop.f32.mrf.mxu0
    %v6260 = vadd.f32 %v918, %v6259
    %v6261 = vpop.f32.mrf.mxu0
    %6262 = vdwg.mxu0
    %6263 = vmax.xlane.f32.xlu0 %v6260
    %v6264 = vpop.xlane.xlu0 %6263
    %v6265 = vsub.f32 %v6260, %v6264
    %v6266 = vmul.f32 %v6265, 1.442695
    %v6267 = vpow.pop %v6266
    %6268 = vadd.xlane.f32.xlu0 %v6267
    %v6269 = vpop.xlane.xlu0 %6268
    %v6270 = vlog2.pop %v6269
    %v6271 = vmul.f32 %v6270, 0.6931472
    %v6272 = vadd.f32 %v6271, %v6264
    %v6273 = vsub.f32 %v6260, %v6272
    %s6274 = scalar_lea.vmem [#allocation5], 48
    %6275 = vst [vmem:[%s6274] sm:$0xff] %v6273
    %vm6276 = vcmp.eq.f32.partialorder %v6260, %v6264
    %v6277 = vsel %vm6276, %v61, 128
    %v6278 = vand.u32 %v6277, 65535
    %v6279 = vshra.s32 %v6277, 16
    %v6280 = vcvt.s32.f32 %v6278
    %v6281 = vcvt.s32.f32 %v6279
    %6282 = vmin.xlane.f32.xlu0 %v6281
    %v6283 = vpop.xlane.xlu0 %6282
    %vm6284 = vcmp.eq.f32.partialorder %v6281, %v6283
    %v6285 = vsel %vm6284, %v6280, inf
    %6286 = vmin.xlane.f32.xlu0 %v6285
    %v6287 = vpop.xlane.xlu0 %6286
    %v6288 = vcvt.f32.s32 %v6287
    %v6289 = vcvt.f32.s32 %v6283
    %v6290 = vshll.u32 %v6289, 16
    %v6291 = vadd.s32 %v6290, %v6288
    %vm6292 = vcmp.eq.s32.totalorder %v61, %v6291
    %v6293 = vsel %vm6292, 1, 0
    %v6294 = vcvt.s32.f32 %v6293
    %v6295 = vpack.c.bf16 %v6294, %v6294
    %v6296 = vld [vmem:[%s0] sm:$0xf]
    %v6297 = vld [vmem:[%s0 + $0x4] sm:$0xf]
    %v6298 = vld [vmem:[%s0 + $0x8] sm:$0xf]
    %v6299 = vld [vmem:[%s0 + $0xc] sm:$0xf]
    %v6300 = vld [vmem:[%s0 + $0x10] sm:$0xf]
    %v6301 = vld [vmem:[%s0 + $0x14] sm:$0xf]
    %v6302 = vld [vmem:[%s0 + $0x18] sm:$0xf]
    %v6303 = vld [vmem:[%s0 + $0x1c] sm:$0xf]
    %v6304 = vld [vmem:[%s0 + $0x20] sm:$0xf]
    %v6305 = vld [vmem:[%s0 + $0x24] sm:$0xf]
    %v6306 = vld [vmem:[%s0 + $0x28] sm:$0xf]
    %v6307 = vld [vmem:[%s0 + $0x2c] sm:$0xf]
    %v6308 = vld [vmem:[%s0 + $0x30] sm:$0xf]
    %v6309 = vld [vmem:[%s0 + $0x34] sm:$0xf]
    %v6310 = vld [vmem:[%s0 + $0x38] sm:$0xf]
    %v6311 = vld [vmem:[%s0 + $0x3c] sm:$0xf]
    %v6328 = vunpack.c.l.b16 %v6296
    %v6329 = vunpack.c.l.b16 %v6297
    %v6330 = vunpack.c.l.b16 %v6298
    %v6331 = vunpack.c.l.b16 %v6299
    %v6332 = vunpack.c.l.b16 %v6300
    %v6333 = vunpack.c.l.b16 %v6301
    %v6334 = vunpack.c.l.b16 %v6302
    %v6335 = vunpack.c.l.b16 %v6303
    %v6336 = vunpack.c.l.b16 %v6304
    %v6337 = vunpack.c.l.b16 %v6305
    %v6338 = vunpack.c.l.b16 %v6306
    %v6339 = vunpack.c.l.b16 %v6307
    %v6340 = vunpack.c.l.b16 %v6308
    %v6341 = vunpack.c.l.b16 %v6309
    %v6342 = vunpack.c.l.b16 %v6310
    %v6343 = vunpack.c.l.b16 %v6311
    %v6344 = vpack.c.b16 %v6329, %v6328
    %v6345 = vpack.c.b16 %v6331, %v6330
    %v6346 = vpack.c.b16 %v6333, %v6332
    %v6347 = vpack.c.b16 %v6335, %v6334
    %v6348 = vpack.c.b16 %v6337, %v6336
    %v6349 = vpack.c.b16 %v6339, %v6338
    %v6350 = vpack.c.b16 %v6341, %v6340
    %v6351 = vpack.c.b16 %v6343, %v6342
    %6360 = vmatpush.bf16.msra.mxu0 %v6351
    %6361 = vmatpush.bf16.msra.mxu0 %v6350
    %6362 = vmatpush.bf16.msra.mxu0 %v6349
    %6363 = vmatpush.bf16.msra.mxu0 %v6348
    %6364 = vmatpush.bf16.msra.mxu0 %v6347
    %6365 = vmatpush.bf16.msra.mxu0 %v6346
    %6366 = vmatpush.bf16.msra.mxu0 %v6345
    %6367 = vmatpush.bf16.msra.mxu0 %v6344
    %6368 = vmatmul.bf16.gmra.mxu0 %v6295
    %v6369 = vpop.f32.mrf.mxu0
    %v6370 = vadd.f32 0.0, %v6369
    %v6371 = vpop.f32.mrf.mxu0
    %6372 = vdwg.mxu0
    %v6373 = vpack.c.bf16 %v6370, %v6370
    %v6375 = vsel %vm148, %v6373, %v6146
    %v6376 = vld [vmem:[%s1] sm:$0xff]
    %v6377 = vld [vmem:[%s1 + $0x8] sm:$0xff]
    %v6378 = vld [vmem:[%s1 + $0x10] sm:$0xff]
    %v6379 = vld [vmem:[%s1 + $0x18] sm:$0xff]
    %v6380 = vld [vmem:[%s1 + $0x20] sm:$0xff]
    %v6381 = vld [vmem:[%s1 + $0x28] sm:$0xff]
    %v6382 = vld [vmem:[%s1 + $0x30] sm:$0xff]
    %v6383 = vld [vmem:[%s1 + $0x38] sm:$0xff]
    %v6392 = vunpack.c.l.b16 %v6376
    %v6393 = vunpack.c.h.b16 %v6376
    %v6394 = vunpack.c.l.b16 %v6377
    %v6395 = vunpack.c.h.b16 %v6377
    %v6396 = vunpack.c.l.b16 %v6378
    %v6397 = vunpack.c.h.b16 %v6378
    %v6398 = vunpack.c.l.b16 %v6379
    %v6399 = vunpack.c.h.b16 %v6379
    %v6400 = vunpack.c.l.b16 %v6380
    %v6401 = vunpack.c.h.b16 %v6380
    %v6402 = vunpack.c.l.b16 %v6381
    %v6403 = vunpack.c.h.b16 %v6381
    %v6404 = vunpack.c.l.b16 %v6382
    %v6405 = vunpack.c.h.b16 %v6382
    %v6406 = vunpack.c.l.b16 %v6383
    %v6407 = vunpack.c.h.b16 %v6383
    %v6408 = vpack.c.b16 %v6394, %v6392
    %v6409 = vpack.c.b16 %v6395, %v6393
    %v6410 = vpack.c.b16 %v6398, %v6396
    %v6411 = vpack.c.b16 %v6399, %v6397
    %v6412 = vpack.c.b16 %v6402, %v6400
    %v6413 = vpack.c.b16 %v6403, %v6401
    %v6414 = vpack.c.b16 %v6406, %v6404
    %v6415 = vpack.c.b16 %v6407, %v6405
    %v6424 = vsel %vm205, %v6375, 0
    %6426 = vmatpush.bf16.msra.mxu0 0
    %6427 = vmatpush.bf16.msra.mxu0 0
    %6428 = vmatpush.bf16.msra.mxu0 0
    %6429 = vmatpush.bf16.msra.mxu0 0
    %6430 = vmatpush.bf16.msra.mxu0 %v6414
    %6431 = vmatpush.bf16.msra.mxu0 %v6412
    %6432 = vmatpush.bf16.msra.mxu0 %v6410
    %6433 = vmatpush.bf16.msra.mxu0 %v6408
    %6434 = vmatmul.bf16.gmra.mxu0 %v6424
    %v6435 = vpop.f32.mrf.mxu0
    %v6436 = vadd.f32 %v161, %v6435
    %v6437 = vpop.f32.mrf.mxu0
    %6438 = vdwg.mxu0
    %6439 = vmatpush.bf16.msra.mxu0 0
    %6440 = vmatpush.bf16.msra.mxu0 0
    %6441 = vmatpush.bf16.msra.mxu0 0
    %6442 = vmatpush.bf16.msra.mxu0 0
    %6443 = vmatpush.bf16.msra.mxu0 %v6415
    %6444 = vmatpush.bf16.msra.mxu0 %v6413
    %6445 = vmatpush.bf16.msra.mxu0 %v6411
    %6446 = vmatpush.bf16.msra.mxu0 %v6409
    %6447 = vmatmul.bf16.gmra.mxu0 %v6424
    %v6448 = vpop.f32.mrf.mxu0
    %v6449 = vadd.f32 %v162, %v6448
    %v6450 = vpop.f32.mrf.mxu0
    %6451 = vdwg.mxu0
    %6453 = vrot.lane.b32.xlu0 %v6436, 32
    %v6454 = vpop.permute.xlu0 %6453
    %v6456 = vadd.f32 %v6436, %v6454
    %v6457 = vxor.u32 %v6456, 2147483648
    %v6458 = vmul.f32 %v6457, 1.442695
    %v6459 = vpow.pop %v6458
    %v6460 = vadd.f32 %v6459, 1.0
    %v6461 = vrcp.pop %v6460
    %v6462 = vmul.f32 %v6460, %v6461
    %v6463 = vsub.f32 1.0, %v6462
    %v6464 = vmul.f32 %v6461, %v6463
    %v6465 = vadd.f32 %v6461, %v6464
    %vm6466 = vweird.f32 %v6460
    %vm6467 = vweird.f32 %v6461
    %vm6468 = vmor %vm6466, %vm6467
    %v6469 = vsel %vm6468, %v6461, %v6465
    %v6470 = vand.u32 2147483647, %v6460
    %vm6471 = vcmp.eq.f32.partialorder %v6470, 8.507059e+37
    %v6472 = vand.u32 %v6460, 2147483648
    %v6473 = vor.u32 1.1754944e-38, %v6472
    %v6474 = vsel %vm6471, %v6473, %v6469
    %v6475 = vmul.f32 1.0, %v6474
    %6477 = vrot.lane.b32.xlu0 %v6449, 32
    %v6478 = vpop.permute.xlu0 %6477
    %v6480 = vadd.f32 %v6436, %v6478
    %v6481 = vxor.u32 %v6480, 2147483648
    %v6482 = vmul.f32 %v6481, 1.442695
    %v6483 = vpow.pop %v6482
    %v6484 = vadd.f32 %v6483, 1.0
    %v6485 = vrcp.pop %v6484
    %v6486 = vmul.f32 %v6484, %v6485
    %v6487 = vsub.f32 1.0, %v6486
    %v6488 = vmul.f32 %v6485, %v6487
    %v6489 = vadd.f32 %v6485, %v6488
    %vm6490 = vweird.f32 %v6484
    %vm6491 = vweird.f32 %v6485
    %vm6492 = vmor %vm6490, %vm6491
    %v6493 = vsel %vm6492, %v6485, %v6489
    %v6494 = vand.u32 2147483647, %v6484
    %vm6495 = vcmp.eq.f32.partialorder %v6494, 8.507059e+37
    %v6496 = vand.u32 %v6484, 2147483648
    %v6497 = vor.u32 1.1754944e-38, %v6496
    %v6498 = vsel %vm6495, %v6497, %v6493
    %v6499 = vmul.f32 1.0, %v6498
    %6500 = vrot.lane.b32.xlu0 %v6449, 96
    %v6501 = vpop.permute.xlu0 %6500
    %v6503 = vmul.f32 %v6475, %v6501
    %6505 = vrot.lane.b32.xlu0 %v6503, 64
    %v6506 = vpop.permute.xlu0 %6505
    %v6508 = vadd.f32 %v6436, %v6506
    %v6509 = vtanh.pop %v6508
    %v6510 = vsub.f32 1.0, %v6499
    %6512 = vrot.lane.b32.xlu0 %v6509, 96
    %v6513 = vpop.permute.xlu0 %6512
    %v6515 = vmul.f32 %v6510, %v6513
    %v6516 = vmul.f32 %v6499, %v5631
    %v6517 = vadd.f32 %v6515, %v6516
    %v6518 = vld [vmem:[#allocation2] sm:$0xff]
    %v6519 = vld [vmem:[#allocation2 + $0x8] sm:$0xff]
    %v6520 = vld [vmem:[#allocation2 + $0x10] sm:$0xff]
    %v6521 = vld [vmem:[#allocation2 + $0x18] sm:$0xff]
    %v6522 = vld [vmem:[#allocation2 + $0x20] sm:$0xff]
    %v6523 = vld [vmem:[#allocation2 + $0x28] sm:$0xff]
    %v6524 = vld [vmem:[#allocation2 + $0x30] sm:$0xff]
    %v6525 = vld [vmem:[#allocation2 + $0x38] sm:$0xff]
    %v6527 = vrot.slane %v6517, 1
    %v6528 = vrot.slane %v6517, 2
    %v6529 = vrot.slane %v6517, 3
    %v6530 = vrot.slane %v6517, 4
    %v6531 = vrot.slane %v6517, 5
    %v6532 = vrot.slane %v6517, 6
    %v6533 = vrot.slane %v6517, 7
    %v6534 = vperm.slane %v6517, 0
    %v6535 = vperm.slane %v6527, 0
    %v6536 = vperm.slane %v6528, 0
    %v6537 = vperm.slane %v6529, 0
    %v6538 = vperm.slane %v6530, 0
    %v6539 = vperm.slane %v6531, 0
    %v6540 = vperm.slane %v6532, 0
    %v6541 = vperm.slane %v6533, 0
    %6558 = vrot.lane.b32.xlu0 %v6518, 32
    %v6559 = vpop.permute.xlu0 %6558
    %6560 = vrot.lane.b32.xlu0 %v6519, 32
    %v6561 = vpop.permute.xlu0 %6560
    %6562 = vrot.lane.b32.xlu0 %v6520, 32
    %v6563 = vpop.permute.xlu0 %6562
    %6564 = vrot.lane.b32.xlu0 %v6521, 32
    %v6565 = vpop.permute.xlu0 %6564
    %6566 = vrot.lane.b32.xlu0 %v6522, 32
    %v6567 = vpop.permute.xlu0 %6566
    %6568 = vrot.lane.b32.xlu0 %v6523, 32
    %v6569 = vpop.permute.xlu0 %6568
    %6570 = vrot.lane.b32.xlu0 %v6524, 32
    %v6571 = vpop.permute.xlu0 %6570
    %6572 = vrot.lane.b32.xlu0 %v6525, 32
    %v6573 = vpop.permute.xlu0 %6572
    %v6582 = vmul.f32 %v6534, %v6559
    %v6583 = vmul.f32 %v6535, %v6561
    %v6584 = vmul.f32 %v6536, %v6563
    %v6585 = vmul.f32 %v6537, %v6565
    %v6586 = vmul.f32 %v6538, %v6567
    %v6587 = vmul.f32 %v6539, %v6569
    %v6588 = vmul.f32 %v6540, %v6571
    %v6589 = vmul.f32 %v6541, %v6573
    %6598 = vrot.lane.b32.xlu0 %v6582, 96
    %v6599 = vpop.permute.xlu0 %6598
    %6600 = vrot.lane.b32.xlu0 %v6583, 96
    %v6601 = vpop.permute.xlu0 %6600
    %6602 = vrot.lane.b32.xlu0 %v6584, 96
    %v6603 = vpop.permute.xlu0 %6602
    %6604 = vrot.lane.b32.xlu0 %v6585, 96
    %v6605 = vpop.permute.xlu0 %6604
    %6606 = vrot.lane.b32.xlu0 %v6586, 96
    %v6607 = vpop.permute.xlu0 %6606
    %6608 = vrot.lane.b32.xlu0 %v6587, 96
    %v6609 = vpop.permute.xlu0 %6608
    %6610 = vrot.lane.b32.xlu0 %v6588, 96
    %v6611 = vpop.permute.xlu0 %6610
    %6612 = vrot.lane.b32.xlu0 %v6589, 96
    %v6613 = vpop.permute.xlu0 %6612
    %v6622 = vsel %vm148, %v6599, 0.0
    %6623 = vadd.xlane.f32.xlu0 %v6622
    %v6624 = vpop.xlane.xlu0 %6623
    %v6625 = vsel %vm148, %v6601, 0.0
    %6626 = vadd.xlane.f32.xlu0 %v6625
    %v6627 = vpop.xlane.xlu0 %6626
    %v6628 = vsel %vm148, %v6603, 0.0
    %6629 = vadd.xlane.f32.xlu0 %v6628
    %v6630 = vpop.xlane.xlu0 %6629
    %v6631 = vsel %vm148, %v6605, 0.0
    %6632 = vadd.xlane.f32.xlu0 %v6631
    %v6633 = vpop.xlane.xlu0 %6632
    %v6634 = vsel %vm148, %v6607, 0.0
    %6635 = vadd.xlane.f32.xlu0 %v6634
    %v6636 = vpop.xlane.xlu0 %6635
    %v6637 = vsel %vm148, %v6609, 0.0
    %6638 = vadd.xlane.f32.xlu0 %v6637
    %v6639 = vpop.xlane.xlu0 %6638
    %v6640 = vsel %vm148, %v6611, 0.0
    %6641 = vadd.xlane.f32.xlu0 %v6640
    %v6642 = vpop.xlane.xlu0 %6641
    %v6643 = vsel %vm148, %v6613, 0.0
    %6644 = vadd.xlane.f32.xlu0 %v6643
    %v6645 = vpop.xlane.xlu0 %6644
    %v6654 = vperm.slane %v6624, %v61
    %v6655 = vperm.slane %v6627, %v61
    %v6656 = vperm.slane %v6630, %v61
    %v6657 = vperm.slane %v6633, %v61
    %v6658 = vperm.slane %v6636, %v61
    %v6659 = vperm.slane %v6639, %v61
    %v6660 = vperm.slane %v6642, %v61
    %v6661 = vperm.slane %v6645, %v61
    %v6662 = vsel %vm448, %v6655, %v6654
    %v6663 = vsel %vm450, %v6656, %v6662
    %v6664 = vsel %vm452, %v6657, %v6663
    %v6665 = vsel %vm454, %v6658, %v6664
    %v6666 = vsel %vm456, %v6659, %v6665
    %v6667 = vsel %vm458, %v6660, %v6666
    %v6668 = vsel %vm460, %v6661, %v6667
    %v6670 = vsel %vm463, %v6668, -inf
    %6671 = vmax.xlane.f32.xlu0 %v6670
    %v6672 = vpop.xlane.xlu0 %6671
    %v6674 = vperm.slane %v6672, 0
    %v6675 = vperm.slane %v6672, 1
    %v6676 = vperm.slane %v6672, 2
    %v6677 = vperm.slane %v6672, 3
    %v6678 = vperm.slane %v6672, 4
    %v6679 = vperm.slane %v6672, 5
    %v6680 = vperm.slane %v6672, 6
    %v6681 = vperm.slane %v6672, 7
    %v6690 = vsub.f32 %v6624, %v6674
    %v6691 = vsub.f32 %v6627, %v6675
    %v6692 = vsub.f32 %v6630, %v6676
    %v6693 = vsub.f32 %v6633, %v6677
    %v6694 = vsub.f32 %v6636, %v6678
    %v6695 = vsub.f32 %v6639, %v6679
    %v6696 = vsub.f32 %v6642, %v6680
    %v6697 = vsub.f32 %v6645, %v6681
    %v6698 = vmul.f32 %v6690, 1.442695
    %v6699 = vpow.pop %v6698
    %v6700 = vmul.f32 %v6691, 1.442695
    %v6701 = vpow.pop %v6700
    %v6702 = vmul.f32 %v6692, 1.442695
    %v6703 = vpow.pop %v6702
    %v6704 = vmul.f32 %v6693, 1.442695
    %v6705 = vpow.pop %v6704
    %v6706 = vmul.f32 %v6694, 1.442695
    %v6707 = vpow.pop %v6706
    %v6708 = vmul.f32 %v6695, 1.442695
    %v6709 = vpow.pop %v6708
    %v6710 = vmul.f32 %v6696, 1.442695
    %v6711 = vpow.pop %v6710
    %v6712 = vmul.f32 %v6697, 1.442695
    %v6713 = vpow.pop %v6712
    %6722 = vset.pattern.permute.xlu0 0
    %6723 = vperm.xlu0 %6722, %v6699
    %v6724 = vpop.permute.xlu0 %6723
    %6725 = vset.pattern.permute.xlu0 0
    %6726 = vperm.xlu0 %6725, %v6701
    %v6727 = vpop.permute.xlu0 %6726
    %6728 = vset.pattern.permute.xlu0 0
    %6729 = vperm.xlu0 %6728, %v6703
    %v6730 = vpop.permute.xlu0 %6729
    %6731 = vset.pattern.permute.xlu0 0
    %6732 = vperm.xlu0 %6731, %v6705
    %v6733 = vpop.permute.xlu0 %6732
    %6734 = vset.pattern.permute.xlu0 0
    %6735 = vperm.xlu0 %6734, %v6707
    %v6736 = vpop.permute.xlu0 %6735
    %6737 = vset.pattern.permute.xlu0 0
    %6738 = vperm.xlu0 %6737, %v6709
    %v6739 = vpop.permute.xlu0 %6738
    %6740 = vset.pattern.permute.xlu0 0
    %6741 = vperm.xlu0 %6740, %v6711
    %v6742 = vpop.permute.xlu0 %6741
    %6743 = vset.pattern.permute.xlu0 0
    %6744 = vperm.xlu0 %6743, %v6713
    %v6745 = vpop.permute.xlu0 %6744
    %v6746 = vperm.slane %v6724, %v61
    %v6747 = vperm.slane %v6727, %v61
    %v6748 = vperm.slane %v6730, %v61
    %v6749 = vperm.slane %v6733, %v61
    %v6750 = vperm.slane %v6736, %v61
    %v6751 = vperm.slane %v6739, %v61
    %v6752 = vperm.slane %v6742, %v61
    %v6753 = vperm.slane %v6745, %v61
    %v6754 = vsel %vm448, %v6747, %v6746
    %v6755 = vsel %vm450, %v6748, %v6754
    %v6756 = vsel %vm452, %v6749, %v6755
    %v6757 = vsel %vm454, %v6750, %v6756
    %v6758 = vsel %vm456, %v6751, %v6757
    %v6759 = vsel %vm458, %v6752, %v6758
    %v6760 = vsel %vm460, %v6753, %v6759
    %v6762 = vsel %vm463, %v6760, 0.0
    %6763 = vadd.xlane.f32.xlu0 %v6762
    %v6764 = vpop.xlane.xlu0 %6763
    %v6766 = vperm.slane %v6764, 0
    %v6767 = vperm.slane %v6764, 1
    %v6768 = vperm.slane %v6764, 2
    %v6769 = vperm.slane %v6764, 3
    %v6770 = vperm.slane %v6764, 4
    %v6771 = vperm.slane %v6764, 5
    %v6772 = vperm.slane %v6764, 6
    %v6773 = vperm.slane %v6764, 7
    %v6782 = vrcp.pop %v6766
    %v6783 = vmul.f32 %v6766, %v6782
    %v6784 = vsub.f32 1.0, %v6783
    %v6785 = vmul.f32 %v6782, %v6784
    %v6786 = vadd.f32 %v6782, %v6785
    %vm6787 = vweird.f32 %v6766
    %vm6788 = vweird.f32 %v6782
    %vm6789 = vmor %vm6787, %vm6788
    %v6790 = vsel %vm6789, %v6782, %v6786
    %v6791 = vand.u32 2147483647, %v6766
    %vm6792 = vcmp.eq.f32.partialorder %v6791, 8.507059e+37
    %v6793 = vand.u32 %v6766, 2147483648
    %v6794 = vor.u32 1.1754944e-38, %v6793
    %v6795 = vsel %vm6792, %v6794, %v6790
    %v6796 = vmul.f32 %v6699, %v6795
    %v6797 = vrcp.pop %v6767
    %v6798 = vmul.f32 %v6767, %v6797
    %v6799 = vsub.f32 1.0, %v6798
    %v6800 = vmul.f32 %v6797, %v6799
    %v6801 = vadd.f32 %v6797, %v6800
    %vm6802 = vweird.f32 %v6767
    %vm6803 = vweird.f32 %v6797
    %vm6804 = vmor %vm6802, %vm6803
    %v6805 = vsel %vm6804, %v6797, %v6801
    %v6806 = vand.u32 2147483647, %v6767
    %vm6807 = vcmp.eq.f32.partialorder %v6806, 8.507059e+37
    %v6808 = vand.u32 %v6767, 2147483648
    %v6809 = vor.u32 1.1754944e-38, %v6808
    %v6810 = vsel %vm6807, %v6809, %v6805
    %v6811 = vmul.f32 %v6701, %v6810
    %v6812 = vrcp.pop %v6768
    %v6813 = vmul.f32 %v6768, %v6812
    %v6814 = vsub.f32 1.0, %v6813
    %v6815 = vmul.f32 %v6812, %v6814
    %v6816 = vadd.f32 %v6812, %v6815
    %vm6817 = vweird.f32 %v6768
    %vm6818 = vweird.f32 %v6812
    %vm6819 = vmor %vm6817, %vm6818
    %v6820 = vsel %vm6819, %v6812, %v6816
    %v6821 = vand.u32 2147483647, %v6768
    %vm6822 = vcmp.eq.f32.partialorder %v6821, 8.507059e+37
    %v6823 = vand.u32 %v6768, 2147483648
    %v6824 = vor.u32 1.1754944e-38, %v6823
    %v6825 = vsel %vm6822, %v6824, %v6820
    %v6826 = vmul.f32 %v6703, %v6825
    %v6827 = vrcp.pop %v6769
    %v6828 = vmul.f32 %v6769, %v6827
    %v6829 = vsub.f32 1.0, %v6828
    %v6830 = vmul.f32 %v6827, %v6829
    %v6831 = vadd.f32 %v6827, %v6830
    %vm6832 = vweird.f32 %v6769
    %vm6833 = vweird.f32 %v6827
    %vm6834 = vmor %vm6832, %vm6833
    %v6835 = vsel %vm6834, %v6827, %v6831
    %v6836 = vand.u32 2147483647, %v6769
    %vm6837 = vcmp.eq.f32.partialorder %v6836, 8.507059e+37
    %v6838 = vand.u32 %v6769, 2147483648
    %v6839 = vor.u32 1.1754944e-38, %v6838
    %v6840 = vsel %vm6837, %v6839, %v6835
    %v6841 = vmul.f32 %v6705, %v6840
    %v6842 = vrcp.pop %v6770
    %v6843 = vmul.f32 %v6770, %v6842
    %v6844 = vsub.f32 1.0, %v6843
    %v6845 = vmul.f32 %v6842, %v6844
    %v6846 = vadd.f32 %v6842, %v6845
    %vm6847 = vweird.f32 %v6770
    %vm6848 = vweird.f32 %v6842
    %vm6849 = vmor %vm6847, %vm6848
    %v6850 = vsel %vm6849, %v6842, %v6846
    %v6851 = vand.u32 2147483647, %v6770
    %vm6852 = vcmp.eq.f32.partialorder %v6851, 8.507059e+37
    %v6853 = vand.u32 %v6770, 2147483648
    %v6854 = vor.u32 1.1754944e-38, %v6853
    %v6855 = vsel %vm6852, %v6854, %v6850
    %v6856 = vmul.f32 %v6707, %v6855
    %v6857 = vrcp.pop %v6771
    %v6858 = vmul.f32 %v6771, %v6857
    %v6859 = vsub.f32 1.0, %v6858
    %v6860 = vmul.f32 %v6857, %v6859
    %v6861 = vadd.f32 %v6857, %v6860
    %vm6862 = vweird.f32 %v6771
    %vm6863 = vweird.f32 %v6857
    %vm6864 = vmor %vm6862, %vm6863
    %v6865 = vsel %vm6864, %v6857, %v6861
    %v6866 = vand.u32 2147483647, %v6771
    %vm6867 = vcmp.eq.f32.partialorder %v6866, 8.507059e+37
    %v6868 = vand.u32 %v6771, 2147483648
    %v6869 = vor.u32 1.1754944e-38, %v6868
    %v6870 = vsel %vm6867, %v6869, %v6865
    %v6871 = vmul.f32 %v6709, %v6870
    %v6872 = vrcp.pop %v6772
    %v6873 = vmul.f32 %v6772, %v6872
    %v6874 = vsub.f32 1.0, %v6873
    %v6875 = vmul.f32 %v6872, %v6874
    %v6876 = vadd.f32 %v6872, %v6875
    %vm6877 = vweird.f32 %v6772
    %vm6878 = vweird.f32 %v6872
    %vm6879 = vmor %vm6877, %vm6878
    %v6880 = vsel %vm6879, %v6872, %v6876
    %v6881 = vand.u32 2147483647, %v6772
    %vm6882 = vcmp.eq.f32.partialorder %v6881, 8.507059e+37
    %v6883 = vand.u32 %v6772, 2147483648
    %v6884 = vor.u32 1.1754944e-38, %v6883
    %v6885 = vsel %vm6882, %v6884, %v6880
    %v6886 = vmul.f32 %v6711, %v6885
    %v6887 = vrcp.pop %v6773
    %v6888 = vmul.f32 %v6773, %v6887
    %v6889 = vsub.f32 1.0, %v6888
    %v6890 = vmul.f32 %v6887, %v6889
    %v6891 = vadd.f32 %v6887, %v6890
    %vm6892 = vweird.f32 %v6773
    %vm6893 = vweird.f32 %v6887
    %vm6894 = vmor %vm6892, %vm6893
    %v6895 = vsel %vm6894, %v6887, %v6891
    %v6896 = vand.u32 2147483647, %v6773
    %vm6897 = vcmp.eq.f32.partialorder %v6896, 8.507059e+37
    %v6898 = vand.u32 %v6773, 2147483648
    %v6899 = vor.u32 1.1754944e-38, %v6898
    %v6900 = vsel %vm6897, %v6899, %v6895
    %v6901 = vmul.f32 %v6713, %v6900
    %6910 = vset.pattern.permute.xlu0 0
    %6911 = vperm.xlu0 %6910, %v6796
    %v6912 = vpop.permute.xlu0 %6911
    %6913 = vset.pattern.permute.xlu0 0
    %6914 = vperm.xlu0 %6913, %v6811
    %v6915 = vpop.permute.xlu0 %6914
    %6916 = vset.pattern.permute.xlu0 0
    %6917 = vperm.xlu0 %6916, %v6826
    %v6918 = vpop.permute.xlu0 %6917
    %6919 = vset.pattern.permute.xlu0 0
    %6920 = vperm.xlu0 %6919, %v6841
    %v6921 = vpop.permute.xlu0 %6920
    %6922 = vset.pattern.permute.xlu0 0
    %6923 = vperm.xlu0 %6922, %v6856
    %v6924 = vpop.permute.xlu0 %6923
    %6925 = vset.pattern.permute.xlu0 0
    %6926 = vperm.xlu0 %6925, %v6871
    %v6927 = vpop.permute.xlu0 %6926
    %6928 = vset.pattern.permute.xlu0 0
    %6929 = vperm.xlu0 %6928, %v6886
    %v6930 = vpop.permute.xlu0 %6929
    %6931 = vset.pattern.permute.xlu0 0
    %6932 = vperm.xlu0 %6931, %v6901
    %v6933 = vpop.permute.xlu0 %6932
    %v6934 = vperm.slane %v6912, %v61
    %v6935 = vperm.slane %v6915, %v61
    %v6936 = vperm.slane %v6918, %v61
    %v6937 = vperm.slane %v6921, %v61
    %v6938 = vperm.slane %v6924, %v61
    %v6939 = vperm.slane %v6927, %v61
    %v6940 = vperm.slane %v6930, %v61
    %v6941 = vperm.slane %v6933, %v61
    %v6942 = vsel %vm448, %v6935, %v6934
    %v6943 = vsel %vm450, %v6936, %v6942
    %v6944 = vsel %vm452, %v6937, %v6943
    %v6945 = vsel %vm454, %v6938, %v6944
    %v6946 = vsel %vm456, %v6939, %v6945
    %v6947 = vsel %vm458, %v6940, %v6946
    %v6948 = vsel %vm460, %v6941, %v6947
    %s6950 = scalar_lea.vmem [#allocation6], 56
    %6951 = vst.msk [vmem:[%s6950] sm:$0xff] %vm463, %v6948
    %v6960 = vmul.f32 %v6912, %v6518
    %v6961 = vmul.f32 %v6915, %v6519
    %v6962 = vmul.f32 %v6918, %v6520
    %v6963 = vmul.f32 %v6921, %v6521
    %v6964 = vmul.f32 %v6924, %v6522
    %v6965 = vmul.f32 %v6927, %v6523
    %v6966 = vmul.f32 %v6930, %v6524
    %v6967 = vmul.f32 %v6933, %v6525
    %v6968 = vsel %vm148, %v6960, 0.0
    %v6969 = vrot.slane %v6968, 4
    %v6970 = vadd.f32 %v6968, %v6969
    %v6971 = vrot.slane %v6970, 2
    %v6972 = vadd.f32 %v6970, %v6971
    %v6973 = vrot.slane %v6972, 1
    %v6974 = vadd.f32 %v6972, %v6973
    %v6975 = vsel %vm148, %v6961, 0.0
    %v6976 = vrot.slane %v6975, 4
    %v6977 = vadd.f32 %v6975, %v6976
    %v6978 = vrot.slane %v6977, 2
    %v6979 = vadd.f32 %v6977, %v6978
    %v6980 = vrot.slane %v6979, 1
    %v6981 = vadd.f32 %v6979, %v6980
    %v6982 = vsel %vm148, %v6962, 0.0
    %v6983 = vrot.slane %v6982, 4
    %v6984 = vadd.f32 %v6982, %v6983
    %v6985 = vrot.slane %v6984, 2
    %v6986 = vadd.f32 %v6984, %v6985
    %v6987 = vrot.slane %v6986, 1
    %v6988 = vadd.f32 %v6986, %v6987
    %v6989 = vsel %vm148, %v6963, 0.0
    %v6990 = vrot.slane %v6989, 4
    %v6991 = vadd.f32 %v6989, %v6990
    %v6992 = vrot.slane %v6991, 2
    %v6993 = vadd.f32 %v6991, %v6992
    %v6994 = vrot.slane %v6993, 1
    %v6995 = vadd.f32 %v6993, %v6994
    %v6996 = vsel %vm148, %v6964, 0.0
    %v6997 = vrot.slane %v6996, 4
    %v6998 = vadd.f32 %v6996, %v6997
    %v6999 = vrot.slane %v6998, 2
    %v7000 = vadd.f32 %v6998, %v6999
    %v7001 = vrot.slane %v7000, 1
    %v7002 = vadd.f32 %v7000, %v7001
    %v7003 = vsel %vm148, %v6965, 0.0
    %v7004 = vrot.slane %v7003, 4
    %v7005 = vadd.f32 %v7003, %v7004
    %v7006 = vrot.slane %v7005, 2
    %v7007 = vadd.f32 %v7005, %v7006
    %v7008 = vrot.slane %v7007, 1
    %v7009 = vadd.f32 %v7007, %v7008
    %v7010 = vsel %vm148, %v6966, 0.0
    %v7011 = vrot.slane %v7010, 4
    %v7012 = vadd.f32 %v7010, %v7011
    %v7013 = vrot.slane %v7012, 2
    %v7014 = vadd.f32 %v7012, %v7013
    %v7015 = vrot.slane %v7014, 1
    %v7016 = vadd.f32 %v7014, %v7015
    %v7017 = vsel %vm148, %v6967, 0.0
    %v7018 = vrot.slane %v7017, 4
    %v7019 = vadd.f32 %v7017, %v7018
    %v7020 = vrot.slane %v7019, 2
    %v7021 = vadd.f32 %v7019, %v7020
    %v7022 = vrot.slane %v7021, 1
    %v7023 = vadd.f32 %v7021, %v7022
    %v7024 = vpack.c.bf16 %v6974, %v6974
    %v7025 = vpack.c.bf16 %v6981, %v6981
    %v7026 = vpack.c.bf16 %v6988, %v6988
    %v7027 = vpack.c.bf16 %v6995, %v6995
    %v7028 = vpack.c.bf16 %v7002, %v7002
    %v7029 = vpack.c.bf16 %v7009, %v7009
    %v7030 = vpack.c.bf16 %v7016, %v7016
    %v7031 = vpack.c.bf16 %v7023, %v7023
    %v7032 = vpack.c.bf16 %v6517, %v6517
    %v7041 = vperm.slane %v7024, 0
    %v7042 = vperm.slane %v7025, 0
    %v7043 = vperm.slane %v7026, 0
    %v7044 = vperm.slane %v7027, 0
    %v7045 = vperm.slane %v7028, 0
    %v7046 = vperm.slane %v7029, 0
    %v7047 = vperm.slane %v7030, 0
    %v7048 = vperm.slane %v7031, 0
    %v7049 = vunpack.c.l.b16 %v7041
    %v7050 = vunpack.c.l.b16 %v7042
    %v7051 = vunpack.c.l.b16 %v7043
    %v7052 = vunpack.c.l.b16 %v7044
    %v7053 = vunpack.c.l.b16 %v7045
    %v7054 = vunpack.c.l.b16 %v7046
    %v7055 = vunpack.c.l.b16 %v7047
    %v7056 = vunpack.c.l.b16 %v7048
    %v7057 = vsel %vm448, %v7050, %v7049
    %v7058 = vsel %vm450, %v7051, %v7057
    %v7059 = vsel %vm452, %v7052, %v7058
    %v7060 = vsel %vm454, %v7053, %v7059
    %v7061 = vsel %vm456, %v7054, %v7060
    %v7062 = vsel %vm458, %v7055, %v7061
    %v7063 = vsel %vm460, %v7056, %v7062
    %v7064 = vpack.c.b16 %v7063, %v7063
    %v7067 = vsel %vm148, %v7064, %v7032
    %v7068 = vld [vmem:[%s3] sm:$0xf]
    %v7069 = vld [vmem:[%s3 + $0x4] sm:$0xf]
    %v7070 = vld [vmem:[%s3 + $0x8] sm:$0xf]
    %v7071 = vld [vmem:[%s3 + $0xc] sm:$0xf]
    %v7072 = vld [vmem:[%s3 + $0x10] sm:$0xf]
    %v7073 = vld [vmem:[%s3 + $0x14] sm:$0xf]
    %v7074 = vld [vmem:[%s3 + $0x18] sm:$0xf]
    %v7075 = vld [vmem:[%s3 + $0x1c] sm:$0xf]
    %v7084 = vunpack.c.l.b16 %v7068
    %v7085 = vunpack.c.l.b16 %v7069
    %v7086 = vunpack.c.l.b16 %v7070
    %v7087 = vunpack.c.l.b16 %v7071
    %v7088 = vunpack.c.l.b16 %v7072
    %v7089 = vunpack.c.l.b16 %v7073
    %v7090 = vunpack.c.l.b16 %v7074
    %v7091 = vunpack.c.l.b16 %v7075
    %v7092 = vpack.c.b16 %v7085, %v7084
    %v7093 = vpack.c.b16 %v7087, %v7086
    %v7094 = vpack.c.b16 %v7089, %v7088
    %v7095 = vpack.c.b16 %v7091, %v7090
    %v7100 = vsel %vm205, %v7067, 0
    %7102 = vmatpush.bf16.msra.mxu0 0
    %7103 = vmatpush.bf16.msra.mxu0 0
    %7104 = vmatpush.bf16.msra.mxu0 0
    %7105 = vmatpush.bf16.msra.mxu0 0
    %7106 = vmatpush.bf16.msra.mxu0 %v7095
    %7107 = vmatpush.bf16.msra.mxu0 %v7094
    %7108 = vmatpush.bf16.msra.mxu0 %v7093
    %7109 = vmatpush.bf16.msra.mxu0 %v7092
    %7110 = vmatmul.bf16.gmra.mxu0 %v7100
    %v7111 = vpop.f32.mrf.mxu0
    %v7112 = vadd.f32 %v870, %v7111
    %v7113 = vpop.f32.mrf.mxu0
    %7114 = vdwg.mxu0
    %v7115 = vtanh.pop %v7112
    %v7116 = vpack.c.bf16 %v7115, %v7115
    %v7117 = vld [vmem:[%s5] sm:$0xf]
    %v7118 = vld [vmem:[%s5 + $0x4] sm:$0xf]
    %v7119 = vld [vmem:[%s5 + $0x8] sm:$0xf]
    %v7120 = vld [vmem:[%s5 + $0xc] sm:$0xf]
    %v7125 = vunpack.c.l.b16 %v7117
    %v7126 = vunpack.c.l.b16 %v7118
    %v7127 = vunpack.c.l.b16 %v7119
    %v7128 = vunpack.c.l.b16 %v7120
    %v7129 = vpack.c.b16 %v7126, %v7125
    %v7130 = vpack.c.b16 %v7128, %v7127
    %v7134 = vsel %vm148, %v7116, 0
    %7136 = vmatpush.bf16.msra.mxu0 0
    %7137 = vmatpush.bf16.msra.mxu0 0
    %7138 = vmatpush.bf16.msra.mxu0 0
    %7139 = vmatpush.bf16.msra.mxu0 0
    %7140 = vmatpush.bf16.msra.mxu0 0
    %7141 = vmatpush.bf16.msra.mxu0 0
    %7142 = vmatpush.bf16.msra.mxu0 %v7130
    %7143 = vmatpush.bf16.msra.mxu0 %v7129
    %7144 = vmatmul.bf16.gmra.mxu0 %v7134
    %v7145 = vpop.f32.mrf.mxu0
    %v7146 = vadd.f32 %v918, %v7145
    %v7147 = vpop.f32.mrf.mxu0
    %7148 = vdwg.mxu0
    %7149 = vmax.xlane.f32.xlu0 %v7146
    %v7150 = vpop.xlane.xlu0 %7149
    %v7151 = vsub.f32 %v7146, %v7150
    %v7152 = vmul.f32 %v7151, 1.442695
    %v7153 = vpow.pop %v7152
    %7154 = vadd.xlane.f32.xlu0 %v7153
    %v7155 = vpop.xlane.xlu0 %7154
    %v7156 = vlog2.pop %v7155
    %v7157 = vmul.f32 %v7156, 0.6931472
    %v7158 = vadd.f32 %v7157, %v7150
    %v7159 = vsub.f32 %v7146, %v7158
    %s7160 = scalar_lea.vmem [#allocation5], 56
    %7161 = vst [vmem:[%s7160] sm:$0xff] %v7159
    %7162 = vrot.lane.b32.xlu0 %v6517, 96
    %v7163 = vpop.permute.xlu0 %7162
    %7165 = vst.msk [vmem:[#allocation8] sm:$0xff] %vm148, %v7163
    // Predicated region
    $region46: #{tpu_custom_call.1} parent=1 // pred_check
      _
    $region47: #{tpu_custom_call.1} parent=1 // pred_check_branch
      %7167 = sbr.rel (0) target = $region49
    $region48: #{tpu_custom_call.1} parent=1 // pred_region
      %7169 = vsyncadd [#allocation4], 0
      %s7170 = sshll.u32 [#allocation5], 4
      %s7171 = int_to_ptr.vmem [resolvable:$true] %s7170
      %s7172 = sshll.u32 %s10, 4
      %s7173 = int_to_ptr.hbm [resolvable:$true] %s7172
      %7178 = dma.vmem_to_hbm [thread:$0]  %s7171, 1024, %s7173, [#allocation4], 128, 128, 8
    $region49: #{tpu_custom_call.1} parent=1 // pred_fallthru
      _
    // Predicated region
    $region50: #{tpu_custom_call.1} parent=1 // pred_check
      _
    $region51: #{tpu_custom_call.1} parent=1 // pred_check_branch
      %7180 = sbr.rel (0) target = $region53
    $region52: #{tpu_custom_call.1} parent=1 // pred_region
      %7182 = vsyncadd [#allocation7], 0
      %s7183 = sshll.u32 [#allocation6], 4
      %s7184 = int_to_ptr.vmem [resolvable:$true] %s7183
      %s7185 = sshll.u32 %s11, 4
      %s7186 = int_to_ptr.hbm [resolvable:$true] %s7185
      %7191 = dma.vmem_to_hbm [thread:$0]  %s7184, 1024, %s7186, [#allocation7], 128, 128, 8
    $region53: #{tpu_custom_call.1} parent=1 // pred_fallthru
      _
    // Predicated region
    $region54: #{tpu_custom_call.1} parent=1 // pred_check
      _
    $region55: #{tpu_custom_call.1} parent=1 // pred_check_branch
      %7193 = sbr.rel (0) target = $region57
    $region56: #{tpu_custom_call.1} parent=1 // pred_region
      %7195 = vsyncadd [#allocation7], 0
      %s7197 = sshll.u32 [#allocation8], 4
      %s7198 = int_to_ptr.vmem [resolvable:$true] %s7197
      %s7199 = sshll.u32 %s12, 4
      %s7200 = int_to_ptr.hbm [resolvable:$true] %s7199
      %7202 = dma.vmem_to_hbm [thread:$0]  %s7198, 128, %s7200, [#allocation7]
    $region57: #{tpu_custom_call.1} parent=1 // pred_fallthru
      _
    // Predicated region
    $region58: #{tpu_custom_call.1} parent=1 // pred_check
      _
    $region59: #{tpu_custom_call.1} parent=1 // pred_check_branch
      %7204 = sbr.rel (0) target = $region61
    $region60: #{tpu_custom_call.1} parent=1 // pred_region
      %7206 = dma.done [#allocation4], 1024
    $region61: #{tpu_custom_call.1} parent=1 // pred_fallthru
      _
    // Predicated region
    $region62: #{tpu_custom_call.1} parent=1 // pred_check
      _
    $region63: #{tpu_custom_call.1} parent=1 // pred_check_branch
      %7208 = sbr.rel (0) target = $region65
    $region64: #{tpu_custom_call.1} parent=1 // pred_region
      %7210 = dma.done [#allocation7], 1024
    $region65: #{tpu_custom_call.1} parent=1 // pred_fallthru
      _
    // Predicated region
    $region66: #{tpu_custom_call.1} parent=1 // pred_check
      _
    $region67: #{tpu_custom_call.1} parent=1 // pred_check_branch
      %7212 = sbr.rel (0) target = $region69
    $region68: #{tpu_custom_call.1} parent=1 // pred_region
      %7214 = dma.done [#allocation7], 128
    $region69: #{tpu_custom_call.1} parent=1 // pred_fallthru
      _
    %7215 = vsyncpa [#allocation3], 1
    %7216 = vsyncpa [#allocation4], 1
    %7217 = vsyncpa [#allocation7], 1

</llo_original>
